<compile_context>
chip_gen: v7x
topology: tpu7x:2x2x1
jax: 0.10.0
libtpu: 0.0.40
codegen_flags: <defaults>
</compile_context>

<pallas_src>
import jax
import jax.numpy as jnp
from jax.experimental import pallas as pl
from jax.experimental.pallas import tpu as pltpu

# ---- model hyper-parameters (mirrors the PyTorch module) -------------------
INPUT_SIZE = 1
HIDDEN_SIZES = [10, 10, 10]
OUTPUT_SIZE = 1
H = 10                       # true hidden width

LANE = 128                   # TPU lane width: 128 batch rows per chunk
FP = 16                      # hidden features padded to 16 sublanes
TB_MAX = 4096                # batch rows per grid step (sweepable 2048-8192)
TC_MAX = TB_MAX // LANE      # chunks per grid step

# packed-parameter tile indices (each tile is FP rows x LANE lanes)
T_W1 = 0                     # layer-1 weight column (row f = w1[f], lane-bcast)
T_B1 = 1
T_W2 = 2                     # 2..11  : layer-2 column f (row g = W2[f,g])
T_B2 = 12
T_W3 = 13                    # 13..22 : layer-3 column f
T_B3 = 23
T_W4 = 24                    # layer-4 weight (row f = w4[f])
T_B4 = 25                    # row 0 = b4
N_TILES = 26
WP_ROWS = N_TILES * FP       # 416


def _round_up(n, m):
    return ((n + m - 1) // m) * m


# ---- Pallas kernel ----------------------------------------------------------
def _mlp_kernel(x_ref, wp_ref, o_ref):
    """x_ref: (tc, 128) batch chunks (batch on lanes). wp_ref: (416, 128)
    packed lane-broadcast parameter tiles. o_ref: (tc, 128) outputs."""
    tc = x_ref.shape[0]

    def tile(i):                                  # i-th (FP, LANE) param tile
        return wp_ref[i * FP:(i + 1) * FP, :]

    def sigmoid(z):                               # one EUP push (tanh), not exp+recip
        return 0.5 * jnp.tanh(0.5 * z) + 0.5

    b4_row = wp_ref[T_B4 * FP:T_B4 * FP + 1, :]   # (1, LANE)

    for c in range(tc):                           # static unrolled chunk loop
        xrow = x_ref[c:c + 1, :]                  # (1, LANE): 128 batch rows

        # layer 1 (1 -> 10): VPU broadcast outer product, features -> sublanes
        h = sigmoid(tile(T_W1) * xrow + tile(T_B1))          # (FP, LANE)

        # layer 2 (10 -> 10): ten sublane-broadcast FMAs on the VPU (no MXU)
        acc = tile(T_B2)
        for f in range(H):
            acc = acc + tile(T_W2 + f) * h[f:f + 1, :]
        h = sigmoid(acc)

        # layer 3 (10 -> 10)
        acc = tile(T_B3)
        for f in range(H):
            acc = acc + tile(T_W3 + f) * h[f:f + 1, :]
        h = sigmoid(acc)

        # layer 4 (10 -> 1): elementwise * then sublane reduce.
        # Padded h rows are sigmoid(0)=0.5 but always meet zero w4 rows.
        y = jnp.sum(tile(T_W4) * h, axis=0, keepdims=True) + b4_row
        o_ref[c:c + 1, :] = y


# ---- operand packing --------------------------------------------------------
def pack_params(params):
    """Pack all weights/biases into one (416, 128) f32 operand of
    lane-broadcast (16, 128) tiles (padded rows are exactly zero)."""
    def col_tile(vec):
        v = jnp.zeros((FP,), jnp.float32).at[:vec.shape[0]].set(
            vec.astype(jnp.float32))
        return jnp.broadcast_to(v[:, None], (FP, LANE))

    tiles = [col_tile(params["w1"][0, :]), col_tile(params["b1"])]
    tiles += [col_tile(params["w2"][f, :]) for f in range(H)]
    tiles += [col_tile(params["b2"])]
    tiles += [col_tile(params["w3"][f, :]) for f in range(H)]
    tiles += [col_tile(params["b3"])]
    tiles += [col_tile(params["w4"][:, 0]), col_tile(params["b4"])]
    return jnp.concatenate(tiles, axis=0)         # (WP_ROWS, LANE)


# ---- forward ----------------------------------------------------------------
@jax.jit
def approx_nn_forward(x, wp):
    """x: (B, 1) float32. wp: packed params from pack_params."""
    B = x.shape[0]
    n_chunks = pl.cdiv(B, LANE)                   # 128 batch rows per chunk

    tc = min(TC_MAX, _round_up(n_chunks, 8))      # chunks per grid step (mult of 8)
    # keep >= 2 (balanced) grid blocks when there is enough work so the
    # "parallel" batch axis feeds both v7x TensorCores
    if n_chunks >= 16 and pl.cdiv(n_chunks, tc) < 2:
        tc = _round_up(pl.cdiv(n_chunks, 2), 8)
    n_blocks = pl.cdiv(n_chunks, tc)
    n_chunks_pad = n_blocks * tc
    b_pad = n_chunks_pad * LANE

    # lane-dense view of x: (n_chunks_pad, 128); batch rides on lanes.
    # TODO(synk): handle the ragged tail inside the kernel to avoid this pad
    # and the output slice copy once the op is HBM-bound.
    x_lanes = jnp.pad(x.reshape(-1), (0, b_pad - B)).reshape(n_chunks_pad, LANE)

    out = pl.pallas_call(
        _mlp_kernel,
        out_shape=jax.ShapeDtypeStruct((n_chunks_pad, LANE), jnp.float32),
        grid_spec=pltpu.PrefetchScalarGridSpec(
            num_scalar_prefetch=0,
            grid=(n_blocks,),
            in_specs=[
                pl.BlockSpec((tc, LANE), lambda i: (i, 0)),        # x tile
                pl.BlockSpec((WP_ROWS, LANE), lambda i: (0, 0)),   # packed params
            ],
            out_specs=pl.BlockSpec((tc, LANE), lambda i: (i, 0)),
        ),
        compiler_params=pltpu.CompilerParams(
            dimension_semantics=("parallel",),     # shard batch across TCs (v7x)
        ),
    )(x_lanes, wp)

    return out.reshape(-1)[:B].reshape(B, OUTPUT_SIZE)


# ---- deterministic parameter init (PyTorch nn.Linear-style uniform) --------
def init_params(key):
    sizes = [INPUT_SIZE] + HIDDEN_SIZES + [OUTPUT_SIZE]
    params = {}
    for i, (fan_in, fan_out) in enumerate(zip(sizes[:-1], sizes[1:]), start=1):
        key, kw, kb = jax.random.split(key, 3)
        bound = 1.0 / jnp.sqrt(fan_in)
        # store W as (in_features, out_features) == transpose of torch's layout
        params[f"w{i}"] = jax.random.uniform(
            kw, (fan_in, fan_out), jnp.float32, -bound, bound)
        params[f"b{i}"] = jax.random.uniform(
            kb, (fan_out,), jnp.float32, -bound, bound)
    return params


def reference_forward(x, params):
    hp = jax.lax.Precision.HIGHEST                # full-f32 reference on TPU
    h = x
    for i in range(1, 4):
        h = jax.nn.sigmoid(
            jnp.dot(h, params[f"w{i}"], precision=hp) + params[f"b{i}"])
    return jnp.dot(h, params["w4"], precision=hp) + params["b4"]


if __name__ == "__main__":
    key = jax.random.PRNGKey(0)
    kx, kp = jax.random.split(key)
    B = 3000   # small, but exercises 2 grid blocks + the padded tail
    x = jax.random.normal(kx, (B, INPUT_SIZE), dtype=jnp.float32)
    params = init_params(kp)
    wp = pack_params(params)

    out = approx_nn_forward(x, wp)
    jax.block_until_ready(out)

    ref = reference_forward(x, params)
    assert out.shape == (B, OUTPUT_SIZE), out.shape
    assert jnp.allclose(out, ref, atol=1e-5, rtol=1e-5), (
        float(jnp.max(jnp.abs(out - ref))))
    print("KERNEL_OK")
</pallas_src>

<mosaic_0001>
module attributes {stable_mosaic.version = 11 : i64} {
  func.func @_mlp_kernel(%arg0: i32, %arg1: memref<16x128xf32, #tpu.memory_space<vmem>>, %arg2: memref<416x128xf32, #tpu.memory_space<vmem>>, %arg3: memref<16x128xf32, #tpu.memory_space<vmem>>) attributes {dimension_semantics = [#tpu.dimension_semantics<parallel>], iteration_bounds = array<i64: 2>, scalar_prefetch = 0 : i64, scratch_operands = 0 : i64, tpu.core_type = #tpu.core_type<tc>, window_params = [{transform_indices = @transform_0, window_bounds = array<i64: 16, 128>}, {pipeline_mode = #tpu.pipeline_mode<synchronous>, transform_indices = @transform_1, window_bounds = array<i64: 416, 128>}, {transform_indices = @transform_2, window_bounds = array<i64: 16, 128>}]} {
    %c400 = arith.constant 400 : index
    %c0 = arith.constant 0 : index
    %0 = vector.load %arg2[%c400, %c0] : memref<416x128xf32, #tpu.memory_space<vmem>>, vector<1x128xf32>
    %c0_0 = arith.constant 0 : index
    %c0_1 = arith.constant 0 : index
    %1 = vector.load %arg1[%c0_0, %c0_1] : memref<16x128xf32, #tpu.memory_space<vmem>>, vector<1x128xf32>
    %c0_2 = arith.constant 0 : index
    %c0_3 = arith.constant 0 : index
    %2 = vector.load %arg2[%c0_2, %c0_3] : memref<416x128xf32, #tpu.memory_space<vmem>>, vector<16x128xf32>
    %3 = vector.broadcast %1 : vector<1x128xf32> to vector<16x128xf32>
    %4 = arith.mulf %2, %3 : vector<16x128xf32>
    %c16 = arith.constant 16 : index
    %c0_4 = arith.constant 0 : index
    %5 = vector.load %arg2[%c16, %c0_4] : memref<416x128xf32, #tpu.memory_space<vmem>>, vector<16x128xf32>
    %6 = arith.addf %4, %5 : vector<16x128xf32>
    %cst = arith.constant 5.000000e-01 : f32
    %7 = vector.broadcast %cst : f32 to vector<16x128xf32>
    %8 = arith.mulf %7, %6 : vector<16x128xf32>
    %9 = math.tanh %8 : vector<16x128xf32>
    %cst_5 = arith.constant 5.000000e-01 : f32
    %10 = vector.broadcast %cst_5 : f32 to vector<16x128xf32>
    %11 = arith.mulf %10, %9 : vector<16x128xf32>
    %cst_6 = arith.constant 5.000000e-01 : f32
    %12 = vector.broadcast %cst_6 : f32 to vector<16x128xf32>
    %13 = arith.addf %11, %12 : vector<16x128xf32>
    %c192 = arith.constant 192 : index
    %c0_7 = arith.constant 0 : index
    %14 = vector.load %arg2[%c192, %c0_7] : memref<416x128xf32, #tpu.memory_space<vmem>>, vector<16x128xf32>
    %c32 = arith.constant 32 : index
    %c0_8 = arith.constant 0 : index
    %15 = vector.load %arg2[%c32, %c0_8] : memref<416x128xf32, #tpu.memory_space<vmem>>, vector<16x128xf32>
    %16 = vector.extract_strided_slice %13 {offsets = [0, 0], sizes = [1, 128], strides = [1, 1]} : vector<16x128xf32> to vector<1x128xf32>
    %17 = vector.broadcast %16 : vector<1x128xf32> to vector<16x128xf32>
    %18 = arith.mulf %15, %17 : vector<16x128xf32>
    %19 = arith.addf %14, %18 : vector<16x128xf32>
    %c48 = arith.constant 48 : index
    %c0_9 = arith.constant 0 : index
    %20 = vector.load %arg2[%c48, %c0_9] : memref<416x128xf32, #tpu.memory_space<vmem>>, vector<16x128xf32>
    %21 = vector.extract_strided_slice %13 {offsets = [1, 0], sizes = [1, 128], strides = [1, 1]} : vector<16x128xf32> to vector<1x128xf32>
    %22 = vector.broadcast %21 : vector<1x128xf32> to vector<16x128xf32>
    %23 = arith.mulf %20, %22 : vector<16x128xf32>
    %24 = arith.addf %19, %23 : vector<16x128xf32>
    %c64 = arith.constant 64 : index
    %c0_10 = arith.constant 0 : index
    %25 = vector.load %arg2[%c64, %c0_10] : memref<416x128xf32, #tpu.memory_space<vmem>>, vector<16x128xf32>
    %26 = vector.extract_strided_slice %13 {offsets = [2, 0], sizes = [1, 128], strides = [1, 1]} : vector<16x128xf32> to vector<1x128xf32>
    %27 = vector.broadcast %26 : vector<1x128xf32> to vector<16x128xf32>
    %28 = arith.mulf %25, %27 : vector<16x128xf32>
    %29 = arith.addf %24, %28 : vector<16x128xf32>
    %c80 = arith.constant 80 : index
    %c0_11 = arith.constant 0 : index
    %30 = vector.load %arg2[%c80, %c0_11] : memref<416x128xf32, #tpu.memory_space<vmem>>, vector<16x128xf32>
    %31 = vector.extract_strided_slice %13 {offsets = [3, 0], sizes = [1, 128], strides = [1, 1]} : vector<16x128xf32> to vector<1x128xf32>
    %32 = vector.broadcast %31 : vector<1x128xf32> to vector<16x128xf32>
    %33 = arith.mulf %30, %32 : vector<16x128xf32>
    %34 = arith.addf %29, %33 : vector<16x128xf32>
    %c96 = arith.constant 96 : index
    %c0_12 = arith.constant 0 : index
    %35 = vector.load %arg2[%c96, %c0_12] : memref<416x128xf32, #tpu.memory_space<vmem>>, vector<16x128xf32>
    %36 = vector.extract_strided_slice %13 {offsets = [4, 0], sizes = [1, 128], strides = [1, 1]} : vector<16x128xf32> to vector<1x128xf32>
    %37 = vector.broadcast %36 : vector<1x128xf32> to vector<16x128xf32>
    %38 = arith.mulf %35, %37 : vector<16x128xf32>
    %39 = arith.addf %34, %38 : vector<16x128xf32>
    %c112 = arith.constant 112 : index
    %c0_13 = arith.constant 0 : index
    %40 = vector.load %arg2[%c112, %c0_13] : memref<416x128xf32, #tpu.memory_space<vmem>>, vector<16x128xf32>
    %41 = vector.extract_strided_slice %13 {offsets = [5, 0], sizes = [1, 128], strides = [1, 1]} : vector<16x128xf32> to vector<1x128xf32>
    %42 = vector.broadcast %41 : vector<1x128xf32> to vector<16x128xf32>
    %43 = arith.mulf %40, %42 : vector<16x128xf32>
    %44 = arith.addf %39, %43 : vector<16x128xf32>
    %c128 = arith.constant 128 : index
    %c0_14 = arith.constant 0 : index
    %45 = vector.load %arg2[%c128, %c0_14] : memref<416x128xf32, #tpu.memory_space<vmem>>, vector<16x128xf32>
    %46 = vector.extract_strided_slice %13 {offsets = [6, 0], sizes = [1, 128], strides = [1, 1]} : vector<16x128xf32> to vector<1x128xf32>
    %47 = vector.broadcast %46 : vector<1x128xf32> to vector<16x128xf32>
    %48 = arith.mulf %45, %47 : vector<16x128xf32>
    %49 = arith.addf %44, %48 : vector<16x128xf32>
    %c144 = arith.constant 144 : index
    %c0_15 = arith.constant 0 : index
    %50 = vector.load %arg2[%c144, %c0_15] : memref<416x128xf32, #tpu.memory_space<vmem>>, vector<16x128xf32>
    %51 = vector.extract_strided_slice %13 {offsets = [7, 0], sizes = [1, 128], strides = [1, 1]} : vector<16x128xf32> to vector<1x128xf32>
    %52 = vector.broadcast %51 : vector<1x128xf32> to vector<16x128xf32>
    %53 = arith.mulf %50, %52 : vector<16x128xf32>
    %54 = arith.addf %49, %53 : vector<16x128xf32>
    %c160 = arith.constant 160 : index
    %c0_16 = arith.constant 0 : index
    %55 = vector.load %arg2[%c160, %c0_16] : memref<416x128xf32, #tpu.memory_space<vmem>>, vector<16x128xf32>
    %56 = vector.extract_strided_slice %13 {offsets = [8, 0], sizes = [1, 128], strides = [1, 1]} : vector<16x128xf32> to vector<1x128xf32>
    %57 = vector.broadcast %56 : vector<1x128xf32> to vector<16x128xf32>
    %58 = arith.mulf %55, %57 : vector<16x128xf32>
    %59 = arith.addf %54, %58 : vector<16x128xf32>
    %c176 = arith.constant 176 : index
    %c0_17 = arith.constant 0 : index
    %60 = vector.load %arg2[%c176, %c0_17] : memref<416x128xf32, #tpu.memory_space<vmem>>, vector<16x128xf32>
    %61 = vector.extract_strided_slice %13 {offsets = [9, 0], sizes = [1, 128], strides = [1, 1]} : vector<16x128xf32> to vector<1x128xf32>
    %62 = vector.broadcast %61 : vector<1x128xf32> to vector<16x128xf32>
    %63 = arith.mulf %60, %62 : vector<16x128xf32>
    %64 = arith.addf %59, %63 : vector<16x128xf32>
    %cst_18 = arith.constant 5.000000e-01 : f32
    %65 = vector.broadcast %cst_18 : f32 to vector<16x128xf32>
    %66 = arith.mulf %65, %64 : vector<16x128xf32>
    %67 = math.tanh %66 : vector<16x128xf32>
    %cst_19 = arith.constant 5.000000e-01 : f32
    %68 = vector.broadcast %cst_19 : f32 to vector<16x128xf32>
    %69 = arith.mulf %68, %67 : vector<16x128xf32>
    %cst_20 = arith.constant 5.000000e-01 : f32
    %70 = vector.broadcast %cst_20 : f32 to vector<16x128xf32>
    %71 = arith.addf %69, %70 : vector<16x128xf32>
    %c368 = arith.constant 368 : index
    %c0_21 = arith.constant 0 : index
    %72 = vector.load %arg2[%c368, %c0_21] : memref<416x128xf32, #tpu.memory_space<vmem>>, vector<16x128xf32>
    %c208 = arith.constant 208 : index
    %c0_22 = arith.constant 0 : index
    %73 = vector.load %arg2[%c208, %c0_22] : memref<416x128xf32, #tpu.memory_space<vmem>>, vector<16x128xf32>
    %74 = vector.extract_strided_slice %71 {offsets = [0, 0], sizes = [1, 128], strides = [1, 1]} : vector<16x128xf32> to vector<1x128xf32>
    %75 = vector.broadcast %74 : vector<1x128xf32> to vector<16x128xf32>
    %76 = arith.mulf %73, %75 : vector<16x128xf32>
    %77 = arith.addf %72, %76 : vector<16x128xf32>
    %c224 = arith.constant 224 : index
    %c0_23 = arith.constant 0 : index
    %78 = vector.load %arg2[%c224, %c0_23] : memref<416x128xf32, #tpu.memory_space<vmem>>, vector<16x128xf32>
    %79 = vector.extract_strided_slice %71 {offsets = [1, 0], sizes = [1, 128], strides = [1, 1]} : vector<16x128xf32> to vector<1x128xf32>
    %80 = vector.broadcast %79 : vector<1x128xf32> to vector<16x128xf32>
    %81 = arith.mulf %78, %80 : vector<16x128xf32>
    %82 = arith.addf %77, %81 : vector<16x128xf32>
    %c240 = arith.constant 240 : index
    %c0_24 = arith.constant 0 : index
    %83 = vector.load %arg2[%c240, %c0_24] : memref<416x128xf32, #tpu.memory_space<vmem>>, vector<16x128xf32>
    %84 = vector.extract_strided_slice %71 {offsets = [2, 0], sizes = [1, 128], strides = [1, 1]} : vector<16x128xf32> to vector<1x128xf32>
    %85 = vector.broadcast %84 : vector<1x128xf32> to vector<16x128xf32>
    %86 = arith.mulf %83, %85 : vector<16x128xf32>
    %87 = arith.addf %82, %86 : vector<16x128xf32>
    %c256 = arith.constant 256 : index
    %c0_25 = arith.constant 0 : index
    %88 = vector.load %arg2[%c256, %c0_25] : memref<416x128xf32, #tpu.memory_space<vmem>>, vector<16x128xf32>
    %89 = vector.extract_strided_slice %71 {offsets = [3, 0], sizes = [1, 128], strides = [1, 1]} : vector<16x128xf32> to vector<1x128xf32>
    %90 = vector.broadcast %89 : vector<1x128xf32> to vector<16x128xf32>
    %91 = arith.mulf %88, %90 : vector<16x128xf32>
    %92 = arith.addf %87, %91 : vector<16x128xf32>
    %c272 = arith.constant 272 : index
    %c0_26 = arith.constant 0 : index
    %93 = vector.load %arg2[%c272, %c0_26] : memref<416x128xf32, #tpu.memory_space<vmem>>, vector<16x128xf32>
    %94 = vector.extract_strided_slice %71 {offsets = [4, 0], sizes = [1, 128], strides = [1, 1]} : vector<16x128xf32> to vector<1x128xf32>
    %95 = vector.broadcast %94 : vector<1x128xf32> to vector<16x128xf32>
    %96 = arith.mulf %93, %95 : vector<16x128xf32>
    %97 = arith.addf %92, %96 : vector<16x128xf32>
    %c288 = arith.constant 288 : index
    %c0_27 = arith.constant 0 : index
    %98 = vector.load %arg2[%c288, %c0_27] : memref<416x128xf32, #tpu.memory_space<vmem>>, vector<16x128xf32>
    %99 = vector.extract_strided_slice %71 {offsets = [5, 0], sizes = [1, 128], strides = [1, 1]} : vector<16x128xf32> to vector<1x128xf32>
    %100 = vector.broadcast %99 : vector<1x128xf32> to vector<16x128xf32>
    %101 = arith.mulf %98, %100 : vector<16x128xf32>
    %102 = arith.addf %97, %101 : vector<16x128xf32>
    %c304 = arith.constant 304 : index
    %c0_28 = arith.constant 0 : index
    %103 = vector.load %arg2[%c304, %c0_28] : memref<416x128xf32, #tpu.memory_space<vmem>>, vector<16x128xf32>
    %104 = vector.extract_strided_slice %71 {offsets = [6, 0], sizes = [1, 128], strides = [1, 1]} : vector<16x128xf32> to vector<1x128xf32>
    %105 = vector.broadcast %104 : vector<1x128xf32> to vector<16x128xf32>
    %106 = arith.mulf %103, %105 : vector<16x128xf32>
    %107 = arith.addf %102, %106 : vector<16x128xf32>
    %c320 = arith.constant 320 : index
    %c0_29 = arith.constant 0 : index
    %108 = vector.load %arg2[%c320, %c0_29] : memref<416x128xf32, #tpu.memory_space<vmem>>, vector<16x128xf32>
    %109 = vector.extract_strided_slice %71 {offsets = [7, 0], sizes = [1, 128], strides = [1, 1]} : vector<16x128xf32> to vector<1x128xf32>
    %110 = vector.broadcast %109 : vector<1x128xf32> to vector<16x128xf32>
    %111 = arith.mulf %108, %110 : vector<16x128xf32>
    %112 = arith.addf %107, %111 : vector<16x128xf32>
    %c336 = arith.constant 336 : index
    %c0_30 = arith.constant 0 : index
    %113 = vector.load %arg2[%c336, %c0_30] : memref<416x128xf32, #tpu.memory_space<vmem>>, vector<16x128xf32>
    %114 = vector.extract_strided_slice %71 {offsets = [8, 0], sizes = [1, 128], strides = [1, 1]} : vector<16x128xf32> to vector<1x128xf32>
    %115 = vector.broadcast %114 : vector<1x128xf32> to vector<16x128xf32>
    %116 = arith.mulf %113, %115 : vector<16x128xf32>
    %117 = arith.addf %112, %116 : vector<16x128xf32>
    %c352 = arith.constant 352 : index
    %c0_31 = arith.constant 0 : index
    %118 = vector.load %arg2[%c352, %c0_31] : memref<416x128xf32, #tpu.memory_space<vmem>>, vector<16x128xf32>
    %119 = vector.extract_strided_slice %71 {offsets = [9, 0], sizes = [1, 128], strides = [1, 1]} : vector<16x128xf32> to vector<1x128xf32>
    %120 = vector.broadcast %119 : vector<1x128xf32> to vector<16x128xf32>
    %121 = arith.mulf %118, %120 : vector<16x128xf32>
    %122 = arith.addf %117, %121 : vector<16x128xf32>
    %cst_32 = arith.constant 5.000000e-01 : f32
    %123 = vector.broadcast %cst_32 : f32 to vector<16x128xf32>
    %124 = arith.mulf %123, %122 : vector<16x128xf32>
    %125 = math.tanh %124 : vector<16x128xf32>
    %cst_33 = arith.constant 5.000000e-01 : f32
    %126 = vector.broadcast %cst_33 : f32 to vector<16x128xf32>
    %127 = arith.mulf %126, %125 : vector<16x128xf32>
    %cst_34 = arith.constant 5.000000e-01 : f32
    %128 = vector.broadcast %cst_34 : f32 to vector<16x128xf32>
    %129 = arith.addf %127, %128 : vector<16x128xf32>
    %c384 = arith.constant 384 : index
    %c0_35 = arith.constant 0 : index
    %130 = vector.load %arg2[%c384, %c0_35] : memref<416x128xf32, #tpu.memory_space<vmem>>, vector<16x128xf32>
    %131 = arith.mulf %130, %129 : vector<16x128xf32>
    %cst_36 = arith.constant dense<0.000000e+00> : vector<128xf32>
    %132 = vector.multi_reduction <add>, %131, %cst_36 [0] : vector<16x128xf32> to vector<128xf32>
    %133 = vector.shape_cast %132 : vector<128xf32> to vector<1x128xf32>
    %134 = arith.addf %133, %0 : vector<1x128xf32>
    %c0_37 = arith.constant 0 : index
    %c0_38 = arith.constant 0 : index
    %135 = vector.load %arg3[%c0_37, %c0_38] : memref<16x128xf32, #tpu.memory_space<vmem>>, vector<1x128xf32>
    tpu.vector_store %arg3[%c0_37, %c0_38], %134 {strides = array<i32>} : memref<16x128xf32, #tpu.memory_space<vmem>>, vector<1x128xf32>,
    %c1 = arith.constant 1 : index
    %c0_39 = arith.constant 0 : index
    %136 = vector.load %arg1[%c1, %c0_39] : memref<16x128xf32, #tpu.memory_space<vmem>>, vector<1x128xf32>
    %c0_40 = arith.constant 0 : index
    %c0_41 = arith.constant 0 : index
    %137 = vector.load %arg2[%c0_40, %c0_41] : memref<416x128xf32, #tpu.memory_space<vmem>>, vector<16x128xf32>
    %138 = vector.broadcast %136 : vector<1x128xf32> to vector<16x128xf32>
    %139 = arith.mulf %137, %138 : vector<16x128xf32>
    %c16_42 = arith.constant 16 : index
    %c0_43 = arith.constant 0 : index
    %140 = vector.load %arg2[%c16_42, %c0_43] : memref<416x128xf32, #tpu.memory_space<vmem>>, vector<16x128xf32>
    %141 = arith.addf %139, %140 : vector<16x128xf32>
    %cst_44 = arith.constant 5.000000e-01 : f32
    %142 = vector.broadcast %cst_44 : f32 to vector<16x128xf32>
    %143 = arith.mulf %142, %141 : vector<16x128xf32>
    %144 = math.tanh %143 : vector<16x128xf32>
    %cst_45 = arith.constant 5.000000e-01 : f32
    %145 = vector.broadcast %cst_45 : f32 to vector<16x128xf32>
    %146 = arith.mulf %145, %144 : vector<16x128xf32>
    %cst_46 = arith.constant 5.000000e-01 : f32
    %147 = vector.broadcast %cst_46 : f32 to vector<16x128xf32>
    %148 = arith.addf %146, %147 : vector<16x128xf32>
    %c192_47 = arith.constant 192 : index
    %c0_48 = arith.constant 0 : index
    %149 = vector.load %arg2[%c192_47, %c0_48] : memref<416x128xf32, #tpu.memory_space<vmem>>, vector<16x128xf32>
    %c32_49 = arith.constant 32 : index
    %c0_50 = arith.constant 0 : index
    %150 = vector.load %arg2[%c32_49, %c0_50] : memref<416x128xf32, #tpu.memory_space<vmem>>, vector<16x128xf32>
    %151 = vector.extract_strided_slice %148 {offsets = [0, 0], sizes = [1, 128], strides = [1, 1]} : vector<16x128xf32> to vector<1x128xf32>
    %152 = vector.broadcast %151 : vector<1x128xf32> to vector<16x128xf32>
    %153 = arith.mulf %150, %152 : vector<16x128xf32>
    %154 = arith.addf %149, %153 : vector<16x128xf32>
    %c48_51 = arith.constant 48 : index
    %c0_52 = arith.constant 0 : index
    %155 = vector.load %arg2[%c48_51, %c0_52] : memref<416x128xf32, #tpu.memory_space<vmem>>, vector<16x128xf32>
    %156 = vector.extract_strided_slice %148 {offsets = [1, 0], sizes = [1, 128], strides = [1, 1]} : vector<16x128xf32> to vector<1x128xf32>
    %157 = vector.broadcast %156 : vector<1x128xf32> to vector<16x128xf32>
    %158 = arith.mulf %155, %157 : vector<16x128xf32>
    %159 = arith.addf %154, %158 : vector<16x128xf32>
    %c64_53 = arith.constant 64 : index
    %c0_54 = arith.constant 0 : index
    %160 = vector.load %arg2[%c64_53, %c0_54] : memref<416x128xf32, #tpu.memory_space<vmem>>, vector<16x128xf32>
    %161 = vector.extract_strided_slice %148 {offsets = [2, 0], sizes = [1, 128], strides = [1, 1]} : vector<16x128xf32> to vector<1x128xf32>
    %162 = vector.broadcast %161 : vector<1x128xf32> to vector<16x128xf32>
    %163 = arith.mulf %160, %162 : vector<16x128xf32>
    %164 = arith.addf %159, %163 : vector<16x128xf32>
    %c80_55 = arith.constant 80 : index
    %c0_56 = arith.constant 0 : index
    %165 = vector.load %arg2[%c80_55, %c0_56] : memref<416x128xf32, #tpu.memory_space<vmem>>, vector<16x128xf32>
    %166 = vector.extract_strided_slice %148 {offsets = [3, 0], sizes = [1, 128], strides = [1, 1]} : vector<16x128xf32> to vector<1x128xf32>
    %167 = vector.broadcast %166 : vector<1x128xf32> to vector<16x128xf32>
    %168 = arith.mulf %165, %167 : vector<16x128xf32>
    %169 = arith.addf %164, %168 : vector<16x128xf32>
    %c96_57 = arith.constant 96 : index
    %c0_58 = arith.constant 0 : index
    %170 = vector.load %arg2[%c96_57, %c0_58] : memref<416x128xf32, #tpu.memory_space<vmem>>, vector<16x128xf32>
    %171 = vector.extract_strided_slice %148 {offsets = [4, 0], sizes = [1, 128], strides = [1, 1]} : vector<16x128xf32> to vector<1x128xf32>
    %172 = vector.broadcast %171 : vector<1x128xf32> to vector<16x128xf32>
    %173 = arith.mulf %170, %172 : vector<16x128xf32>
    %174 = arith.addf %169, %173 : vector<16x128xf32>
    %c112_59 = arith.constant 112 : index
    %c0_60 = arith.constant 0 : index
    %175 = vector.load %arg2[%c112_59, %c0_60] : memref<416x128xf32, #tpu.memory_space<vmem>>, vector<16x128xf32>
    %176 = vector.extract_strided_slice %148 {offsets = [5, 0], sizes = [1, 128], strides = [1, 1]} : vector<16x128xf32> to vector<1x128xf32>
    %177 = vector.broadcast %176 : vector<1x128xf32> to vector<16x128xf32>
    %178 = arith.mulf %175, %177 : vector<16x128xf32>
    %179 = arith.addf %174, %178 : vector<16x128xf32>
    %c128_61 = arith.constant 128 : index
    %c0_62 = arith.constant 0 : index
    %180 = vector.load %arg2[%c128_61, %c0_62] : memref<416x128xf32, #tpu.memory_space<vmem>>, vector<16x128xf32>
    %181 = vector.extract_strided_slice %148 {offsets = [6, 0], sizes = [1, 128], strides = [1, 1]} : vector<16x128xf32> to vector<1x128xf32>
    %182 = vector.broadcast %181 : vector<1x128xf32> to vector<16x128xf32>
    %183 = arith.mulf %180, %182 : vector<16x128xf32>
    %184 = arith.addf %179, %183 : vector<16x128xf32>
    %c144_63 = arith.constant 144 : index
    %c0_64 = arith.constant 0 : index
    %185 = vector.load %arg2[%c144_63, %c0_64] : memref<416x128xf32, #tpu.memory_space<vmem>>, vector<16x128xf32>
    %186 = vector.extract_strided_slice %148 {offsets = [7, 0], sizes = [1, 128], strides = [1, 1]} : vector<16x128xf32> to vector<1x128xf32>
    %187 = vector.broadcast %186 : vector<1x128xf32> to vector<16x128xf32>
    %188 = arith.mulf %185, %187 : vector<16x128xf32>
    %189 = arith.addf %184, %188 : vector<16x128xf32>
    %c160_65 = arith.constant 160 : index
    %c0_66 = arith.constant 0 : index
    %190 = vector.load %arg2[%c160_65, %c0_66] : memref<416x128xf32, #tpu.memory_space<vmem>>, vector<16x128xf32>
    %191 = vector.extract_strided_slice %148 {offsets = [8, 0], sizes = [1, 128], strides = [1, 1]} : vector<16x128xf32> to vector<1x128xf32>
    %192 = vector.broadcast %191 : vector<1x128xf32> to vector<16x128xf32>
    %193 = arith.mulf %190, %192 : vector<16x128xf32>
    %194 = arith.addf %189, %193 : vector<16x128xf32>
    %c176_67 = arith.constant 176 : index
    %c0_68 = arith.constant 0 : index
    %195 = vector.load %arg2[%c176_67, %c0_68] : memref<416x128xf32, #tpu.memory_space<vmem>>, vector<16x128xf32>
    %196 = vector.extract_strided_slice %148 {offsets = [9, 0], sizes = [1, 128], strides = [1, 1]} : vector<16x128xf32> to vector<1x128xf32>
    %197 = vector.broadcast %196 : vector<1x128xf32> to vector<16x128xf32>
    %198 = arith.mulf %195, %197 : vector<16x128xf32>
    %199 = arith.addf %194, %198 : vector<16x128xf32>
    %cst_69 = arith.constant 5.000000e-01 : f32
    %200 = vector.broadcast %cst_69 : f32 to vector<16x128xf32>
    %201 = arith.mulf %200, %199 : vector<16x128xf32>
    %202 = math.tanh %201 : vector<16x128xf32>
    %cst_70 = arith.constant 5.000000e-01 : f32
    %203 = vector.broadcast %cst_70 : f32 to vector<16x128xf32>
    %204 = arith.mulf %203, %202 : vector<16x128xf32>
    %cst_71 = arith.constant 5.000000e-01 : f32
    %205 = vector.broadcast %cst_71 : f32 to vector<16x128xf32>
    %206 = arith.addf %204, %205 : vector<16x128xf32>
    %c368_72 = arith.constant 368 : index
    %c0_73 = arith.constant 0 : index
    %207 = vector.load %arg2[%c368_72, %c0_73] : memref<416x128xf32, #tpu.memory_space<vmem>>, vector<16x128xf32>
    %c208_74 = arith.constant 208 : index
    %c0_75 = arith.constant 0 : index
    %208 = vector.load %arg2[%c208_74, %c0_75] : memref<416x128xf32, #tpu.memory_space<vmem>>, vector<16x128xf32>
    %209 = vector.extract_strided_slice %206 {offsets = [0, 0], sizes = [1, 128], strides = [1, 1]} : vector<16x128xf32> to vector<1x128xf32>
    %210 = vector.broadcast %209 : vector<1x128xf32> to vector<16x128xf32>
    %211 = arith.mulf %208, %210 : vector<16x128xf32>
    %212 = arith.addf %207, %211 : vector<16x128xf32>
    %c224_76 = arith.constant 224 : index
    %c0_77 = arith.constant 0 : index
    %213 = vector.load %arg2[%c224_76, %c0_77] : memref<416x128xf32, #tpu.memory_space<vmem>>, vector<16x128xf32>
    %214 = vector.extract_strided_slice %206 {offsets = [1, 0], sizes = [1, 128], strides = [1, 1]} : vector<16x128xf32> to vector<1x128xf32>
    %215 = vector.broadcast %214 : vector<1x128xf32> to vector<16x128xf32>
    %216 = arith.mulf %213, %215 : vector<16x128xf32>
    %217 = arith.addf %212, %216 : vector<16x128xf32>
    %c240_78 = arith.constant 240 : index
    %c0_79 = arith.constant 0 : index
    %218 = vector.load %arg2[%c240_78, %c0_79] : memref<416x128xf32, #tpu.memory_space<vmem>>, vector<16x128xf32>
    %219 = vector.extract_strided_slice %206 {offsets = [2, 0], sizes = [1, 128], strides = [1, 1]} : vector<16x128xf32> to vector<1x128xf32>
    %220 = vector.broadcast %219 : vector<1x128xf32> to vector<16x128xf32>
    %221 = arith.mulf %218, %220 : vector<16x128xf32>
    %222 = arith.addf %217, %221 : vector<16x128xf32>
    %c256_80 = arith.constant 256 : index
    %c0_81 = arith.constant 0 : index
    %223 = vector.load %arg2[%c256_80, %c0_81] : memref<416x128xf32, #tpu.memory_space<vmem>>, vector<16x128xf32>
    %224 = vector.extract_strided_slice %206 {offsets = [3, 0], sizes = [1, 128], strides = [1, 1]} : vector<16x128xf32> to vector<1x128xf32>
    %225 = vector.broadcast %224 : vector<1x128xf32> to vector<16x128xf32>
    %226 = arith.mulf %223, %225 : vector<16x128xf32>
    %227 = arith.addf %222, %226 : vector<16x128xf32>
    %c272_82 = arith.constant 272 : index
    %c0_83 = arith.constant 0 : index
    %228 = vector.load %arg2[%c272_82, %c0_83] : memref<416x128xf32, #tpu.memory_space<vmem>>, vector<16x128xf32>
    %229 = vector.extract_strided_slice %206 {offsets = [4, 0], sizes = [1, 128], strides = [1, 1]} : vector<16x128xf32> to vector<1x128xf32>
    %230 = vector.broadcast %229 : vector<1x128xf32> to vector<16x128xf32>
    %231 = arith.mulf %228, %230 : vector<16x128xf32>
    %232 = arith.addf %227, %231 : vector<16x128xf32>
    %c288_84 = arith.constant 288 : index
    %c0_85 = arith.constant 0 : index
    %233 = vector.load %arg2[%c288_84, %c0_85] : memref<416x128xf32, #tpu.memory_space<vmem>>, vector<16x128xf32>
    %234 = vector.extract_strided_slice %206 {offsets = [5, 0], sizes = [1, 128], strides = [1, 1]} : vector<16x128xf32> to vector<1x128xf32>
    %235 = vector.broadcast %234 : vector<1x128xf32> to vector<16x128xf32>
    %236 = arith.mulf %233, %235 : vector<16x128xf32>
    %237 = arith.addf %232, %236 : vector<16x128xf32>
    %c304_86 = arith.constant 304 : index
    %c0_87 = arith.constant 0 : index
    %238 = vector.load %arg2[%c304_86, %c0_87] : memref<416x128xf32, #tpu.memory_space<vmem>>, vector<16x128xf32>
    %239 = vector.extract_strided_slice %206 {offsets = [6, 0], sizes = [1, 128], strides = [1, 1]} : vector<16x128xf32> to vector<1x128xf32>
    %240 = vector.broadcast %239 : vector<1x128xf32> to vector<16x128xf32>
    %241 = arith.mulf %238, %240 : vector<16x128xf32>
    %242 = arith.addf %237, %241 : vector<16x128xf32>
    %c320_88 = arith.constant 320 : index
    %c0_89 = arith.constant 0 : index
    %243 = vector.load %arg2[%c320_88, %c0_89] : memref<416x128xf32, #tpu.memory_space<vmem>>, vector<16x128xf32>
    %244 = vector.extract_strided_slice %206 {offsets = [7, 0], sizes = [1, 128], strides = [1, 1]} : vector<16x128xf32> to vector<1x128xf32>
    %245 = vector.broadcast %244 : vector<1x128xf32> to vector<16x128xf32>
    %246 = arith.mulf %243, %245 : vector<16x128xf32>
    %247 = arith.addf %242, %246 : vector<16x128xf32>
    %c336_90 = arith.constant 336 : index
    %c0_91 = arith.constant 0 : index
    %248 = vector.load %arg2[%c336_90, %c0_91] : memref<416x128xf32, #tpu.memory_space<vmem>>, vector<16x128xf32>
    %249 = vector.extract_strided_slice %206 {offsets = [8, 0], sizes = [1, 128], strides = [1, 1]} : vector<16x128xf32> to vector<1x128xf32>
    %250 = vector.broadcast %249 : vector<1x128xf32> to vector<16x128xf32>
    %251 = arith.mulf %248, %250 : vector<16x128xf32>
    %252 = arith.addf %247, %251 : vector<16x128xf32>
    %c352_92 = arith.constant 352 : index
    %c0_93 = arith.constant 0 : index
    %253 = vector.load %arg2[%c352_92, %c0_93] : memref<416x128xf32, #tpu.memory_space<vmem>>, vector<16x128xf32>
    %254 = vector.extract_strided_slice %206 {offsets = [9, 0], sizes = [1, 128], strides = [1, 1]} : vector<16x128xf32> to vector<1x128xf32>
    %255 = vector.broadcast %254 : vector<1x128xf32> to vector<16x128xf32>
    %256 = arith.mulf %253, %255 : vector<16x128xf32>
    %257 = arith.addf %252, %256 : vector<16x128xf32>
    %cst_94 = arith.constant 5.000000e-01 : f32
    %258 = vector.broadcast %cst_94 : f32 to vector<16x128xf32>
    %259 = arith.mulf %258, %257 : vector<16x128xf32>
    %260 = math.tanh %259 : vector<16x128xf32>
    %cst_95 = arith.constant 5.000000e-01 : f32
    %261 = vector.broadcast %cst_95 : f32 to vector<16x128xf32>
    %262 = arith.mulf %261, %260 : vector<16x128xf32>
    %cst_96 = arith.constant 5.000000e-01 : f32
    %263 = vector.broadcast %cst_96 : f32 to vector<16x128xf32>
    %264 = arith.addf %262, %263 : vector<16x128xf32>
    %c384_97 = arith.constant 384 : index
    %c0_98 = arith.constant 0 : index
    %265 = vector.load %arg2[%c384_97, %c0_98] : memref<416x128xf32, #tpu.memory_space<vmem>>, vector<16x128xf32>
    %266 = arith.mulf %265, %264 : vector<16x128xf32>
    %cst_99 = arith.constant dense<0.000000e+00> : vector<128xf32>
    %267 = vector.multi_reduction <add>, %266, %cst_99 [0] : vector<16x128xf32> to vector<128xf32>
    %268 = vector.shape_cast %267 : vector<128xf32> to vector<1x128xf32>
    %269 = arith.addf %268, %0 : vector<1x128xf32>
    %c1_100 = arith.constant 1 : index
    %c0_101 = arith.constant 0 : index
    %270 = vector.load %arg3[%c1_100, %c0_101] : memref<16x128xf32, #tpu.memory_space<vmem>>, vector<1x128xf32>
    tpu.vector_store %arg3[%c1_100, %c0_101], %269 {strides = array<i32>} : memref<16x128xf32, #tpu.memory_space<vmem>>, vector<1x128xf32>,
    %c2 = arith.constant 2 : index
    %c0_102 = arith.constant 0 : index
    %271 = vector.load %arg1[%c2, %c0_102] : memref<16x128xf32, #tpu.memory_space<vmem>>, vector<1x128xf32>
    %c0_103 = arith.constant 0 : index
    %c0_104 = arith.constant 0 : index
    %272 = vector.load %arg2[%c0_103, %c0_104] : memref<416x128xf32, #tpu.memory_space<vmem>>, vector<16x128xf32>
    %273 = vector.broadcast %271 : vector<1x128xf32> to vector<16x128xf32>
    %274 = arith.mulf %272, %273 : vector<16x128xf32>
    %c16_105 = arith.constant 16 : index
    %c0_106 = arith.constant 0 : index
    %275 = vector.load %arg2[%c16_105, %c0_106] : memref<416x128xf32, #tpu.memory_space<vmem>>, vector<16x128xf32>
    %276 = arith.addf %274, %275 : vector<16x128xf32>
    %cst_107 = arith.constant 5.000000e-01 : f32
    %277 = vector.broadcast %cst_107 : f32 to vector<16x128xf32>
    %278 = arith.mulf %277, %276 : vector<16x128xf32>
    %279 = math.tanh %278 : vector<16x128xf32>
    %cst_108 = arith.constant 5.000000e-01 : f32
    %280 = vector.broadcast %cst_108 : f32 to vector<16x128xf32>
    %281 = arith.mulf %280, %279 : vector<16x128xf32>
    %cst_109 = arith.constant 5.000000e-01 : f32
    %282 = vector.broadcast %cst_109 : f32 to vector<16x128xf32>
    %283 = arith.addf %281, %282 : vector<16x128xf32>
    %c192_110 = arith.constant 192 : index
    %c0_111 = arith.constant 0 : index
    %284 = vector.load %arg2[%c192_110, %c0_111] : memref<416x128xf32, #tpu.memory_space<vmem>>, vector<16x128xf32>
    %c32_112 = arith.constant 32 : index
    %c0_113 = arith.constant 0 : index
    %285 = vector.load %arg2[%c32_112, %c0_113] : memref<416x128xf32, #tpu.memory_space<vmem>>, vector<16x128xf32>
    %286 = vector.extract_strided_slice %283 {offsets = [0, 0], sizes = [1, 128], strides = [1, 1]} : vector<16x128xf32> to vector<1x128xf32>
    %287 = vector.broadcast %286 : vector<1x128xf32> to vector<16x128xf32>
    %288 = arith.mulf %285, %287 : vector<16x128xf32>
    %289 = arith.addf %284, %288 : vector<16x128xf32>
    %c48_114 = arith.constant 48 : index
    %c0_115 = arith.constant 0 : index
    %290 = vector.load %arg2[%c48_114, %c0_115] : memref<416x128xf32, #tpu.memory_space<vmem>>, vector<16x128xf32>
    %291 = vector.extract_strided_slice %283 {offsets = [1, 0], sizes = [1, 128], strides = [1, 1]} : vector<16x128xf32> to vector<1x128xf32>
    %292 = vector.broadcast %291 : vector<1x128xf32> to vector<16x128xf32>
    %293 = arith.mulf %290, %292 : vector<16x128xf32>
    %294 = arith.addf %289, %293 : vector<16x128xf32>
    %c64_116 = arith.constant 64 : index
    %c0_117 = arith.constant 0 : index
    %295 = vector.load %arg2[%c64_116, %c0_117] : memref<416x128xf32, #tpu.memory_space<vmem>>, vector<16x128xf32>
    %296 = vector.extract_strided_slice %283 {offsets = [2, 0], sizes = [1, 128], strides = [1, 1]} : vector<16x128xf32> to vector<1x128xf32>
    %297 = vector.broadcast %296 : vector<1x128xf32> to vector<16x128xf32>
    %298 = arith.mulf %295, %297 : vector<16x128xf32>
    %299 = arith.addf %294, %298 : vector<16x128xf32>
    %c80_118 = arith.constant 80 : index
    %c0_119 = arith.constant 0 : index
    %300 = vector.load %arg2[%c80_118, %c0_119] : memref<416x128xf32, #tpu.memory_space<vmem>>, vector<16x128xf32>
    %301 = vector.extract_strided_slice %283 {offsets = [3, 0], sizes = [1, 128], strides = [1, 1]} : vector<16x128xf32> to vector<1x128xf32>
    %302 = vector.broadcast %301 : vector<1x128xf32> to vector<16x128xf32>
    %303 = arith.mulf %300, %302 : vector<16x128xf32>
    %304 = arith.addf %299, %303 : vector<16x128xf32>
    %c96_120 = arith.constant 96 : index
    %c0_121 = arith.constant 0 : index
    %305 = vector.load %arg2[%c96_120, %c0_121] : memref<416x128xf32, #tpu.memory_space<vmem>>, vector<16x128xf32>
    %306 = vector.extract_strided_slice %283 {offsets = [4, 0], sizes = [1, 128], strides = [1, 1]} : vector<16x128xf32> to vector<1x128xf32>
    %307 = vector.broadcast %306 : vector<1x128xf32> to vector<16x128xf32>
    %308 = arith.mulf %305, %307 : vector<16x128xf32>
    %309 = arith.addf %304, %308 : vector<16x128xf32>
    %c112_122 = arith.constant 112 : index
    %c0_123 = arith.constant 0 : index
    %310 = vector.load %arg2[%c112_122, %c0_123] : memref<416x128xf32, #tpu.memory_space<vmem>>, vector<16x128xf32>
    %311 = vector.extract_strided_slice %283 {offsets = [5, 0], sizes = [1, 128], strides = [1, 1]} : vector<16x128xf32> to vector<1x128xf32>
    %312 = vector.broadcast %311 : vector<1x128xf32> to vector<16x128xf32>
    %313 = arith.mulf %310, %312 : vector<16x128xf32>
    %314 = arith.addf %309, %313 : vector<16x128xf32>
    %c128_124 = arith.constant 128 : index
    %c0_125 = arith.constant 0 : index
    %315 = vector.load %arg2[%c128_124, %c0_125] : memref<416x128xf32, #tpu.memory_space<vmem>>, vector<16x128xf32>
    %316 = vector.extract_strided_slice %283 {offsets = [6, 0], sizes = [1, 128], strides = [1, 1]} : vector<16x128xf32> to vector<1x128xf32>
    %317 = vector.broadcast %316 : vector<1x128xf32> to vector<16x128xf32>
    %318 = arith.mulf %315, %317 : vector<16x128xf32>
    %319 = arith.addf %314, %318 : vector<16x128xf32>
    %c144_126 = arith.constant 144 : index
    %c0_127 = arith.constant 0 : index
    %320 = vector.load %arg2[%c144_126, %c0_127] : memref<416x128xf32, #tpu.memory_space<vmem>>, vector<16x128xf32>
    %321 = vector.extract_strided_slice %283 {offsets = [7, 0], sizes = [1, 128], strides = [1, 1]} : vector<16x128xf32> to vector<1x128xf32>
    %322 = vector.broadcast %321 : vector<1x128xf32> to vector<16x128xf32>
    %323 = arith.mulf %320, %322 : vector<16x128xf32>
    %324 = arith.addf %319, %323 : vector<16x128xf32>
    %c160_128 = arith.constant 160 : index
    %c0_129 = arith.constant 0 : index
    %325 = vector.load %arg2[%c160_128, %c0_129] : memref<416x128xf32, #tpu.memory_space<vmem>>, vector<16x128xf32>
    %326 = vector.extract_strided_slice %283 {offsets = [8, 0], sizes = [1, 128], strides = [1, 1]} : vector<16x128xf32> to vector<1x128xf32>
    %327 = vector.broadcast %326 : vector<1x128xf32> to vector<16x128xf32>
    %328 = arith.mulf %325, %327 : vector<16x128xf32>
    %329 = arith.addf %324, %328 : vector<16x128xf32>
    %c176_130 = arith.constant 176 : index
    %c0_131 = arith.constant 0 : index
    %330 = vector.load %arg2[%c176_130, %c0_131] : memref<416x128xf32, #tpu.memory_space<vmem>>, vector<16x128xf32>
    %331 = vector.extract_strided_slice %283 {offsets = [9, 0], sizes = [1, 128], strides = [1, 1]} : vector<16x128xf32> to vector<1x128xf32>
    %332 = vector.broadcast %331 : vector<1x128xf32> to vector<16x128xf32>
    %333 = arith.mulf %330, %332 : vector<16x128xf32>
    %334 = arith.addf %329, %333 : vector<16x128xf32>
    %cst_132 = arith.constant 5.000000e-01 : f32
    %335 = vector.broadcast %cst_132 : f32 to vector<16x128xf32>
    %336 = arith.mulf %335, %334 : vector<16x128xf32>
    %337 = math.tanh %336 : vector<16x128xf32>
    %cst_133 = arith.constant 5.000000e-01 : f32
    %338 = vector.broadcast %cst_133 : f32 to vector<16x128xf32>
    %339 = arith.mulf %338, %337 : vector<16x128xf32>
    %cst_134 = arith.constant 5.000000e-01 : f32
    %340 = vector.broadcast %cst_134 : f32 to vector<16x128xf32>
    %341 = arith.addf %339, %340 : vector<16x128xf32>
    %c368_135 = arith.constant 368 : index
    %c0_136 = arith.constant 0 : index
    %342 = vector.load %arg2[%c368_135, %c0_136] : memref<416x128xf32, #tpu.memory_space<vmem>>, vector<16x128xf32>
    %c208_137 = arith.constant 208 : index
    %c0_138 = arith.constant 0 : index
    %343 = vector.load %arg2[%c208_137, %c0_138] : memref<416x128xf32, #tpu.memory_space<vmem>>, vector<16x128xf32>
    %344 = vector.extract_strided_slice %341 {offsets = [0, 0], sizes = [1, 128], strides = [1, 1]} : vector<16x128xf32> to vector<1x128xf32>
    %345 = vector.broadcast %344 : vector<1x128xf32> to vector<16x128xf32>
    %346 = arith.mulf %343, %345 : vector<16x128xf32>
    %347 = arith.addf %342, %346 : vector<16x128xf32>
    %c224_139 = arith.constant 224 : index
    %c0_140 = arith.constant 0 : index
    %348 = vector.load %arg2[%c224_139, %c0_140] : memref<416x128xf32, #tpu.memory_space<vmem>>, vector<16x128xf32>
    %349 = vector.extract_strided_slice %341 {offsets = [1, 0], sizes = [1, 128], strides = [1, 1]} : vector<16x128xf32> to vector<1x128xf32>
    %350 = vector.broadcast %349 : vector<1x128xf32> to vector<16x128xf32>
    %351 = arith.mulf %348, %350 : vector<16x128xf32>
    %352 = arith.addf %347, %351 : vector<16x128xf32>
    %c240_141 = arith.constant 240 : index
    %c0_142 = arith.constant 0 : index
    %353 = vector.load %arg2[%c240_141, %c0_142] : memref<416x128xf32, #tpu.memory_space<vmem>>, vector<16x128xf32>
    %354 = vector.extract_strided_slice %341 {offsets = [2, 0], sizes = [1, 128], strides = [1, 1]} : vector<16x128xf32> to vector<1x128xf32>
    %355 = vector.broadcast %354 : vector<1x128xf32> to vector<16x128xf32>
    %356 = arith.mulf %353, %355 : vector<16x128xf32>
    %357 = arith.addf %352, %356 : vector<16x128xf32>
    %c256_143 = arith.constant 256 : index
    %c0_144 = arith.constant 0 : index
    %358 = vector.load %arg2[%c256_143, %c0_144] : memref<416x128xf32, #tpu.memory_space<vmem>>, vector<16x128xf32>
    %359 = vector.extract_strided_slice %341 {offsets = [3, 0], sizes = [1, 128], strides = [1, 1]} : vector<16x128xf32> to vector<1x128xf32>
    %360 = vector.broadcast %359 : vector<1x128xf32> to vector<16x128xf32>
    %361 = arith.mulf %358, %360 : vector<16x128xf32>
    %362 = arith.addf %357, %361 : vector<16x128xf32>
    %c272_145 = arith.constant 272 : index
    %c0_146 = arith.constant 0 : index
    %363 = vector.load %arg2[%c272_145, %c0_146] : memref<416x128xf32, #tpu.memory_space<vmem>>, vector<16x128xf32>
    %364 = vector.extract_strided_slice %341 {offsets = [4, 0], sizes = [1, 128], strides = [1, 1]} : vector<16x128xf32> to vector<1x128xf32>
    %365 = vector.broadcast %364 : vector<1x128xf32> to vector<16x128xf32>
    %366 = arith.mulf %363, %365 : vector<16x128xf32>
    %367 = arith.addf %362, %366 : vector<16x128xf32>
    %c288_147 = arith.constant 288 : index
    %c0_148 = arith.constant 0 : index
    %368 = vector.load %arg2[%c288_147, %c0_148] : memref<416x128xf32, #tpu.memory_space<vmem>>, vector<16x128xf32>
    %369 = vector.extract_strided_slice %341 {offsets = [5, 0], sizes = [1, 128], strides = [1, 1]} : vector<16x128xf32> to vector<1x128xf32>
    %370 = vector.broadcast %369 : vector<1x128xf32> to vector<16x128xf32>
    %371 = arith.mulf %368, %370 : vector<16x128xf32>
    %372 = arith.addf %367, %371 : vector<16x128xf32>
    %c304_149 = arith.constant 304 : index
    %c0_150 = arith.constant 0 : index
    %373 = vector.load %arg2[%c304_149, %c0_150] : memref<416x128xf32, #tpu.memory_space<vmem>>, vector<16x128xf32>
    %374 = vector.extract_strided_slice %341 {offsets = [6, 0], sizes = [1, 128], strides = [1, 1]} : vector<16x128xf32> to vector<1x128xf32>
    %375 = vector.broadcast %374 : vector<1x128xf32> to vector<16x128xf32>
    %376 = arith.mulf %373, %375 : vector<16x128xf32>
    %377 = arith.addf %372, %376 : vector<16x128xf32>
    %c320_151 = arith.constant 320 : index
    %c0_152 = arith.constant 0 : index
    %378 = vector.load %arg2[%c320_151, %c0_152] : memref<416x128xf32, #tpu.memory_space<vmem>>, vector<16x128xf32>
    %379 = vector.extract_strided_slice %341 {offsets = [7, 0], sizes = [1, 128], strides = [1, 1]} : vector<16x128xf32> to vector<1x128xf32>
    %380 = vector.broadcast %379 : vector<1x128xf32> to vector<16x128xf32>
    %381 = arith.mulf %378, %380 : vector<16x128xf32>
    %382 = arith.addf %377, %381 : vector<16x128xf32>
    %c336_153 = arith.constant 336 : index
    %c0_154 = arith.constant 0 : index
    %383 = vector.load %arg2[%c336_153, %c0_154] : memref<416x128xf32, #tpu.memory_space<vmem>>, vector<16x128xf32>
    %384 = vector.extract_strided_slice %341 {offsets = [8, 0], sizes = [1, 128], strides = [1, 1]} : vector<16x128xf32> to vector<1x128xf32>
    %385 = vector.broadcast %384 : vector<1x128xf32> to vector<16x128xf32>
    %386 = arith.mulf %383, %385 : vector<16x128xf32>
    %387 = arith.addf %382, %386 : vector<16x128xf32>
    %c352_155 = arith.constant 352 : index
    %c0_156 = arith.constant 0 : index
    %388 = vector.load %arg2[%c352_155, %c0_156] : memref<416x128xf32, #tpu.memory_space<vmem>>, vector<16x128xf32>
    %389 = vector.extract_strided_slice %341 {offsets = [9, 0], sizes = [1, 128], strides = [1, 1]} : vector<16x128xf32> to vector<1x128xf32>
    %390 = vector.broadcast %389 : vector<1x128xf32> to vector<16x128xf32>
    %391 = arith.mulf %388, %390 : vector<16x128xf32>
    %392 = arith.addf %387, %391 : vector<16x128xf32>
    %cst_157 = arith.constant 5.000000e-01 : f32
    %393 = vector.broadcast %cst_157 : f32 to vector<16x128xf32>
    %394 = arith.mulf %393, %392 : vector<16x128xf32>
    %395 = math.tanh %394 : vector<16x128xf32>
    %cst_158 = arith.constant 5.000000e-01 : f32
    %396 = vector.broadcast %cst_158 : f32 to vector<16x128xf32>
    %397 = arith.mulf %396, %395 : vector<16x128xf32>
    %cst_159 = arith.constant 5.000000e-01 : f32
    %398 = vector.broadcast %cst_159 : f32 to vector<16x128xf32>
    %399 = arith.addf %397, %398 : vector<16x128xf32>
    %c384_160 = arith.constant 384 : index
    %c0_161 = arith.constant 0 : index
    %400 = vector.load %arg2[%c384_160, %c0_161] : memref<416x128xf32, #tpu.memory_space<vmem>>, vector<16x128xf32>
    %401 = arith.mulf %400, %399 : vector<16x128xf32>
    %cst_162 = arith.constant dense<0.000000e+00> : vector<128xf32>
    %402 = vector.multi_reduction <add>, %401, %cst_162 [0] : vector<16x128xf32> to vector<128xf32>
    %403 = vector.shape_cast %402 : vector<128xf32> to vector<1x128xf32>
    %404 = arith.addf %403, %0 : vector<1x128xf32>
    %c2_163 = arith.constant 2 : index
    %c0_164 = arith.constant 0 : index
    %405 = vector.load %arg3[%c2_163, %c0_164] : memref<16x128xf32, #tpu.memory_space<vmem>>, vector<1x128xf32>
    tpu.vector_store %arg3[%c2_163, %c0_164], %404 {strides = array<i32>} : memref<16x128xf32, #tpu.memory_space<vmem>>, vector<1x128xf32>,
    %c3 = arith.constant 3 : index
    %c0_165 = arith.constant 0 : index
    %406 = vector.load %arg1[%c3, %c0_165] : memref<16x128xf32, #tpu.memory_space<vmem>>, vector<1x128xf32>
    %c0_166 = arith.constant 0 : index
    %c0_167 = arith.constant 0 : index
    %407 = vector.load %arg2[%c0_166, %c0_167] : memref<416x128xf32, #tpu.memory_space<vmem>>, vector<16x128xf32>
    %408 = vector.broadcast %406 : vector<1x128xf32> to vector<16x128xf32>
    %409 = arith.mulf %407, %408 : vector<16x128xf32>
    %c16_168 = arith.constant 16 : index
    %c0_169 = arith.constant 0 : index
    %410 = vector.load %arg2[%c16_168, %c0_169] : memref<416x128xf32, #tpu.memory_space<vmem>>, vector<16x128xf32>
    %411 = arith.addf %409, %410 : vector<16x128xf32>
    %cst_170 = arith.constant 5.000000e-01 : f32
    %412 = vector.broadcast %cst_170 : f32 to vector<16x128xf32>
    %413 = arith.mulf %412, %411 : vector<16x128xf32>
    %414 = math.tanh %413 : vector<16x128xf32>
    %cst_171 = arith.constant 5.000000e-01 : f32
    %415 = vector.broadcast %cst_171 : f32 to vector<16x128xf32>
    %416 = arith.mulf %415, %414 : vector<16x128xf32>
    %cst_172 = arith.constant 5.000000e-01 : f32
    %417 = vector.broadcast %cst_172 : f32 to vector<16x128xf32>
    %418 = arith.addf %416, %417 : vector<16x128xf32>
    %c192_173 = arith.constant 192 : index
    %c0_174 = arith.constant 0 : index
    %419 = vector.load %arg2[%c192_173, %c0_174] : memref<416x128xf32, #tpu.memory_space<vmem>>, vector<16x128xf32>
    %c32_175 = arith.constant 32 : index
    %c0_176 = arith.constant 0 : index
    %420 = vector.load %arg2[%c32_175, %c0_176] : memref<416x128xf32, #tpu.memory_space<vmem>>, vector<16x128xf32>
    %421 = vector.extract_strided_slice %418 {offsets = [0, 0], sizes = [1, 128], strides = [1, 1]} : vector<16x128xf32> to vector<1x128xf32>
    %422 = vector.broadcast %421 : vector<1x128xf32> to vector<16x128xf32>
    %423 = arith.mulf %420, %422 : vector<16x128xf32>
    %424 = arith.addf %419, %423 : vector<16x128xf32>
    %c48_177 = arith.constant 48 : index
    %c0_178 = arith.constant 0 : index
    %425 = vector.load %arg2[%c48_177, %c0_178] : memref<416x128xf32, #tpu.memory_space<vmem>>, vector<16x128xf32>
    %426 = vector.extract_strided_slice %418 {offsets = [1, 0], sizes = [1, 128], strides = [1, 1]} : vector<16x128xf32> to vector<1x128xf32>
    %427 = vector.broadcast %426 : vector<1x128xf32> to vector<16x128xf32>
    %428 = arith.mulf %425, %427 : vector<16x128xf32>
    %429 = arith.addf %424, %428 : vector<16x128xf32>
    %c64_179 = arith.constant 64 : index
    %c0_180 = arith.constant 0 : index
    %430 = vector.load %arg2[%c64_179, %c0_180] : memref<416x128xf32, #tpu.memory_space<vmem>>, vector<16x128xf32>
    %431 = vector.extract_strided_slice %418 {offsets = [2, 0], sizes = [1, 128], strides = [1, 1]} : vector<16x128xf32> to vector<1x128xf32>
    %432 = vector.broadcast %431 : vector<1x128xf32> to vector<16x128xf32>
    %433 = arith.mulf %430, %432 : vector<16x128xf32>
    %434 = arith.addf %429, %433 : vector<16x128xf32>
    %c80_181 = arith.constant 80 : index
    %c0_182 = arith.constant 0 : index
    %435 = vector.load %arg2[%c80_181, %c0_182] : memref<416x128xf32, #tpu.memory_space<vmem>>, vector<16x128xf32>
    %436 = vector.extract_strided_slice %418 {offsets = [3, 0], sizes = [1, 128], strides = [1, 1]} : vector<16x128xf32> to vector<1x128xf32>
    %437 = vector.broadcast %436 : vector<1x128xf32> to vector<16x128xf32>
    %438 = arith.mulf %435, %437 : vector<16x128xf32>
    %439 = arith.addf %434, %438 : vector<16x128xf32>
    %c96_183 = arith.constant 96 : index
    %c0_184 = arith.constant 0 : index
    %440 = vector.load %arg2[%c96_183, %c0_184] : memref<416x128xf32, #tpu.memory_space<vmem>>, vector<16x128xf32>
    %441 = vector.extract_strided_slice %418 {offsets = [4, 0], sizes = [1, 128], strides = [1, 1]} : vector<16x128xf32> to vector<1x128xf32>
    %442 = vector.broadcast %441 : vector<1x128xf32> to vector<16x128xf32>
    %443 = arith.mulf %440, %442 : vector<16x128xf32>
    %444 = arith.addf %439, %443 : vector<16x128xf32>
    %c112_185 = arith.constant 112 : index
    %c0_186 = arith.constant 0 : index
    %445 = vector.load %arg2[%c112_185, %c0_186] : memref<416x128xf32, #tpu.memory_space<vmem>>, vector<16x128xf32>
    %446 = vector.extract_strided_slice %418 {offsets = [5, 0], sizes = [1, 128], strides = [1, 1]} : vector<16x128xf32> to vector<1x128xf32>
    %447 = vector.broadcast %446 : vector<1x128xf32> to vector<16x128xf32>
    %448 = arith.mulf %445, %447 : vector<16x128xf32>
    %449 = arith.addf %444, %448 : vector<16x128xf32>
    %c128_187 = arith.constant 128 : index
    %c0_188 = arith.constant 0 : index
    %450 = vector.load %arg2[%c128_187, %c0_188] : memref<416x128xf32, #tpu.memory_space<vmem>>, vector<16x128xf32>
    %451 = vector.extract_strided_slice %418 {offsets = [6, 0], sizes = [1, 128], strides = [1, 1]} : vector<16x128xf32> to vector<1x128xf32>
    %452 = vector.broadcast %451 : vector<1x128xf32> to vector<16x128xf32>
    %453 = arith.mulf %450, %452 : vector<16x128xf32>
    %454 = arith.addf %449, %453 : vector<16x128xf32>
    %c144_189 = arith.constant 144 : index
    %c0_190 = arith.constant 0 : index
    %455 = vector.load %arg2[%c144_189, %c0_190] : memref<416x128xf32, #tpu.memory_space<vmem>>, vector<16x128xf32>
    %456 = vector.extract_strided_slice %418 {offsets = [7, 0], sizes = [1, 128], strides = [1, 1]} : vector<16x128xf32> to vector<1x128xf32>
    %457 = vector.broadcast %456 : vector<1x128xf32> to vector<16x128xf32>
    %458 = arith.mulf %455, %457 : vector<16x128xf32>
    %459 = arith.addf %454, %458 : vector<16x128xf32>
    %c160_191 = arith.constant 160 : index
    %c0_192 = arith.constant 0 : index
    %460 = vector.load %arg2[%c160_191, %c0_192] : memref<416x128xf32, #tpu.memory_space<vmem>>, vector<16x128xf32>
    %461 = vector.extract_strided_slice %418 {offsets = [8, 0], sizes = [1, 128], strides = [1, 1]} : vector<16x128xf32> to vector<1x128xf32>
    %462 = vector.broadcast %461 : vector<1x128xf32> to vector<16x128xf32>
    %463 = arith.mulf %460, %462 : vector<16x128xf32>
    %464 = arith.addf %459, %463 : vector<16x128xf32>
    %c176_193 = arith.constant 176 : index
    %c0_194 = arith.constant 0 : index
    %465 = vector.load %arg2[%c176_193, %c0_194] : memref<416x128xf32, #tpu.memory_space<vmem>>, vector<16x128xf32>
    %466 = vector.extract_strided_slice %418 {offsets = [9, 0], sizes = [1, 128], strides = [1, 1]} : vector<16x128xf32> to vector<1x128xf32>
    %467 = vector.broadcast %466 : vector<1x128xf32> to vector<16x128xf32>
    %468 = arith.mulf %465, %467 : vector<16x128xf32>
    %469 = arith.addf %464, %468 : vector<16x128xf32>
    %cst_195 = arith.constant 5.000000e-01 : f32
    %470 = vector.broadcast %cst_195 : f32 to vector<16x128xf32>
    %471 = arith.mulf %470, %469 : vector<16x128xf32>
    %472 = math.tanh %471 : vector<16x128xf32>
    %cst_196 = arith.constant 5.000000e-01 : f32
    %473 = vector.broadcast %cst_196 : f32 to vector<16x128xf32>
    %474 = arith.mulf %473, %472 : vector<16x128xf32>
    %cst_197 = arith.constant 5.000000e-01 : f32
    %475 = vector.broadcast %cst_197 : f32 to vector<16x128xf32>
    %476 = arith.addf %474, %475 : vector<16x128xf32>
    %c368_198 = arith.constant 368 : index
    %c0_199 = arith.constant 0 : index
    %477 = vector.load %arg2[%c368_198, %c0_199] : memref<416x128xf32, #tpu.memory_space<vmem>>, vector<16x128xf32>
    %c208_200 = arith.constant 208 : index
    %c0_201 = arith.constant 0 : index
    %478 = vector.load %arg2[%c208_200, %c0_201] : memref<416x128xf32, #tpu.memory_space<vmem>>, vector<16x128xf32>
    %479 = vector.extract_strided_slice %476 {offsets = [0, 0], sizes = [1, 128], strides = [1, 1]} : vector<16x128xf32> to vector<1x128xf32>
    %480 = vector.broadcast %479 : vector<1x128xf32> to vector<16x128xf32>
    %481 = arith.mulf %478, %480 : vector<16x128xf32>
    %482 = arith.addf %477, %481 : vector<16x128xf32>
    %c224_202 = arith.constant 224 : index
    %c0_203 = arith.constant 0 : index
    %483 = vector.load %arg2[%c224_202, %c0_203] : memref<416x128xf32, #tpu.memory_space<vmem>>, vector<16x128xf32>
    %484 = vector.extract_strided_slice %476 {offsets = [1, 0], sizes = [1, 128], strides = [1, 1]} : vector<16x128xf32> to vector<1x128xf32>
    %485 = vector.broadcast %484 : vector<1x128xf32> to vector<16x128xf32>
    %486 = arith.mulf %483, %485 : vector<16x128xf32>
    %487 = arith.addf %482, %486 : vector<16x128xf32>
    %c240_204 = arith.constant 240 : index
    %c0_205 = arith.constant 0 : index
    %488 = vector.load %arg2[%c240_204, %c0_205] : memref<416x128xf32, #tpu.memory_space<vmem>>, vector<16x128xf32>
    %489 = vector.extract_strided_slice %476 {offsets = [2, 0], sizes = [1, 128], strides = [1, 1]} : vector<16x128xf32> to vector<1x128xf32>
    %490 = vector.broadcast %489 : vector<1x128xf32> to vector<16x128xf32>
    %491 = arith.mulf %488, %490 : vector<16x128xf32>
    %492 = arith.addf %487, %491 : vector<16x128xf32>
    %c256_206 = arith.constant 256 : index
    %c0_207 = arith.constant 0 : index
    %493 = vector.load %arg2[%c256_206, %c0_207] : memref<416x128xf32, #tpu.memory_space<vmem>>, vector<16x128xf32>
    %494 = vector.extract_strided_slice %476 {offsets = [3, 0], sizes = [1, 128], strides = [1, 1]} : vector<16x128xf32> to vector<1x128xf32>
    %495 = vector.broadcast %494 : vector<1x128xf32> to vector<16x128xf32>
    %496 = arith.mulf %493, %495 : vector<16x128xf32>
    %497 = arith.addf %492, %496 : vector<16x128xf32>
    %c272_208 = arith.constant 272 : index
    %c0_209 = arith.constant 0 : index
    %498 = vector.load %arg2[%c272_208, %c0_209] : memref<416x128xf32, #tpu.memory_space<vmem>>, vector<16x128xf32>
    %499 = vector.extract_strided_slice %476 {offsets = [4, 0], sizes = [1, 128], strides = [1, 1]} : vector<16x128xf32> to vector<1x128xf32>
    %500 = vector.broadcast %499 : vector<1x128xf32> to vector<16x128xf32>
    %501 = arith.mulf %498, %500 : vector<16x128xf32>
    %502 = arith.addf %497, %501 : vector<16x128xf32>
    %c288_210 = arith.constant 288 : index
    %c0_211 = arith.constant 0 : index
    %503 = vector.load %arg2[%c288_210, %c0_211] : memref<416x128xf32, #tpu.memory_space<vmem>>, vector<16x128xf32>
    %504 = vector.extract_strided_slice %476 {offsets = [5, 0], sizes = [1, 128], strides = [1, 1]} : vector<16x128xf32> to vector<1x128xf32>
    %505 = vector.broadcast %504 : vector<1x128xf32> to vector<16x128xf32>
    %506 = arith.mulf %503, %505 : vector<16x128xf32>
    %507 = arith.addf %502, %506 : vector<16x128xf32>
    %c304_212 = arith.constant 304 : index
    %c0_213 = arith.constant 0 : index
    %508 = vector.load %arg2[%c304_212, %c0_213] : memref<416x128xf32, #tpu.memory_space<vmem>>, vector<16x128xf32>
    %509 = vector.extract_strided_slice %476 {offsets = [6, 0], sizes = [1, 128], strides = [1, 1]} : vector<16x128xf32> to vector<1x128xf32>
    %510 = vector.broadcast %509 : vector<1x128xf32> to vector<16x128xf32>
    %511 = arith.mulf %508, %510 : vector<16x128xf32>
    %512 = arith.addf %507, %511 : vector<16x128xf32>
    %c320_214 = arith.constant 320 : index
    %c0_215 = arith.constant 0 : index
    %513 = vector.load %arg2[%c320_214, %c0_215] : memref<416x128xf32, #tpu.memory_space<vmem>>, vector<16x128xf32>
    %514 = vector.extract_strided_slice %476 {offsets = [7, 0], sizes = [1, 128], strides = [1, 1]} : vector<16x128xf32> to vector<1x128xf32>
    %515 = vector.broadcast %514 : vector<1x128xf32> to vector<16x128xf32>
    %516 = arith.mulf %513, %515 : vector<16x128xf32>
    %517 = arith.addf %512, %516 : vector<16x128xf32>
    %c336_216 = arith.constant 336 : index
    %c0_217 = arith.constant 0 : index
    %518 = vector.load %arg2[%c336_216, %c0_217] : memref<416x128xf32, #tpu.memory_space<vmem>>, vector<16x128xf32>
    %519 = vector.extract_strided_slice %476 {offsets = [8, 0], sizes = [1, 128], strides = [1, 1]} : vector<16x128xf32> to vector<1x128xf32>
    %520 = vector.broadcast %519 : vector<1x128xf32> to vector<16x128xf32>
    %521 = arith.mulf %518, %520 : vector<16x128xf32>
    %522 = arith.addf %517, %521 : vector<16x128xf32>
    %c352_218 = arith.constant 352 : index
    %c0_219 = arith.constant 0 : index
    %523 = vector.load %arg2[%c352_218, %c0_219] : memref<416x128xf32, #tpu.memory_space<vmem>>, vector<16x128xf32>
    %524 = vector.extract_strided_slice %476 {offsets = [9, 0], sizes = [1, 128], strides = [1, 1]} : vector<16x128xf32> to vector<1x128xf32>
    %525 = vector.broadcast %524 : vector<1x128xf32> to vector<16x128xf32>
    %526 = arith.mulf %523, %525 : vector<16x128xf32>
    %527 = arith.addf %522, %526 : vector<16x128xf32>
    %cst_220 = arith.constant 5.000000e-01 : f32
    %528 = vector.broadcast %cst_220 : f32 to vector<16x128xf32>
    %529 = arith.mulf %528, %527 : vector<16x128xf32>
    %530 = math.tanh %529 : vector<16x128xf32>
    %cst_221 = arith.constant 5.000000e-01 : f32
    %531 = vector.broadcast %cst_221 : f32 to vector<16x128xf32>
    %532 = arith.mulf %531, %530 : vector<16x128xf32>
    %cst_222 = arith.constant 5.000000e-01 : f32
    %533 = vector.broadcast %cst_222 : f32 to vector<16x128xf32>
    %534 = arith.addf %532, %533 : vector<16x128xf32>
    %c384_223 = arith.constant 384 : index
    %c0_224 = arith.constant 0 : index
    %535 = vector.load %arg2[%c384_223, %c0_224] : memref<416x128xf32, #tpu.memory_space<vmem>>, vector<16x128xf32>
    %536 = arith.mulf %535, %534 : vector<16x128xf32>
    %cst_225 = arith.constant dense<0.000000e+00> : vector<128xf32>
    %537 = vector.multi_reduction <add>, %536, %cst_225 [0] : vector<16x128xf32> to vector<128xf32>
    %538 = vector.shape_cast %537 : vector<128xf32> to vector<1x128xf32>
    %539 = arith.addf %538, %0 : vector<1x128xf32>
    %c3_226 = arith.constant 3 : index
    %c0_227 = arith.constant 0 : index
    %540 = vector.load %arg3[%c3_226, %c0_227] : memref<16x128xf32, #tpu.memory_space<vmem>>, vector<1x128xf32>
    tpu.vector_store %arg3[%c3_226, %c0_227], %539 {strides = array<i32>} : memref<16x128xf32, #tpu.memory_space<vmem>>, vector<1x128xf32>,
    %c4 = arith.constant 4 : index
    %c0_228 = arith.constant 0 : index
    %541 = vector.load %arg1[%c4, %c0_228] : memref<16x128xf32, #tpu.memory_space<vmem>>, vector<1x128xf32>
    %c0_229 = arith.constant 0 : index
    %c0_230 = arith.constant 0 : index
    %542 = vector.load %arg2[%c0_229, %c0_230] : memref<416x128xf32, #tpu.memory_space<vmem>>, vector<16x128xf32>
    %543 = vector.broadcast %541 : vector<1x128xf32> to vector<16x128xf32>
    %544 = arith.mulf %542, %543 : vector<16x128xf32>
    %c16_231 = arith.constant 16 : index
    %c0_232 = arith.constant 0 : index
    %545 = vector.load %arg2[%c16_231, %c0_232] : memref<416x128xf32, #tpu.memory_space<vmem>>, vector<16x128xf32>
    %546 = arith.addf %544, %545 : vector<16x128xf32>
    %cst_233 = arith.constant 5.000000e-01 : f32
    %547 = vector.broadcast %cst_233 : f32 to vector<16x128xf32>
    %548 = arith.mulf %547, %546 : vector<16x128xf32>
    %549 = math.tanh %548 : vector<16x128xf32>
    %cst_234 = arith.constant 5.000000e-01 : f32
    %550 = vector.broadcast %cst_234 : f32 to vector<16x128xf32>
    %551 = arith.mulf %550, %549 : vector<16x128xf32>
    %cst_235 = arith.constant 5.000000e-01 : f32
    %552 = vector.broadcast %cst_235 : f32 to vector<16x128xf32>
    %553 = arith.addf %551, %552 : vector<16x128xf32>
    %c192_236 = arith.constant 192 : index
    %c0_237 = arith.constant 0 : index
    %554 = vector.load %arg2[%c192_236, %c0_237] : memref<416x128xf32, #tpu.memory_space<vmem>>, vector<16x128xf32>
    %c32_238 = arith.constant 32 : index
    %c0_239 = arith.constant 0 : index
    %555 = vector.load %arg2[%c32_238, %c0_239] : memref<416x128xf32, #tpu.memory_space<vmem>>, vector<16x128xf32>
    %556 = vector.extract_strided_slice %553 {offsets = [0, 0], sizes = [1, 128], strides = [1, 1]} : vector<16x128xf32> to vector<1x128xf32>
    %557 = vector.broadcast %556 : vector<1x128xf32> to vector<16x128xf32>
    %558 = arith.mulf %555, %557 : vector<16x128xf32>
    %559 = arith.addf %554, %558 : vector<16x128xf32>
    %c48_240 = arith.constant 48 : index
    %c0_241 = arith.constant 0 : index
    %560 = vector.load %arg2[%c48_240, %c0_241] : memref<416x128xf32, #tpu.memory_space<vmem>>, vector<16x128xf32>
    %561 = vector.extract_strided_slice %553 {offsets = [1, 0], sizes = [1, 128], strides = [1, 1]} : vector<16x128xf32> to vector<1x128xf32>
    %562 = vector.broadcast %561 : vector<1x128xf32> to vector<16x128xf32>
    %563 = arith.mulf %560, %562 : vector<16x128xf32>
    %564 = arith.addf %559, %563 : vector<16x128xf32>
    %c64_242 = arith.constant 64 : index
    %c0_243 = arith.constant 0 : index
    %565 = vector.load %arg2[%c64_242, %c0_243] : memref<416x128xf32, #tpu.memory_space<vmem>>, vector<16x128xf32>
    %566 = vector.extract_strided_slice %553 {offsets = [2, 0], sizes = [1, 128], strides = [1, 1]} : vector<16x128xf32> to vector<1x128xf32>
    %567 = vector.broadcast %566 : vector<1x128xf32> to vector<16x128xf32>
    %568 = arith.mulf %565, %567 : vector<16x128xf32>
    %569 = arith.addf %564, %568 : vector<16x128xf32>
    %c80_244 = arith.constant 80 : index
    %c0_245 = arith.constant 0 : index
    %570 = vector.load %arg2[%c80_244, %c0_245] : memref<416x128xf32, #tpu.memory_space<vmem>>, vector<16x128xf32>
    %571 = vector.extract_strided_slice %553 {offsets = [3, 0], sizes = [1, 128], strides = [1, 1]} : vector<16x128xf32> to vector<1x128xf32>
    %572 = vector.broadcast %571 : vector<1x128xf32> to vector<16x128xf32>
    %573 = arith.mulf %570, %572 : vector<16x128xf32>
    %574 = arith.addf %569, %573 : vector<16x128xf32>
    %c96_246 = arith.constant 96 : index
    %c0_247 = arith.constant 0 : index
    %575 = vector.load %arg2[%c96_246, %c0_247] : memref<416x128xf32, #tpu.memory_space<vmem>>, vector<16x128xf32>
    %576 = vector.extract_strided_slice %553 {offsets = [4, 0], sizes = [1, 128], strides = [1, 1]} : vector<16x128xf32> to vector<1x128xf32>
    %577 = vector.broadcast %576 : vector<1x128xf32> to vector<16x128xf32>
    %578 = arith.mulf %575, %577 : vector<16x128xf32>
    %579 = arith.addf %574, %578 : vector<16x128xf32>
    %c112_248 = arith.constant 112 : index
    %c0_249 = arith.constant 0 : index
    %580 = vector.load %arg2[%c112_248, %c0_249] : memref<416x128xf32, #tpu.memory_space<vmem>>, vector<16x128xf32>
    %581 = vector.extract_strided_slice %553 {offsets = [5, 0], sizes = [1, 128], strides = [1, 1]} : vector<16x128xf32> to vector<1x128xf32>
    %582 = vector.broadcast %581 : vector<1x128xf32> to vector<16x128xf32>
    %583 = arith.mulf %580, %582 : vector<16x128xf32>
    %584 = arith.addf %579, %583 : vector<16x128xf32>
    %c128_250 = arith.constant 128 : index
    %c0_251 = arith.constant 0 : index
    %585 = vector.load %arg2[%c128_250, %c0_251] : memref<416x128xf32, #tpu.memory_space<vmem>>, vector<16x128xf32>
    %586 = vector.extract_strided_slice %553 {offsets = [6, 0], sizes = [1, 128], strides = [1, 1]} : vector<16x128xf32> to vector<1x128xf32>
    %587 = vector.broadcast %586 : vector<1x128xf32> to vector<16x128xf32>
    %588 = arith.mulf %585, %587 : vector<16x128xf32>
    %589 = arith.addf %584, %588 : vector<16x128xf32>
    %c144_252 = arith.constant 144 : index
    %c0_253 = arith.constant 0 : index
    %590 = vector.load %arg2[%c144_252, %c0_253] : memref<416x128xf32, #tpu.memory_space<vmem>>, vector<16x128xf32>
    %591 = vector.extract_strided_slice %553 {offsets = [7, 0], sizes = [1, 128], strides = [1, 1]} : vector<16x128xf32> to vector<1x128xf32>
    %592 = vector.broadcast %591 : vector<1x128xf32> to vector<16x128xf32>
    %593 = arith.mulf %590, %592 : vector<16x128xf32>
    %594 = arith.addf %589, %593 : vector<16x128xf32>
    %c160_254 = arith.constant 160 : index
    %c0_255 = arith.constant 0 : index
    %595 = vector.load %arg2[%c160_254, %c0_255] : memref<416x128xf32, #tpu.memory_space<vmem>>, vector<16x128xf32>
    %596 = vector.extract_strided_slice %553 {offsets = [8, 0], sizes = [1, 128], strides = [1, 1]} : vector<16x128xf32> to vector<1x128xf32>
    %597 = vector.broadcast %596 : vector<1x128xf32> to vector<16x128xf32>
    %598 = arith.mulf %595, %597 : vector<16x128xf32>
    %599 = arith.addf %594, %598 : vector<16x128xf32>
    %c176_256 = arith.constant 176 : index
    %c0_257 = arith.constant 0 : index
    %600 = vector.load %arg2[%c176_256, %c0_257] : memref<416x128xf32, #tpu.memory_space<vmem>>, vector<16x128xf32>
    %601 = vector.extract_strided_slice %553 {offsets = [9, 0], sizes = [1, 128], strides = [1, 1]} : vector<16x128xf32> to vector<1x128xf32>
    %602 = vector.broadcast %601 : vector<1x128xf32> to vector<16x128xf32>
    %603 = arith.mulf %600, %602 : vector<16x128xf32>
    %604 = arith.addf %599, %603 : vector<16x128xf32>
    %cst_258 = arith.constant 5.000000e-01 : f32
    %605 = vector.broadcast %cst_258 : f32 to vector<16x128xf32>
    %606 = arith.mulf %605, %604 : vector<16x128xf32>
    %607 = math.tanh %606 : vector<16x128xf32>
    %cst_259 = arith.constant 5.000000e-01 : f32
    %608 = vector.broadcast %cst_259 : f32 to vector<16x128xf32>
    %609 = arith.mulf %608, %607 : vector<16x128xf32>
    %cst_260 = arith.constant 5.000000e-01 : f32
    %610 = vector.broadcast %cst_260 : f32 to vector<16x128xf32>
    %611 = arith.addf %609, %610 : vector<16x128xf32>
    %c368_261 = arith.constant 368 : index
    %c0_262 = arith.constant 0 : index
    %612 = vector.load %arg2[%c368_261, %c0_262] : memref<416x128xf32, #tpu.memory_space<vmem>>, vector<16x128xf32>
    %c208_263 = arith.constant 208 : index
    %c0_264 = arith.constant 0 : index
    %613 = vector.load %arg2[%c208_263, %c0_264] : memref<416x128xf32, #tpu.memory_space<vmem>>, vector<16x128xf32>
    %614 = vector.extract_strided_slice %611 {offsets = [0, 0], sizes = [1, 128], strides = [1, 1]} : vector<16x128xf32> to vector<1x128xf32>
    %615 = vector.broadcast %614 : vector<1x128xf32> to vector<16x128xf32>
    %616 = arith.mulf %613, %615 : vector<16x128xf32>
    %617 = arith.addf %612, %616 : vector<16x128xf32>
    %c224_265 = arith.constant 224 : index
    %c0_266 = arith.constant 0 : index
    %618 = vector.load %arg2[%c224_265, %c0_266] : memref<416x128xf32, #tpu.memory_space<vmem>>, vector<16x128xf32>
    %619 = vector.extract_strided_slice %611 {offsets = [1, 0], sizes = [1, 128], strides = [1, 1]} : vector<16x128xf32> to vector<1x128xf32>
    %620 = vector.broadcast %619 : vector<1x128xf32> to vector<16x128xf32>
    %621 = arith.mulf %618, %620 : vector<16x128xf32>
    %622 = arith.addf %617, %621 : vector<16x128xf32>
    %c240_267 = arith.constant 240 : index
    %c0_268 = arith.constant 0 : index
    %623 = vector.load %arg2[%c240_267, %c0_268] : memref<416x128xf32, #tpu.memory_space<vmem>>, vector<16x128xf32>
    %624 = vector.extract_strided_slice %611 {offsets = [2, 0], sizes = [1, 128], strides = [1, 1]} : vector<16x128xf32> to vector<1x128xf32>
    %625 = vector.broadcast %624 : vector<1x128xf32> to vector<16x128xf32>
    %626 = arith.mulf %623, %625 : vector<16x128xf32>
    %627 = arith.addf %622, %626 : vector<16x128xf32>
    %c256_269 = arith.constant 256 : index
    %c0_270 = arith.constant 0 : index
    %628 = vector.load %arg2[%c256_269, %c0_270] : memref<416x128xf32, #tpu.memory_space<vmem>>, vector<16x128xf32>
    %629 = vector.extract_strided_slice %611 {offsets = [3, 0], sizes = [1, 128], strides = [1, 1]} : vector<16x128xf32> to vector<1x128xf32>
    %630 = vector.broadcast %629 : vector<1x128xf32> to vector<16x128xf32>
    %631 = arith.mulf %628, %630 : vector<16x128xf32>
    %632 = arith.addf %627, %631 : vector<16x128xf32>
    %c272_271 = arith.constant 272 : index
    %c0_272 = arith.constant 0 : index
    %633 = vector.load %arg2[%c272_271, %c0_272] : memref<416x128xf32, #tpu.memory_space<vmem>>, vector<16x128xf32>
    %634 = vector.extract_strided_slice %611 {offsets = [4, 0], sizes = [1, 128], strides = [1, 1]} : vector<16x128xf32> to vector<1x128xf32>
    %635 = vector.broadcast %634 : vector<1x128xf32> to vector<16x128xf32>
    %636 = arith.mulf %633, %635 : vector<16x128xf32>
    %637 = arith.addf %632, %636 : vector<16x128xf32>
    %c288_273 = arith.constant 288 : index
    %c0_274 = arith.constant 0 : index
    %638 = vector.load %arg2[%c288_273, %c0_274] : memref<416x128xf32, #tpu.memory_space<vmem>>, vector<16x128xf32>
    %639 = vector.extract_strided_slice %611 {offsets = [5, 0], sizes = [1, 128], strides = [1, 1]} : vector<16x128xf32> to vector<1x128xf32>
    %640 = vector.broadcast %639 : vector<1x128xf32> to vector<16x128xf32>
    %641 = arith.mulf %638, %640 : vector<16x128xf32>
    %642 = arith.addf %637, %641 : vector<16x128xf32>
    %c304_275 = arith.constant 304 : index
    %c0_276 = arith.constant 0 : index
    %643 = vector.load %arg2[%c304_275, %c0_276] : memref<416x128xf32, #tpu.memory_space<vmem>>, vector<16x128xf32>
    %644 = vector.extract_strided_slice %611 {offsets = [6, 0], sizes = [1, 128], strides = [1, 1]} : vector<16x128xf32> to vector<1x128xf32>
    %645 = vector.broadcast %644 : vector<1x128xf32> to vector<16x128xf32>
    %646 = arith.mulf %643, %645 : vector<16x128xf32>
    %647 = arith.addf %642, %646 : vector<16x128xf32>
    %c320_277 = arith.constant 320 : index
    %c0_278 = arith.constant 0 : index
    %648 = vector.load %arg2[%c320_277, %c0_278] : memref<416x128xf32, #tpu.memory_space<vmem>>, vector<16x128xf32>
    %649 = vector.extract_strided_slice %611 {offsets = [7, 0], sizes = [1, 128], strides = [1, 1]} : vector<16x128xf32> to vector<1x128xf32>
    %650 = vector.broadcast %649 : vector<1x128xf32> to vector<16x128xf32>
    %651 = arith.mulf %648, %650 : vector<16x128xf32>
    %652 = arith.addf %647, %651 : vector<16x128xf32>
    %c336_279 = arith.constant 336 : index
    %c0_280 = arith.constant 0 : index
    %653 = vector.load %arg2[%c336_279, %c0_280] : memref<416x128xf32, #tpu.memory_space<vmem>>, vector<16x128xf32>
    %654 = vector.extract_strided_slice %611 {offsets = [8, 0], sizes = [1, 128], strides = [1, 1]} : vector<16x128xf32> to vector<1x128xf32>
    %655 = vector.broadcast %654 : vector<1x128xf32> to vector<16x128xf32>
    %656 = arith.mulf %653, %655 : vector<16x128xf32>
    %657 = arith.addf %652, %656 : vector<16x128xf32>
    %c352_281 = arith.constant 352 : index
    %c0_282 = arith.constant 0 : index
    %658 = vector.load %arg2[%c352_281, %c0_282] : memref<416x128xf32, #tpu.memory_space<vmem>>, vector<16x128xf32>
    %659 = vector.extract_strided_slice %611 {offsets = [9, 0], sizes = [1, 128], strides = [1, 1]} : vector<16x128xf32> to vector<1x128xf32>
    %660 = vector.broadcast %659 : vector<1x128xf32> to vector<16x128xf32>
    %661 = arith.mulf %658, %660 : vector<16x128xf32>
    %662 = arith.addf %657, %661 : vector<16x128xf32>
    %cst_283 = arith.constant 5.000000e-01 : f32
    %663 = vector.broadcast %cst_283 : f32 to vector<16x128xf32>
    %664 = arith.mulf %663, %662 : vector<16x128xf32>
    %665 = math.tanh %664 : vector<16x128xf32>
    %cst_284 = arith.constant 5.000000e-01 : f32
    %666 = vector.broadcast %cst_284 : f32 to vector<16x128xf32>
    %667 = arith.mulf %666, %665 : vector<16x128xf32>
    %cst_285 = arith.constant 5.000000e-01 : f32
    %668 = vector.broadcast %cst_285 : f32 to vector<16x128xf32>
    %669 = arith.addf %667, %668 : vector<16x128xf32>
    %c384_286 = arith.constant 384 : index
    %c0_287 = arith.constant 0 : index
    %670 = vector.load %arg2[%c384_286, %c0_287] : memref<416x128xf32, #tpu.memory_space<vmem>>, vector<16x128xf32>
    %671 = arith.mulf %670, %669 : vector<16x128xf32>
    %cst_288 = arith.constant dense<0.000000e+00> : vector<128xf32>
    %672 = vector.multi_reduction <add>, %671, %cst_288 [0] : vector<16x128xf32> to vector<128xf32>
    %673 = vector.shape_cast %672 : vector<128xf32> to vector<1x128xf32>
    %674 = arith.addf %673, %0 : vector<1x128xf32>
    %c4_289 = arith.constant 4 : index
    %c0_290 = arith.constant 0 : index
    %675 = vector.load %arg3[%c4_289, %c0_290] : memref<16x128xf32, #tpu.memory_space<vmem>>, vector<1x128xf32>
    tpu.vector_store %arg3[%c4_289, %c0_290], %674 {strides = array<i32>} : memref<16x128xf32, #tpu.memory_space<vmem>>, vector<1x128xf32>,
    %c5 = arith.constant 5 : index
    %c0_291 = arith.constant 0 : index
    %676 = vector.load %arg1[%c5, %c0_291] : memref<16x128xf32, #tpu.memory_space<vmem>>, vector<1x128xf32>
    %c0_292 = arith.constant 0 : index
    %c0_293 = arith.constant 0 : index
    %677 = vector.load %arg2[%c0_292, %c0_293] : memref<416x128xf32, #tpu.memory_space<vmem>>, vector<16x128xf32>
    %678 = vector.broadcast %676 : vector<1x128xf32> to vector<16x128xf32>
    %679 = arith.mulf %677, %678 : vector<16x128xf32>
    %c16_294 = arith.constant 16 : index
    %c0_295 = arith.constant 0 : index
    %680 = vector.load %arg2[%c16_294, %c0_295] : memref<416x128xf32, #tpu.memory_space<vmem>>, vector<16x128xf32>
    %681 = arith.addf %679, %680 : vector<16x128xf32>
    %cst_296 = arith.constant 5.000000e-01 : f32
    %682 = vector.broadcast %cst_296 : f32 to vector<16x128xf32>
    %683 = arith.mulf %682, %681 : vector<16x128xf32>
    %684 = math.tanh %683 : vector<16x128xf32>
    %cst_297 = arith.constant 5.000000e-01 : f32
    %685 = vector.broadcast %cst_297 : f32 to vector<16x128xf32>
    %686 = arith.mulf %685, %684 : vector<16x128xf32>
    %cst_298 = arith.constant 5.000000e-01 : f32
    %687 = vector.broadcast %cst_298 : f32 to vector<16x128xf32>
    %688 = arith.addf %686, %687 : vector<16x128xf32>
    %c192_299 = arith.constant 192 : index
    %c0_300 = arith.constant 0 : index
    %689 = vector.load %arg2[%c192_299, %c0_300] : memref<416x128xf32, #tpu.memory_space<vmem>>, vector<16x128xf32>
    %c32_301 = arith.constant 32 : index
    %c0_302 = arith.constant 0 : index
    %690 = vector.load %arg2[%c32_301, %c0_302] : memref<416x128xf32, #tpu.memory_space<vmem>>, vector<16x128xf32>
    %691 = vector.extract_strided_slice %688 {offsets = [0, 0], sizes = [1, 128], strides = [1, 1]} : vector<16x128xf32> to vector<1x128xf32>
    %692 = vector.broadcast %691 : vector<1x128xf32> to vector<16x128xf32>
    %693 = arith.mulf %690, %692 : vector<16x128xf32>
    %694 = arith.addf %689, %693 : vector<16x128xf32>
    %c48_303 = arith.constant 48 : index
    %c0_304 = arith.constant 0 : index
    %695 = vector.load %arg2[%c48_303, %c0_304] : memref<416x128xf32, #tpu.memory_space<vmem>>, vector<16x128xf32>
    %696 = vector.extract_strided_slice %688 {offsets = [1, 0], sizes = [1, 128], strides = [1, 1]} : vector<16x128xf32> to vector<1x128xf32>
    %697 = vector.broadcast %696 : vector<1x128xf32> to vector<16x128xf32>
    %698 = arith.mulf %695, %697 : vector<16x128xf32>
    %699 = arith.addf %694, %698 : vector<16x128xf32>
    %c64_305 = arith.constant 64 : index
    %c0_306 = arith.constant 0 : index
    %700 = vector.load %arg2[%c64_305, %c0_306] : memref<416x128xf32, #tpu.memory_space<vmem>>, vector<16x128xf32>
    %701 = vector.extract_strided_slice %688 {offsets = [2, 0], sizes = [1, 128], strides = [1, 1]} : vector<16x128xf32> to vector<1x128xf32>
    %702 = vector.broadcast %701 : vector<1x128xf32> to vector<16x128xf32>
    %703 = arith.mulf %700, %702 : vector<16x128xf32>
    %704 = arith.addf %699, %703 : vector<16x128xf32>
    %c80_307 = arith.constant 80 : index
    %c0_308 = arith.constant 0 : index
    %705 = vector.load %arg2[%c80_307, %c0_308] : memref<416x128xf32, #tpu.memory_space<vmem>>, vector<16x128xf32>
    %706 = vector.extract_strided_slice %688 {offsets = [3, 0], sizes = [1, 128], strides = [1, 1]} : vector<16x128xf32> to vector<1x128xf32>
    %707 = vector.broadcast %706 : vector<1x128xf32> to vector<16x128xf32>
    %708 = arith.mulf %705, %707 : vector<16x128xf32>
    %709 = arith.addf %704, %708 : vector<16x128xf32>
    %c96_309 = arith.constant 96 : index
    %c0_310 = arith.constant 0 : index
    %710 = vector.load %arg2[%c96_309, %c0_310] : memref<416x128xf32, #tpu.memory_space<vmem>>, vector<16x128xf32>
    %711 = vector.extract_strided_slice %688 {offsets = [4, 0], sizes = [1, 128], strides = [1, 1]} : vector<16x128xf32> to vector<1x128xf32>
    %712 = vector.broadcast %711 : vector<1x128xf32> to vector<16x128xf32>
    %713 = arith.mulf %710, %712 : vector<16x128xf32>
    %714 = arith.addf %709, %713 : vector<16x128xf32>
    %c112_311 = arith.constant 112 : index
    %c0_312 = arith.constant 0 : index
    %715 = vector.load %arg2[%c112_311, %c0_312] : memref<416x128xf32, #tpu.memory_space<vmem>>, vector<16x128xf32>
    %716 = vector.extract_strided_slice %688 {offsets = [5, 0], sizes = [1, 128], strides = [1, 1]} : vector<16x128xf32> to vector<1x128xf32>
    %717 = vector.broadcast %716 : vector<1x128xf32> to vector<16x128xf32>
    %718 = arith.mulf %715, %717 : vector<16x128xf32>
    %719 = arith.addf %714, %718 : vector<16x128xf32>
    %c128_313 = arith.constant 128 : index
    %c0_314 = arith.constant 0 : index
    %720 = vector.load %arg2[%c128_313, %c0_314] : memref<416x128xf32, #tpu.memory_space<vmem>>, vector<16x128xf32>
    %721 = vector.extract_strided_slice %688 {offsets = [6, 0], sizes = [1, 128], strides = [1, 1]} : vector<16x128xf32> to vector<1x128xf32>
    %722 = vector.broadcast %721 : vector<1x128xf32> to vector<16x128xf32>
    %723 = arith.mulf %720, %722 : vector<16x128xf32>
    %724 = arith.addf %719, %723 : vector<16x128xf32>
    %c144_315 = arith.constant 144 : index
    %c0_316 = arith.constant 0 : index
    %725 = vector.load %arg2[%c144_315, %c0_316] : memref<416x128xf32, #tpu.memory_space<vmem>>, vector<16x128xf32>
    %726 = vector.extract_strided_slice %688 {offsets = [7, 0], sizes = [1, 128], strides = [1, 1]} : vector<16x128xf32> to vector<1x128xf32>
    %727 = vector.broadcast %726 : vector<1x128xf32> to vector<16x128xf32>
    %728 = arith.mulf %725, %727 : vector<16x128xf32>
    %729 = arith.addf %724, %728 : vector<16x128xf32>
    %c160_317 = arith.constant 160 : index
    %c0_318 = arith.constant 0 : index
    %730 = vector.load %arg2[%c160_317, %c0_318] : memref<416x128xf32, #tpu.memory_space<vmem>>, vector<16x128xf32>
    %731 = vector.extract_strided_slice %688 {offsets = [8, 0], sizes = [1, 128], strides = [1, 1]} : vector<16x128xf32> to vector<1x128xf32>
    %732 = vector.broadcast %731 : vector<1x128xf32> to vector<16x128xf32>
    %733 = arith.mulf %730, %732 : vector<16x128xf32>
    %734 = arith.addf %729, %733 : vector<16x128xf32>
    %c176_319 = arith.constant 176 : index
    %c0_320 = arith.constant 0 : index
    %735 = vector.load %arg2[%c176_319, %c0_320] : memref<416x128xf32, #tpu.memory_space<vmem>>, vector<16x128xf32>
    %736 = vector.extract_strided_slice %688 {offsets = [9, 0], sizes = [1, 128], strides = [1, 1]} : vector<16x128xf32> to vector<1x128xf32>
    %737 = vector.broadcast %736 : vector<1x128xf32> to vector<16x128xf32>
    %738 = arith.mulf %735, %737 : vector<16x128xf32>
    %739 = arith.addf %734, %738 : vector<16x128xf32>
    %cst_321 = arith.constant 5.000000e-01 : f32
    %740 = vector.broadcast %cst_321 : f32 to vector<16x128xf32>
    %741 = arith.mulf %740, %739 : vector<16x128xf32>
    %742 = math.tanh %741 : vector<16x128xf32>
    %cst_322 = arith.constant 5.000000e-01 : f32
    %743 = vector.broadcast %cst_322 : f32 to vector<16x128xf32>
    %744 = arith.mulf %743, %742 : vector<16x128xf32>
    %cst_323 = arith.constant 5.000000e-01 : f32
    %745 = vector.broadcast %cst_323 : f32 to vector<16x128xf32>
    %746 = arith.addf %744, %745 : vector<16x128xf32>
    %c368_324 = arith.constant 368 : index
    %c0_325 = arith.constant 0 : index
    %747 = vector.load %arg2[%c368_324, %c0_325] : memref<416x128xf32, #tpu.memory_space<vmem>>, vector<16x128xf32>
    %c208_326 = arith.constant 208 : index
    %c0_327 = arith.constant 0 : index
    %748 = vector.load %arg2[%c208_326, %c0_327] : memref<416x128xf32, #tpu.memory_space<vmem>>, vector<16x128xf32>
    %749 = vector.extract_strided_slice %746 {offsets = [0, 0], sizes = [1, 128], strides = [1, 1]} : vector<16x128xf32> to vector<1x128xf32>
    %750 = vector.broadcast %749 : vector<1x128xf32> to vector<16x128xf32>
    %751 = arith.mulf %748, %750 : vector<16x128xf32>
    %752 = arith.addf %747, %751 : vector<16x128xf32>
    %c224_328 = arith.constant 224 : index
    %c0_329 = arith.constant 0 : index
    %753 = vector.load %arg2[%c224_328, %c0_329] : memref<416x128xf32, #tpu.memory_space<vmem>>, vector<16x128xf32>
    %754 = vector.extract_strided_slice %746 {offsets = [1, 0], sizes = [1, 128], strides = [1, 1]} : vector<16x128xf32> to vector<1x128xf32>
    %755 = vector.broadcast %754 : vector<1x128xf32> to vector<16x128xf32>
    %756 = arith.mulf %753, %755 : vector<16x128xf32>
    %757 = arith.addf %752, %756 : vector<16x128xf32>
    %c240_330 = arith.constant 240 : index
    %c0_331 = arith.constant 0 : index
    %758 = vector.load %arg2[%c240_330, %c0_331] : memref<416x128xf32, #tpu.memory_space<vmem>>, vector<16x128xf32>
    %759 = vector.extract_strided_slice %746 {offsets = [2, 0], sizes = [1, 128], strides = [1, 1]} : vector<16x128xf32> to vector<1x128xf32>
    %760 = vector.broadcast %759 : vector<1x128xf32> to vector<16x128xf32>
    %761 = arith.mulf %758, %760 : vector<16x128xf32>
    %762 = arith.addf %757, %761 : vector<16x128xf32>
    %c256_332 = arith.constant 256 : index
    %c0_333 = arith.constant 0 : index
    %763 = vector.load %arg2[%c256_332, %c0_333] : memref<416x128xf32, #tpu.memory_space<vmem>>, vector<16x128xf32>
    %764 = vector.extract_strided_slice %746 {offsets = [3, 0], sizes = [1, 128], strides = [1, 1]} : vector<16x128xf32> to vector<1x128xf32>
    %765 = vector.broadcast %764 : vector<1x128xf32> to vector<16x128xf32>
    %766 = arith.mulf %763, %765 : vector<16x128xf32>
    %767 = arith.addf %762, %766 : vector<16x128xf32>
    %c272_334 = arith.constant 272 : index
    %c0_335 = arith.constant 0 : index
    %768 = vector.load %arg2[%c272_334, %c0_335] : memref<416x128xf32, #tpu.memory_space<vmem>>, vector<16x128xf32>
    %769 = vector.extract_strided_slice %746 {offsets = [4, 0], sizes = [1, 128], strides = [1, 1]} : vector<16x128xf32> to vector<1x128xf32>
    %770 = vector.broadcast %769 : vector<1x128xf32> to vector<16x128xf32>
    %771 = arith.mulf %768, %770 : vector<16x128xf32>
    %772 = arith.addf %767, %771 : vector<16x128xf32>
    %c288_336 = arith.constant 288 : index
    %c0_337 = arith.constant 0 : index
    %773 = vector.load %arg2[%c288_336, %c0_337] : memref<416x128xf32, #tpu.memory_space<vmem>>, vector<16x128xf32>
    %774 = vector.extract_strided_slice %746 {offsets = [5, 0], sizes = [1, 128], strides = [1, 1]} : vector<16x128xf32> to vector<1x128xf32>
    %775 = vector.broadcast %774 : vector<1x128xf32> to vector<16x128xf32>
    %776 = arith.mulf %773, %775 : vector<16x128xf32>
    %777 = arith.addf %772, %776 : vector<16x128xf32>
    %c304_338 = arith.constant 304 : index
    %c0_339 = arith.constant 0 : index
    %778 = vector.load %arg2[%c304_338, %c0_339] : memref<416x128xf32, #tpu.memory_space<vmem>>, vector<16x128xf32>
    %779 = vector.extract_strided_slice %746 {offsets = [6, 0], sizes = [1, 128], strides = [1, 1]} : vector<16x128xf32> to vector<1x128xf32>
    %780 = vector.broadcast %779 : vector<1x128xf32> to vector<16x128xf32>
    %781 = arith.mulf %778, %780 : vector<16x128xf32>
    %782 = arith.addf %777, %781 : vector<16x128xf32>
    %c320_340 = arith.constant 320 : index
    %c0_341 = arith.constant 0 : index
    %783 = vector.load %arg2[%c320_340, %c0_341] : memref<416x128xf32, #tpu.memory_space<vmem>>, vector<16x128xf32>
    %784 = vector.extract_strided_slice %746 {offsets = [7, 0], sizes = [1, 128], strides = [1, 1]} : vector<16x128xf32> to vector<1x128xf32>
    %785 = vector.broadcast %784 : vector<1x128xf32> to vector<16x128xf32>
    %786 = arith.mulf %783, %785 : vector<16x128xf32>
    %787 = arith.addf %782, %786 : vector<16x128xf32>
    %c336_342 = arith.constant 336 : index
    %c0_343 = arith.constant 0 : index
    %788 = vector.load %arg2[%c336_342, %c0_343] : memref<416x128xf32, #tpu.memory_space<vmem>>, vector<16x128xf32>
    %789 = vector.extract_strided_slice %746 {offsets = [8, 0], sizes = [1, 128], strides = [1, 1]} : vector<16x128xf32> to vector<1x128xf32>
    %790 = vector.broadcast %789 : vector<1x128xf32> to vector<16x128xf32>
    %791 = arith.mulf %788, %790 : vector<16x128xf32>
    %792 = arith.addf %787, %791 : vector<16x128xf32>
    %c352_344 = arith.constant 352 : index
    %c0_345 = arith.constant 0 : index
    %793 = vector.load %arg2[%c352_344, %c0_345] : memref<416x128xf32, #tpu.memory_space<vmem>>, vector<16x128xf32>
    %794 = vector.extract_strided_slice %746 {offsets = [9, 0], sizes = [1, 128], strides = [1, 1]} : vector<16x128xf32> to vector<1x128xf32>
    %795 = vector.broadcast %794 : vector<1x128xf32> to vector<16x128xf32>
    %796 = arith.mulf %793, %795 : vector<16x128xf32>
    %797 = arith.addf %792, %796 : vector<16x128xf32>
    %cst_346 = arith.constant 5.000000e-01 : f32
    %798 = vector.broadcast %cst_346 : f32 to vector<16x128xf32>
    %799 = arith.mulf %798, %797 : vector<16x128xf32>
    %800 = math.tanh %799 : vector<16x128xf32>
    %cst_347 = arith.constant 5.000000e-01 : f32
    %801 = vector.broadcast %cst_347 : f32 to vector<16x128xf32>
    %802 = arith.mulf %801, %800 : vector<16x128xf32>
    %cst_348 = arith.constant 5.000000e-01 : f32
    %803 = vector.broadcast %cst_348 : f32 to vector<16x128xf32>
    %804 = arith.addf %802, %803 : vector<16x128xf32>
    %c384_349 = arith.constant 384 : index
    %c0_350 = arith.constant 0 : index
    %805 = vector.load %arg2[%c384_349, %c0_350] : memref<416x128xf32, #tpu.memory_space<vmem>>, vector<16x128xf32>
    %806 = arith.mulf %805, %804 : vector<16x128xf32>
    %cst_351 = arith.constant dense<0.000000e+00> : vector<128xf32>
    %807 = vector.multi_reduction <add>, %806, %cst_351 [0] : vector<16x128xf32> to vector<128xf32>
    %808 = vector.shape_cast %807 : vector<128xf32> to vector<1x128xf32>
    %809 = arith.addf %808, %0 : vector<1x128xf32>
    %c5_352 = arith.constant 5 : index
    %c0_353 = arith.constant 0 : index
    %810 = vector.load %arg3[%c5_352, %c0_353] : memref<16x128xf32, #tpu.memory_space<vmem>>, vector<1x128xf32>
    tpu.vector_store %arg3[%c5_352, %c0_353], %809 {strides = array<i32>} : memref<16x128xf32, #tpu.memory_space<vmem>>, vector<1x128xf32>,
    %c6 = arith.constant 6 : index
    %c0_354 = arith.constant 0 : index
    %811 = vector.load %arg1[%c6, %c0_354] : memref<16x128xf32, #tpu.memory_space<vmem>>, vector<1x128xf32>
    %c0_355 = arith.constant 0 : index
    %c0_356 = arith.constant 0 : index
    %812 = vector.load %arg2[%c0_355, %c0_356] : memref<416x128xf32, #tpu.memory_space<vmem>>, vector<16x128xf32>
    %813 = vector.broadcast %811 : vector<1x128xf32> to vector<16x128xf32>
    %814 = arith.mulf %812, %813 : vector<16x128xf32>
    %c16_357 = arith.constant 16 : index
    %c0_358 = arith.constant 0 : index
    %815 = vector.load %arg2[%c16_357, %c0_358] : memref<416x128xf32, #tpu.memory_space<vmem>>, vector<16x128xf32>
    %816 = arith.addf %814, %815 : vector<16x128xf32>
    %cst_359 = arith.constant 5.000000e-01 : f32
    %817 = vector.broadcast %cst_359 : f32 to vector<16x128xf32>
    %818 = arith.mulf %817, %816 : vector<16x128xf32>
    %819 = math.tanh %818 : vector<16x128xf32>
    %cst_360 = arith.constant 5.000000e-01 : f32
    %820 = vector.broadcast %cst_360 : f32 to vector<16x128xf32>
    %821 = arith.mulf %820, %819 : vector<16x128xf32>
    %cst_361 = arith.constant 5.000000e-01 : f32
    %822 = vector.broadcast %cst_361 : f32 to vector<16x128xf32>
    %823 = arith.addf %821, %822 : vector<16x128xf32>
    %c192_362 = arith.constant 192 : index
    %c0_363 = arith.constant 0 : index
    %824 = vector.load %arg2[%c192_362, %c0_363] : memref<416x128xf32, #tpu.memory_space<vmem>>, vector<16x128xf32>
    %c32_364 = arith.constant 32 : index
    %c0_365 = arith.constant 0 : index
    %825 = vector.load %arg2[%c32_364, %c0_365] : memref<416x128xf32, #tpu.memory_space<vmem>>, vector<16x128xf32>
    %826 = vector.extract_strided_slice %823 {offsets = [0, 0], sizes = [1, 128], strides = [1, 1]} : vector<16x128xf32> to vector<1x128xf32>
    %827 = vector.broadcast %826 : vector<1x128xf32> to vector<16x128xf32>
    %828 = arith.mulf %825, %827 : vector<16x128xf32>
    %829 = arith.addf %824, %828 : vector<16x128xf32>
    %c48_366 = arith.constant 48 : index
    %c0_367 = arith.constant 0 : index
    %830 = vector.load %arg2[%c48_366, %c0_367] : memref<416x128xf32, #tpu.memory_space<vmem>>, vector<16x128xf32>
    %831 = vector.extract_strided_slice %823 {offsets = [1, 0], sizes = [1, 128], strides = [1, 1]} : vector<16x128xf32> to vector<1x128xf32>
    %832 = vector.broadcast %831 : vector<1x128xf32> to vector<16x128xf32>
    %833 = arith.mulf %830, %832 : vector<16x128xf32>
    %834 = arith.addf %829, %833 : vector<16x128xf32>
    %c64_368 = arith.constant 64 : index
    %c0_369 = arith.constant 0 : index
    %835 = vector.load %arg2[%c64_368, %c0_369] : memref<416x128xf32, #tpu.memory_space<vmem>>, vector<16x128xf32>
    %836 = vector.extract_strided_slice %823 {offsets = [2, 0], sizes = [1, 128], strides = [1, 1]} : vector<16x128xf32> to vector<1x128xf32>
    %837 = vector.broadcast %836 : vector<1x128xf32> to vector<16x128xf32>
    %838 = arith.mulf %835, %837 : vector<16x128xf32>
    %839 = arith.addf %834, %838 : vector<16x128xf32>
    %c80_370 = arith.constant 80 : index
    %c0_371 = arith.constant 0 : index
    %840 = vector.load %arg2[%c80_370, %c0_371] : memref<416x128xf32, #tpu.memory_space<vmem>>, vector<16x128xf32>
    %841 = vector.extract_strided_slice %823 {offsets = [3, 0], sizes = [1, 128], strides = [1, 1]} : vector<16x128xf32> to vector<1x128xf32>
    %842 = vector.broadcast %841 : vector<1x128xf32> to vector<16x128xf32>
    %843 = arith.mulf %840, %842 : vector<16x128xf32>
    %844 = arith.addf %839, %843 : vector<16x128xf32>
    %c96_372 = arith.constant 96 : index
    %c0_373 = arith.constant 0 : index
    %845 = vector.load %arg2[%c96_372, %c0_373] : memref<416x128xf32, #tpu.memory_space<vmem>>, vector<16x128xf32>
    %846 = vector.extract_strided_slice %823 {offsets = [4, 0], sizes = [1, 128], strides = [1, 1]} : vector<16x128xf32> to vector<1x128xf32>
    %847 = vector.broadcast %846 : vector<1x128xf32> to vector<16x128xf32>
    %848 = arith.mulf %845, %847 : vector<16x128xf32>
    %849 = arith.addf %844, %848 : vector<16x128xf32>
    %c112_374 = arith.constant 112 : index
    %c0_375 = arith.constant 0 : index
    %850 = vector.load %arg2[%c112_374, %c0_375] : memref<416x128xf32, #tpu.memory_space<vmem>>, vector<16x128xf32>
    %851 = vector.extract_strided_slice %823 {offsets = [5, 0], sizes = [1, 128], strides = [1, 1]} : vector<16x128xf32> to vector<1x128xf32>
    %852 = vector.broadcast %851 : vector<1x128xf32> to vector<16x128xf32>
    %853 = arith.mulf %850, %852 : vector<16x128xf32>
    %854 = arith.addf %849, %853 : vector<16x128xf32>
    %c128_376 = arith.constant 128 : index
    %c0_377 = arith.constant 0 : index
    %855 = vector.load %arg2[%c128_376, %c0_377] : memref<416x128xf32, #tpu.memory_space<vmem>>, vector<16x128xf32>
    %856 = vector.extract_strided_slice %823 {offsets = [6, 0], sizes = [1, 128], strides = [1, 1]} : vector<16x128xf32> to vector<1x128xf32>
    %857 = vector.broadcast %856 : vector<1x128xf32> to vector<16x128xf32>
    %858 = arith.mulf %855, %857 : vector<16x128xf32>
    %859 = arith.addf %854, %858 : vector<16x128xf32>
    %c144_378 = arith.constant 144 : index
    %c0_379 = arith.constant 0 : index
    %860 = vector.load %arg2[%c144_378, %c0_379] : memref<416x128xf32, #tpu.memory_space<vmem>>, vector<16x128xf32>
    %861 = vector.extract_strided_slice %823 {offsets = [7, 0], sizes = [1, 128], strides = [1, 1]} : vector<16x128xf32> to vector<1x128xf32>
    %862 = vector.broadcast %861 : vector<1x128xf32> to vector<16x128xf32>
    %863 = arith.mulf %860, %862 : vector<16x128xf32>
    %864 = arith.addf %859, %863 : vector<16x128xf32>
    %c160_380 = arith.constant 160 : index
    %c0_381 = arith.constant 0 : index
    %865 = vector.load %arg2[%c160_380, %c0_381] : memref<416x128xf32, #tpu.memory_space<vmem>>, vector<16x128xf32>
    %866 = vector.extract_strided_slice %823 {offsets = [8, 0], sizes = [1, 128], strides = [1, 1]} : vector<16x128xf32> to vector<1x128xf32>
    %867 = vector.broadcast %866 : vector<1x128xf32> to vector<16x128xf32>
    %868 = arith.mulf %865, %867 : vector<16x128xf32>
    %869 = arith.addf %864, %868 : vector<16x128xf32>
    %c176_382 = arith.constant 176 : index
    %c0_383 = arith.constant 0 : index
    %870 = vector.load %arg2[%c176_382, %c0_383] : memref<416x128xf32, #tpu.memory_space<vmem>>, vector<16x128xf32>
    %871 = vector.extract_strided_slice %823 {offsets = [9, 0], sizes = [1, 128], strides = [1, 1]} : vector<16x128xf32> to vector<1x128xf32>
    %872 = vector.broadcast %871 : vector<1x128xf32> to vector<16x128xf32>
    %873 = arith.mulf %870, %872 : vector<16x128xf32>
    %874 = arith.addf %869, %873 : vector<16x128xf32>
    %cst_384 = arith.constant 5.000000e-01 : f32
    %875 = vector.broadcast %cst_384 : f32 to vector<16x128xf32>
    %876 = arith.mulf %875, %874 : vector<16x128xf32>
    %877 = math.tanh %876 : vector<16x128xf32>
    %cst_385 = arith.constant 5.000000e-01 : f32
    %878 = vector.broadcast %cst_385 : f32 to vector<16x128xf32>
    %879 = arith.mulf %878, %877 : vector<16x128xf32>
    %cst_386 = arith.constant 5.000000e-01 : f32
    %880 = vector.broadcast %cst_386 : f32 to vector<16x128xf32>
    %881 = arith.addf %879, %880 : vector<16x128xf32>
    %c368_387 = arith.constant 368 : index
    %c0_388 = arith.constant 0 : index
    %882 = vector.load %arg2[%c368_387, %c0_388] : memref<416x128xf32, #tpu.memory_space<vmem>>, vector<16x128xf32>
    %c208_389 = arith.constant 208 : index
    %c0_390 = arith.constant 0 : index
    %883 = vector.load %arg2[%c208_389, %c0_390] : memref<416x128xf32, #tpu.memory_space<vmem>>, vector<16x128xf32>
    %884 = vector.extract_strided_slice %881 {offsets = [0, 0], sizes = [1, 128], strides = [1, 1]} : vector<16x128xf32> to vector<1x128xf32>
    %885 = vector.broadcast %884 : vector<1x128xf32> to vector<16x128xf32>
    %886 = arith.mulf %883, %885 : vector<16x128xf32>
    %887 = arith.addf %882, %886 : vector<16x128xf32>
    %c224_391 = arith.constant 224 : index
    %c0_392 = arith.constant 0 : index
    %888 = vector.load %arg2[%c224_391, %c0_392] : memref<416x128xf32, #tpu.memory_space<vmem>>, vector<16x128xf32>
    %889 = vector.extract_strided_slice %881 {offsets = [1, 0], sizes = [1, 128], strides = [1, 1]} : vector<16x128xf32> to vector<1x128xf32>
    %890 = vector.broadcast %889 : vector<1x128xf32> to vector<16x128xf32>
    %891 = arith.mulf %888, %890 : vector<16x128xf32>
    %892 = arith.addf %887, %891 : vector<16x128xf32>
    %c240_393 = arith.constant 240 : index
    %c0_394 = arith.constant 0 : index
    %893 = vector.load %arg2[%c240_393, %c0_394] : memref<416x128xf32, #tpu.memory_space<vmem>>, vector<16x128xf32>
    %894 = vector.extract_strided_slice %881 {offsets = [2, 0], sizes = [1, 128], strides = [1, 1]} : vector<16x128xf32> to vector<1x128xf32>
    %895 = vector.broadcast %894 : vector<1x128xf32> to vector<16x128xf32>
    %896 = arith.mulf %893, %895 : vector<16x128xf32>
    %897 = arith.addf %892, %896 : vector<16x128xf32>
    %c256_395 = arith.constant 256 : index
    %c0_396 = arith.constant 0 : index
    %898 = vector.load %arg2[%c256_395, %c0_396] : memref<416x128xf32, #tpu.memory_space<vmem>>, vector<16x128xf32>
    %899 = vector.extract_strided_slice %881 {offsets = [3, 0], sizes = [1, 128], strides = [1, 1]} : vector<16x128xf32> to vector<1x128xf32>
    %900 = vector.broadcast %899 : vector<1x128xf32> to vector<16x128xf32>
    %901 = arith.mulf %898, %900 : vector<16x128xf32>
    %902 = arith.addf %897, %901 : vector<16x128xf32>
    %c272_397 = arith.constant 272 : index
    %c0_398 = arith.constant 0 : index
    %903 = vector.load %arg2[%c272_397, %c0_398] : memref<416x128xf32, #tpu.memory_space<vmem>>, vector<16x128xf32>
    %904 = vector.extract_strided_slice %881 {offsets = [4, 0], sizes = [1, 128], strides = [1, 1]} : vector<16x128xf32> to vector<1x128xf32>
    %905 = vector.broadcast %904 : vector<1x128xf32> to vector<16x128xf32>
    %906 = arith.mulf %903, %905 : vector<16x128xf32>
    %907 = arith.addf %902, %906 : vector<16x128xf32>
    %c288_399 = arith.constant 288 : index
    %c0_400 = arith.constant 0 : index
    %908 = vector.load %arg2[%c288_399, %c0_400] : memref<416x128xf32, #tpu.memory_space<vmem>>, vector<16x128xf32>
    %909 = vector.extract_strided_slice %881 {offsets = [5, 0], sizes = [1, 128], strides = [1, 1]} : vector<16x128xf32> to vector<1x128xf32>
    %910 = vector.broadcast %909 : vector<1x128xf32> to vector<16x128xf32>
    %911 = arith.mulf %908, %910 : vector<16x128xf32>
    %912 = arith.addf %907, %911 : vector<16x128xf32>
    %c304_401 = arith.constant 304 : index
    %c0_402 = arith.constant 0 : index
    %913 = vector.load %arg2[%c304_401, %c0_402] : memref<416x128xf32, #tpu.memory_space<vmem>>, vector<16x128xf32>
    %914 = vector.extract_strided_slice %881 {offsets = [6, 0], sizes = [1, 128], strides = [1, 1]} : vector<16x128xf32> to vector<1x128xf32>
    %915 = vector.broadcast %914 : vector<1x128xf32> to vector<16x128xf32>
    %916 = arith.mulf %913, %915 : vector<16x128xf32>
    %917 = arith.addf %912, %916 : vector<16x128xf32>
    %c320_403 = arith.constant 320 : index
    %c0_404 = arith.constant 0 : index
    %918 = vector.load %arg2[%c320_403, %c0_404] : memref<416x128xf32, #tpu.memory_space<vmem>>, vector<16x128xf32>
    %919 = vector.extract_strided_slice %881 {offsets = [7, 0], sizes = [1, 128], strides = [1, 1]} : vector<16x128xf32> to vector<1x128xf32>
    %920 = vector.broadcast %919 : vector<1x128xf32> to vector<16x128xf32>
    %921 = arith.mulf %918, %920 : vector<16x128xf32>
    %922 = arith.addf %917, %921 : vector<16x128xf32>
    %c336_405 = arith.constant 336 : index
    %c0_406 = arith.constant 0 : index
    %923 = vector.load %arg2[%c336_405, %c0_406] : memref<416x128xf32, #tpu.memory_space<vmem>>, vector<16x128xf32>
    %924 = vector.extract_strided_slice %881 {offsets = [8, 0], sizes = [1, 128], strides = [1, 1]} : vector<16x128xf32> to vector<1x128xf32>
    %925 = vector.broadcast %924 : vector<1x128xf32> to vector<16x128xf32>
    %926 = arith.mulf %923, %925 : vector<16x128xf32>
    %927 = arith.addf %922, %926 : vector<16x128xf32>
    %c352_407 = arith.constant 352 : index
    %c0_408 = arith.constant 0 : index
    %928 = vector.load %arg2[%c352_407, %c0_408] : memref<416x128xf32, #tpu.memory_space<vmem>>, vector<16x128xf32>
    %929 = vector.extract_strided_slice %881 {offsets = [9, 0], sizes = [1, 128], strides = [1, 1]} : vector<16x128xf32> to vector<1x128xf32>
    %930 = vector.broadcast %929 : vector<1x128xf32> to vector<16x128xf32>
    %931 = arith.mulf %928, %930 : vector<16x128xf32>
    %932 = arith.addf %927, %931 : vector<16x128xf32>
    %cst_409 = arith.constant 5.000000e-01 : f32
    %933 = vector.broadcast %cst_409 : f32 to vector<16x128xf32>
    %934 = arith.mulf %933, %932 : vector<16x128xf32>
    %935 = math.tanh %934 : vector<16x128xf32>
    %cst_410 = arith.constant 5.000000e-01 : f32
    %936 = vector.broadcast %cst_410 : f32 to vector<16x128xf32>
    %937 = arith.mulf %936, %935 : vector<16x128xf32>
    %cst_411 = arith.constant 5.000000e-01 : f32
    %938 = vector.broadcast %cst_411 : f32 to vector<16x128xf32>
    %939 = arith.addf %937, %938 : vector<16x128xf32>
    %c384_412 = arith.constant 384 : index
    %c0_413 = arith.constant 0 : index
    %940 = vector.load %arg2[%c384_412, %c0_413] : memref<416x128xf32, #tpu.memory_space<vmem>>, vector<16x128xf32>
    %941 = arith.mulf %940, %939 : vector<16x128xf32>
    %cst_414 = arith.constant dense<0.000000e+00> : vector<128xf32>
    %942 = vector.multi_reduction <add>, %941, %cst_414 [0] : vector<16x128xf32> to vector<128xf32>
    %943 = vector.shape_cast %942 : vector<128xf32> to vector<1x128xf32>
    %944 = arith.addf %943, %0 : vector<1x128xf32>
    %c6_415 = arith.constant 6 : index
    %c0_416 = arith.constant 0 : index
    %945 = vector.load %arg3[%c6_415, %c0_416] : memref<16x128xf32, #tpu.memory_space<vmem>>, vector<1x128xf32>
    tpu.vector_store %arg3[%c6_415, %c0_416], %944 {strides = array<i32>} : memref<16x128xf32, #tpu.memory_space<vmem>>, vector<1x128xf32>,
    %c7 = arith.constant 7 : index
    %c0_417 = arith.constant 0 : index
    %946 = vector.load %arg1[%c7, %c0_417] : memref<16x128xf32, #tpu.memory_space<vmem>>, vector<1x128xf32>
    %c0_418 = arith.constant 0 : index
    %c0_419 = arith.constant 0 : index
    %947 = vector.load %arg2[%c0_418, %c0_419] : memref<416x128xf32, #tpu.memory_space<vmem>>, vector<16x128xf32>
    %948 = vector.broadcast %946 : vector<1x128xf32> to vector<16x128xf32>
    %949 = arith.mulf %947, %948 : vector<16x128xf32>
    %c16_420 = arith.constant 16 : index
    %c0_421 = arith.constant 0 : index
    %950 = vector.load %arg2[%c16_420, %c0_421] : memref<416x128xf32, #tpu.memory_space<vmem>>, vector<16x128xf32>
    %951 = arith.addf %949, %950 : vector<16x128xf32>
    %cst_422 = arith.constant 5.000000e-01 : f32
    %952 = vector.broadcast %cst_422 : f32 to vector<16x128xf32>
    %953 = arith.mulf %952, %951 : vector<16x128xf32>
    %954 = math.tanh %953 : vector<16x128xf32>
    %cst_423 = arith.constant 5.000000e-01 : f32
    %955 = vector.broadcast %cst_423 : f32 to vector<16x128xf32>
    %956 = arith.mulf %955, %954 : vector<16x128xf32>
    %cst_424 = arith.constant 5.000000e-01 : f32
    %957 = vector.broadcast %cst_424 : f32 to vector<16x128xf32>
    %958 = arith.addf %956, %957 : vector<16x128xf32>
    %c192_425 = arith.constant 192 : index
    %c0_426 = arith.constant 0 : index
    %959 = vector.load %arg2[%c192_425, %c0_426] : memref<416x128xf32, #tpu.memory_space<vmem>>, vector<16x128xf32>
    %c32_427 = arith.constant 32 : index
    %c0_428 = arith.constant 0 : index
    %960 = vector.load %arg2[%c32_427, %c0_428] : memref<416x128xf32, #tpu.memory_space<vmem>>, vector<16x128xf32>
    %961 = vector.extract_strided_slice %958 {offsets = [0, 0], sizes = [1, 128], strides = [1, 1]} : vector<16x128xf32> to vector<1x128xf32>
    %962 = vector.broadcast %961 : vector<1x128xf32> to vector<16x128xf32>
    %963 = arith.mulf %960, %962 : vector<16x128xf32>
    %964 = arith.addf %959, %963 : vector<16x128xf32>
    %c48_429 = arith.constant 48 : index
    %c0_430 = arith.constant 0 : index
    %965 = vector.load %arg2[%c48_429, %c0_430] : memref<416x128xf32, #tpu.memory_space<vmem>>, vector<16x128xf32>
    %966 = vector.extract_strided_slice %958 {offsets = [1, 0], sizes = [1, 128], strides = [1, 1]} : vector<16x128xf32> to vector<1x128xf32>
    %967 = vector.broadcast %966 : vector<1x128xf32> to vector<16x128xf32>
    %968 = arith.mulf %965, %967 : vector<16x128xf32>
    %969 = arith.addf %964, %968 : vector<16x128xf32>
    %c64_431 = arith.constant 64 : index
    %c0_432 = arith.constant 0 : index
    %970 = vector.load %arg2[%c64_431, %c0_432] : memref<416x128xf32, #tpu.memory_space<vmem>>, vector<16x128xf32>
    %971 = vector.extract_strided_slice %958 {offsets = [2, 0], sizes = [1, 128], strides = [1, 1]} : vector<16x128xf32> to vector<1x128xf32>
    %972 = vector.broadcast %971 : vector<1x128xf32> to vector<16x128xf32>
    %973 = arith.mulf %970, %972 : vector<16x128xf32>
    %974 = arith.addf %969, %973 : vector<16x128xf32>
    %c80_433 = arith.constant 80 : index
    %c0_434 = arith.constant 0 : index
    %975 = vector.load %arg2[%c80_433, %c0_434] : memref<416x128xf32, #tpu.memory_space<vmem>>, vector<16x128xf32>
    %976 = vector.extract_strided_slice %958 {offsets = [3, 0], sizes = [1, 128], strides = [1, 1]} : vector<16x128xf32> to vector<1x128xf32>
    %977 = vector.broadcast %976 : vector<1x128xf32> to vector<16x128xf32>
    %978 = arith.mulf %975, %977 : vector<16x128xf32>
    %979 = arith.addf %974, %978 : vector<16x128xf32>
    %c96_435 = arith.constant 96 : index
    %c0_436 = arith.constant 0 : index
    %980 = vector.load %arg2[%c96_435, %c0_436] : memref<416x128xf32, #tpu.memory_space<vmem>>, vector<16x128xf32>
    %981 = vector.extract_strided_slice %958 {offsets = [4, 0], sizes = [1, 128], strides = [1, 1]} : vector<16x128xf32> to vector<1x128xf32>
    %982 = vector.broadcast %981 : vector<1x128xf32> to vector<16x128xf32>
    %983 = arith.mulf %980, %982 : vector<16x128xf32>
    %984 = arith.addf %979, %983 : vector<16x128xf32>
    %c112_437 = arith.constant 112 : index
    %c0_438 = arith.constant 0 : index
    %985 = vector.load %arg2[%c112_437, %c0_438] : memref<416x128xf32, #tpu.memory_space<vmem>>, vector<16x128xf32>
    %986 = vector.extract_strided_slice %958 {offsets = [5, 0], sizes = [1, 128], strides = [1, 1]} : vector<16x128xf32> to vector<1x128xf32>
    %987 = vector.broadcast %986 : vector<1x128xf32> to vector<16x128xf32>
    %988 = arith.mulf %985, %987 : vector<16x128xf32>
    %989 = arith.addf %984, %988 : vector<16x128xf32>
    %c128_439 = arith.constant 128 : index
    %c0_440 = arith.constant 0 : index
    %990 = vector.load %arg2[%c128_439, %c0_440] : memref<416x128xf32, #tpu.memory_space<vmem>>, vector<16x128xf32>
    %991 = vector.extract_strided_slice %958 {offsets = [6, 0], sizes = [1, 128], strides = [1, 1]} : vector<16x128xf32> to vector<1x128xf32>
    %992 = vector.broadcast %991 : vector<1x128xf32> to vector<16x128xf32>
    %993 = arith.mulf %990, %992 : vector<16x128xf32>
    %994 = arith.addf %989, %993 : vector<16x128xf32>
    %c144_441 = arith.constant 144 : index
    %c0_442 = arith.constant 0 : index
    %995 = vector.load %arg2[%c144_441, %c0_442] : memref<416x128xf32, #tpu.memory_space<vmem>>, vector<16x128xf32>
    %996 = vector.extract_strided_slice %958 {offsets = [7, 0], sizes = [1, 128], strides = [1, 1]} : vector<16x128xf32> to vector<1x128xf32>
    %997 = vector.broadcast %996 : vector<1x128xf32> to vector<16x128xf32>
    %998 = arith.mulf %995, %997 : vector<16x128xf32>
    %999 = arith.addf %994, %998 : vector<16x128xf32>
    %c160_443 = arith.constant 160 : index
    %c0_444 = arith.constant 0 : index
    %1000 = vector.load %arg2[%c160_443, %c0_444] : memref<416x128xf32, #tpu.memory_space<vmem>>, vector<16x128xf32>
    %1001 = vector.extract_strided_slice %958 {offsets = [8, 0], sizes = [1, 128], strides = [1, 1]} : vector<16x128xf32> to vector<1x128xf32>
    %1002 = vector.broadcast %1001 : vector<1x128xf32> to vector<16x128xf32>
    %1003 = arith.mulf %1000, %1002 : vector<16x128xf32>
    %1004 = arith.addf %999, %1003 : vector<16x128xf32>
    %c176_445 = arith.constant 176 : index
    %c0_446 = arith.constant 0 : index
    %1005 = vector.load %arg2[%c176_445, %c0_446] : memref<416x128xf32, #tpu.memory_space<vmem>>, vector<16x128xf32>
    %1006 = vector.extract_strided_slice %958 {offsets = [9, 0], sizes = [1, 128], strides = [1, 1]} : vector<16x128xf32> to vector<1x128xf32>
    %1007 = vector.broadcast %1006 : vector<1x128xf32> to vector<16x128xf32>
    %1008 = arith.mulf %1005, %1007 : vector<16x128xf32>
    %1009 = arith.addf %1004, %1008 : vector<16x128xf32>
    %cst_447 = arith.constant 5.000000e-01 : f32
    %1010 = vector.broadcast %cst_447 : f32 to vector<16x128xf32>
    %1011 = arith.mulf %1010, %1009 : vector<16x128xf32>
    %1012 = math.tanh %1011 : vector<16x128xf32>
    %cst_448 = arith.constant 5.000000e-01 : f32
    %1013 = vector.broadcast %cst_448 : f32 to vector<16x128xf32>
    %1014 = arith.mulf %1013, %1012 : vector<16x128xf32>
    %cst_449 = arith.constant 5.000000e-01 : f32
    %1015 = vector.broadcast %cst_449 : f32 to vector<16x128xf32>
    %1016 = arith.addf %1014, %1015 : vector<16x128xf32>
    %c368_450 = arith.constant 368 : index
    %c0_451 = arith.constant 0 : index
    %1017 = vector.load %arg2[%c368_450, %c0_451] : memref<416x128xf32, #tpu.memory_space<vmem>>, vector<16x128xf32>
    %c208_452 = arith.constant 208 : index
    %c0_453 = arith.constant 0 : index
    %1018 = vector.load %arg2[%c208_452, %c0_453] : memref<416x128xf32, #tpu.memory_space<vmem>>, vector<16x128xf32>
    %1019 = vector.extract_strided_slice %1016 {offsets = [0, 0], sizes = [1, 128], strides = [1, 1]} : vector<16x128xf32> to vector<1x128xf32>
    %1020 = vector.broadcast %1019 : vector<1x128xf32> to vector<16x128xf32>
    %1021 = arith.mulf %1018, %1020 : vector<16x128xf32>
    %1022 = arith.addf %1017, %1021 : vector<16x128xf32>
    %c224_454 = arith.constant 224 : index
    %c0_455 = arith.constant 0 : index
    %1023 = vector.load %arg2[%c224_454, %c0_455] : memref<416x128xf32, #tpu.memory_space<vmem>>, vector<16x128xf32>
    %1024 = vector.extract_strided_slice %1016 {offsets = [1, 0], sizes = [1, 128], strides = [1, 1]} : vector<16x128xf32> to vector<1x128xf32>
    %1025 = vector.broadcast %1024 : vector<1x128xf32> to vector<16x128xf32>
    %1026 = arith.mulf %1023, %1025 : vector<16x128xf32>
    %1027 = arith.addf %1022, %1026 : vector<16x128xf32>
    %c240_456 = arith.constant 240 : index
    %c0_457 = arith.constant 0 : index
    %1028 = vector.load %arg2[%c240_456, %c0_457] : memref<416x128xf32, #tpu.memory_space<vmem>>, vector<16x128xf32>
    %1029 = vector.extract_strided_slice %1016 {offsets = [2, 0], sizes = [1, 128], strides = [1, 1]} : vector<16x128xf32> to vector<1x128xf32>
    %1030 = vector.broadcast %1029 : vector<1x128xf32> to vector<16x128xf32>
    %1031 = arith.mulf %1028, %1030 : vector<16x128xf32>
    %1032 = arith.addf %1027, %1031 : vector<16x128xf32>
    %c256_458 = arith.constant 256 : index
    %c0_459 = arith.constant 0 : index
    %1033 = vector.load %arg2[%c256_458, %c0_459] : memref<416x128xf32, #tpu.memory_space<vmem>>, vector<16x128xf32>
    %1034 = vector.extract_strided_slice %1016 {offsets = [3, 0], sizes = [1, 128], strides = [1, 1]} : vector<16x128xf32> to vector<1x128xf32>
    %1035 = vector.broadcast %1034 : vector<1x128xf32> to vector<16x128xf32>
    %1036 = arith.mulf %1033, %1035 : vector<16x128xf32>
    %1037 = arith.addf %1032, %1036 : vector<16x128xf32>
    %c272_460 = arith.constant 272 : index
    %c0_461 = arith.constant 0 : index
    %1038 = vector.load %arg2[%c272_460, %c0_461] : memref<416x128xf32, #tpu.memory_space<vmem>>, vector<16x128xf32>
    %1039 = vector.extract_strided_slice %1016 {offsets = [4, 0], sizes = [1, 128], strides = [1, 1]} : vector<16x128xf32> to vector<1x128xf32>
    %1040 = vector.broadcast %1039 : vector<1x128xf32> to vector<16x128xf32>
    %1041 = arith.mulf %1038, %1040 : vector<16x128xf32>
    %1042 = arith.addf %1037, %1041 : vector<16x128xf32>
    %c288_462 = arith.constant 288 : index
    %c0_463 = arith.constant 0 : index
    %1043 = vector.load %arg2[%c288_462, %c0_463] : memref<416x128xf32, #tpu.memory_space<vmem>>, vector<16x128xf32>
    %1044 = vector.extract_strided_slice %1016 {offsets = [5, 0], sizes = [1, 128], strides = [1, 1]} : vector<16x128xf32> to vector<1x128xf32>
    %1045 = vector.broadcast %1044 : vector<1x128xf32> to vector<16x128xf32>
    %1046 = arith.mulf %1043, %1045 : vector<16x128xf32>
    %1047 = arith.addf %1042, %1046 : vector<16x128xf32>
    %c304_464 = arith.constant 304 : index
    %c0_465 = arith.constant 0 : index
    %1048 = vector.load %arg2[%c304_464, %c0_465] : memref<416x128xf32, #tpu.memory_space<vmem>>, vector<16x128xf32>
    %1049 = vector.extract_strided_slice %1016 {offsets = [6, 0], sizes = [1, 128], strides = [1, 1]} : vector<16x128xf32> to vector<1x128xf32>
    %1050 = vector.broadcast %1049 : vector<1x128xf32> to vector<16x128xf32>
    %1051 = arith.mulf %1048, %1050 : vector<16x128xf32>
    %1052 = arith.addf %1047, %1051 : vector<16x128xf32>
    %c320_466 = arith.constant 320 : index
    %c0_467 = arith.constant 0 : index
    %1053 = vector.load %arg2[%c320_466, %c0_467] : memref<416x128xf32, #tpu.memory_space<vmem>>, vector<16x128xf32>
    %1054 = vector.extract_strided_slice %1016 {offsets = [7, 0], sizes = [1, 128], strides = [1, 1]} : vector<16x128xf32> to vector<1x128xf32>
    %1055 = vector.broadcast %1054 : vector<1x128xf32> to vector<16x128xf32>
    %1056 = arith.mulf %1053, %1055 : vector<16x128xf32>
    %1057 = arith.addf %1052, %1056 : vector<16x128xf32>
    %c336_468 = arith.constant 336 : index
    %c0_469 = arith.constant 0 : index
    %1058 = vector.load %arg2[%c336_468, %c0_469] : memref<416x128xf32, #tpu.memory_space<vmem>>, vector<16x128xf32>
    %1059 = vector.extract_strided_slice %1016 {offsets = [8, 0], sizes = [1, 128], strides = [1, 1]} : vector<16x128xf32> to vector<1x128xf32>
    %1060 = vector.broadcast %1059 : vector<1x128xf32> to vector<16x128xf32>
    %1061 = arith.mulf %1058, %1060 : vector<16x128xf32>
    %1062 = arith.addf %1057, %1061 : vector<16x128xf32>
    %c352_470 = arith.constant 352 : index
    %c0_471 = arith.constant 0 : index
    %1063 = vector.load %arg2[%c352_470, %c0_471] : memref<416x128xf32, #tpu.memory_space<vmem>>, vector<16x128xf32>
    %1064 = vector.extract_strided_slice %1016 {offsets = [9, 0], sizes = [1, 128], strides = [1, 1]} : vector<16x128xf32> to vector<1x128xf32>
    %1065 = vector.broadcast %1064 : vector<1x128xf32> to vector<16x128xf32>
    %1066 = arith.mulf %1063, %1065 : vector<16x128xf32>
    %1067 = arith.addf %1062, %1066 : vector<16x128xf32>
    %cst_472 = arith.constant 5.000000e-01 : f32
    %1068 = vector.broadcast %cst_472 : f32 to vector<16x128xf32>
    %1069 = arith.mulf %1068, %1067 : vector<16x128xf32>
    %1070 = math.tanh %1069 : vector<16x128xf32>
    %cst_473 = arith.constant 5.000000e-01 : f32
    %1071 = vector.broadcast %cst_473 : f32 to vector<16x128xf32>
    %1072 = arith.mulf %1071, %1070 : vector<16x128xf32>
    %cst_474 = arith.constant 5.000000e-01 : f32
    %1073 = vector.broadcast %cst_474 : f32 to vector<16x128xf32>
    %1074 = arith.addf %1072, %1073 : vector<16x128xf32>
    %c384_475 = arith.constant 384 : index
    %c0_476 = arith.constant 0 : index
    %1075 = vector.load %arg2[%c384_475, %c0_476] : memref<416x128xf32, #tpu.memory_space<vmem>>, vector<16x128xf32>
    %1076 = arith.mulf %1075, %1074 : vector<16x128xf32>
    %cst_477 = arith.constant dense<0.000000e+00> : vector<128xf32>
    %1077 = vector.multi_reduction <add>, %1076, %cst_477 [0] : vector<16x128xf32> to vector<128xf32>
    %1078 = vector.shape_cast %1077 : vector<128xf32> to vector<1x128xf32>
    %1079 = arith.addf %1078, %0 : vector<1x128xf32>
    %c7_478 = arith.constant 7 : index
    %c0_479 = arith.constant 0 : index
    %1080 = vector.load %arg3[%c7_478, %c0_479] : memref<16x128xf32, #tpu.memory_space<vmem>>, vector<1x128xf32>
    tpu.vector_store %arg3[%c7_478, %c0_479], %1079 {strides = array<i32>} : memref<16x128xf32, #tpu.memory_space<vmem>>, vector<1x128xf32>,
    %c8 = arith.constant 8 : index
    %c0_480 = arith.constant 0 : index
    %1081 = vector.load %arg1[%c8, %c0_480] : memref<16x128xf32, #tpu.memory_space<vmem>>, vector<1x128xf32>
    %c0_481 = arith.constant 0 : index
    %c0_482 = arith.constant 0 : index
    %1082 = vector.load %arg2[%c0_481, %c0_482] : memref<416x128xf32, #tpu.memory_space<vmem>>, vector<16x128xf32>
    %1083 = vector.broadcast %1081 : vector<1x128xf32> to vector<16x128xf32>
    %1084 = arith.mulf %1082, %1083 : vector<16x128xf32>
    %c16_483 = arith.constant 16 : index
    %c0_484 = arith.constant 0 : index
    %1085 = vector.load %arg2[%c16_483, %c0_484] : memref<416x128xf32, #tpu.memory_space<vmem>>, vector<16x128xf32>
    %1086 = arith.addf %1084, %1085 : vector<16x128xf32>
    %cst_485 = arith.constant 5.000000e-01 : f32
    %1087 = vector.broadcast %cst_485 : f32 to vector<16x128xf32>
    %1088 = arith.mulf %1087, %1086 : vector<16x128xf32>
    %1089 = math.tanh %1088 : vector<16x128xf32>
    %cst_486 = arith.constant 5.000000e-01 : f32
    %1090 = vector.broadcast %cst_486 : f32 to vector<16x128xf32>
    %1091 = arith.mulf %1090, %1089 : vector<16x128xf32>
    %cst_487 = arith.constant 5.000000e-01 : f32
    %1092 = vector.broadcast %cst_487 : f32 to vector<16x128xf32>
    %1093 = arith.addf %1091, %1092 : vector<16x128xf32>
    %c192_488 = arith.constant 192 : index
    %c0_489 = arith.constant 0 : index
    %1094 = vector.load %arg2[%c192_488, %c0_489] : memref<416x128xf32, #tpu.memory_space<vmem>>, vector<16x128xf32>
    %c32_490 = arith.constant 32 : index
    %c0_491 = arith.constant 0 : index
    %1095 = vector.load %arg2[%c32_490, %c0_491] : memref<416x128xf32, #tpu.memory_space<vmem>>, vector<16x128xf32>
    %1096 = vector.extract_strided_slice %1093 {offsets = [0, 0], sizes = [1, 128], strides = [1, 1]} : vector<16x128xf32> to vector<1x128xf32>
    %1097 = vector.broadcast %1096 : vector<1x128xf32> to vector<16x128xf32>
    %1098 = arith.mulf %1095, %1097 : vector<16x128xf32>
    %1099 = arith.addf %1094, %1098 : vector<16x128xf32>
    %c48_492 = arith.constant 48 : index
    %c0_493 = arith.constant 0 : index
    %1100 = vector.load %arg2[%c48_492, %c0_493] : memref<416x128xf32, #tpu.memory_space<vmem>>, vector<16x128xf32>
    %1101 = vector.extract_strided_slice %1093 {offsets = [1, 0], sizes = [1, 128], strides = [1, 1]} : vector<16x128xf32> to vector<1x128xf32>
    %1102 = vector.broadcast %1101 : vector<1x128xf32> to vector<16x128xf32>
    %1103 = arith.mulf %1100, %1102 : vector<16x128xf32>
    %1104 = arith.addf %1099, %1103 : vector<16x128xf32>
    %c64_494 = arith.constant 64 : index
    %c0_495 = arith.constant 0 : index
    %1105 = vector.load %arg2[%c64_494, %c0_495] : memref<416x128xf32, #tpu.memory_space<vmem>>, vector<16x128xf32>
    %1106 = vector.extract_strided_slice %1093 {offsets = [2, 0], sizes = [1, 128], strides = [1, 1]} : vector<16x128xf32> to vector<1x128xf32>
    %1107 = vector.broadcast %1106 : vector<1x128xf32> to vector<16x128xf32>
    %1108 = arith.mulf %1105, %1107 : vector<16x128xf32>
    %1109 = arith.addf %1104, %1108 : vector<16x128xf32>
    %c80_496 = arith.constant 80 : index
    %c0_497 = arith.constant 0 : index
    %1110 = vector.load %arg2[%c80_496, %c0_497] : memref<416x128xf32, #tpu.memory_space<vmem>>, vector<16x128xf32>
    %1111 = vector.extract_strided_slice %1093 {offsets = [3, 0], sizes = [1, 128], strides = [1, 1]} : vector<16x128xf32> to vector<1x128xf32>
    %1112 = vector.broadcast %1111 : vector<1x128xf32> to vector<16x128xf32>
    %1113 = arith.mulf %1110, %1112 : vector<16x128xf32>
    %1114 = arith.addf %1109, %1113 : vector<16x128xf32>
    %c96_498 = arith.constant 96 : index
    %c0_499 = arith.constant 0 : index
    %1115 = vector.load %arg2[%c96_498, %c0_499] : memref<416x128xf32, #tpu.memory_space<vmem>>, vector<16x128xf32>
    %1116 = vector.extract_strided_slice %1093 {offsets = [4, 0], sizes = [1, 128], strides = [1, 1]} : vector<16x128xf32> to vector<1x128xf32>
    %1117 = vector.broadcast %1116 : vector<1x128xf32> to vector<16x128xf32>
    %1118 = arith.mulf %1115, %1117 : vector<16x128xf32>
    %1119 = arith.addf %1114, %1118 : vector<16x128xf32>
    %c112_500 = arith.constant 112 : index
    %c0_501 = arith.constant 0 : index
    %1120 = vector.load %arg2[%c112_500, %c0_501] : memref<416x128xf32, #tpu.memory_space<vmem>>, vector<16x128xf32>
    %1121 = vector.extract_strided_slice %1093 {offsets = [5, 0], sizes = [1, 128], strides = [1, 1]} : vector<16x128xf32> to vector<1x128xf32>
    %1122 = vector.broadcast %1121 : vector<1x128xf32> to vector<16x128xf32>
    %1123 = arith.mulf %1120, %1122 : vector<16x128xf32>
    %1124 = arith.addf %1119, %1123 : vector<16x128xf32>
    %c128_502 = arith.constant 128 : index
    %c0_503 = arith.constant 0 : index
    %1125 = vector.load %arg2[%c128_502, %c0_503] : memref<416x128xf32, #tpu.memory_space<vmem>>, vector<16x128xf32>
    %1126 = vector.extract_strided_slice %1093 {offsets = [6, 0], sizes = [1, 128], strides = [1, 1]} : vector<16x128xf32> to vector<1x128xf32>
    %1127 = vector.broadcast %1126 : vector<1x128xf32> to vector<16x128xf32>
    %1128 = arith.mulf %1125, %1127 : vector<16x128xf32>
    %1129 = arith.addf %1124, %1128 : vector<16x128xf32>
    %c144_504 = arith.constant 144 : index
    %c0_505 = arith.constant 0 : index
    %1130 = vector.load %arg2[%c144_504, %c0_505] : memref<416x128xf32, #tpu.memory_space<vmem>>, vector<16x128xf32>
    %1131 = vector.extract_strided_slice %1093 {offsets = [7, 0], sizes = [1, 128], strides = [1, 1]} : vector<16x128xf32> to vector<1x128xf32>
    %1132 = vector.broadcast %1131 : vector<1x128xf32> to vector<16x128xf32>
    %1133 = arith.mulf %1130, %1132 : vector<16x128xf32>
    %1134 = arith.addf %1129, %1133 : vector<16x128xf32>
    %c160_506 = arith.constant 160 : index
    %c0_507 = arith.constant 0 : index
    %1135 = vector.load %arg2[%c160_506, %c0_507] : memref<416x128xf32, #tpu.memory_space<vmem>>, vector<16x128xf32>
    %1136 = vector.extract_strided_slice %1093 {offsets = [8, 0], sizes = [1, 128], strides = [1, 1]} : vector<16x128xf32> to vector<1x128xf32>
    %1137 = vector.broadcast %1136 : vector<1x128xf32> to vector<16x128xf32>
    %1138 = arith.mulf %1135, %1137 : vector<16x128xf32>
    %1139 = arith.addf %1134, %1138 : vector<16x128xf32>
    %c176_508 = arith.constant 176 : index
    %c0_509 = arith.constant 0 : index
    %1140 = vector.load %arg2[%c176_508, %c0_509] : memref<416x128xf32, #tpu.memory_space<vmem>>, vector<16x128xf32>
    %1141 = vector.extract_strided_slice %1093 {offsets = [9, 0], sizes = [1, 128], strides = [1, 1]} : vector<16x128xf32> to vector<1x128xf32>
    %1142 = vector.broadcast %1141 : vector<1x128xf32> to vector<16x128xf32>
    %1143 = arith.mulf %1140, %1142 : vector<16x128xf32>
    %1144 = arith.addf %1139, %1143 : vector<16x128xf32>
    %cst_510 = arith.constant 5.000000e-01 : f32
    %1145 = vector.broadcast %cst_510 : f32 to vector<16x128xf32>
    %1146 = arith.mulf %1145, %1144 : vector<16x128xf32>
    %1147 = math.tanh %1146 : vector<16x128xf32>
    %cst_511 = arith.constant 5.000000e-01 : f32
    %1148 = vector.broadcast %cst_511 : f32 to vector<16x128xf32>
    %1149 = arith.mulf %1148, %1147 : vector<16x128xf32>
    %cst_512 = arith.constant 5.000000e-01 : f32
    %1150 = vector.broadcast %cst_512 : f32 to vector<16x128xf32>
    %1151 = arith.addf %1149, %1150 : vector<16x128xf32>
    %c368_513 = arith.constant 368 : index
    %c0_514 = arith.constant 0 : index
    %1152 = vector.load %arg2[%c368_513, %c0_514] : memref<416x128xf32, #tpu.memory_space<vmem>>, vector<16x128xf32>
    %c208_515 = arith.constant 208 : index
    %c0_516 = arith.constant 0 : index
    %1153 = vector.load %arg2[%c208_515, %c0_516] : memref<416x128xf32, #tpu.memory_space<vmem>>, vector<16x128xf32>
    %1154 = vector.extract_strided_slice %1151 {offsets = [0, 0], sizes = [1, 128], strides = [1, 1]} : vector<16x128xf32> to vector<1x128xf32>
    %1155 = vector.broadcast %1154 : vector<1x128xf32> to vector<16x128xf32>
    %1156 = arith.mulf %1153, %1155 : vector<16x128xf32>
    %1157 = arith.addf %1152, %1156 : vector<16x128xf32>
    %c224_517 = arith.constant 224 : index
    %c0_518 = arith.constant 0 : index
    %1158 = vector.load %arg2[%c224_517, %c0_518] : memref<416x128xf32, #tpu.memory_space<vmem>>, vector<16x128xf32>
    %1159 = vector.extract_strided_slice %1151 {offsets = [1, 0], sizes = [1, 128], strides = [1, 1]} : vector<16x128xf32> to vector<1x128xf32>
    %1160 = vector.broadcast %1159 : vector<1x128xf32> to vector<16x128xf32>
    %1161 = arith.mulf %1158, %1160 : vector<16x128xf32>
    %1162 = arith.addf %1157, %1161 : vector<16x128xf32>
    %c240_519 = arith.constant 240 : index
    %c0_520 = arith.constant 0 : index
    %1163 = vector.load %arg2[%c240_519, %c0_520] : memref<416x128xf32, #tpu.memory_space<vmem>>, vector<16x128xf32>
    %1164 = vector.extract_strided_slice %1151 {offsets = [2, 0], sizes = [1, 128], strides = [1, 1]} : vector<16x128xf32> to vector<1x128xf32>
    %1165 = vector.broadcast %1164 : vector<1x128xf32> to vector<16x128xf32>
    %1166 = arith.mulf %1163, %1165 : vector<16x128xf32>
    %1167 = arith.addf %1162, %1166 : vector<16x128xf32>
    %c256_521 = arith.constant 256 : index
    %c0_522 = arith.constant 0 : index
    %1168 = vector.load %arg2[%c256_521, %c0_522] : memref<416x128xf32, #tpu.memory_space<vmem>>, vector<16x128xf32>
    %1169 = vector.extract_strided_slice %1151 {offsets = [3, 0], sizes = [1, 128], strides = [1, 1]} : vector<16x128xf32> to vector<1x128xf32>
    %1170 = vector.broadcast %1169 : vector<1x128xf32> to vector<16x128xf32>
    %1171 = arith.mulf %1168, %1170 : vector<16x128xf32>
    %1172 = arith.addf %1167, %1171 : vector<16x128xf32>
    %c272_523 = arith.constant 272 : index
    %c0_524 = arith.constant 0 : index
    %1173 = vector.load %arg2[%c272_523, %c0_524] : memref<416x128xf32, #tpu.memory_space<vmem>>, vector<16x128xf32>
    %1174 = vector.extract_strided_slice %1151 {offsets = [4, 0], sizes = [1, 128], strides = [1, 1]} : vector<16x128xf32> to vector<1x128xf32>
    %1175 = vector.broadcast %1174 : vector<1x128xf32> to vector<16x128xf32>
    %1176 = arith.mulf %1173, %1175 : vector<16x128xf32>
    %1177 = arith.addf %1172, %1176 : vector<16x128xf32>
    %c288_525 = arith.constant 288 : index
    %c0_526 = arith.constant 0 : index
    %1178 = vector.load %arg2[%c288_525, %c0_526] : memref<416x128xf32, #tpu.memory_space<vmem>>, vector<16x128xf32>
    %1179 = vector.extract_strided_slice %1151 {offsets = [5, 0], sizes = [1, 128], strides = [1, 1]} : vector<16x128xf32> to vector<1x128xf32>
    %1180 = vector.broadcast %1179 : vector<1x128xf32> to vector<16x128xf32>
    %1181 = arith.mulf %1178, %1180 : vector<16x128xf32>
    %1182 = arith.addf %1177, %1181 : vector<16x128xf32>
    %c304_527 = arith.constant 304 : index
    %c0_528 = arith.constant 0 : index
    %1183 = vector.load %arg2[%c304_527, %c0_528] : memref<416x128xf32, #tpu.memory_space<vmem>>, vector<16x128xf32>
    %1184 = vector.extract_strided_slice %1151 {offsets = [6, 0], sizes = [1, 128], strides = [1, 1]} : vector<16x128xf32> to vector<1x128xf32>
    %1185 = vector.broadcast %1184 : vector<1x128xf32> to vector<16x128xf32>
    %1186 = arith.mulf %1183, %1185 : vector<16x128xf32>
    %1187 = arith.addf %1182, %1186 : vector<16x128xf32>
    %c320_529 = arith.constant 320 : index
    %c0_530 = arith.constant 0 : index
    %1188 = vector.load %arg2[%c320_529, %c0_530] : memref<416x128xf32, #tpu.memory_space<vmem>>, vector<16x128xf32>
    %1189 = vector.extract_strided_slice %1151 {offsets = [7, 0], sizes = [1, 128], strides = [1, 1]} : vector<16x128xf32> to vector<1x128xf32>
    %1190 = vector.broadcast %1189 : vector<1x128xf32> to vector<16x128xf32>
    %1191 = arith.mulf %1188, %1190 : vector<16x128xf32>
    %1192 = arith.addf %1187, %1191 : vector<16x128xf32>
    %c336_531 = arith.constant 336 : index
    %c0_532 = arith.constant 0 : index
    %1193 = vector.load %arg2[%c336_531, %c0_532] : memref<416x128xf32, #tpu.memory_space<vmem>>, vector<16x128xf32>
    %1194 = vector.extract_strided_slice %1151 {offsets = [8, 0], sizes = [1, 128], strides = [1, 1]} : vector<16x128xf32> to vector<1x128xf32>
    %1195 = vector.broadcast %1194 : vector<1x128xf32> to vector<16x128xf32>
    %1196 = arith.mulf %1193, %1195 : vector<16x128xf32>
    %1197 = arith.addf %1192, %1196 : vector<16x128xf32>
    %c352_533 = arith.constant 352 : index
    %c0_534 = arith.constant 0 : index
    %1198 = vector.load %arg2[%c352_533, %c0_534] : memref<416x128xf32, #tpu.memory_space<vmem>>, vector<16x128xf32>
    %1199 = vector.extract_strided_slice %1151 {offsets = [9, 0], sizes = [1, 128], strides = [1, 1]} : vector<16x128xf32> to vector<1x128xf32>
    %1200 = vector.broadcast %1199 : vector<1x128xf32> to vector<16x128xf32>
    %1201 = arith.mulf %1198, %1200 : vector<16x128xf32>
    %1202 = arith.addf %1197, %1201 : vector<16x128xf32>
    %cst_535 = arith.constant 5.000000e-01 : f32
    %1203 = vector.broadcast %cst_535 : f32 to vector<16x128xf32>
    %1204 = arith.mulf %1203, %1202 : vector<16x128xf32>
    %1205 = math.tanh %1204 : vector<16x128xf32>
    %cst_536 = arith.constant 5.000000e-01 : f32
    %1206 = vector.broadcast %cst_536 : f32 to vector<16x128xf32>
    %1207 = arith.mulf %1206, %1205 : vector<16x128xf32>
    %cst_537 = arith.constant 5.000000e-01 : f32
    %1208 = vector.broadcast %cst_537 : f32 to vector<16x128xf32>
    %1209 = arith.addf %1207, %1208 : vector<16x128xf32>
    %c384_538 = arith.constant 384 : index
    %c0_539 = arith.constant 0 : index
    %1210 = vector.load %arg2[%c384_538, %c0_539] : memref<416x128xf32, #tpu.memory_space<vmem>>, vector<16x128xf32>
    %1211 = arith.mulf %1210, %1209 : vector<16x128xf32>
    %cst_540 = arith.constant dense<0.000000e+00> : vector<128xf32>
    %1212 = vector.multi_reduction <add>, %1211, %cst_540 [0] : vector<16x128xf32> to vector<128xf32>
    %1213 = vector.shape_cast %1212 : vector<128xf32> to vector<1x128xf32>
    %1214 = arith.addf %1213, %0 : vector<1x128xf32>
    %c8_541 = arith.constant 8 : index
    %c0_542 = arith.constant 0 : index
    %1215 = vector.load %arg3[%c8_541, %c0_542] : memref<16x128xf32, #tpu.memory_space<vmem>>, vector<1x128xf32>
    tpu.vector_store %arg3[%c8_541, %c0_542], %1214 {strides = array<i32>} : memref<16x128xf32, #tpu.memory_space<vmem>>, vector<1x128xf32>,
    %c9 = arith.constant 9 : index
    %c0_543 = arith.constant 0 : index
    %1216 = vector.load %arg1[%c9, %c0_543] : memref<16x128xf32, #tpu.memory_space<vmem>>, vector<1x128xf32>
    %c0_544 = arith.constant 0 : index
    %c0_545 = arith.constant 0 : index
    %1217 = vector.load %arg2[%c0_544, %c0_545] : memref<416x128xf32, #tpu.memory_space<vmem>>, vector<16x128xf32>
    %1218 = vector.broadcast %1216 : vector<1x128xf32> to vector<16x128xf32>
    %1219 = arith.mulf %1217, %1218 : vector<16x128xf32>
    %c16_546 = arith.constant 16 : index
    %c0_547 = arith.constant 0 : index
    %1220 = vector.load %arg2[%c16_546, %c0_547] : memref<416x128xf32, #tpu.memory_space<vmem>>, vector<16x128xf32>
    %1221 = arith.addf %1219, %1220 : vector<16x128xf32>
    %cst_548 = arith.constant 5.000000e-01 : f32
    %1222 = vector.broadcast %cst_548 : f32 to vector<16x128xf32>
    %1223 = arith.mulf %1222, %1221 : vector<16x128xf32>
    %1224 = math.tanh %1223 : vector<16x128xf32>
    %cst_549 = arith.constant 5.000000e-01 : f32
    %1225 = vector.broadcast %cst_549 : f32 to vector<16x128xf32>
    %1226 = arith.mulf %1225, %1224 : vector<16x128xf32>
    %cst_550 = arith.constant 5.000000e-01 : f32
    %1227 = vector.broadcast %cst_550 : f32 to vector<16x128xf32>
    %1228 = arith.addf %1226, %1227 : vector<16x128xf32>
    %c192_551 = arith.constant 192 : index
    %c0_552 = arith.constant 0 : index
    %1229 = vector.load %arg2[%c192_551, %c0_552] : memref<416x128xf32, #tpu.memory_space<vmem>>, vector<16x128xf32>
    %c32_553 = arith.constant 32 : index
    %c0_554 = arith.constant 0 : index
    %1230 = vector.load %arg2[%c32_553, %c0_554] : memref<416x128xf32, #tpu.memory_space<vmem>>, vector<16x128xf32>
    %1231 = vector.extract_strided_slice %1228 {offsets = [0, 0], sizes = [1, 128], strides = [1, 1]} : vector<16x128xf32> to vector<1x128xf32>
    %1232 = vector.broadcast %1231 : vector<1x128xf32> to vector<16x128xf32>
    %1233 = arith.mulf %1230, %1232 : vector<16x128xf32>
    %1234 = arith.addf %1229, %1233 : vector<16x128xf32>
    %c48_555 = arith.constant 48 : index
    %c0_556 = arith.constant 0 : index
    %1235 = vector.load %arg2[%c48_555, %c0_556] : memref<416x128xf32, #tpu.memory_space<vmem>>, vector<16x128xf32>
    %1236 = vector.extract_strided_slice %1228 {offsets = [1, 0], sizes = [1, 128], strides = [1, 1]} : vector<16x128xf32> to vector<1x128xf32>
    %1237 = vector.broadcast %1236 : vector<1x128xf32> to vector<16x128xf32>
    %1238 = arith.mulf %1235, %1237 : vector<16x128xf32>
    %1239 = arith.addf %1234, %1238 : vector<16x128xf32>
    %c64_557 = arith.constant 64 : index
    %c0_558 = arith.constant 0 : index
    %1240 = vector.load %arg2[%c64_557, %c0_558] : memref<416x128xf32, #tpu.memory_space<vmem>>, vector<16x128xf32>
    %1241 = vector.extract_strided_slice %1228 {offsets = [2, 0], sizes = [1, 128], strides = [1, 1]} : vector<16x128xf32> to vector<1x128xf32>
    %1242 = vector.broadcast %1241 : vector<1x128xf32> to vector<16x128xf32>
    %1243 = arith.mulf %1240, %1242 : vector<16x128xf32>
    %1244 = arith.addf %1239, %1243 : vector<16x128xf32>
    %c80_559 = arith.constant 80 : index
    %c0_560 = arith.constant 0 : index
    %1245 = vector.load %arg2[%c80_559, %c0_560] : memref<416x128xf32, #tpu.memory_space<vmem>>, vector<16x128xf32>
    %1246 = vector.extract_strided_slice %1228 {offsets = [3, 0], sizes = [1, 128], strides = [1, 1]} : vector<16x128xf32> to vector<1x128xf32>
    %1247 = vector.broadcast %1246 : vector<1x128xf32> to vector<16x128xf32>
    %1248 = arith.mulf %1245, %1247 : vector<16x128xf32>
    %1249 = arith.addf %1244, %1248 : vector<16x128xf32>
    %c96_561 = arith.constant 96 : index
    %c0_562 = arith.constant 0 : index
    %1250 = vector.load %arg2[%c96_561, %c0_562] : memref<416x128xf32, #tpu.memory_space<vmem>>, vector<16x128xf32>
    %1251 = vector.extract_strided_slice %1228 {offsets = [4, 0], sizes = [1, 128], strides = [1, 1]} : vector<16x128xf32> to vector<1x128xf32>
    %1252 = vector.broadcast %1251 : vector<1x128xf32> to vector<16x128xf32>
    %1253 = arith.mulf %1250, %1252 : vector<16x128xf32>
    %1254 = arith.addf %1249, %1253 : vector<16x128xf32>
    %c112_563 = arith.constant 112 : index
    %c0_564 = arith.constant 0 : index
    %1255 = vector.load %arg2[%c112_563, %c0_564] : memref<416x128xf32, #tpu.memory_space<vmem>>, vector<16x128xf32>
    %1256 = vector.extract_strided_slice %1228 {offsets = [5, 0], sizes = [1, 128], strides = [1, 1]} : vector<16x128xf32> to vector<1x128xf32>
    %1257 = vector.broadcast %1256 : vector<1x128xf32> to vector<16x128xf32>
    %1258 = arith.mulf %1255, %1257 : vector<16x128xf32>
    %1259 = arith.addf %1254, %1258 : vector<16x128xf32>
    %c128_565 = arith.constant 128 : index
    %c0_566 = arith.constant 0 : index
    %1260 = vector.load %arg2[%c128_565, %c0_566] : memref<416x128xf32, #tpu.memory_space<vmem>>, vector<16x128xf32>
    %1261 = vector.extract_strided_slice %1228 {offsets = [6, 0], sizes = [1, 128], strides = [1, 1]} : vector<16x128xf32> to vector<1x128xf32>
    %1262 = vector.broadcast %1261 : vector<1x128xf32> to vector<16x128xf32>
    %1263 = arith.mulf %1260, %1262 : vector<16x128xf32>
    %1264 = arith.addf %1259, %1263 : vector<16x128xf32>
    %c144_567 = arith.constant 144 : index
    %c0_568 = arith.constant 0 : index
    %1265 = vector.load %arg2[%c144_567, %c0_568] : memref<416x128xf32, #tpu.memory_space<vmem>>, vector<16x128xf32>
    %1266 = vector.extract_strided_slice %1228 {offsets = [7, 0], sizes = [1, 128], strides = [1, 1]} : vector<16x128xf32> to vector<1x128xf32>
    %1267 = vector.broadcast %1266 : vector<1x128xf32> to vector<16x128xf32>
    %1268 = arith.mulf %1265, %1267 : vector<16x128xf32>
    %1269 = arith.addf %1264, %1268 : vector<16x128xf32>
    %c160_569 = arith.constant 160 : index
    %c0_570 = arith.constant 0 : index
    %1270 = vector.load %arg2[%c160_569, %c0_570] : memref<416x128xf32, #tpu.memory_space<vmem>>, vector<16x128xf32>
    %1271 = vector.extract_strided_slice %1228 {offsets = [8, 0], sizes = [1, 128], strides = [1, 1]} : vector<16x128xf32> to vector<1x128xf32>
    %1272 = vector.broadcast %1271 : vector<1x128xf32> to vector<16x128xf32>
    %1273 = arith.mulf %1270, %1272 : vector<16x128xf32>
    %1274 = arith.addf %1269, %1273 : vector<16x128xf32>
    %c176_571 = arith.constant 176 : index
    %c0_572 = arith.constant 0 : index
    %1275 = vector.load %arg2[%c176_571, %c0_572] : memref<416x128xf32, #tpu.memory_space<vmem>>, vector<16x128xf32>
    %1276 = vector.extract_strided_slice %1228 {offsets = [9, 0], sizes = [1, 128], strides = [1, 1]} : vector<16x128xf32> to vector<1x128xf32>
    %1277 = vector.broadcast %1276 : vector<1x128xf32> to vector<16x128xf32>
    %1278 = arith.mulf %1275, %1277 : vector<16x128xf32>
    %1279 = arith.addf %1274, %1278 : vector<16x128xf32>
    %cst_573 = arith.constant 5.000000e-01 : f32
    %1280 = vector.broadcast %cst_573 : f32 to vector<16x128xf32>
    %1281 = arith.mulf %1280, %1279 : vector<16x128xf32>
    %1282 = math.tanh %1281 : vector<16x128xf32>
    %cst_574 = arith.constant 5.000000e-01 : f32
    %1283 = vector.broadcast %cst_574 : f32 to vector<16x128xf32>
    %1284 = arith.mulf %1283, %1282 : vector<16x128xf32>
    %cst_575 = arith.constant 5.000000e-01 : f32
    %1285 = vector.broadcast %cst_575 : f32 to vector<16x128xf32>
    %1286 = arith.addf %1284, %1285 : vector<16x128xf32>
    %c368_576 = arith.constant 368 : index
    %c0_577 = arith.constant 0 : index
    %1287 = vector.load %arg2[%c368_576, %c0_577] : memref<416x128xf32, #tpu.memory_space<vmem>>, vector<16x128xf32>
    %c208_578 = arith.constant 208 : index
    %c0_579 = arith.constant 0 : index
    %1288 = vector.load %arg2[%c208_578, %c0_579] : memref<416x128xf32, #tpu.memory_space<vmem>>, vector<16x128xf32>
    %1289 = vector.extract_strided_slice %1286 {offsets = [0, 0], sizes = [1, 128], strides = [1, 1]} : vector<16x128xf32> to vector<1x128xf32>
    %1290 = vector.broadcast %1289 : vector<1x128xf32> to vector<16x128xf32>
    %1291 = arith.mulf %1288, %1290 : vector<16x128xf32>
    %1292 = arith.addf %1287, %1291 : vector<16x128xf32>
    %c224_580 = arith.constant 224 : index
    %c0_581 = arith.constant 0 : index
    %1293 = vector.load %arg2[%c224_580, %c0_581] : memref<416x128xf32, #tpu.memory_space<vmem>>, vector<16x128xf32>
    %1294 = vector.extract_strided_slice %1286 {offsets = [1, 0], sizes = [1, 128], strides = [1, 1]} : vector<16x128xf32> to vector<1x128xf32>
    %1295 = vector.broadcast %1294 : vector<1x128xf32> to vector<16x128xf32>
    %1296 = arith.mulf %1293, %1295 : vector<16x128xf32>
    %1297 = arith.addf %1292, %1296 : vector<16x128xf32>
    %c240_582 = arith.constant 240 : index
    %c0_583 = arith.constant 0 : index
    %1298 = vector.load %arg2[%c240_582, %c0_583] : memref<416x128xf32, #tpu.memory_space<vmem>>, vector<16x128xf32>
    %1299 = vector.extract_strided_slice %1286 {offsets = [2, 0], sizes = [1, 128], strides = [1, 1]} : vector<16x128xf32> to vector<1x128xf32>
    %1300 = vector.broadcast %1299 : vector<1x128xf32> to vector<16x128xf32>
    %1301 = arith.mulf %1298, %1300 : vector<16x128xf32>
    %1302 = arith.addf %1297, %1301 : vector<16x128xf32>
    %c256_584 = arith.constant 256 : index
    %c0_585 = arith.constant 0 : index
    %1303 = vector.load %arg2[%c256_584, %c0_585] : memref<416x128xf32, #tpu.memory_space<vmem>>, vector<16x128xf32>
    %1304 = vector.extract_strided_slice %1286 {offsets = [3, 0], sizes = [1, 128], strides = [1, 1]} : vector<16x128xf32> to vector<1x128xf32>
    %1305 = vector.broadcast %1304 : vector<1x128xf32> to vector<16x128xf32>
    %1306 = arith.mulf %1303, %1305 : vector<16x128xf32>
    %1307 = arith.addf %1302, %1306 : vector<16x128xf32>
    %c272_586 = arith.constant 272 : index
    %c0_587 = arith.constant 0 : index
    %1308 = vector.load %arg2[%c272_586, %c0_587] : memref<416x128xf32, #tpu.memory_space<vmem>>, vector<16x128xf32>
    %1309 = vector.extract_strided_slice %1286 {offsets = [4, 0], sizes = [1, 128], strides = [1, 1]} : vector<16x128xf32> to vector<1x128xf32>
    %1310 = vector.broadcast %1309 : vector<1x128xf32> to vector<16x128xf32>
    %1311 = arith.mulf %1308, %1310 : vector<16x128xf32>
    %1312 = arith.addf %1307, %1311 : vector<16x128xf32>
    %c288_588 = arith.constant 288 : index
    %c0_589 = arith.constant 0 : index
    %1313 = vector.load %arg2[%c288_588, %c0_589] : memref<416x128xf32, #tpu.memory_space<vmem>>, vector<16x128xf32>
    %1314 = vector.extract_strided_slice %1286 {offsets = [5, 0], sizes = [1, 128], strides = [1, 1]} : vector<16x128xf32> to vector<1x128xf32>
    %1315 = vector.broadcast %1314 : vector<1x128xf32> to vector<16x128xf32>
    %1316 = arith.mulf %1313, %1315 : vector<16x128xf32>
    %1317 = arith.addf %1312, %1316 : vector<16x128xf32>
    %c304_590 = arith.constant 304 : index
    %c0_591 = arith.constant 0 : index
    %1318 = vector.load %arg2[%c304_590, %c0_591] : memref<416x128xf32, #tpu.memory_space<vmem>>, vector<16x128xf32>
    %1319 = vector.extract_strided_slice %1286 {offsets = [6, 0], sizes = [1, 128], strides = [1, 1]} : vector<16x128xf32> to vector<1x128xf32>
    %1320 = vector.broadcast %1319 : vector<1x128xf32> to vector<16x128xf32>
    %1321 = arith.mulf %1318, %1320 : vector<16x128xf32>
    %1322 = arith.addf %1317, %1321 : vector<16x128xf32>
    %c320_592 = arith.constant 320 : index
    %c0_593 = arith.constant 0 : index
    %1323 = vector.load %arg2[%c320_592, %c0_593] : memref<416x128xf32, #tpu.memory_space<vmem>>, vector<16x128xf32>
    %1324 = vector.extract_strided_slice %1286 {offsets = [7, 0], sizes = [1, 128], strides = [1, 1]} : vector<16x128xf32> to vector<1x128xf32>
    %1325 = vector.broadcast %1324 : vector<1x128xf32> to vector<16x128xf32>
    %1326 = arith.mulf %1323, %1325 : vector<16x128xf32>
    %1327 = arith.addf %1322, %1326 : vector<16x128xf32>
    %c336_594 = arith.constant 336 : index
    %c0_595 = arith.constant 0 : index
    %1328 = vector.load %arg2[%c336_594, %c0_595] : memref<416x128xf32, #tpu.memory_space<vmem>>, vector<16x128xf32>
    %1329 = vector.extract_strided_slice %1286 {offsets = [8, 0], sizes = [1, 128], strides = [1, 1]} : vector<16x128xf32> to vector<1x128xf32>
    %1330 = vector.broadcast %1329 : vector<1x128xf32> to vector<16x128xf32>
    %1331 = arith.mulf %1328, %1330 : vector<16x128xf32>
    %1332 = arith.addf %1327, %1331 : vector<16x128xf32>
    %c352_596 = arith.constant 352 : index
    %c0_597 = arith.constant 0 : index
    %1333 = vector.load %arg2[%c352_596, %c0_597] : memref<416x128xf32, #tpu.memory_space<vmem>>, vector<16x128xf32>
    %1334 = vector.extract_strided_slice %1286 {offsets = [9, 0], sizes = [1, 128], strides = [1, 1]} : vector<16x128xf32> to vector<1x128xf32>
    %1335 = vector.broadcast %1334 : vector<1x128xf32> to vector<16x128xf32>
    %1336 = arith.mulf %1333, %1335 : vector<16x128xf32>
    %1337 = arith.addf %1332, %1336 : vector<16x128xf32>
    %cst_598 = arith.constant 5.000000e-01 : f32
    %1338 = vector.broadcast %cst_598 : f32 to vector<16x128xf32>
    %1339 = arith.mulf %1338, %1337 : vector<16x128xf32>
    %1340 = math.tanh %1339 : vector<16x128xf32>
    %cst_599 = arith.constant 5.000000e-01 : f32
    %1341 = vector.broadcast %cst_599 : f32 to vector<16x128xf32>
    %1342 = arith.mulf %1341, %1340 : vector<16x128xf32>
    %cst_600 = arith.constant 5.000000e-01 : f32
    %1343 = vector.broadcast %cst_600 : f32 to vector<16x128xf32>
    %1344 = arith.addf %1342, %1343 : vector<16x128xf32>
    %c384_601 = arith.constant 384 : index
    %c0_602 = arith.constant 0 : index
    %1345 = vector.load %arg2[%c384_601, %c0_602] : memref<416x128xf32, #tpu.memory_space<vmem>>, vector<16x128xf32>
    %1346 = arith.mulf %1345, %1344 : vector<16x128xf32>
    %cst_603 = arith.constant dense<0.000000e+00> : vector<128xf32>
    %1347 = vector.multi_reduction <add>, %1346, %cst_603 [0] : vector<16x128xf32> to vector<128xf32>
    %1348 = vector.shape_cast %1347 : vector<128xf32> to vector<1x128xf32>
    %1349 = arith.addf %1348, %0 : vector<1x128xf32>
    %c9_604 = arith.constant 9 : index
    %c0_605 = arith.constant 0 : index
    %1350 = vector.load %arg3[%c9_604, %c0_605] : memref<16x128xf32, #tpu.memory_space<vmem>>, vector<1x128xf32>
    tpu.vector_store %arg3[%c9_604, %c0_605], %1349 {strides = array<i32>} : memref<16x128xf32, #tpu.memory_space<vmem>>, vector<1x128xf32>,
    %c10 = arith.constant 10 : index
    %c0_606 = arith.constant 0 : index
    %1351 = vector.load %arg1[%c10, %c0_606] : memref<16x128xf32, #tpu.memory_space<vmem>>, vector<1x128xf32>
    %c0_607 = arith.constant 0 : index
    %c0_608 = arith.constant 0 : index
    %1352 = vector.load %arg2[%c0_607, %c0_608] : memref<416x128xf32, #tpu.memory_space<vmem>>, vector<16x128xf32>
    %1353 = vector.broadcast %1351 : vector<1x128xf32> to vector<16x128xf32>
    %1354 = arith.mulf %1352, %1353 : vector<16x128xf32>
    %c16_609 = arith.constant 16 : index
    %c0_610 = arith.constant 0 : index
    %1355 = vector.load %arg2[%c16_609, %c0_610] : memref<416x128xf32, #tpu.memory_space<vmem>>, vector<16x128xf32>
    %1356 = arith.addf %1354, %1355 : vector<16x128xf32>
    %cst_611 = arith.constant 5.000000e-01 : f32
    %1357 = vector.broadcast %cst_611 : f32 to vector<16x128xf32>
    %1358 = arith.mulf %1357, %1356 : vector<16x128xf32>
    %1359 = math.tanh %1358 : vector<16x128xf32>
    %cst_612 = arith.constant 5.000000e-01 : f32
    %1360 = vector.broadcast %cst_612 : f32 to vector<16x128xf32>
    %1361 = arith.mulf %1360, %1359 : vector<16x128xf32>
    %cst_613 = arith.constant 5.000000e-01 : f32
    %1362 = vector.broadcast %cst_613 : f32 to vector<16x128xf32>
    %1363 = arith.addf %1361, %1362 : vector<16x128xf32>
    %c192_614 = arith.constant 192 : index
    %c0_615 = arith.constant 0 : index
    %1364 = vector.load %arg2[%c192_614, %c0_615] : memref<416x128xf32, #tpu.memory_space<vmem>>, vector<16x128xf32>
    %c32_616 = arith.constant 32 : index
    %c0_617 = arith.constant 0 : index
    %1365 = vector.load %arg2[%c32_616, %c0_617] : memref<416x128xf32, #tpu.memory_space<vmem>>, vector<16x128xf32>
    %1366 = vector.extract_strided_slice %1363 {offsets = [0, 0], sizes = [1, 128], strides = [1, 1]} : vector<16x128xf32> to vector<1x128xf32>
    %1367 = vector.broadcast %1366 : vector<1x128xf32> to vector<16x128xf32>
    %1368 = arith.mulf %1365, %1367 : vector<16x128xf32>
    %1369 = arith.addf %1364, %1368 : vector<16x128xf32>
    %c48_618 = arith.constant 48 : index
    %c0_619 = arith.constant 0 : index
    %1370 = vector.load %arg2[%c48_618, %c0_619] : memref<416x128xf32, #tpu.memory_space<vmem>>, vector<16x128xf32>
    %1371 = vector.extract_strided_slice %1363 {offsets = [1, 0], sizes = [1, 128], strides = [1, 1]} : vector<16x128xf32> to vector<1x128xf32>
    %1372 = vector.broadcast %1371 : vector<1x128xf32> to vector<16x128xf32>
    %1373 = arith.mulf %1370, %1372 : vector<16x128xf32>
    %1374 = arith.addf %1369, %1373 : vector<16x128xf32>
    %c64_620 = arith.constant 64 : index
    %c0_621 = arith.constant 0 : index
    %1375 = vector.load %arg2[%c64_620, %c0_621] : memref<416x128xf32, #tpu.memory_space<vmem>>, vector<16x128xf32>
    %1376 = vector.extract_strided_slice %1363 {offsets = [2, 0], sizes = [1, 128], strides = [1, 1]} : vector<16x128xf32> to vector<1x128xf32>
    %1377 = vector.broadcast %1376 : vector<1x128xf32> to vector<16x128xf32>
    %1378 = arith.mulf %1375, %1377 : vector<16x128xf32>
    %1379 = arith.addf %1374, %1378 : vector<16x128xf32>
    %c80_622 = arith.constant 80 : index
    %c0_623 = arith.constant 0 : index
    %1380 = vector.load %arg2[%c80_622, %c0_623] : memref<416x128xf32, #tpu.memory_space<vmem>>, vector<16x128xf32>
    %1381 = vector.extract_strided_slice %1363 {offsets = [3, 0], sizes = [1, 128], strides = [1, 1]} : vector<16x128xf32> to vector<1x128xf32>
    %1382 = vector.broadcast %1381 : vector<1x128xf32> to vector<16x128xf32>
    %1383 = arith.mulf %1380, %1382 : vector<16x128xf32>
    %1384 = arith.addf %1379, %1383 : vector<16x128xf32>
    %c96_624 = arith.constant 96 : index
    %c0_625 = arith.constant 0 : index
    %1385 = vector.load %arg2[%c96_624, %c0_625] : memref<416x128xf32, #tpu.memory_space<vmem>>, vector<16x128xf32>
    %1386 = vector.extract_strided_slice %1363 {offsets = [4, 0], sizes = [1, 128], strides = [1, 1]} : vector<16x128xf32> to vector<1x128xf32>
    %1387 = vector.broadcast %1386 : vector<1x128xf32> to vector<16x128xf32>
    %1388 = arith.mulf %1385, %1387 : vector<16x128xf32>
    %1389 = arith.addf %1384, %1388 : vector<16x128xf32>
    %c112_626 = arith.constant 112 : index
    %c0_627 = arith.constant 0 : index
    %1390 = vector.load %arg2[%c112_626, %c0_627] : memref<416x128xf32, #tpu.memory_space<vmem>>, vector<16x128xf32>
    %1391 = vector.extract_strided_slice %1363 {offsets = [5, 0], sizes = [1, 128], strides = [1, 1]} : vector<16x128xf32> to vector<1x128xf32>
    %1392 = vector.broadcast %1391 : vector<1x128xf32> to vector<16x128xf32>
    %1393 = arith.mulf %1390, %1392 : vector<16x128xf32>
    %1394 = arith.addf %1389, %1393 : vector<16x128xf32>
    %c128_628 = arith.constant 128 : index
    %c0_629 = arith.constant 0 : index
    %1395 = vector.load %arg2[%c128_628, %c0_629] : memref<416x128xf32, #tpu.memory_space<vmem>>, vector<16x128xf32>
    %1396 = vector.extract_strided_slice %1363 {offsets = [6, 0], sizes = [1, 128], strides = [1, 1]} : vector<16x128xf32> to vector<1x128xf32>
    %1397 = vector.broadcast %1396 : vector<1x128xf32> to vector<16x128xf32>
    %1398 = arith.mulf %1395, %1397 : vector<16x128xf32>
    %1399 = arith.addf %1394, %1398 : vector<16x128xf32>
    %c144_630 = arith.constant 144 : index
    %c0_631 = arith.constant 0 : index
    %1400 = vector.load %arg2[%c144_630, %c0_631] : memref<416x128xf32, #tpu.memory_space<vmem>>, vector<16x128xf32>
    %1401 = vector.extract_strided_slice %1363 {offsets = [7, 0], sizes = [1, 128], strides = [1, 1]} : vector<16x128xf32> to vector<1x128xf32>
    %1402 = vector.broadcast %1401 : vector<1x128xf32> to vector<16x128xf32>
    %1403 = arith.mulf %1400, %1402 : vector<16x128xf32>
    %1404 = arith.addf %1399, %1403 : vector<16x128xf32>
    %c160_632 = arith.constant 160 : index
    %c0_633 = arith.constant 0 : index
    %1405 = vector.load %arg2[%c160_632, %c0_633] : memref<416x128xf32, #tpu.memory_space<vmem>>, vector<16x128xf32>
    %1406 = vector.extract_strided_slice %1363 {offsets = [8, 0], sizes = [1, 128], strides = [1, 1]} : vector<16x128xf32> to vector<1x128xf32>
    %1407 = vector.broadcast %1406 : vector<1x128xf32> to vector<16x128xf32>
    %1408 = arith.mulf %1405, %1407 : vector<16x128xf32>
    %1409 = arith.addf %1404, %1408 : vector<16x128xf32>
    %c176_634 = arith.constant 176 : index
    %c0_635 = arith.constant 0 : index
    %1410 = vector.load %arg2[%c176_634, %c0_635] : memref<416x128xf32, #tpu.memory_space<vmem>>, vector<16x128xf32>
    %1411 = vector.extract_strided_slice %1363 {offsets = [9, 0], sizes = [1, 128], strides = [1, 1]} : vector<16x128xf32> to vector<1x128xf32>
    %1412 = vector.broadcast %1411 : vector<1x128xf32> to vector<16x128xf32>
    %1413 = arith.mulf %1410, %1412 : vector<16x128xf32>
    %1414 = arith.addf %1409, %1413 : vector<16x128xf32>
    %cst_636 = arith.constant 5.000000e-01 : f32
    %1415 = vector.broadcast %cst_636 : f32 to vector<16x128xf32>
    %1416 = arith.mulf %1415, %1414 : vector<16x128xf32>
    %1417 = math.tanh %1416 : vector<16x128xf32>
    %cst_637 = arith.constant 5.000000e-01 : f32
    %1418 = vector.broadcast %cst_637 : f32 to vector<16x128xf32>
    %1419 = arith.mulf %1418, %1417 : vector<16x128xf32>
    %cst_638 = arith.constant 5.000000e-01 : f32
    %1420 = vector.broadcast %cst_638 : f32 to vector<16x128xf32>
    %1421 = arith.addf %1419, %1420 : vector<16x128xf32>
    %c368_639 = arith.constant 368 : index
    %c0_640 = arith.constant 0 : index
    %1422 = vector.load %arg2[%c368_639, %c0_640] : memref<416x128xf32, #tpu.memory_space<vmem>>, vector<16x128xf32>
    %c208_641 = arith.constant 208 : index
    %c0_642 = arith.constant 0 : index
    %1423 = vector.load %arg2[%c208_641, %c0_642] : memref<416x128xf32, #tpu.memory_space<vmem>>, vector<16x128xf32>
    %1424 = vector.extract_strided_slice %1421 {offsets = [0, 0], sizes = [1, 128], strides = [1, 1]} : vector<16x128xf32> to vector<1x128xf32>
    %1425 = vector.broadcast %1424 : vector<1x128xf32> to vector<16x128xf32>
    %1426 = arith.mulf %1423, %1425 : vector<16x128xf32>
    %1427 = arith.addf %1422, %1426 : vector<16x128xf32>
    %c224_643 = arith.constant 224 : index
    %c0_644 = arith.constant 0 : index
    %1428 = vector.load %arg2[%c224_643, %c0_644] : memref<416x128xf32, #tpu.memory_space<vmem>>, vector<16x128xf32>
    %1429 = vector.extract_strided_slice %1421 {offsets = [1, 0], sizes = [1, 128], strides = [1, 1]} : vector<16x128xf32> to vector<1x128xf32>
    %1430 = vector.broadcast %1429 : vector<1x128xf32> to vector<16x128xf32>
    %1431 = arith.mulf %1428, %1430 : vector<16x128xf32>
    %1432 = arith.addf %1427, %1431 : vector<16x128xf32>
    %c240_645 = arith.constant 240 : index
    %c0_646 = arith.constant 0 : index
    %1433 = vector.load %arg2[%c240_645, %c0_646] : memref<416x128xf32, #tpu.memory_space<vmem>>, vector<16x128xf32>
    %1434 = vector.extract_strided_slice %1421 {offsets = [2, 0], sizes = [1, 128], strides = [1, 1]} : vector<16x128xf32> to vector<1x128xf32>
    %1435 = vector.broadcast %1434 : vector<1x128xf32> to vector<16x128xf32>
    %1436 = arith.mulf %1433, %1435 : vector<16x128xf32>
    %1437 = arith.addf %1432, %1436 : vector<16x128xf32>
    %c256_647 = arith.constant 256 : index
    %c0_648 = arith.constant 0 : index
    %1438 = vector.load %arg2[%c256_647, %c0_648] : memref<416x128xf32, #tpu.memory_space<vmem>>, vector<16x128xf32>
    %1439 = vector.extract_strided_slice %1421 {offsets = [3, 0], sizes = [1, 128], strides = [1, 1]} : vector<16x128xf32> to vector<1x128xf32>
    %1440 = vector.broadcast %1439 : vector<1x128xf32> to vector<16x128xf32>
    %1441 = arith.mulf %1438, %1440 : vector<16x128xf32>
    %1442 = arith.addf %1437, %1441 : vector<16x128xf32>
    %c272_649 = arith.constant 272 : index
    %c0_650 = arith.constant 0 : index
    %1443 = vector.load %arg2[%c272_649, %c0_650] : memref<416x128xf32, #tpu.memory_space<vmem>>, vector<16x128xf32>
    %1444 = vector.extract_strided_slice %1421 {offsets = [4, 0], sizes = [1, 128], strides = [1, 1]} : vector<16x128xf32> to vector<1x128xf32>
    %1445 = vector.broadcast %1444 : vector<1x128xf32> to vector<16x128xf32>
    %1446 = arith.mulf %1443, %1445 : vector<16x128xf32>
    %1447 = arith.addf %1442, %1446 : vector<16x128xf32>
    %c288_651 = arith.constant 288 : index
    %c0_652 = arith.constant 0 : index
    %1448 = vector.load %arg2[%c288_651, %c0_652] : memref<416x128xf32, #tpu.memory_space<vmem>>, vector<16x128xf32>
    %1449 = vector.extract_strided_slice %1421 {offsets = [5, 0], sizes = [1, 128], strides = [1, 1]} : vector<16x128xf32> to vector<1x128xf32>
    %1450 = vector.broadcast %1449 : vector<1x128xf32> to vector<16x128xf32>
    %1451 = arith.mulf %1448, %1450 : vector<16x128xf32>
    %1452 = arith.addf %1447, %1451 : vector<16x128xf32>
    %c304_653 = arith.constant 304 : index
    %c0_654 = arith.constant 0 : index
    %1453 = vector.load %arg2[%c304_653, %c0_654] : memref<416x128xf32, #tpu.memory_space<vmem>>, vector<16x128xf32>
    %1454 = vector.extract_strided_slice %1421 {offsets = [6, 0], sizes = [1, 128], strides = [1, 1]} : vector<16x128xf32> to vector<1x128xf32>
    %1455 = vector.broadcast %1454 : vector<1x128xf32> to vector<16x128xf32>
    %1456 = arith.mulf %1453, %1455 : vector<16x128xf32>
    %1457 = arith.addf %1452, %1456 : vector<16x128xf32>
    %c320_655 = arith.constant 320 : index
    %c0_656 = arith.constant 0 : index
    %1458 = vector.load %arg2[%c320_655, %c0_656] : memref<416x128xf32, #tpu.memory_space<vmem>>, vector<16x128xf32>
    %1459 = vector.extract_strided_slice %1421 {offsets = [7, 0], sizes = [1, 128], strides = [1, 1]} : vector<16x128xf32> to vector<1x128xf32>
    %1460 = vector.broadcast %1459 : vector<1x128xf32> to vector<16x128xf32>
    %1461 = arith.mulf %1458, %1460 : vector<16x128xf32>
    %1462 = arith.addf %1457, %1461 : vector<16x128xf32>
    %c336_657 = arith.constant 336 : index
    %c0_658 = arith.constant 0 : index
    %1463 = vector.load %arg2[%c336_657, %c0_658] : memref<416x128xf32, #tpu.memory_space<vmem>>, vector<16x128xf32>
    %1464 = vector.extract_strided_slice %1421 {offsets = [8, 0], sizes = [1, 128], strides = [1, 1]} : vector<16x128xf32> to vector<1x128xf32>
    %1465 = vector.broadcast %1464 : vector<1x128xf32> to vector<16x128xf32>
    %1466 = arith.mulf %1463, %1465 : vector<16x128xf32>
    %1467 = arith.addf %1462, %1466 : vector<16x128xf32>
    %c352_659 = arith.constant 352 : index
    %c0_660 = arith.constant 0 : index
    %1468 = vector.load %arg2[%c352_659, %c0_660] : memref<416x128xf32, #tpu.memory_space<vmem>>, vector<16x128xf32>
    %1469 = vector.extract_strided_slice %1421 {offsets = [9, 0], sizes = [1, 128], strides = [1, 1]} : vector<16x128xf32> to vector<1x128xf32>
    %1470 = vector.broadcast %1469 : vector<1x128xf32> to vector<16x128xf32>
    %1471 = arith.mulf %1468, %1470 : vector<16x128xf32>
    %1472 = arith.addf %1467, %1471 : vector<16x128xf32>
    %cst_661 = arith.constant 5.000000e-01 : f32
    %1473 = vector.broadcast %cst_661 : f32 to vector<16x128xf32>
    %1474 = arith.mulf %1473, %1472 : vector<16x128xf32>
    %1475 = math.tanh %1474 : vector<16x128xf32>
    %cst_662 = arith.constant 5.000000e-01 : f32
    %1476 = vector.broadcast %cst_662 : f32 to vector<16x128xf32>
    %1477 = arith.mulf %1476, %1475 : vector<16x128xf32>
    %cst_663 = arith.constant 5.000000e-01 : f32
    %1478 = vector.broadcast %cst_663 : f32 to vector<16x128xf32>
    %1479 = arith.addf %1477, %1478 : vector<16x128xf32>
    %c384_664 = arith.constant 384 : index
    %c0_665 = arith.constant 0 : index
    %1480 = vector.load %arg2[%c384_664, %c0_665] : memref<416x128xf32, #tpu.memory_space<vmem>>, vector<16x128xf32>
    %1481 = arith.mulf %1480, %1479 : vector<16x128xf32>
    %cst_666 = arith.constant dense<0.000000e+00> : vector<128xf32>
    %1482 = vector.multi_reduction <add>, %1481, %cst_666 [0] : vector<16x128xf32> to vector<128xf32>
    %1483 = vector.shape_cast %1482 : vector<128xf32> to vector<1x128xf32>
    %1484 = arith.addf %1483, %0 : vector<1x128xf32>
    %c10_667 = arith.constant 10 : index
    %c0_668 = arith.constant 0 : index
    %1485 = vector.load %arg3[%c10_667, %c0_668] : memref<16x128xf32, #tpu.memory_space<vmem>>, vector<1x128xf32>
    tpu.vector_store %arg3[%c10_667, %c0_668], %1484 {strides = array<i32>} : memref<16x128xf32, #tpu.memory_space<vmem>>, vector<1x128xf32>,
    %c11 = arith.constant 11 : index
    %c0_669 = arith.constant 0 : index
    %1486 = vector.load %arg1[%c11, %c0_669] : memref<16x128xf32, #tpu.memory_space<vmem>>, vector<1x128xf32>
    %c0_670 = arith.constant 0 : index
    %c0_671 = arith.constant 0 : index
    %1487 = vector.load %arg2[%c0_670, %c0_671] : memref<416x128xf32, #tpu.memory_space<vmem>>, vector<16x128xf32>
    %1488 = vector.broadcast %1486 : vector<1x128xf32> to vector<16x128xf32>
    %1489 = arith.mulf %1487, %1488 : vector<16x128xf32>
    %c16_672 = arith.constant 16 : index
    %c0_673 = arith.constant 0 : index
    %1490 = vector.load %arg2[%c16_672, %c0_673] : memref<416x128xf32, #tpu.memory_space<vmem>>, vector<16x128xf32>
    %1491 = arith.addf %1489, %1490 : vector<16x128xf32>
    %cst_674 = arith.constant 5.000000e-01 : f32
    %1492 = vector.broadcast %cst_674 : f32 to vector<16x128xf32>
    %1493 = arith.mulf %1492, %1491 : vector<16x128xf32>
    %1494 = math.tanh %1493 : vector<16x128xf32>
    %cst_675 = arith.constant 5.000000e-01 : f32
    %1495 = vector.broadcast %cst_675 : f32 to vector<16x128xf32>
    %1496 = arith.mulf %1495, %1494 : vector<16x128xf32>
    %cst_676 = arith.constant 5.000000e-01 : f32
    %1497 = vector.broadcast %cst_676 : f32 to vector<16x128xf32>
    %1498 = arith.addf %1496, %1497 : vector<16x128xf32>
    %c192_677 = arith.constant 192 : index
    %c0_678 = arith.constant 0 : index
    %1499 = vector.load %arg2[%c192_677, %c0_678] : memref<416x128xf32, #tpu.memory_space<vmem>>, vector<16x128xf32>
    %c32_679 = arith.constant 32 : index
    %c0_680 = arith.constant 0 : index
    %1500 = vector.load %arg2[%c32_679, %c0_680] : memref<416x128xf32, #tpu.memory_space<vmem>>, vector<16x128xf32>
    %1501 = vector.extract_strided_slice %1498 {offsets = [0, 0], sizes = [1, 128], strides = [1, 1]} : vector<16x128xf32> to vector<1x128xf32>
    %1502 = vector.broadcast %1501 : vector<1x128xf32> to vector<16x128xf32>
    %1503 = arith.mulf %1500, %1502 : vector<16x128xf32>
    %1504 = arith.addf %1499, %1503 : vector<16x128xf32>
    %c48_681 = arith.constant 48 : index
    %c0_682 = arith.constant 0 : index
    %1505 = vector.load %arg2[%c48_681, %c0_682] : memref<416x128xf32, #tpu.memory_space<vmem>>, vector<16x128xf32>
    %1506 = vector.extract_strided_slice %1498 {offsets = [1, 0], sizes = [1, 128], strides = [1, 1]} : vector<16x128xf32> to vector<1x128xf32>
    %1507 = vector.broadcast %1506 : vector<1x128xf32> to vector<16x128xf32>
    %1508 = arith.mulf %1505, %1507 : vector<16x128xf32>
    %1509 = arith.addf %1504, %1508 : vector<16x128xf32>
    %c64_683 = arith.constant 64 : index
    %c0_684 = arith.constant 0 : index
    %1510 = vector.load %arg2[%c64_683, %c0_684] : memref<416x128xf32, #tpu.memory_space<vmem>>, vector<16x128xf32>
    %1511 = vector.extract_strided_slice %1498 {offsets = [2, 0], sizes = [1, 128], strides = [1, 1]} : vector<16x128xf32> to vector<1x128xf32>
    %1512 = vector.broadcast %1511 : vector<1x128xf32> to vector<16x128xf32>
    %1513 = arith.mulf %1510, %1512 : vector<16x128xf32>
    %1514 = arith.addf %1509, %1513 : vector<16x128xf32>
    %c80_685 = arith.constant 80 : index
    %c0_686 = arith.constant 0 : index
    %1515 = vector.load %arg2[%c80_685, %c0_686] : memref<416x128xf32, #tpu.memory_space<vmem>>, vector<16x128xf32>
    %1516 = vector.extract_strided_slice %1498 {offsets = [3, 0], sizes = [1, 128], strides = [1, 1]} : vector<16x128xf32> to vector<1x128xf32>
    %1517 = vector.broadcast %1516 : vector<1x128xf32> to vector<16x128xf32>
    %1518 = arith.mulf %1515, %1517 : vector<16x128xf32>
    %1519 = arith.addf %1514, %1518 : vector<16x128xf32>
    %c96_687 = arith.constant 96 : index
    %c0_688 = arith.constant 0 : index
    %1520 = vector.load %arg2[%c96_687, %c0_688] : memref<416x128xf32, #tpu.memory_space<vmem>>, vector<16x128xf32>
    %1521 = vector.extract_strided_slice %1498 {offsets = [4, 0], sizes = [1, 128], strides = [1, 1]} : vector<16x128xf32> to vector<1x128xf32>
    %1522 = vector.broadcast %1521 : vector<1x128xf32> to vector<16x128xf32>
    %1523 = arith.mulf %1520, %1522 : vector<16x128xf32>
    %1524 = arith.addf %1519, %1523 : vector<16x128xf32>
    %c112_689 = arith.constant 112 : index
    %c0_690 = arith.constant 0 : index
    %1525 = vector.load %arg2[%c112_689, %c0_690] : memref<416x128xf32, #tpu.memory_space<vmem>>, vector<16x128xf32>
    %1526 = vector.extract_strided_slice %1498 {offsets = [5, 0], sizes = [1, 128], strides = [1, 1]} : vector<16x128xf32> to vector<1x128xf32>
    %1527 = vector.broadcast %1526 : vector<1x128xf32> to vector<16x128xf32>
    %1528 = arith.mulf %1525, %1527 : vector<16x128xf32>
    %1529 = arith.addf %1524, %1528 : vector<16x128xf32>
    %c128_691 = arith.constant 128 : index
    %c0_692 = arith.constant 0 : index
    %1530 = vector.load %arg2[%c128_691, %c0_692] : memref<416x128xf32, #tpu.memory_space<vmem>>, vector<16x128xf32>
    %1531 = vector.extract_strided_slice %1498 {offsets = [6, 0], sizes = [1, 128], strides = [1, 1]} : vector<16x128xf32> to vector<1x128xf32>
    %1532 = vector.broadcast %1531 : vector<1x128xf32> to vector<16x128xf32>
    %1533 = arith.mulf %1530, %1532 : vector<16x128xf32>
    %1534 = arith.addf %1529, %1533 : vector<16x128xf32>
    %c144_693 = arith.constant 144 : index
    %c0_694 = arith.constant 0 : index
    %1535 = vector.load %arg2[%c144_693, %c0_694] : memref<416x128xf32, #tpu.memory_space<vmem>>, vector<16x128xf32>
    %1536 = vector.extract_strided_slice %1498 {offsets = [7, 0], sizes = [1, 128], strides = [1, 1]} : vector<16x128xf32> to vector<1x128xf32>
    %1537 = vector.broadcast %1536 : vector<1x128xf32> to vector<16x128xf32>
    %1538 = arith.mulf %1535, %1537 : vector<16x128xf32>
    %1539 = arith.addf %1534, %1538 : vector<16x128xf32>
    %c160_695 = arith.constant 160 : index
    %c0_696 = arith.constant 0 : index
    %1540 = vector.load %arg2[%c160_695, %c0_696] : memref<416x128xf32, #tpu.memory_space<vmem>>, vector<16x128xf32>
    %1541 = vector.extract_strided_slice %1498 {offsets = [8, 0], sizes = [1, 128], strides = [1, 1]} : vector<16x128xf32> to vector<1x128xf32>
    %1542 = vector.broadcast %1541 : vector<1x128xf32> to vector<16x128xf32>
    %1543 = arith.mulf %1540, %1542 : vector<16x128xf32>
    %1544 = arith.addf %1539, %1543 : vector<16x128xf32>
    %c176_697 = arith.constant 176 : index
    %c0_698 = arith.constant 0 : index
    %1545 = vector.load %arg2[%c176_697, %c0_698] : memref<416x128xf32, #tpu.memory_space<vmem>>, vector<16x128xf32>
    %1546 = vector.extract_strided_slice %1498 {offsets = [9, 0], sizes = [1, 128], strides = [1, 1]} : vector<16x128xf32> to vector<1x128xf32>
    %1547 = vector.broadcast %1546 : vector<1x128xf32> to vector<16x128xf32>
    %1548 = arith.mulf %1545, %1547 : vector<16x128xf32>
    %1549 = arith.addf %1544, %1548 : vector<16x128xf32>
    %cst_699 = arith.constant 5.000000e-01 : f32
    %1550 = vector.broadcast %cst_699 : f32 to vector<16x128xf32>
    %1551 = arith.mulf %1550, %1549 : vector<16x128xf32>
    %1552 = math.tanh %1551 : vector<16x128xf32>
    %cst_700 = arith.constant 5.000000e-01 : f32
    %1553 = vector.broadcast %cst_700 : f32 to vector<16x128xf32>
    %1554 = arith.mulf %1553, %1552 : vector<16x128xf32>
    %cst_701 = arith.constant 5.000000e-01 : f32
    %1555 = vector.broadcast %cst_701 : f32 to vector<16x128xf32>
    %1556 = arith.addf %1554, %1555 : vector<16x128xf32>
    %c368_702 = arith.constant 368 : index
    %c0_703 = arith.constant 0 : index
    %1557 = vector.load %arg2[%c368_702, %c0_703] : memref<416x128xf32, #tpu.memory_space<vmem>>, vector<16x128xf32>
    %c208_704 = arith.constant 208 : index
    %c0_705 = arith.constant 0 : index
    %1558 = vector.load %arg2[%c208_704, %c0_705] : memref<416x128xf32, #tpu.memory_space<vmem>>, vector<16x128xf32>
    %1559 = vector.extract_strided_slice %1556 {offsets = [0, 0], sizes = [1, 128], strides = [1, 1]} : vector<16x128xf32> to vector<1x128xf32>
    %1560 = vector.broadcast %1559 : vector<1x128xf32> to vector<16x128xf32>
    %1561 = arith.mulf %1558, %1560 : vector<16x128xf32>
    %1562 = arith.addf %1557, %1561 : vector<16x128xf32>
    %c224_706 = arith.constant 224 : index
    %c0_707 = arith.constant 0 : index
    %1563 = vector.load %arg2[%c224_706, %c0_707] : memref<416x128xf32, #tpu.memory_space<vmem>>, vector<16x128xf32>
    %1564 = vector.extract_strided_slice %1556 {offsets = [1, 0], sizes = [1, 128], strides = [1, 1]} : vector<16x128xf32> to vector<1x128xf32>
    %1565 = vector.broadcast %1564 : vector<1x128xf32> to vector<16x128xf32>
    %1566 = arith.mulf %1563, %1565 : vector<16x128xf32>
    %1567 = arith.addf %1562, %1566 : vector<16x128xf32>
    %c240_708 = arith.constant 240 : index
    %c0_709 = arith.constant 0 : index
    %1568 = vector.load %arg2[%c240_708, %c0_709] : memref<416x128xf32, #tpu.memory_space<vmem>>, vector<16x128xf32>
    %1569 = vector.extract_strided_slice %1556 {offsets = [2, 0], sizes = [1, 128], strides = [1, 1]} : vector<16x128xf32> to vector<1x128xf32>
    %1570 = vector.broadcast %1569 : vector<1x128xf32> to vector<16x128xf32>
    %1571 = arith.mulf %1568, %1570 : vector<16x128xf32>
    %1572 = arith.addf %1567, %1571 : vector<16x128xf32>
    %c256_710 = arith.constant 256 : index
    %c0_711 = arith.constant 0 : index
    %1573 = vector.load %arg2[%c256_710, %c0_711] : memref<416x128xf32, #tpu.memory_space<vmem>>, vector<16x128xf32>
    %1574 = vector.extract_strided_slice %1556 {offsets = [3, 0], sizes = [1, 128], strides = [1, 1]} : vector<16x128xf32> to vector<1x128xf32>
    %1575 = vector.broadcast %1574 : vector<1x128xf32> to vector<16x128xf32>
    %1576 = arith.mulf %1573, %1575 : vector<16x128xf32>
    %1577 = arith.addf %1572, %1576 : vector<16x128xf32>
    %c272_712 = arith.constant 272 : index
    %c0_713 = arith.constant 0 : index
    %1578 = vector.load %arg2[%c272_712, %c0_713] : memref<416x128xf32, #tpu.memory_space<vmem>>, vector<16x128xf32>
    %1579 = vector.extract_strided_slice %1556 {offsets = [4, 0], sizes = [1, 128], strides = [1, 1]} : vector<16x128xf32> to vector<1x128xf32>
    %1580 = vector.broadcast %1579 : vector<1x128xf32> to vector<16x128xf32>
    %1581 = arith.mulf %1578, %1580 : vector<16x128xf32>
    %1582 = arith.addf %1577, %1581 : vector<16x128xf32>
    %c288_714 = arith.constant 288 : index
    %c0_715 = arith.constant 0 : index
    %1583 = vector.load %arg2[%c288_714, %c0_715] : memref<416x128xf32, #tpu.memory_space<vmem>>, vector<16x128xf32>
    %1584 = vector.extract_strided_slice %1556 {offsets = [5, 0], sizes = [1, 128], strides = [1, 1]} : vector<16x128xf32> to vector<1x128xf32>
    %1585 = vector.broadcast %1584 : vector<1x128xf32> to vector<16x128xf32>
    %1586 = arith.mulf %1583, %1585 : vector<16x128xf32>
    %1587 = arith.addf %1582, %1586 : vector<16x128xf32>
    %c304_716 = arith.constant 304 : index
    %c0_717 = arith.constant 0 : index
    %1588 = vector.load %arg2[%c304_716, %c0_717] : memref<416x128xf32, #tpu.memory_space<vmem>>, vector<16x128xf32>
    %1589 = vector.extract_strided_slice %1556 {offsets = [6, 0], sizes = [1, 128], strides = [1, 1]} : vector<16x128xf32> to vector<1x128xf32>
    %1590 = vector.broadcast %1589 : vector<1x128xf32> to vector<16x128xf32>
    %1591 = arith.mulf %1588, %1590 : vector<16x128xf32>
    %1592 = arith.addf %1587, %1591 : vector<16x128xf32>
    %c320_718 = arith.constant 320 : index
    %c0_719 = arith.constant 0 : index
    %1593 = vector.load %arg2[%c320_718, %c0_719] : memref<416x128xf32, #tpu.memory_space<vmem>>, vector<16x128xf32>
    %1594 = vector.extract_strided_slice %1556 {offsets = [7, 0], sizes = [1, 128], strides = [1, 1]} : vector<16x128xf32> to vector<1x128xf32>
    %1595 = vector.broadcast %1594 : vector<1x128xf32> to vector<16x128xf32>
    %1596 = arith.mulf %1593, %1595 : vector<16x128xf32>
    %1597 = arith.addf %1592, %1596 : vector<16x128xf32>
    %c336_720 = arith.constant 336 : index
    %c0_721 = arith.constant 0 : index
    %1598 = vector.load %arg2[%c336_720, %c0_721] : memref<416x128xf32, #tpu.memory_space<vmem>>, vector<16x128xf32>
    %1599 = vector.extract_strided_slice %1556 {offsets = [8, 0], sizes = [1, 128], strides = [1, 1]} : vector<16x128xf32> to vector<1x128xf32>
    %1600 = vector.broadcast %1599 : vector<1x128xf32> to vector<16x128xf32>
    %1601 = arith.mulf %1598, %1600 : vector<16x128xf32>
    %1602 = arith.addf %1597, %1601 : vector<16x128xf32>
    %c352_722 = arith.constant 352 : index
    %c0_723 = arith.constant 0 : index
    %1603 = vector.load %arg2[%c352_722, %c0_723] : memref<416x128xf32, #tpu.memory_space<vmem>>, vector<16x128xf32>
    %1604 = vector.extract_strided_slice %1556 {offsets = [9, 0], sizes = [1, 128], strides = [1, 1]} : vector<16x128xf32> to vector<1x128xf32>
    %1605 = vector.broadcast %1604 : vector<1x128xf32> to vector<16x128xf32>
    %1606 = arith.mulf %1603, %1605 : vector<16x128xf32>
    %1607 = arith.addf %1602, %1606 : vector<16x128xf32>
    %cst_724 = arith.constant 5.000000e-01 : f32
    %1608 = vector.broadcast %cst_724 : f32 to vector<16x128xf32>
    %1609 = arith.mulf %1608, %1607 : vector<16x128xf32>
    %1610 = math.tanh %1609 : vector<16x128xf32>
    %cst_725 = arith.constant 5.000000e-01 : f32
    %1611 = vector.broadcast %cst_725 : f32 to vector<16x128xf32>
    %1612 = arith.mulf %1611, %1610 : vector<16x128xf32>
    %cst_726 = arith.constant 5.000000e-01 : f32
    %1613 = vector.broadcast %cst_726 : f32 to vector<16x128xf32>
    %1614 = arith.addf %1612, %1613 : vector<16x128xf32>
    %c384_727 = arith.constant 384 : index
    %c0_728 = arith.constant 0 : index
    %1615 = vector.load %arg2[%c384_727, %c0_728] : memref<416x128xf32, #tpu.memory_space<vmem>>, vector<16x128xf32>
    %1616 = arith.mulf %1615, %1614 : vector<16x128xf32>
    %cst_729 = arith.constant dense<0.000000e+00> : vector<128xf32>
    %1617 = vector.multi_reduction <add>, %1616, %cst_729 [0] : vector<16x128xf32> to vector<128xf32>
    %1618 = vector.shape_cast %1617 : vector<128xf32> to vector<1x128xf32>
    %1619 = arith.addf %1618, %0 : vector<1x128xf32>
    %c11_730 = arith.constant 11 : index
    %c0_731 = arith.constant 0 : index
    %1620 = vector.load %arg3[%c11_730, %c0_731] : memref<16x128xf32, #tpu.memory_space<vmem>>, vector<1x128xf32>
    tpu.vector_store %arg3[%c11_730, %c0_731], %1619 {strides = array<i32>} : memref<16x128xf32, #tpu.memory_space<vmem>>, vector<1x128xf32>,
    %c12 = arith.constant 12 : index
    %c0_732 = arith.constant 0 : index
    %1621 = vector.load %arg1[%c12, %c0_732] : memref<16x128xf32, #tpu.memory_space<vmem>>, vector<1x128xf32>
    %c0_733 = arith.constant 0 : index
    %c0_734 = arith.constant 0 : index
    %1622 = vector.load %arg2[%c0_733, %c0_734] : memref<416x128xf32, #tpu.memory_space<vmem>>, vector<16x128xf32>
    %1623 = vector.broadcast %1621 : vector<1x128xf32> to vector<16x128xf32>
    %1624 = arith.mulf %1622, %1623 : vector<16x128xf32>
    %c16_735 = arith.constant 16 : index
    %c0_736 = arith.constant 0 : index
    %1625 = vector.load %arg2[%c16_735, %c0_736] : memref<416x128xf32, #tpu.memory_space<vmem>>, vector<16x128xf32>
    %1626 = arith.addf %1624, %1625 : vector<16x128xf32>
    %cst_737 = arith.constant 5.000000e-01 : f32
    %1627 = vector.broadcast %cst_737 : f32 to vector<16x128xf32>
    %1628 = arith.mulf %1627, %1626 : vector<16x128xf32>
    %1629 = math.tanh %1628 : vector<16x128xf32>
    %cst_738 = arith.constant 5.000000e-01 : f32
    %1630 = vector.broadcast %cst_738 : f32 to vector<16x128xf32>
    %1631 = arith.mulf %1630, %1629 : vector<16x128xf32>
    %cst_739 = arith.constant 5.000000e-01 : f32
    %1632 = vector.broadcast %cst_739 : f32 to vector<16x128xf32>
    %1633 = arith.addf %1631, %1632 : vector<16x128xf32>
    %c192_740 = arith.constant 192 : index
    %c0_741 = arith.constant 0 : index
    %1634 = vector.load %arg2[%c192_740, %c0_741] : memref<416x128xf32, #tpu.memory_space<vmem>>, vector<16x128xf32>
    %c32_742 = arith.constant 32 : index
    %c0_743 = arith.constant 0 : index
    %1635 = vector.load %arg2[%c32_742, %c0_743] : memref<416x128xf32, #tpu.memory_space<vmem>>, vector<16x128xf32>
    %1636 = vector.extract_strided_slice %1633 {offsets = [0, 0], sizes = [1, 128], strides = [1, 1]} : vector<16x128xf32> to vector<1x128xf32>
    %1637 = vector.broadcast %1636 : vector<1x128xf32> to vector<16x128xf32>
    %1638 = arith.mulf %1635, %1637 : vector<16x128xf32>
    %1639 = arith.addf %1634, %1638 : vector<16x128xf32>
    %c48_744 = arith.constant 48 : index
    %c0_745 = arith.constant 0 : index
    %1640 = vector.load %arg2[%c48_744, %c0_745] : memref<416x128xf32, #tpu.memory_space<vmem>>, vector<16x128xf32>
    %1641 = vector.extract_strided_slice %1633 {offsets = [1, 0], sizes = [1, 128], strides = [1, 1]} : vector<16x128xf32> to vector<1x128xf32>
    %1642 = vector.broadcast %1641 : vector<1x128xf32> to vector<16x128xf32>
    %1643 = arith.mulf %1640, %1642 : vector<16x128xf32>
    %1644 = arith.addf %1639, %1643 : vector<16x128xf32>
    %c64_746 = arith.constant 64 : index
    %c0_747 = arith.constant 0 : index
    %1645 = vector.load %arg2[%c64_746, %c0_747] : memref<416x128xf32, #tpu.memory_space<vmem>>, vector<16x128xf32>
    %1646 = vector.extract_strided_slice %1633 {offsets = [2, 0], sizes = [1, 128], strides = [1, 1]} : vector<16x128xf32> to vector<1x128xf32>
    %1647 = vector.broadcast %1646 : vector<1x128xf32> to vector<16x128xf32>
    %1648 = arith.mulf %1645, %1647 : vector<16x128xf32>
    %1649 = arith.addf %1644, %1648 : vector<16x128xf32>
    %c80_748 = arith.constant 80 : index
    %c0_749 = arith.constant 0 : index
    %1650 = vector.load %arg2[%c80_748, %c0_749] : memref<416x128xf32, #tpu.memory_space<vmem>>, vector<16x128xf32>
    %1651 = vector.extract_strided_slice %1633 {offsets = [3, 0], sizes = [1, 128], strides = [1, 1]} : vector<16x128xf32> to vector<1x128xf32>
    %1652 = vector.broadcast %1651 : vector<1x128xf32> to vector<16x128xf32>
    %1653 = arith.mulf %1650, %1652 : vector<16x128xf32>
    %1654 = arith.addf %1649, %1653 : vector<16x128xf32>
    %c96_750 = arith.constant 96 : index
    %c0_751 = arith.constant 0 : index
    %1655 = vector.load %arg2[%c96_750, %c0_751] : memref<416x128xf32, #tpu.memory_space<vmem>>, vector<16x128xf32>
    %1656 = vector.extract_strided_slice %1633 {offsets = [4, 0], sizes = [1, 128], strides = [1, 1]} : vector<16x128xf32> to vector<1x128xf32>
    %1657 = vector.broadcast %1656 : vector<1x128xf32> to vector<16x128xf32>
    %1658 = arith.mulf %1655, %1657 : vector<16x128xf32>
    %1659 = arith.addf %1654, %1658 : vector<16x128xf32>
    %c112_752 = arith.constant 112 : index
    %c0_753 = arith.constant 0 : index
    %1660 = vector.load %arg2[%c112_752, %c0_753] : memref<416x128xf32, #tpu.memory_space<vmem>>, vector<16x128xf32>
    %1661 = vector.extract_strided_slice %1633 {offsets = [5, 0], sizes = [1, 128], strides = [1, 1]} : vector<16x128xf32> to vector<1x128xf32>
    %1662 = vector.broadcast %1661 : vector<1x128xf32> to vector<16x128xf32>
    %1663 = arith.mulf %1660, %1662 : vector<16x128xf32>
    %1664 = arith.addf %1659, %1663 : vector<16x128xf32>
    %c128_754 = arith.constant 128 : index
    %c0_755 = arith.constant 0 : index
    %1665 = vector.load %arg2[%c128_754, %c0_755] : memref<416x128xf32, #tpu.memory_space<vmem>>, vector<16x128xf32>
    %1666 = vector.extract_strided_slice %1633 {offsets = [6, 0], sizes = [1, 128], strides = [1, 1]} : vector<16x128xf32> to vector<1x128xf32>
    %1667 = vector.broadcast %1666 : vector<1x128xf32> to vector<16x128xf32>
    %1668 = arith.mulf %1665, %1667 : vector<16x128xf32>
    %1669 = arith.addf %1664, %1668 : vector<16x128xf32>
    %c144_756 = arith.constant 144 : index
    %c0_757 = arith.constant 0 : index
    %1670 = vector.load %arg2[%c144_756, %c0_757] : memref<416x128xf32, #tpu.memory_space<vmem>>, vector<16x128xf32>
    %1671 = vector.extract_strided_slice %1633 {offsets = [7, 0], sizes = [1, 128], strides = [1, 1]} : vector<16x128xf32> to vector<1x128xf32>
    %1672 = vector.broadcast %1671 : vector<1x128xf32> to vector<16x128xf32>
    %1673 = arith.mulf %1670, %1672 : vector<16x128xf32>
    %1674 = arith.addf %1669, %1673 : vector<16x128xf32>
    %c160_758 = arith.constant 160 : index
    %c0_759 = arith.constant 0 : index
    %1675 = vector.load %arg2[%c160_758, %c0_759] : memref<416x128xf32, #tpu.memory_space<vmem>>, vector<16x128xf32>
    %1676 = vector.extract_strided_slice %1633 {offsets = [8, 0], sizes = [1, 128], strides = [1, 1]} : vector<16x128xf32> to vector<1x128xf32>
    %1677 = vector.broadcast %1676 : vector<1x128xf32> to vector<16x128xf32>
    %1678 = arith.mulf %1675, %1677 : vector<16x128xf32>
    %1679 = arith.addf %1674, %1678 : vector<16x128xf32>
    %c176_760 = arith.constant 176 : index
    %c0_761 = arith.constant 0 : index
    %1680 = vector.load %arg2[%c176_760, %c0_761] : memref<416x128xf32, #tpu.memory_space<vmem>>, vector<16x128xf32>
    %1681 = vector.extract_strided_slice %1633 {offsets = [9, 0], sizes = [1, 128], strides = [1, 1]} : vector<16x128xf32> to vector<1x128xf32>
    %1682 = vector.broadcast %1681 : vector<1x128xf32> to vector<16x128xf32>
    %1683 = arith.mulf %1680, %1682 : vector<16x128xf32>
    %1684 = arith.addf %1679, %1683 : vector<16x128xf32>
    %cst_762 = arith.constant 5.000000e-01 : f32
    %1685 = vector.broadcast %cst_762 : f32 to vector<16x128xf32>
    %1686 = arith.mulf %1685, %1684 : vector<16x128xf32>
    %1687 = math.tanh %1686 : vector<16x128xf32>
    %cst_763 = arith.constant 5.000000e-01 : f32
    %1688 = vector.broadcast %cst_763 : f32 to vector<16x128xf32>
    %1689 = arith.mulf %1688, %1687 : vector<16x128xf32>
    %cst_764 = arith.constant 5.000000e-01 : f32
    %1690 = vector.broadcast %cst_764 : f32 to vector<16x128xf32>
    %1691 = arith.addf %1689, %1690 : vector<16x128xf32>
    %c368_765 = arith.constant 368 : index
    %c0_766 = arith.constant 0 : index
    %1692 = vector.load %arg2[%c368_765, %c0_766] : memref<416x128xf32, #tpu.memory_space<vmem>>, vector<16x128xf32>
    %c208_767 = arith.constant 208 : index
    %c0_768 = arith.constant 0 : index
    %1693 = vector.load %arg2[%c208_767, %c0_768] : memref<416x128xf32, #tpu.memory_space<vmem>>, vector<16x128xf32>
    %1694 = vector.extract_strided_slice %1691 {offsets = [0, 0], sizes = [1, 128], strides = [1, 1]} : vector<16x128xf32> to vector<1x128xf32>
    %1695 = vector.broadcast %1694 : vector<1x128xf32> to vector<16x128xf32>
    %1696 = arith.mulf %1693, %1695 : vector<16x128xf32>
    %1697 = arith.addf %1692, %1696 : vector<16x128xf32>
    %c224_769 = arith.constant 224 : index
    %c0_770 = arith.constant 0 : index
    %1698 = vector.load %arg2[%c224_769, %c0_770] : memref<416x128xf32, #tpu.memory_space<vmem>>, vector<16x128xf32>
    %1699 = vector.extract_strided_slice %1691 {offsets = [1, 0], sizes = [1, 128], strides = [1, 1]} : vector<16x128xf32> to vector<1x128xf32>
    %1700 = vector.broadcast %1699 : vector<1x128xf32> to vector<16x128xf32>
    %1701 = arith.mulf %1698, %1700 : vector<16x128xf32>
    %1702 = arith.addf %1697, %1701 : vector<16x128xf32>
    %c240_771 = arith.constant 240 : index
    %c0_772 = arith.constant 0 : index
    %1703 = vector.load %arg2[%c240_771, %c0_772] : memref<416x128xf32, #tpu.memory_space<vmem>>, vector<16x128xf32>
    %1704 = vector.extract_strided_slice %1691 {offsets = [2, 0], sizes = [1, 128], strides = [1, 1]} : vector<16x128xf32> to vector<1x128xf32>
    %1705 = vector.broadcast %1704 : vector<1x128xf32> to vector<16x128xf32>
    %1706 = arith.mulf %1703, %1705 : vector<16x128xf32>
    %1707 = arith.addf %1702, %1706 : vector<16x128xf32>
    %c256_773 = arith.constant 256 : index
    %c0_774 = arith.constant 0 : index
    %1708 = vector.load %arg2[%c256_773, %c0_774] : memref<416x128xf32, #tpu.memory_space<vmem>>, vector<16x128xf32>
    %1709 = vector.extract_strided_slice %1691 {offsets = [3, 0], sizes = [1, 128], strides = [1, 1]} : vector<16x128xf32> to vector<1x128xf32>
    %1710 = vector.broadcast %1709 : vector<1x128xf32> to vector<16x128xf32>
    %1711 = arith.mulf %1708, %1710 : vector<16x128xf32>
    %1712 = arith.addf %1707, %1711 : vector<16x128xf32>
    %c272_775 = arith.constant 272 : index
    %c0_776 = arith.constant 0 : index
    %1713 = vector.load %arg2[%c272_775, %c0_776] : memref<416x128xf32, #tpu.memory_space<vmem>>, vector<16x128xf32>
    %1714 = vector.extract_strided_slice %1691 {offsets = [4, 0], sizes = [1, 128], strides = [1, 1]} : vector<16x128xf32> to vector<1x128xf32>
    %1715 = vector.broadcast %1714 : vector<1x128xf32> to vector<16x128xf32>
    %1716 = arith.mulf %1713, %1715 : vector<16x128xf32>
    %1717 = arith.addf %1712, %1716 : vector<16x128xf32>
    %c288_777 = arith.constant 288 : index
    %c0_778 = arith.constant 0 : index
    %1718 = vector.load %arg2[%c288_777, %c0_778] : memref<416x128xf32, #tpu.memory_space<vmem>>, vector<16x128xf32>
    %1719 = vector.extract_strided_slice %1691 {offsets = [5, 0], sizes = [1, 128], strides = [1, 1]} : vector<16x128xf32> to vector<1x128xf32>
    %1720 = vector.broadcast %1719 : vector<1x128xf32> to vector<16x128xf32>
    %1721 = arith.mulf %1718, %1720 : vector<16x128xf32>
    %1722 = arith.addf %1717, %1721 : vector<16x128xf32>
    %c304_779 = arith.constant 304 : index
    %c0_780 = arith.constant 0 : index
    %1723 = vector.load %arg2[%c304_779, %c0_780] : memref<416x128xf32, #tpu.memory_space<vmem>>, vector<16x128xf32>
    %1724 = vector.extract_strided_slice %1691 {offsets = [6, 0], sizes = [1, 128], strides = [1, 1]} : vector<16x128xf32> to vector<1x128xf32>
    %1725 = vector.broadcast %1724 : vector<1x128xf32> to vector<16x128xf32>
    %1726 = arith.mulf %1723, %1725 : vector<16x128xf32>
    %1727 = arith.addf %1722, %1726 : vector<16x128xf32>
    %c320_781 = arith.constant 320 : index
    %c0_782 = arith.constant 0 : index
    %1728 = vector.load %arg2[%c320_781, %c0_782] : memref<416x128xf32, #tpu.memory_space<vmem>>, vector<16x128xf32>
    %1729 = vector.extract_strided_slice %1691 {offsets = [7, 0], sizes = [1, 128], strides = [1, 1]} : vector<16x128xf32> to vector<1x128xf32>
    %1730 = vector.broadcast %1729 : vector<1x128xf32> to vector<16x128xf32>
    %1731 = arith.mulf %1728, %1730 : vector<16x128xf32>
    %1732 = arith.addf %1727, %1731 : vector<16x128xf32>
    %c336_783 = arith.constant 336 : index
    %c0_784 = arith.constant 0 : index
    %1733 = vector.load %arg2[%c336_783, %c0_784] : memref<416x128xf32, #tpu.memory_space<vmem>>, vector<16x128xf32>
    %1734 = vector.extract_strided_slice %1691 {offsets = [8, 0], sizes = [1, 128], strides = [1, 1]} : vector<16x128xf32> to vector<1x128xf32>
    %1735 = vector.broadcast %1734 : vector<1x128xf32> to vector<16x128xf32>
    %1736 = arith.mulf %1733, %1735 : vector<16x128xf32>
    %1737 = arith.addf %1732, %1736 : vector<16x128xf32>
    %c352_785 = arith.constant 352 : index
    %c0_786 = arith.constant 0 : index
    %1738 = vector.load %arg2[%c352_785, %c0_786] : memref<416x128xf32, #tpu.memory_space<vmem>>, vector<16x128xf32>
    %1739 = vector.extract_strided_slice %1691 {offsets = [9, 0], sizes = [1, 128], strides = [1, 1]} : vector<16x128xf32> to vector<1x128xf32>
    %1740 = vector.broadcast %1739 : vector<1x128xf32> to vector<16x128xf32>
    %1741 = arith.mulf %1738, %1740 : vector<16x128xf32>
    %1742 = arith.addf %1737, %1741 : vector<16x128xf32>
    %cst_787 = arith.constant 5.000000e-01 : f32
    %1743 = vector.broadcast %cst_787 : f32 to vector<16x128xf32>
    %1744 = arith.mulf %1743, %1742 : vector<16x128xf32>
    %1745 = math.tanh %1744 : vector<16x128xf32>
    %cst_788 = arith.constant 5.000000e-01 : f32
    %1746 = vector.broadcast %cst_788 : f32 to vector<16x128xf32>
    %1747 = arith.mulf %1746, %1745 : vector<16x128xf32>
    %cst_789 = arith.constant 5.000000e-01 : f32
    %1748 = vector.broadcast %cst_789 : f32 to vector<16x128xf32>
    %1749 = arith.addf %1747, %1748 : vector<16x128xf32>
    %c384_790 = arith.constant 384 : index
    %c0_791 = arith.constant 0 : index
    %1750 = vector.load %arg2[%c384_790, %c0_791] : memref<416x128xf32, #tpu.memory_space<vmem>>, vector<16x128xf32>
    %1751 = arith.mulf %1750, %1749 : vector<16x128xf32>
    %cst_792 = arith.constant dense<0.000000e+00> : vector<128xf32>
    %1752 = vector.multi_reduction <add>, %1751, %cst_792 [0] : vector<16x128xf32> to vector<128xf32>
    %1753 = vector.shape_cast %1752 : vector<128xf32> to vector<1x128xf32>
    %1754 = arith.addf %1753, %0 : vector<1x128xf32>
    %c12_793 = arith.constant 12 : index
    %c0_794 = arith.constant 0 : index
    %1755 = vector.load %arg3[%c12_793, %c0_794] : memref<16x128xf32, #tpu.memory_space<vmem>>, vector<1x128xf32>
    tpu.vector_store %arg3[%c12_793, %c0_794], %1754 {strides = array<i32>} : memref<16x128xf32, #tpu.memory_space<vmem>>, vector<1x128xf32>,
    %c13 = arith.constant 13 : index
    %c0_795 = arith.constant 0 : index
    %1756 = vector.load %arg1[%c13, %c0_795] : memref<16x128xf32, #tpu.memory_space<vmem>>, vector<1x128xf32>
    %c0_796 = arith.constant 0 : index
    %c0_797 = arith.constant 0 : index
    %1757 = vector.load %arg2[%c0_796, %c0_797] : memref<416x128xf32, #tpu.memory_space<vmem>>, vector<16x128xf32>
    %1758 = vector.broadcast %1756 : vector<1x128xf32> to vector<16x128xf32>
    %1759 = arith.mulf %1757, %1758 : vector<16x128xf32>
    %c16_798 = arith.constant 16 : index
    %c0_799 = arith.constant 0 : index
    %1760 = vector.load %arg2[%c16_798, %c0_799] : memref<416x128xf32, #tpu.memory_space<vmem>>, vector<16x128xf32>
    %1761 = arith.addf %1759, %1760 : vector<16x128xf32>
    %cst_800 = arith.constant 5.000000e-01 : f32
    %1762 = vector.broadcast %cst_800 : f32 to vector<16x128xf32>
    %1763 = arith.mulf %1762, %1761 : vector<16x128xf32>
    %1764 = math.tanh %1763 : vector<16x128xf32>
    %cst_801 = arith.constant 5.000000e-01 : f32
    %1765 = vector.broadcast %cst_801 : f32 to vector<16x128xf32>
    %1766 = arith.mulf %1765, %1764 : vector<16x128xf32>
    %cst_802 = arith.constant 5.000000e-01 : f32
    %1767 = vector.broadcast %cst_802 : f32 to vector<16x128xf32>
    %1768 = arith.addf %1766, %1767 : vector<16x128xf32>
    %c192_803 = arith.constant 192 : index
    %c0_804 = arith.constant 0 : index
    %1769 = vector.load %arg2[%c192_803, %c0_804] : memref<416x128xf32, #tpu.memory_space<vmem>>, vector<16x128xf32>
    %c32_805 = arith.constant 32 : index
    %c0_806 = arith.constant 0 : index
    %1770 = vector.load %arg2[%c32_805, %c0_806] : memref<416x128xf32, #tpu.memory_space<vmem>>, vector<16x128xf32>
    %1771 = vector.extract_strided_slice %1768 {offsets = [0, 0], sizes = [1, 128], strides = [1, 1]} : vector<16x128xf32> to vector<1x128xf32>
    %1772 = vector.broadcast %1771 : vector<1x128xf32> to vector<16x128xf32>
    %1773 = arith.mulf %1770, %1772 : vector<16x128xf32>
    %1774 = arith.addf %1769, %1773 : vector<16x128xf32>
    %c48_807 = arith.constant 48 : index
    %c0_808 = arith.constant 0 : index
    %1775 = vector.load %arg2[%c48_807, %c0_808] : memref<416x128xf32, #tpu.memory_space<vmem>>, vector<16x128xf32>
    %1776 = vector.extract_strided_slice %1768 {offsets = [1, 0], sizes = [1, 128], strides = [1, 1]} : vector<16x128xf32> to vector<1x128xf32>
    %1777 = vector.broadcast %1776 : vector<1x128xf32> to vector<16x128xf32>
    %1778 = arith.mulf %1775, %1777 : vector<16x128xf32>
    %1779 = arith.addf %1774, %1778 : vector<16x128xf32>
    %c64_809 = arith.constant 64 : index
    %c0_810 = arith.constant 0 : index
    %1780 = vector.load %arg2[%c64_809, %c0_810] : memref<416x128xf32, #tpu.memory_space<vmem>>, vector<16x128xf32>
    %1781 = vector.extract_strided_slice %1768 {offsets = [2, 0], sizes = [1, 128], strides = [1, 1]} : vector<16x128xf32> to vector<1x128xf32>
    %1782 = vector.broadcast %1781 : vector<1x128xf32> to vector<16x128xf32>
    %1783 = arith.mulf %1780, %1782 : vector<16x128xf32>
    %1784 = arith.addf %1779, %1783 : vector<16x128xf32>
    %c80_811 = arith.constant 80 : index
    %c0_812 = arith.constant 0 : index
    %1785 = vector.load %arg2[%c80_811, %c0_812] : memref<416x128xf32, #tpu.memory_space<vmem>>, vector<16x128xf32>
    %1786 = vector.extract_strided_slice %1768 {offsets = [3, 0], sizes = [1, 128], strides = [1, 1]} : vector<16x128xf32> to vector<1x128xf32>
    %1787 = vector.broadcast %1786 : vector<1x128xf32> to vector<16x128xf32>
    %1788 = arith.mulf %1785, %1787 : vector<16x128xf32>
    %1789 = arith.addf %1784, %1788 : vector<16x128xf32>
    %c96_813 = arith.constant 96 : index
    %c0_814 = arith.constant 0 : index
    %1790 = vector.load %arg2[%c96_813, %c0_814] : memref<416x128xf32, #tpu.memory_space<vmem>>, vector<16x128xf32>
    %1791 = vector.extract_strided_slice %1768 {offsets = [4, 0], sizes = [1, 128], strides = [1, 1]} : vector<16x128xf32> to vector<1x128xf32>
    %1792 = vector.broadcast %1791 : vector<1x128xf32> to vector<16x128xf32>
    %1793 = arith.mulf %1790, %1792 : vector<16x128xf32>
    %1794 = arith.addf %1789, %1793 : vector<16x128xf32>
    %c112_815 = arith.constant 112 : index
    %c0_816 = arith.constant 0 : index
    %1795 = vector.load %arg2[%c112_815, %c0_816] : memref<416x128xf32, #tpu.memory_space<vmem>>, vector<16x128xf32>
    %1796 = vector.extract_strided_slice %1768 {offsets = [5, 0], sizes = [1, 128], strides = [1, 1]} : vector<16x128xf32> to vector<1x128xf32>
    %1797 = vector.broadcast %1796 : vector<1x128xf32> to vector<16x128xf32>
    %1798 = arith.mulf %1795, %1797 : vector<16x128xf32>
    %1799 = arith.addf %1794, %1798 : vector<16x128xf32>
    %c128_817 = arith.constant 128 : index
    %c0_818 = arith.constant 0 : index
    %1800 = vector.load %arg2[%c128_817, %c0_818] : memref<416x128xf32, #tpu.memory_space<vmem>>, vector<16x128xf32>
    %1801 = vector.extract_strided_slice %1768 {offsets = [6, 0], sizes = [1, 128], strides = [1, 1]} : vector<16x128xf32> to vector<1x128xf32>
    %1802 = vector.broadcast %1801 : vector<1x128xf32> to vector<16x128xf32>
    %1803 = arith.mulf %1800, %1802 : vector<16x128xf32>
    %1804 = arith.addf %1799, %1803 : vector<16x128xf32>
    %c144_819 = arith.constant 144 : index
    %c0_820 = arith.constant 0 : index
    %1805 = vector.load %arg2[%c144_819, %c0_820] : memref<416x128xf32, #tpu.memory_space<vmem>>, vector<16x128xf32>
    %1806 = vector.extract_strided_slice %1768 {offsets = [7, 0], sizes = [1, 128], strides = [1, 1]} : vector<16x128xf32> to vector<1x128xf32>
    %1807 = vector.broadcast %1806 : vector<1x128xf32> to vector<16x128xf32>
    %1808 = arith.mulf %1805, %1807 : vector<16x128xf32>
    %1809 = arith.addf %1804, %1808 : vector<16x128xf32>
    %c160_821 = arith.constant 160 : index
    %c0_822 = arith.constant 0 : index
    %1810 = vector.load %arg2[%c160_821, %c0_822] : memref<416x128xf32, #tpu.memory_space<vmem>>, vector<16x128xf32>
    %1811 = vector.extract_strided_slice %1768 {offsets = [8, 0], sizes = [1, 128], strides = [1, 1]} : vector<16x128xf32> to vector<1x128xf32>
    %1812 = vector.broadcast %1811 : vector<1x128xf32> to vector<16x128xf32>
    %1813 = arith.mulf %1810, %1812 : vector<16x128xf32>
    %1814 = arith.addf %1809, %1813 : vector<16x128xf32>
    %c176_823 = arith.constant 176 : index
    %c0_824 = arith.constant 0 : index
    %1815 = vector.load %arg2[%c176_823, %c0_824] : memref<416x128xf32, #tpu.memory_space<vmem>>, vector<16x128xf32>
    %1816 = vector.extract_strided_slice %1768 {offsets = [9, 0], sizes = [1, 128], strides = [1, 1]} : vector<16x128xf32> to vector<1x128xf32>
    %1817 = vector.broadcast %1816 : vector<1x128xf32> to vector<16x128xf32>
    %1818 = arith.mulf %1815, %1817 : vector<16x128xf32>
    %1819 = arith.addf %1814, %1818 : vector<16x128xf32>
    %cst_825 = arith.constant 5.000000e-01 : f32
    %1820 = vector.broadcast %cst_825 : f32 to vector<16x128xf32>
    %1821 = arith.mulf %1820, %1819 : vector<16x128xf32>
    %1822 = math.tanh %1821 : vector<16x128xf32>
    %cst_826 = arith.constant 5.000000e-01 : f32
    %1823 = vector.broadcast %cst_826 : f32 to vector<16x128xf32>
    %1824 = arith.mulf %1823, %1822 : vector<16x128xf32>
    %cst_827 = arith.constant 5.000000e-01 : f32
    %1825 = vector.broadcast %cst_827 : f32 to vector<16x128xf32>
    %1826 = arith.addf %1824, %1825 : vector<16x128xf32>
    %c368_828 = arith.constant 368 : index
    %c0_829 = arith.constant 0 : index
    %1827 = vector.load %arg2[%c368_828, %c0_829] : memref<416x128xf32, #tpu.memory_space<vmem>>, vector<16x128xf32>
    %c208_830 = arith.constant 208 : index
    %c0_831 = arith.constant 0 : index
    %1828 = vector.load %arg2[%c208_830, %c0_831] : memref<416x128xf32, #tpu.memory_space<vmem>>, vector<16x128xf32>
    %1829 = vector.extract_strided_slice %1826 {offsets = [0, 0], sizes = [1, 128], strides = [1, 1]} : vector<16x128xf32> to vector<1x128xf32>
    %1830 = vector.broadcast %1829 : vector<1x128xf32> to vector<16x128xf32>
    %1831 = arith.mulf %1828, %1830 : vector<16x128xf32>
    %1832 = arith.addf %1827, %1831 : vector<16x128xf32>
    %c224_832 = arith.constant 224 : index
    %c0_833 = arith.constant 0 : index
    %1833 = vector.load %arg2[%c224_832, %c0_833] : memref<416x128xf32, #tpu.memory_space<vmem>>, vector<16x128xf32>
    %1834 = vector.extract_strided_slice %1826 {offsets = [1, 0], sizes = [1, 128], strides = [1, 1]} : vector<16x128xf32> to vector<1x128xf32>
    %1835 = vector.broadcast %1834 : vector<1x128xf32> to vector<16x128xf32>
    %1836 = arith.mulf %1833, %1835 : vector<16x128xf32>
    %1837 = arith.addf %1832, %1836 : vector<16x128xf32>
    %c240_834 = arith.constant 240 : index
    %c0_835 = arith.constant 0 : index
    %1838 = vector.load %arg2[%c240_834, %c0_835] : memref<416x128xf32, #tpu.memory_space<vmem>>, vector<16x128xf32>
    %1839 = vector.extract_strided_slice %1826 {offsets = [2, 0], sizes = [1, 128], strides = [1, 1]} : vector<16x128xf32> to vector<1x128xf32>
    %1840 = vector.broadcast %1839 : vector<1x128xf32> to vector<16x128xf32>
    %1841 = arith.mulf %1838, %1840 : vector<16x128xf32>
    %1842 = arith.addf %1837, %1841 : vector<16x128xf32>
    %c256_836 = arith.constant 256 : index
    %c0_837 = arith.constant 0 : index
    %1843 = vector.load %arg2[%c256_836, %c0_837] : memref<416x128xf32, #tpu.memory_space<vmem>>, vector<16x128xf32>
    %1844 = vector.extract_strided_slice %1826 {offsets = [3, 0], sizes = [1, 128], strides = [1, 1]} : vector<16x128xf32> to vector<1x128xf32>
    %1845 = vector.broadcast %1844 : vector<1x128xf32> to vector<16x128xf32>
    %1846 = arith.mulf %1843, %1845 : vector<16x128xf32>
    %1847 = arith.addf %1842, %1846 : vector<16x128xf32>
    %c272_838 = arith.constant 272 : index
    %c0_839 = arith.constant 0 : index
    %1848 = vector.load %arg2[%c272_838, %c0_839] : memref<416x128xf32, #tpu.memory_space<vmem>>, vector<16x128xf32>
    %1849 = vector.extract_strided_slice %1826 {offsets = [4, 0], sizes = [1, 128], strides = [1, 1]} : vector<16x128xf32> to vector<1x128xf32>
    %1850 = vector.broadcast %1849 : vector<1x128xf32> to vector<16x128xf32>
    %1851 = arith.mulf %1848, %1850 : vector<16x128xf32>
    %1852 = arith.addf %1847, %1851 : vector<16x128xf32>
    %c288_840 = arith.constant 288 : index
    %c0_841 = arith.constant 0 : index
    %1853 = vector.load %arg2[%c288_840, %c0_841] : memref<416x128xf32, #tpu.memory_space<vmem>>, vector<16x128xf32>
    %1854 = vector.extract_strided_slice %1826 {offsets = [5, 0], sizes = [1, 128], strides = [1, 1]} : vector<16x128xf32> to vector<1x128xf32>
    %1855 = vector.broadcast %1854 : vector<1x128xf32> to vector<16x128xf32>
    %1856 = arith.mulf %1853, %1855 : vector<16x128xf32>
    %1857 = arith.addf %1852, %1856 : vector<16x128xf32>
    %c304_842 = arith.constant 304 : index
    %c0_843 = arith.constant 0 : index
    %1858 = vector.load %arg2[%c304_842, %c0_843] : memref<416x128xf32, #tpu.memory_space<vmem>>, vector<16x128xf32>
    %1859 = vector.extract_strided_slice %1826 {offsets = [6, 0], sizes = [1, 128], strides = [1, 1]} : vector<16x128xf32> to vector<1x128xf32>
    %1860 = vector.broadcast %1859 : vector<1x128xf32> to vector<16x128xf32>
    %1861 = arith.mulf %1858, %1860 : vector<16x128xf32>
    %1862 = arith.addf %1857, %1861 : vector<16x128xf32>
    %c320_844 = arith.constant 320 : index
    %c0_845 = arith.constant 0 : index
    %1863 = vector.load %arg2[%c320_844, %c0_845] : memref<416x128xf32, #tpu.memory_space<vmem>>, vector<16x128xf32>
    %1864 = vector.extract_strided_slice %1826 {offsets = [7, 0], sizes = [1, 128], strides = [1, 1]} : vector<16x128xf32> to vector<1x128xf32>
    %1865 = vector.broadcast %1864 : vector<1x128xf32> to vector<16x128xf32>
    %1866 = arith.mulf %1863, %1865 : vector<16x128xf32>
    %1867 = arith.addf %1862, %1866 : vector<16x128xf32>
    %c336_846 = arith.constant 336 : index
    %c0_847 = arith.constant 0 : index
    %1868 = vector.load %arg2[%c336_846, %c0_847] : memref<416x128xf32, #tpu.memory_space<vmem>>, vector<16x128xf32>
    %1869 = vector.extract_strided_slice %1826 {offsets = [8, 0], sizes = [1, 128], strides = [1, 1]} : vector<16x128xf32> to vector<1x128xf32>
    %1870 = vector.broadcast %1869 : vector<1x128xf32> to vector<16x128xf32>
    %1871 = arith.mulf %1868, %1870 : vector<16x128xf32>
    %1872 = arith.addf %1867, %1871 : vector<16x128xf32>
    %c352_848 = arith.constant 352 : index
    %c0_849 = arith.constant 0 : index
    %1873 = vector.load %arg2[%c352_848, %c0_849] : memref<416x128xf32, #tpu.memory_space<vmem>>, vector<16x128xf32>
    %1874 = vector.extract_strided_slice %1826 {offsets = [9, 0], sizes = [1, 128], strides = [1, 1]} : vector<16x128xf32> to vector<1x128xf32>
    %1875 = vector.broadcast %1874 : vector<1x128xf32> to vector<16x128xf32>
    %1876 = arith.mulf %1873, %1875 : vector<16x128xf32>
    %1877 = arith.addf %1872, %1876 : vector<16x128xf32>
    %cst_850 = arith.constant 5.000000e-01 : f32
    %1878 = vector.broadcast %cst_850 : f32 to vector<16x128xf32>
    %1879 = arith.mulf %1878, %1877 : vector<16x128xf32>
    %1880 = math.tanh %1879 : vector<16x128xf32>
    %cst_851 = arith.constant 5.000000e-01 : f32
    %1881 = vector.broadcast %cst_851 : f32 to vector<16x128xf32>
    %1882 = arith.mulf %1881, %1880 : vector<16x128xf32>
    %cst_852 = arith.constant 5.000000e-01 : f32
    %1883 = vector.broadcast %cst_852 : f32 to vector<16x128xf32>
    %1884 = arith.addf %1882, %1883 : vector<16x128xf32>
    %c384_853 = arith.constant 384 : index
    %c0_854 = arith.constant 0 : index
    %1885 = vector.load %arg2[%c384_853, %c0_854] : memref<416x128xf32, #tpu.memory_space<vmem>>, vector<16x128xf32>
    %1886 = arith.mulf %1885, %1884 : vector<16x128xf32>
    %cst_855 = arith.constant dense<0.000000e+00> : vector<128xf32>
    %1887 = vector.multi_reduction <add>, %1886, %cst_855 [0] : vector<16x128xf32> to vector<128xf32>
    %1888 = vector.shape_cast %1887 : vector<128xf32> to vector<1x128xf32>
    %1889 = arith.addf %1888, %0 : vector<1x128xf32>
    %c13_856 = arith.constant 13 : index
    %c0_857 = arith.constant 0 : index
    %1890 = vector.load %arg3[%c13_856, %c0_857] : memref<16x128xf32, #tpu.memory_space<vmem>>, vector<1x128xf32>
    tpu.vector_store %arg3[%c13_856, %c0_857], %1889 {strides = array<i32>} : memref<16x128xf32, #tpu.memory_space<vmem>>, vector<1x128xf32>,
    %c14 = arith.constant 14 : index
    %c0_858 = arith.constant 0 : index
    %1891 = vector.load %arg1[%c14, %c0_858] : memref<16x128xf32, #tpu.memory_space<vmem>>, vector<1x128xf32>
    %c0_859 = arith.constant 0 : index
    %c0_860 = arith.constant 0 : index
    %1892 = vector.load %arg2[%c0_859, %c0_860] : memref<416x128xf32, #tpu.memory_space<vmem>>, vector<16x128xf32>
    %1893 = vector.broadcast %1891 : vector<1x128xf32> to vector<16x128xf32>
    %1894 = arith.mulf %1892, %1893 : vector<16x128xf32>
    %c16_861 = arith.constant 16 : index
    %c0_862 = arith.constant 0 : index
    %1895 = vector.load %arg2[%c16_861, %c0_862] : memref<416x128xf32, #tpu.memory_space<vmem>>, vector<16x128xf32>
    %1896 = arith.addf %1894, %1895 : vector<16x128xf32>
    %cst_863 = arith.constant 5.000000e-01 : f32
    %1897 = vector.broadcast %cst_863 : f32 to vector<16x128xf32>
    %1898 = arith.mulf %1897, %1896 : vector<16x128xf32>
    %1899 = math.tanh %1898 : vector<16x128xf32>
    %cst_864 = arith.constant 5.000000e-01 : f32
    %1900 = vector.broadcast %cst_864 : f32 to vector<16x128xf32>
    %1901 = arith.mulf %1900, %1899 : vector<16x128xf32>
    %cst_865 = arith.constant 5.000000e-01 : f32
    %1902 = vector.broadcast %cst_865 : f32 to vector<16x128xf32>
    %1903 = arith.addf %1901, %1902 : vector<16x128xf32>
    %c192_866 = arith.constant 192 : index
    %c0_867 = arith.constant 0 : index
    %1904 = vector.load %arg2[%c192_866, %c0_867] : memref<416x128xf32, #tpu.memory_space<vmem>>, vector<16x128xf32>
    %c32_868 = arith.constant 32 : index
    %c0_869 = arith.constant 0 : index
    %1905 = vector.load %arg2[%c32_868, %c0_869] : memref<416x128xf32, #tpu.memory_space<vmem>>, vector<16x128xf32>
    %1906 = vector.extract_strided_slice %1903 {offsets = [0, 0], sizes = [1, 128], strides = [1, 1]} : vector<16x128xf32> to vector<1x128xf32>
    %1907 = vector.broadcast %1906 : vector<1x128xf32> to vector<16x128xf32>
    %1908 = arith.mulf %1905, %1907 : vector<16x128xf32>
    %1909 = arith.addf %1904, %1908 : vector<16x128xf32>
    %c48_870 = arith.constant 48 : index
    %c0_871 = arith.constant 0 : index
    %1910 = vector.load %arg2[%c48_870, %c0_871] : memref<416x128xf32, #tpu.memory_space<vmem>>, vector<16x128xf32>
    %1911 = vector.extract_strided_slice %1903 {offsets = [1, 0], sizes = [1, 128], strides = [1, 1]} : vector<16x128xf32> to vector<1x128xf32>
    %1912 = vector.broadcast %1911 : vector<1x128xf32> to vector<16x128xf32>
    %1913 = arith.mulf %1910, %1912 : vector<16x128xf32>
    %1914 = arith.addf %1909, %1913 : vector<16x128xf32>
    %c64_872 = arith.constant 64 : index
    %c0_873 = arith.constant 0 : index
    %1915 = vector.load %arg2[%c64_872, %c0_873] : memref<416x128xf32, #tpu.memory_space<vmem>>, vector<16x128xf32>
    %1916 = vector.extract_strided_slice %1903 {offsets = [2, 0], sizes = [1, 128], strides = [1, 1]} : vector<16x128xf32> to vector<1x128xf32>
    %1917 = vector.broadcast %1916 : vector<1x128xf32> to vector<16x128xf32>
    %1918 = arith.mulf %1915, %1917 : vector<16x128xf32>
    %1919 = arith.addf %1914, %1918 : vector<16x128xf32>
    %c80_874 = arith.constant 80 : index
    %c0_875 = arith.constant 0 : index
    %1920 = vector.load %arg2[%c80_874, %c0_875] : memref<416x128xf32, #tpu.memory_space<vmem>>, vector<16x128xf32>
    %1921 = vector.extract_strided_slice %1903 {offsets = [3, 0], sizes = [1, 128], strides = [1, 1]} : vector<16x128xf32> to vector<1x128xf32>
    %1922 = vector.broadcast %1921 : vector<1x128xf32> to vector<16x128xf32>
    %1923 = arith.mulf %1920, %1922 : vector<16x128xf32>
    %1924 = arith.addf %1919, %1923 : vector<16x128xf32>
    %c96_876 = arith.constant 96 : index
    %c0_877 = arith.constant 0 : index
    %1925 = vector.load %arg2[%c96_876, %c0_877] : memref<416x128xf32, #tpu.memory_space<vmem>>, vector<16x128xf32>
    %1926 = vector.extract_strided_slice %1903 {offsets = [4, 0], sizes = [1, 128], strides = [1, 1]} : vector<16x128xf32> to vector<1x128xf32>
    %1927 = vector.broadcast %1926 : vector<1x128xf32> to vector<16x128xf32>
    %1928 = arith.mulf %1925, %1927 : vector<16x128xf32>
    %1929 = arith.addf %1924, %1928 : vector<16x128xf32>
    %c112_878 = arith.constant 112 : index
    %c0_879 = arith.constant 0 : index
    %1930 = vector.load %arg2[%c112_878, %c0_879] : memref<416x128xf32, #tpu.memory_space<vmem>>, vector<16x128xf32>
    %1931 = vector.extract_strided_slice %1903 {offsets = [5, 0], sizes = [1, 128], strides = [1, 1]} : vector<16x128xf32> to vector<1x128xf32>
    %1932 = vector.broadcast %1931 : vector<1x128xf32> to vector<16x128xf32>
    %1933 = arith.mulf %1930, %1932 : vector<16x128xf32>
    %1934 = arith.addf %1929, %1933 : vector<16x128xf32>
    %c128_880 = arith.constant 128 : index
    %c0_881 = arith.constant 0 : index
    %1935 = vector.load %arg2[%c128_880, %c0_881] : memref<416x128xf32, #tpu.memory_space<vmem>>, vector<16x128xf32>
    %1936 = vector.extract_strided_slice %1903 {offsets = [6, 0], sizes = [1, 128], strides = [1, 1]} : vector<16x128xf32> to vector<1x128xf32>
    %1937 = vector.broadcast %1936 : vector<1x128xf32> to vector<16x128xf32>
    %1938 = arith.mulf %1935, %1937 : vector<16x128xf32>
    %1939 = arith.addf %1934, %1938 : vector<16x128xf32>
    %c144_882 = arith.constant 144 : index
    %c0_883 = arith.constant 0 : index
    %1940 = vector.load %arg2[%c144_882, %c0_883] : memref<416x128xf32, #tpu.memory_space<vmem>>, vector<16x128xf32>
    %1941 = vector.extract_strided_slice %1903 {offsets = [7, 0], sizes = [1, 128], strides = [1, 1]} : vector<16x128xf32> to vector<1x128xf32>
    %1942 = vector.broadcast %1941 : vector<1x128xf32> to vector<16x128xf32>
    %1943 = arith.mulf %1940, %1942 : vector<16x128xf32>
    %1944 = arith.addf %1939, %1943 : vector<16x128xf32>
    %c160_884 = arith.constant 160 : index
    %c0_885 = arith.constant 0 : index
    %1945 = vector.load %arg2[%c160_884, %c0_885] : memref<416x128xf32, #tpu.memory_space<vmem>>, vector<16x128xf32>
    %1946 = vector.extract_strided_slice %1903 {offsets = [8, 0], sizes = [1, 128], strides = [1, 1]} : vector<16x128xf32> to vector<1x128xf32>
    %1947 = vector.broadcast %1946 : vector<1x128xf32> to vector<16x128xf32>
    %1948 = arith.mulf %1945, %1947 : vector<16x128xf32>
    %1949 = arith.addf %1944, %1948 : vector<16x128xf32>
    %c176_886 = arith.constant 176 : index
    %c0_887 = arith.constant 0 : index
    %1950 = vector.load %arg2[%c176_886, %c0_887] : memref<416x128xf32, #tpu.memory_space<vmem>>, vector<16x128xf32>
    %1951 = vector.extract_strided_slice %1903 {offsets = [9, 0], sizes = [1, 128], strides = [1, 1]} : vector<16x128xf32> to vector<1x128xf32>
    %1952 = vector.broadcast %1951 : vector<1x128xf32> to vector<16x128xf32>
    %1953 = arith.mulf %1950, %1952 : vector<16x128xf32>
    %1954 = arith.addf %1949, %1953 : vector<16x128xf32>
    %cst_888 = arith.constant 5.000000e-01 : f32
    %1955 = vector.broadcast %cst_888 : f32 to vector<16x128xf32>
    %1956 = arith.mulf %1955, %1954 : vector<16x128xf32>
    %1957 = math.tanh %1956 : vector<16x128xf32>
    %cst_889 = arith.constant 5.000000e-01 : f32
    %1958 = vector.broadcast %cst_889 : f32 to vector<16x128xf32>
    %1959 = arith.mulf %1958, %1957 : vector<16x128xf32>
    %cst_890 = arith.constant 5.000000e-01 : f32
    %1960 = vector.broadcast %cst_890 : f32 to vector<16x128xf32>
    %1961 = arith.addf %1959, %1960 : vector<16x128xf32>
    %c368_891 = arith.constant 368 : index
    %c0_892 = arith.constant 0 : index
    %1962 = vector.load %arg2[%c368_891, %c0_892] : memref<416x128xf32, #tpu.memory_space<vmem>>, vector<16x128xf32>
    %c208_893 = arith.constant 208 : index
    %c0_894 = arith.constant 0 : index
    %1963 = vector.load %arg2[%c208_893, %c0_894] : memref<416x128xf32, #tpu.memory_space<vmem>>, vector<16x128xf32>
    %1964 = vector.extract_strided_slice %1961 {offsets = [0, 0], sizes = [1, 128], strides = [1, 1]} : vector<16x128xf32> to vector<1x128xf32>
    %1965 = vector.broadcast %1964 : vector<1x128xf32> to vector<16x128xf32>
    %1966 = arith.mulf %1963, %1965 : vector<16x128xf32>
    %1967 = arith.addf %1962, %1966 : vector<16x128xf32>
    %c224_895 = arith.constant 224 : index
    %c0_896 = arith.constant 0 : index
    %1968 = vector.load %arg2[%c224_895, %c0_896] : memref<416x128xf32, #tpu.memory_space<vmem>>, vector<16x128xf32>
    %1969 = vector.extract_strided_slice %1961 {offsets = [1, 0], sizes = [1, 128], strides = [1, 1]} : vector<16x128xf32> to vector<1x128xf32>
    %1970 = vector.broadcast %1969 : vector<1x128xf32> to vector<16x128xf32>
    %1971 = arith.mulf %1968, %1970 : vector<16x128xf32>
    %1972 = arith.addf %1967, %1971 : vector<16x128xf32>
    %c240_897 = arith.constant 240 : index
    %c0_898 = arith.constant 0 : index
    %1973 = vector.load %arg2[%c240_897, %c0_898] : memref<416x128xf32, #tpu.memory_space<vmem>>, vector<16x128xf32>
    %1974 = vector.extract_strided_slice %1961 {offsets = [2, 0], sizes = [1, 128], strides = [1, 1]} : vector<16x128xf32> to vector<1x128xf32>
    %1975 = vector.broadcast %1974 : vector<1x128xf32> to vector<16x128xf32>
    %1976 = arith.mulf %1973, %1975 : vector<16x128xf32>
    %1977 = arith.addf %1972, %1976 : vector<16x128xf32>
    %c256_899 = arith.constant 256 : index
    %c0_900 = arith.constant 0 : index
    %1978 = vector.load %arg2[%c256_899, %c0_900] : memref<416x128xf32, #tpu.memory_space<vmem>>, vector<16x128xf32>
    %1979 = vector.extract_strided_slice %1961 {offsets = [3, 0], sizes = [1, 128], strides = [1, 1]} : vector<16x128xf32> to vector<1x128xf32>
    %1980 = vector.broadcast %1979 : vector<1x128xf32> to vector<16x128xf32>
    %1981 = arith.mulf %1978, %1980 : vector<16x128xf32>
    %1982 = arith.addf %1977, %1981 : vector<16x128xf32>
    %c272_901 = arith.constant 272 : index
    %c0_902 = arith.constant 0 : index
    %1983 = vector.load %arg2[%c272_901, %c0_902] : memref<416x128xf32, #tpu.memory_space<vmem>>, vector<16x128xf32>
    %1984 = vector.extract_strided_slice %1961 {offsets = [4, 0], sizes = [1, 128], strides = [1, 1]} : vector<16x128xf32> to vector<1x128xf32>
    %1985 = vector.broadcast %1984 : vector<1x128xf32> to vector<16x128xf32>
    %1986 = arith.mulf %1983, %1985 : vector<16x128xf32>
    %1987 = arith.addf %1982, %1986 : vector<16x128xf32>
    %c288_903 = arith.constant 288 : index
    %c0_904 = arith.constant 0 : index
    %1988 = vector.load %arg2[%c288_903, %c0_904] : memref<416x128xf32, #tpu.memory_space<vmem>>, vector<16x128xf32>
    %1989 = vector.extract_strided_slice %1961 {offsets = [5, 0], sizes = [1, 128], strides = [1, 1]} : vector<16x128xf32> to vector<1x128xf32>
    %1990 = vector.broadcast %1989 : vector<1x128xf32> to vector<16x128xf32>
    %1991 = arith.mulf %1988, %1990 : vector<16x128xf32>
    %1992 = arith.addf %1987, %1991 : vector<16x128xf32>
    %c304_905 = arith.constant 304 : index
    %c0_906 = arith.constant 0 : index
    %1993 = vector.load %arg2[%c304_905, %c0_906] : memref<416x128xf32, #tpu.memory_space<vmem>>, vector<16x128xf32>
    %1994 = vector.extract_strided_slice %1961 {offsets = [6, 0], sizes = [1, 128], strides = [1, 1]} : vector<16x128xf32> to vector<1x128xf32>
    %1995 = vector.broadcast %1994 : vector<1x128xf32> to vector<16x128xf32>
    %1996 = arith.mulf %1993, %1995 : vector<16x128xf32>
    %1997 = arith.addf %1992, %1996 : vector<16x128xf32>
    %c320_907 = arith.constant 320 : index
    %c0_908 = arith.constant 0 : index
    %1998 = vector.load %arg2[%c320_907, %c0_908] : memref<416x128xf32, #tpu.memory_space<vmem>>, vector<16x128xf32>
    %1999 = vector.extract_strided_slice %1961 {offsets = [7, 0], sizes = [1, 128], strides = [1, 1]} : vector<16x128xf32> to vector<1x128xf32>
    %2000 = vector.broadcast %1999 : vector<1x128xf32> to vector<16x128xf32>
    %2001 = arith.mulf %1998, %2000 : vector<16x128xf32>
    %2002 = arith.addf %1997, %2001 : vector<16x128xf32>
    %c336_909 = arith.constant 336 : index
    %c0_910 = arith.constant 0 : index
    %2003 = vector.load %arg2[%c336_909, %c0_910] : memref<416x128xf32, #tpu.memory_space<vmem>>, vector<16x128xf32>
    %2004 = vector.extract_strided_slice %1961 {offsets = [8, 0], sizes = [1, 128], strides = [1, 1]} : vector<16x128xf32> to vector<1x128xf32>
    %2005 = vector.broadcast %2004 : vector<1x128xf32> to vector<16x128xf32>
    %2006 = arith.mulf %2003, %2005 : vector<16x128xf32>
    %2007 = arith.addf %2002, %2006 : vector<16x128xf32>
    %c352_911 = arith.constant 352 : index
    %c0_912 = arith.constant 0 : index
    %2008 = vector.load %arg2[%c352_911, %c0_912] : memref<416x128xf32, #tpu.memory_space<vmem>>, vector<16x128xf32>
    %2009 = vector.extract_strided_slice %1961 {offsets = [9, 0], sizes = [1, 128], strides = [1, 1]} : vector<16x128xf32> to vector<1x128xf32>
    %2010 = vector.broadcast %2009 : vector<1x128xf32> to vector<16x128xf32>
    %2011 = arith.mulf %2008, %2010 : vector<16x128xf32>
    %2012 = arith.addf %2007, %2011 : vector<16x128xf32>
    %cst_913 = arith.constant 5.000000e-01 : f32
    %2013 = vector.broadcast %cst_913 : f32 to vector<16x128xf32>
    %2014 = arith.mulf %2013, %2012 : vector<16x128xf32>
    %2015 = math.tanh %2014 : vector<16x128xf32>
    %cst_914 = arith.constant 5.000000e-01 : f32
    %2016 = vector.broadcast %cst_914 : f32 to vector<16x128xf32>
    %2017 = arith.mulf %2016, %2015 : vector<16x128xf32>
    %cst_915 = arith.constant 5.000000e-01 : f32
    %2018 = vector.broadcast %cst_915 : f32 to vector<16x128xf32>
    %2019 = arith.addf %2017, %2018 : vector<16x128xf32>
    %c384_916 = arith.constant 384 : index
    %c0_917 = arith.constant 0 : index
    %2020 = vector.load %arg2[%c384_916, %c0_917] : memref<416x128xf32, #tpu.memory_space<vmem>>, vector<16x128xf32>
    %2021 = arith.mulf %2020, %2019 : vector<16x128xf32>
    %cst_918 = arith.constant dense<0.000000e+00> : vector<128xf32>
    %2022 = vector.multi_reduction <add>, %2021, %cst_918 [0] : vector<16x128xf32> to vector<128xf32>
    %2023 = vector.shape_cast %2022 : vector<128xf32> to vector<1x128xf32>
    %2024 = arith.addf %2023, %0 : vector<1x128xf32>
    %c14_919 = arith.constant 14 : index
    %c0_920 = arith.constant 0 : index
    %2025 = vector.load %arg3[%c14_919, %c0_920] : memref<16x128xf32, #tpu.memory_space<vmem>>, vector<1x128xf32>
    tpu.vector_store %arg3[%c14_919, %c0_920], %2024 {strides = array<i32>} : memref<16x128xf32, #tpu.memory_space<vmem>>, vector<1x128xf32>,
    %c15 = arith.constant 15 : index
    %c0_921 = arith.constant 0 : index
    %2026 = vector.load %arg1[%c15, %c0_921] : memref<16x128xf32, #tpu.memory_space<vmem>>, vector<1x128xf32>
    %c0_922 = arith.constant 0 : index
    %c0_923 = arith.constant 0 : index
    %2027 = vector.load %arg2[%c0_922, %c0_923] : memref<416x128xf32, #tpu.memory_space<vmem>>, vector<16x128xf32>
    %2028 = vector.broadcast %2026 : vector<1x128xf32> to vector<16x128xf32>
    %2029 = arith.mulf %2027, %2028 : vector<16x128xf32>
    %c16_924 = arith.constant 16 : index
    %c0_925 = arith.constant 0 : index
    %2030 = vector.load %arg2[%c16_924, %c0_925] : memref<416x128xf32, #tpu.memory_space<vmem>>, vector<16x128xf32>
    %2031 = arith.addf %2029, %2030 : vector<16x128xf32>
    %cst_926 = arith.constant 5.000000e-01 : f32
    %2032 = vector.broadcast %cst_926 : f32 to vector<16x128xf32>
    %2033 = arith.mulf %2032, %2031 : vector<16x128xf32>
    %2034 = math.tanh %2033 : vector<16x128xf32>
    %cst_927 = arith.constant 5.000000e-01 : f32
    %2035 = vector.broadcast %cst_927 : f32 to vector<16x128xf32>
    %2036 = arith.mulf %2035, %2034 : vector<16x128xf32>
    %cst_928 = arith.constant 5.000000e-01 : f32
    %2037 = vector.broadcast %cst_928 : f32 to vector<16x128xf32>
    %2038 = arith.addf %2036, %2037 : vector<16x128xf32>
    %c192_929 = arith.constant 192 : index
    %c0_930 = arith.constant 0 : index
    %2039 = vector.load %arg2[%c192_929, %c0_930] : memref<416x128xf32, #tpu.memory_space<vmem>>, vector<16x128xf32>
    %c32_931 = arith.constant 32 : index
    %c0_932 = arith.constant 0 : index
    %2040 = vector.load %arg2[%c32_931, %c0_932] : memref<416x128xf32, #tpu.memory_space<vmem>>, vector<16x128xf32>
    %2041 = vector.extract_strided_slice %2038 {offsets = [0, 0], sizes = [1, 128], strides = [1, 1]} : vector<16x128xf32> to vector<1x128xf32>
    %2042 = vector.broadcast %2041 : vector<1x128xf32> to vector<16x128xf32>
    %2043 = arith.mulf %2040, %2042 : vector<16x128xf32>
    %2044 = arith.addf %2039, %2043 : vector<16x128xf32>
    %c48_933 = arith.constant 48 : index
    %c0_934 = arith.constant 0 : index
    %2045 = vector.load %arg2[%c48_933, %c0_934] : memref<416x128xf32, #tpu.memory_space<vmem>>, vector<16x128xf32>
    %2046 = vector.extract_strided_slice %2038 {offsets = [1, 0], sizes = [1, 128], strides = [1, 1]} : vector<16x128xf32> to vector<1x128xf32>
    %2047 = vector.broadcast %2046 : vector<1x128xf32> to vector<16x128xf32>
    %2048 = arith.mulf %2045, %2047 : vector<16x128xf32>
    %2049 = arith.addf %2044, %2048 : vector<16x128xf32>
    %c64_935 = arith.constant 64 : index
    %c0_936 = arith.constant 0 : index
    %2050 = vector.load %arg2[%c64_935, %c0_936] : memref<416x128xf32, #tpu.memory_space<vmem>>, vector<16x128xf32>
    %2051 = vector.extract_strided_slice %2038 {offsets = [2, 0], sizes = [1, 128], strides = [1, 1]} : vector<16x128xf32> to vector<1x128xf32>
    %2052 = vector.broadcast %2051 : vector<1x128xf32> to vector<16x128xf32>
    %2053 = arith.mulf %2050, %2052 : vector<16x128xf32>
    %2054 = arith.addf %2049, %2053 : vector<16x128xf32>
    %c80_937 = arith.constant 80 : index
    %c0_938 = arith.constant 0 : index
    %2055 = vector.load %arg2[%c80_937, %c0_938] : memref<416x128xf32, #tpu.memory_space<vmem>>, vector<16x128xf32>
    %2056 = vector.extract_strided_slice %2038 {offsets = [3, 0], sizes = [1, 128], strides = [1, 1]} : vector<16x128xf32> to vector<1x128xf32>
    %2057 = vector.broadcast %2056 : vector<1x128xf32> to vector<16x128xf32>
    %2058 = arith.mulf %2055, %2057 : vector<16x128xf32>
    %2059 = arith.addf %2054, %2058 : vector<16x128xf32>
    %c96_939 = arith.constant 96 : index
    %c0_940 = arith.constant 0 : index
    %2060 = vector.load %arg2[%c96_939, %c0_940] : memref<416x128xf32, #tpu.memory_space<vmem>>, vector<16x128xf32>
    %2061 = vector.extract_strided_slice %2038 {offsets = [4, 0], sizes = [1, 128], strides = [1, 1]} : vector<16x128xf32> to vector<1x128xf32>
    %2062 = vector.broadcast %2061 : vector<1x128xf32> to vector<16x128xf32>
    %2063 = arith.mulf %2060, %2062 : vector<16x128xf32>
    %2064 = arith.addf %2059, %2063 : vector<16x128xf32>
    %c112_941 = arith.constant 112 : index
    %c0_942 = arith.constant 0 : index
    %2065 = vector.load %arg2[%c112_941, %c0_942] : memref<416x128xf32, #tpu.memory_space<vmem>>, vector<16x128xf32>
    %2066 = vector.extract_strided_slice %2038 {offsets = [5, 0], sizes = [1, 128], strides = [1, 1]} : vector<16x128xf32> to vector<1x128xf32>
    %2067 = vector.broadcast %2066 : vector<1x128xf32> to vector<16x128xf32>
    %2068 = arith.mulf %2065, %2067 : vector<16x128xf32>
    %2069 = arith.addf %2064, %2068 : vector<16x128xf32>
    %c128_943 = arith.constant 128 : index
    %c0_944 = arith.constant 0 : index
    %2070 = vector.load %arg2[%c128_943, %c0_944] : memref<416x128xf32, #tpu.memory_space<vmem>>, vector<16x128xf32>
    %2071 = vector.extract_strided_slice %2038 {offsets = [6, 0], sizes = [1, 128], strides = [1, 1]} : vector<16x128xf32> to vector<1x128xf32>
    %2072 = vector.broadcast %2071 : vector<1x128xf32> to vector<16x128xf32>
    %2073 = arith.mulf %2070, %2072 : vector<16x128xf32>
    %2074 = arith.addf %2069, %2073 : vector<16x128xf32>
    %c144_945 = arith.constant 144 : index
    %c0_946 = arith.constant 0 : index
    %2075 = vector.load %arg2[%c144_945, %c0_946] : memref<416x128xf32, #tpu.memory_space<vmem>>, vector<16x128xf32>
    %2076 = vector.extract_strided_slice %2038 {offsets = [7, 0], sizes = [1, 128], strides = [1, 1]} : vector<16x128xf32> to vector<1x128xf32>
    %2077 = vector.broadcast %2076 : vector<1x128xf32> to vector<16x128xf32>
    %2078 = arith.mulf %2075, %2077 : vector<16x128xf32>
    %2079 = arith.addf %2074, %2078 : vector<16x128xf32>
    %c160_947 = arith.constant 160 : index
    %c0_948 = arith.constant 0 : index
    %2080 = vector.load %arg2[%c160_947, %c0_948] : memref<416x128xf32, #tpu.memory_space<vmem>>, vector<16x128xf32>
    %2081 = vector.extract_strided_slice %2038 {offsets = [8, 0], sizes = [1, 128], strides = [1, 1]} : vector<16x128xf32> to vector<1x128xf32>
    %2082 = vector.broadcast %2081 : vector<1x128xf32> to vector<16x128xf32>
    %2083 = arith.mulf %2080, %2082 : vector<16x128xf32>
    %2084 = arith.addf %2079, %2083 : vector<16x128xf32>
    %c176_949 = arith.constant 176 : index
    %c0_950 = arith.constant 0 : index
    %2085 = vector.load %arg2[%c176_949, %c0_950] : memref<416x128xf32, #tpu.memory_space<vmem>>, vector<16x128xf32>
    %2086 = vector.extract_strided_slice %2038 {offsets = [9, 0], sizes = [1, 128], strides = [1, 1]} : vector<16x128xf32> to vector<1x128xf32>
    %2087 = vector.broadcast %2086 : vector<1x128xf32> to vector<16x128xf32>
    %2088 = arith.mulf %2085, %2087 : vector<16x128xf32>
    %2089 = arith.addf %2084, %2088 : vector<16x128xf32>
    %cst_951 = arith.constant 5.000000e-01 : f32
    %2090 = vector.broadcast %cst_951 : f32 to vector<16x128xf32>
    %2091 = arith.mulf %2090, %2089 : vector<16x128xf32>
    %2092 = math.tanh %2091 : vector<16x128xf32>
    %cst_952 = arith.constant 5.000000e-01 : f32
    %2093 = vector.broadcast %cst_952 : f32 to vector<16x128xf32>
    %2094 = arith.mulf %2093, %2092 : vector<16x128xf32>
    %cst_953 = arith.constant 5.000000e-01 : f32
    %2095 = vector.broadcast %cst_953 : f32 to vector<16x128xf32>
    %2096 = arith.addf %2094, %2095 : vector<16x128xf32>
    %c368_954 = arith.constant 368 : index
    %c0_955 = arith.constant 0 : index
    %2097 = vector.load %arg2[%c368_954, %c0_955] : memref<416x128xf32, #tpu.memory_space<vmem>>, vector<16x128xf32>
    %c208_956 = arith.constant 208 : index
    %c0_957 = arith.constant 0 : index
    %2098 = vector.load %arg2[%c208_956, %c0_957] : memref<416x128xf32, #tpu.memory_space<vmem>>, vector<16x128xf32>
    %2099 = vector.extract_strided_slice %2096 {offsets = [0, 0], sizes = [1, 128], strides = [1, 1]} : vector<16x128xf32> to vector<1x128xf32>
    %2100 = vector.broadcast %2099 : vector<1x128xf32> to vector<16x128xf32>
    %2101 = arith.mulf %2098, %2100 : vector<16x128xf32>
    %2102 = arith.addf %2097, %2101 : vector<16x128xf32>
    %c224_958 = arith.constant 224 : index
    %c0_959 = arith.constant 0 : index
    %2103 = vector.load %arg2[%c224_958, %c0_959] : memref<416x128xf32, #tpu.memory_space<vmem>>, vector<16x128xf32>
    %2104 = vector.extract_strided_slice %2096 {offsets = [1, 0], sizes = [1, 128], strides = [1, 1]} : vector<16x128xf32> to vector<1x128xf32>
    %2105 = vector.broadcast %2104 : vector<1x128xf32> to vector<16x128xf32>
    %2106 = arith.mulf %2103, %2105 : vector<16x128xf32>
    %2107 = arith.addf %2102, %2106 : vector<16x128xf32>
    %c240_960 = arith.constant 240 : index
    %c0_961 = arith.constant 0 : index
    %2108 = vector.load %arg2[%c240_960, %c0_961] : memref<416x128xf32, #tpu.memory_space<vmem>>, vector<16x128xf32>
    %2109 = vector.extract_strided_slice %2096 {offsets = [2, 0], sizes = [1, 128], strides = [1, 1]} : vector<16x128xf32> to vector<1x128xf32>
    %2110 = vector.broadcast %2109 : vector<1x128xf32> to vector<16x128xf32>
    %2111 = arith.mulf %2108, %2110 : vector<16x128xf32>
    %2112 = arith.addf %2107, %2111 : vector<16x128xf32>
    %c256_962 = arith.constant 256 : index
    %c0_963 = arith.constant 0 : index
    %2113 = vector.load %arg2[%c256_962, %c0_963] : memref<416x128xf32, #tpu.memory_space<vmem>>, vector<16x128xf32>
    %2114 = vector.extract_strided_slice %2096 {offsets = [3, 0], sizes = [1, 128], strides = [1, 1]} : vector<16x128xf32> to vector<1x128xf32>
    %2115 = vector.broadcast %2114 : vector<1x128xf32> to vector<16x128xf32>
    %2116 = arith.mulf %2113, %2115 : vector<16x128xf32>
    %2117 = arith.addf %2112, %2116 : vector<16x128xf32>
    %c272_964 = arith.constant 272 : index
    %c0_965 = arith.constant 0 : index
    %2118 = vector.load %arg2[%c272_964, %c0_965] : memref<416x128xf32, #tpu.memory_space<vmem>>, vector<16x128xf32>
    %2119 = vector.extract_strided_slice %2096 {offsets = [4, 0], sizes = [1, 128], strides = [1, 1]} : vector<16x128xf32> to vector<1x128xf32>
    %2120 = vector.broadcast %2119 : vector<1x128xf32> to vector<16x128xf32>
    %2121 = arith.mulf %2118, %2120 : vector<16x128xf32>
    %2122 = arith.addf %2117, %2121 : vector<16x128xf32>
    %c288_966 = arith.constant 288 : index
    %c0_967 = arith.constant 0 : index
    %2123 = vector.load %arg2[%c288_966, %c0_967] : memref<416x128xf32, #tpu.memory_space<vmem>>, vector<16x128xf32>
    %2124 = vector.extract_strided_slice %2096 {offsets = [5, 0], sizes = [1, 128], strides = [1, 1]} : vector<16x128xf32> to vector<1x128xf32>
    %2125 = vector.broadcast %2124 : vector<1x128xf32> to vector<16x128xf32>
    %2126 = arith.mulf %2123, %2125 : vector<16x128xf32>
    %2127 = arith.addf %2122, %2126 : vector<16x128xf32>
    %c304_968 = arith.constant 304 : index
    %c0_969 = arith.constant 0 : index
    %2128 = vector.load %arg2[%c304_968, %c0_969] : memref<416x128xf32, #tpu.memory_space<vmem>>, vector<16x128xf32>
    %2129 = vector.extract_strided_slice %2096 {offsets = [6, 0], sizes = [1, 128], strides = [1, 1]} : vector<16x128xf32> to vector<1x128xf32>
    %2130 = vector.broadcast %2129 : vector<1x128xf32> to vector<16x128xf32>
    %2131 = arith.mulf %2128, %2130 : vector<16x128xf32>
    %2132 = arith.addf %2127, %2131 : vector<16x128xf32>
    %c320_970 = arith.constant 320 : index
    %c0_971 = arith.constant 0 : index
    %2133 = vector.load %arg2[%c320_970, %c0_971] : memref<416x128xf32, #tpu.memory_space<vmem>>, vector<16x128xf32>
    %2134 = vector.extract_strided_slice %2096 {offsets = [7, 0], sizes = [1, 128], strides = [1, 1]} : vector<16x128xf32> to vector<1x128xf32>
    %2135 = vector.broadcast %2134 : vector<1x128xf32> to vector<16x128xf32>
    %2136 = arith.mulf %2133, %2135 : vector<16x128xf32>
    %2137 = arith.addf %2132, %2136 : vector<16x128xf32>
    %c336_972 = arith.constant 336 : index
    %c0_973 = arith.constant 0 : index
    %2138 = vector.load %arg2[%c336_972, %c0_973] : memref<416x128xf32, #tpu.memory_space<vmem>>, vector<16x128xf32>
    %2139 = vector.extract_strided_slice %2096 {offsets = [8, 0], sizes = [1, 128], strides = [1, 1]} : vector<16x128xf32> to vector<1x128xf32>
    %2140 = vector.broadcast %2139 : vector<1x128xf32> to vector<16x128xf32>
    %2141 = arith.mulf %2138, %2140 : vector<16x128xf32>
    %2142 = arith.addf %2137, %2141 : vector<16x128xf32>
    %c352_974 = arith.constant 352 : index
    %c0_975 = arith.constant 0 : index
    %2143 = vector.load %arg2[%c352_974, %c0_975] : memref<416x128xf32, #tpu.memory_space<vmem>>, vector<16x128xf32>
    %2144 = vector.extract_strided_slice %2096 {offsets = [9, 0], sizes = [1, 128], strides = [1, 1]} : vector<16x128xf32> to vector<1x128xf32>
    %2145 = vector.broadcast %2144 : vector<1x128xf32> to vector<16x128xf32>
    %2146 = arith.mulf %2143, %2145 : vector<16x128xf32>
    %2147 = arith.addf %2142, %2146 : vector<16x128xf32>
    %cst_976 = arith.constant 5.000000e-01 : f32
    %2148 = vector.broadcast %cst_976 : f32 to vector<16x128xf32>
    %2149 = arith.mulf %2148, %2147 : vector<16x128xf32>
    %2150 = math.tanh %2149 : vector<16x128xf32>
    %cst_977 = arith.constant 5.000000e-01 : f32
    %2151 = vector.broadcast %cst_977 : f32 to vector<16x128xf32>
    %2152 = arith.mulf %2151, %2150 : vector<16x128xf32>
    %cst_978 = arith.constant 5.000000e-01 : f32
    %2153 = vector.broadcast %cst_978 : f32 to vector<16x128xf32>
    %2154 = arith.addf %2152, %2153 : vector<16x128xf32>
    %c384_979 = arith.constant 384 : index
    %c0_980 = arith.constant 0 : index
    %2155 = vector.load %arg2[%c384_979, %c0_980] : memref<416x128xf32, #tpu.memory_space<vmem>>, vector<16x128xf32>
    %2156 = arith.mulf %2155, %2154 : vector<16x128xf32>
    %cst_981 = arith.constant dense<0.000000e+00> : vector<128xf32>
    %2157 = vector.multi_reduction <add>, %2156, %cst_981 [0] : vector<16x128xf32> to vector<128xf32>
    %2158 = vector.shape_cast %2157 : vector<128xf32> to vector<1x128xf32>
    %2159 = arith.addf %2158, %0 : vector<1x128xf32>
    %c15_982 = arith.constant 15 : index
    %c0_983 = arith.constant 0 : index
    %2160 = vector.load %arg3[%c15_982, %c0_983] : memref<16x128xf32, #tpu.memory_space<vmem>>, vector<1x128xf32>
    tpu.vector_store %arg3[%c15_982, %c0_983], %2159 {strides = array<i32>} : memref<16x128xf32, #tpu.memory_space<vmem>>, vector<1x128xf32>,
    return
  }
  func.func @transform_0(%arg0: i32) -> (i32, i32) {
    %c0_i32 = arith.constant 0 : i32
    %c0_i32_0 = arith.constant 0 : i32
    return %arg0, %c0_i32 : i32, i32
  }
  func.func @transform_1(%arg0: i32) -> (i32, i32) {
    %c0_i32 = arith.constant 0 : i32
    %c0_i32_0 = arith.constant 0 : i32
    %c0_i32_1 = arith.constant 0 : i32
    return %c0_i32, %c0_i32_0 : i32, i32
  }
  func.func @transform_2(%arg0: i32) -> (i32, i32) {
    %c0_i32 = arith.constant 0 : i32
    %c0_i32_0 = arith.constant 0 : i32
    return %arg0, %c0_i32 : i32, i32
  }
}

</mosaic_0001>

<llo_original>
// kernel: approx_nn_forward.1
$region0: #{approx_nn_forward.1}
  #allocation0 [shape = 'u32[]', space=smem, size = 0x4, offset = 0x4, fixed_abs, tag = 'smem constant byte address 0x4 - core index']
  #allocation1 [shape = 'u32[144,128]{1,0:T(1,128)}', space=vmem, size = 0x12000, scoped, tag = 'internal scratch']
  %s0 = inlined_call_operand.vmem [shape: f32[32,128], index: 0, kind: input, shape index: {}]
  %s1 = inlined_call_operand.hbm [shape: f32[416,128], index: 1, kind: input, shape index: {}]
  %s2 = inlined_call_operand.vmem [shape: f32[32,128], index: 2, kind: output, shape index: {}]
  %s3 = sld [smem:[#allocation0]]
  $region45: #{approx_nn_forward.1} parent=0
    _
  %s5 = ssub.s32 1, %s3
  %s6 = scalar_select 0, %s5, %s3
  $region1: #{approx_nn_forward.1} parent=0
    #allocation2 [shape = 'u8[212992]{0}', space=vmem, size = 0x34000, scoped, tag = 'input window, operand 1, single buffered']
    #allocation3 [shape = 's32[2]{0}', space=sflag, size = 0x8, scoped, tag = 'scoped memory for approx_nn_forward.1']
    %7 = vsyncpa [#allocation3], 0
    loop: start=0, step=1, limit=4
    $region2: #{approx_nn_forward.1} parent=1 // loop_pre_header
      _
    $region3: #{approx_nn_forward.1} parent=1 // loop_header
      %s9 = sphi 0, %s13
      %p10 = scmp.ge.s32.totalorder %s9, 4
      %s19 = sphi 0, %s21
      %s22 = sphi 0, %s19
      %s23 = sphi 0, %s22
      %s39 = sphi 0, %s23
      %s43 = sphi 0, %s43
      %s45 = sphi 0, %s43
      %s46 = sphi 0, %s45
      %s60 = sphi 0, %s46
      %s66 = sphi 0, %s68
      %s69 = sphi 0, %s66
      %s70 = sphi 0, %s69
      %s86 = sphi 0, %s70
    $region4: #{approx_nn_forward.1} parent=1 // loop_header_branch
      %12 = sbr.rel (%p10) target = $region8
    $region5: #{approx_nn_forward.1} parent=1 // loop_body
      %s14 = ssub.s32 %s9, 1
      %s15 = ssub.s32 %s9, 2
      %s16 = sadd.s32 %s9, 1
      %s17 = ssub.s32 %s9, %s16
      %p18 = scmp.eq.s32.totalorder %s17, 0
      %s20 = sadd.s32 %s19, 1
      %s21 = scalar_select %p18, %s19, %s20
      %p24 = pneg %p18
      %p25 = scmp.eq.s32.totalorder %s9, 1
      %p26 = por %p24, %p25
      %p27 = scmp.ne.s32.totalorder %s19, %s22
      %p28 = scmp.eq.s32.totalorder %s9, 0
      %p29 = por %p27, %p28
      %p30 = scmp.ne.s32.totalorder %s19, %s22
      %p31 = scmp.eq.s32.totalorder %s14, 1
      %p32 = por %p30, %p31
      %p33 = scmp.ne.s32.totalorder %s22, %s23
      %p34 = scmp.eq.s32.totalorder %s14, 0
      %p35 = por %p33, %p34
      %p36 = scmp.ne.s32.totalorder %s22, %s23
      %p37 = scmp.eq.s32.totalorder %s15, 1
      %p38 = por %p36, %p37
      %p40 = scmp.ne.s32.totalorder %s23, %s39
      %p41 = scmp.eq.s32.totalorder %s15, 0
      %p42 = por %p40, %p41
      %s44 = sadd.s32 %s43, 1
      %p47 = scmp.eq.s32.totalorder %s9, 1
      %p48 = scmp.ne.s32.totalorder %s43, %s45
      %p49 = scmp.eq.s32.totalorder %s9, 0
      %p50 = por %p48, %p49
      %p51 = scmp.ne.s32.totalorder %s43, %s45
      %p52 = scmp.eq.s32.totalorder %s14, 1
      %p53 = por %p51, %p52
      %p54 = scmp.ne.s32.totalorder %s45, %s46
      %p55 = scmp.eq.s32.totalorder %s14, 0
      %p56 = por %p54, %p55
      %p57 = scmp.ne.s32.totalorder %s45, %s46
      %p58 = scmp.eq.s32.totalorder %s15, 1
      %p59 = por %p57, %p58
      %p61 = scmp.ne.s32.totalorder %s46, %s60
      %p62 = scmp.eq.s32.totalorder %s15, 0
      %p63 = por %p61, %p62
      %s64 = ssub.s32 %s9, %s16
      %p65 = scmp.eq.s32.totalorder %s64, 0
      %s67 = sadd.s32 %s66, 1
      %s68 = scalar_select %p65, %s66, %s67
      %p71 = pneg %p65
      %p72 = scmp.eq.s32.totalorder %s9, 1
      %p73 = por %p71, %p72
      %p74 = scmp.ne.s32.totalorder %s66, %s69
      %p75 = scmp.eq.s32.totalorder %s9, 0
      %p76 = por %p74, %p75
      %p77 = scmp.ne.s32.totalorder %s66, %s69
      %p78 = scmp.eq.s32.totalorder %s14, 1
      %p79 = por %p77, %p78
      %p80 = scmp.ne.s32.totalorder %s69, %s70
      %p81 = scmp.eq.s32.totalorder %s14, 0
      %p82 = por %p80, %p81
      %p83 = scmp.ne.s32.totalorder %s69, %s70
      %p84 = scmp.eq.s32.totalorder %s15, 1
      %p85 = por %p83, %p84
      %p87 = scmp.ne.s32.totalorder %s70, %s86
      %p88 = scmp.eq.s32.totalorder %s15, 0
      %p89 = por %p87, %p88
      %p90 = scmp.le.s32.totalorder 1, %s9
      %p91 = scmp.lt.s32.totalorder %s9, 3
      %p92 = pnand %p90, %p91
      %p93 = pneg %p92
      // Predicated region
      $region9: #{approx_nn_forward.1} parent=5 // pred_check
        _
      $region10: #{approx_nn_forward.1} parent=5 // pred_check_branch
        %95 = sbr.rel (%p92) target = $region12
      $region11: #{approx_nn_forward.1} parent=5 // pred_region
        %s96 = ssub.s32 %s9, 1
        // Predicated region
        $region13: #{approx_nn_forward.1} parent=11 // pred_check
          %p97 = pneg %p56
        $region14: #{approx_nn_forward.1} parent=11 // pred_check_branch
          %99 = sbr.rel (%p97) target = $region16
        $region15: #{approx_nn_forward.1} parent=11 // pred_region
          %s101 = ssub.s32 6656, 6656
          %102 = vsyncadd [#allocation3], %s101
          %s103 = sshll.u32 [#allocation2], 4
          %s104 = int_to_ptr.vmem [resolvable:$true] %s103
          %109 = dma.hbm_to_vmem [thread:$0]  %s1, 6656, %s104, [#allocation3], 128, 128, 8
        $region16: #{approx_nn_forward.1} parent=11 // pred_fallthru
          _
      $region12: #{approx_nn_forward.1} parent=5 // pred_fallthru
        _
      %p110 = scmp.lt.s32.totalorder %s9, 2
      // Predicated region
      $region17: #{approx_nn_forward.1} parent=5 // pred_check
        %p111 = pneg %p110
      $region18: #{approx_nn_forward.1} parent=5 // pred_check_branch
        %113 = sbr.rel (%p111) target = $region20
      $region19: #{approx_nn_forward.1} parent=5 // pred_region
        // Predicated region
        $region21: #{approx_nn_forward.1} parent=19 // pred_check
          %p114 = pneg %p29
        $region22: #{approx_nn_forward.1} parent=19 // pred_check_branch
          %116 = sbr.rel (%p114) target = $region24
        $region23: #{approx_nn_forward.1} parent=19 // pred_region
          %s117 = smul.u32 2, %s9
          %p118 = scmp.lt.s32.totalorder %s117, 3
          %s119 = scalar_select %p118, %s117, 3
          %s120 = smul.addr %s119, 8
          %s121 = scalar_lea.vmem %s0, %s120
          %s122 = smul.u32 2, %s9
        $region24: #{approx_nn_forward.1} parent=19 // pred_fallthru
          _
      $region20: #{approx_nn_forward.1} parent=5 // pred_fallthru
        _
      %p123 = scmp.le.s32.totalorder 1, %s9
      %p124 = scmp.lt.s32.totalorder %s9, 3
      %p125 = pnand %p123, %p124
      %p126 = pneg %p125
      // Predicated region
      $region25: #{approx_nn_forward.1} parent=5 // pred_check
        _
      $region26: #{approx_nn_forward.1} parent=5 // pred_check_branch
        %128 = sbr.rel (%p125) target = $region28
      $region27: #{approx_nn_forward.1} parent=5 // pred_region
        %s129 = ssub.s32 %s9, 1
        // Predicated region
        $region29: #{approx_nn_forward.1} parent=27 // pred_check
          %p130 = pneg %p56
        $region30: #{approx_nn_forward.1} parent=27 // pred_check_branch
          %132 = sbr.rel (%p130) target = $region32
        $region31: #{approx_nn_forward.1} parent=27 // pred_region
          %133 = dma.done [#allocation3], 6656
        $region32: #{approx_nn_forward.1} parent=27 // pred_fallthru
          _
        %s134 = smul.u32 2, %s14
        %p135 = scmp.lt.s32.totalorder %s134, 3
        %s136 = scalar_select %p135, %s134, 3
        %s137 = smul.addr %s136, 8
        %s138 = scalar_lea.vmem %s0, %s137
        %p139 = pneg %p35
        %p140 = pneg %p32
        %p141 = pneg %p56
        %p142 = pneg %p53
        %p143 = pneg %p82
        %p144 = pneg %p79
        %s145 = smul.u32 2, %s14
        %p146 = scmp.lt.s32.totalorder %s145, 3
        %s147 = scalar_select %p146, %s145, 3
        %s148 = smul.addr %s147, 8
        %s149 = scalar_lea.vmem %s2, %s148
        %s150 = smul.u32 2, %s14
        %p151 = scmp.lt.s32.totalorder %s150, 3
        %s152 = scalar_select %p151, %s150, 3
        %s153 = smul.addr %s152, 8
        %s154 = scalar_lea.vmem %s0, %s153
        %s155 = smul.u32 2, %s14
        %s156 = smul.u32 2, %s14
        %p157 = scmp.lt.s32.totalorder %s156, 3
        %s158 = scalar_select %p157, %s156, 3
        %s159 = smul.addr %s158, 8
        %s160 = scalar_lea.vmem %s2, %s159
        %s161 = smul.u32 2, %s14
        %v162 = vld [vmem:[#allocation2 + $0x190] sm:$0x1]
        %v163 = vld [vmem:[%s154] sm:$0x1]
        %v164 = vld [vmem:[#allocation2] sm:$0xff]
        %v165 = vld [vmem:[#allocation2 + $0x8] sm:$0xff]
        %v166 = vlaneseq
        %v167 = vshrl.u32 %v166, 7
        %v168 = vsub.s32 0, %v167
        %v169 = vrot.slane %v163, %v168
        %v170 = vmul.f32 %v164, %v169
        %v171 = vmul.f32 %v165, %v169
        %v172 = vld [vmem:[#allocation2 + $0x10] sm:$0xff]
        %v173 = vld [vmem:[#allocation2 + $0x18] sm:$0xff]
        %v174 = vadd.f32 %v170, %v172
        %v175 = vadd.f32 %v171, %v173
        %v176 = vmul.f32 %v174, 0.5
        %v177 = vmul.f32 %v175, 0.5
        %v178 = vtanh.pop %v176
        %v179 = vtanh.pop %v177
        %v180 = vmul.f32 %v178, 0.5
        %v181 = vmul.f32 %v179, 0.5
        %v182 = vadd.f32 %v180, 0.5
        %v183 = vadd.f32 %v181, 0.5
        %v184 = vld [vmem:[#allocation2 + $0xc0] sm:$0xff]
        %v185 = vld [vmem:[#allocation2 + $0xc8] sm:$0xff]
        %v186 = vld [vmem:[#allocation2 + $0x20] sm:$0xff]
        %v187 = vld [vmem:[#allocation2 + $0x28] sm:$0xff]
        %v188 = vlaneseq
        %v189 = vshrl.u32 %v188, 7
        %v190 = vsub.s32 0, %v189
        %v191 = vrot.slane %v182, %v190
        %v192 = vmul.f32 %v186, %v191
        %v193 = vmul.f32 %v187, %v191
        %v194 = vadd.f32 %v184, %v192
        %v195 = vadd.f32 %v185, %v193
        %v196 = vld [vmem:[#allocation2 + $0x30] sm:$0xff]
        %v197 = vld [vmem:[#allocation2 + $0x38] sm:$0xff]
        %v198 = vlaneseq
        %v199 = vshrl.u32 %v198, 7
        %v200 = vsub.s32 1, %v199
        %v201 = vrot.slane %v182, %v200
        %v202 = vmul.f32 %v196, %v201
        %v203 = vmul.f32 %v197, %v201
        %v204 = vadd.f32 %v194, %v202
        %v205 = vadd.f32 %v195, %v203
        %v206 = vld [vmem:[#allocation2 + $0x40] sm:$0xff]
        %v207 = vld [vmem:[#allocation2 + $0x48] sm:$0xff]
        %v208 = vlaneseq
        %v209 = vshrl.u32 %v208, 7
        %v210 = vsub.s32 2, %v209
        %v211 = vrot.slane %v182, %v210
        %v212 = vmul.f32 %v206, %v211
        %v213 = vmul.f32 %v207, %v211
        %v214 = vadd.f32 %v204, %v212
        %v215 = vadd.f32 %v205, %v213
        %v216 = vld [vmem:[#allocation2 + $0x50] sm:$0xff]
        %v217 = vld [vmem:[#allocation2 + $0x58] sm:$0xff]
        %v218 = vlaneseq
        %v219 = vshrl.u32 %v218, 7
        %v220 = vsub.s32 3, %v219
        %v221 = vrot.slane %v182, %v220
        %v222 = vmul.f32 %v216, %v221
        %v223 = vmul.f32 %v217, %v221
        %v224 = vadd.f32 %v214, %v222
        %v225 = vadd.f32 %v215, %v223
        %v226 = vld [vmem:[#allocation2 + $0x60] sm:$0xff]
        %v227 = vld [vmem:[#allocation2 + $0x68] sm:$0xff]
        %v228 = vlaneseq
        %v229 = vshrl.u32 %v228, 7
        %v230 = vsub.s32 4, %v229
        %v231 = vrot.slane %v182, %v230
        %v232 = vmul.f32 %v226, %v231
        %v233 = vmul.f32 %v227, %v231
        %v234 = vadd.f32 %v224, %v232
        %v235 = vadd.f32 %v225, %v233
        %v236 = vld [vmem:[#allocation2 + $0x70] sm:$0xff]
        %v237 = vld [vmem:[#allocation2 + $0x78] sm:$0xff]
        %v238 = vlaneseq
        %v239 = vshrl.u32 %v238, 7
        %v240 = vsub.s32 5, %v239
        %v241 = vrot.slane %v182, %v240
        %v242 = vmul.f32 %v236, %v241
        %v243 = vmul.f32 %v237, %v241
        %v244 = vadd.f32 %v234, %v242
        %v245 = vadd.f32 %v235, %v243
        %v246 = vld [vmem:[#allocation2 + $0x80] sm:$0xff]
        %v247 = vld [vmem:[#allocation2 + $0x88] sm:$0xff]
        %v248 = vlaneseq
        %v249 = vshrl.u32 %v248, 7
        %v250 = vsub.s32 6, %v249
        %v251 = vrot.slane %v182, %v250
        %v252 = vmul.f32 %v246, %v251
        %v253 = vmul.f32 %v247, %v251
        %v254 = vadd.f32 %v244, %v252
        %v255 = vadd.f32 %v245, %v253
        %v256 = vld [vmem:[#allocation2 + $0x90] sm:$0xff]
        %v257 = vld [vmem:[#allocation2 + $0x98] sm:$0xff]
        %v258 = vlaneseq
        %v259 = vshrl.u32 %v258, 7
        %v260 = vsub.s32 7, %v259
        %v261 = vrot.slane %v182, %v260
        %v262 = vmul.f32 %v256, %v261
        %v263 = vmul.f32 %v257, %v261
        %v264 = vadd.f32 %v254, %v262
        %v265 = vadd.f32 %v255, %v263
        %v266 = vld [vmem:[#allocation2 + $0xa0] sm:$0xff]
        %v267 = vld [vmem:[#allocation2 + $0xa8] sm:$0xff]
        %v268 = vlaneseq
        %v269 = vshrl.u32 %v268, 7
        %v270 = vsub.s32 0, %v269
        %v271 = vrot.slane %v183, %v270
        %v272 = vmul.f32 %v266, %v271
        %v273 = vmul.f32 %v267, %v271
        %v274 = vadd.f32 %v264, %v272
        %v275 = vadd.f32 %v265, %v273
        %v276 = vld [vmem:[#allocation2 + $0xb0] sm:$0xff]
        %v277 = vld [vmem:[#allocation2 + $0xb8] sm:$0xff]
        %v278 = vlaneseq
        %v279 = vshrl.u32 %v278, 7
        %v280 = vsub.s32 1, %v279
        %v281 = vrot.slane %v183, %v280
        %v282 = vmul.f32 %v276, %v281
        %v283 = vmul.f32 %v277, %v281
        %v284 = vadd.f32 %v274, %v282
        %v285 = vadd.f32 %v275, %v283
        %v286 = vmul.f32 %v284, 0.5
        %v287 = vmul.f32 %v285, 0.5
        %v288 = vtanh.pop %v286
        %v289 = vtanh.pop %v287
        %v290 = vmul.f32 %v288, 0.5
        %v291 = vmul.f32 %v289, 0.5
        %v292 = vadd.f32 %v290, 0.5
        %v293 = vadd.f32 %v291, 0.5
        %v294 = vld [vmem:[#allocation2 + $0x170] sm:$0xff]
        %v295 = vld [vmem:[#allocation2 + $0x178] sm:$0xff]
        %v296 = vld [vmem:[#allocation2 + $0xd0] sm:$0xff]
        %v297 = vld [vmem:[#allocation2 + $0xd8] sm:$0xff]
        %v298 = vlaneseq
        %v299 = vshrl.u32 %v298, 7
        %v300 = vsub.s32 0, %v299
        %v301 = vrot.slane %v292, %v300
        %v302 = vmul.f32 %v296, %v301
        %v303 = vmul.f32 %v297, %v301
        %v304 = vadd.f32 %v294, %v302
        %v305 = vadd.f32 %v295, %v303
        %v306 = vld [vmem:[#allocation2 + $0xe0] sm:$0xff]
        %v307 = vld [vmem:[#allocation2 + $0xe8] sm:$0xff]
        %v308 = vlaneseq
        %v309 = vshrl.u32 %v308, 7
        %v310 = vsub.s32 1, %v309
        %v311 = vrot.slane %v292, %v310
        %v312 = vmul.f32 %v306, %v311
        %v313 = vmul.f32 %v307, %v311
        %v314 = vadd.f32 %v304, %v312
        %v315 = vadd.f32 %v305, %v313
        %v316 = vld [vmem:[#allocation2 + $0xf0] sm:$0xff]
        %v317 = vld [vmem:[#allocation2 + $0xf8] sm:$0xff]
        %v318 = vlaneseq
        %v319 = vshrl.u32 %v318, 7
        %v320 = vsub.s32 2, %v319
        %v321 = vrot.slane %v292, %v320
        %v322 = vmul.f32 %v316, %v321
        %v323 = vmul.f32 %v317, %v321
        %v324 = vadd.f32 %v314, %v322
        %v325 = vadd.f32 %v315, %v323
        %v326 = vld [vmem:[#allocation2 + $0x100] sm:$0xff]
        %v327 = vld [vmem:[#allocation2 + $0x108] sm:$0xff]
        %v328 = vlaneseq
        %v329 = vshrl.u32 %v328, 7
        %v330 = vsub.s32 3, %v329
        %v331 = vrot.slane %v292, %v330
        %v332 = vmul.f32 %v326, %v331
        %v333 = vmul.f32 %v327, %v331
        %v334 = vadd.f32 %v324, %v332
        %v335 = vadd.f32 %v325, %v333
        %v336 = vld [vmem:[#allocation2 + $0x110] sm:$0xff]
        %v337 = vld [vmem:[#allocation2 + $0x118] sm:$0xff]
        %v338 = vlaneseq
        %v339 = vshrl.u32 %v338, 7
        %v340 = vsub.s32 4, %v339
        %v341 = vrot.slane %v292, %v340
        %v342 = vmul.f32 %v336, %v341
        %v343 = vmul.f32 %v337, %v341
        %v344 = vadd.f32 %v334, %v342
        %v345 = vadd.f32 %v335, %v343
        %v346 = vld [vmem:[#allocation2 + $0x120] sm:$0xff]
        %v347 = vld [vmem:[#allocation2 + $0x128] sm:$0xff]
        %v348 = vlaneseq
        %v349 = vshrl.u32 %v348, 7
        %v350 = vsub.s32 5, %v349
        %v351 = vrot.slane %v292, %v350
        %v352 = vmul.f32 %v346, %v351
        %v353 = vmul.f32 %v347, %v351
        %v354 = vadd.f32 %v344, %v352
        %v355 = vadd.f32 %v345, %v353
        %v356 = vld [vmem:[#allocation2 + $0x130] sm:$0xff]
        %v357 = vld [vmem:[#allocation2 + $0x138] sm:$0xff]
        %v358 = vlaneseq
        %v359 = vshrl.u32 %v358, 7
        %v360 = vsub.s32 6, %v359
        %v361 = vrot.slane %v292, %v360
        %v362 = vmul.f32 %v356, %v361
        %v363 = vmul.f32 %v357, %v361
        %v364 = vadd.f32 %v354, %v362
        %v365 = vadd.f32 %v355, %v363
        %v366 = vld [vmem:[#allocation2 + $0x140] sm:$0xff]
        %v367 = vld [vmem:[#allocation2 + $0x148] sm:$0xff]
        %v368 = vlaneseq
        %v369 = vshrl.u32 %v368, 7
        %v370 = vsub.s32 7, %v369
        %v371 = vrot.slane %v292, %v370
        %v372 = vmul.f32 %v366, %v371
        %v373 = vmul.f32 %v367, %v371
        %v374 = vadd.f32 %v364, %v372
        %v375 = vadd.f32 %v365, %v373
        %v376 = vld [vmem:[#allocation2 + $0x150] sm:$0xff]
        %v377 = vld [vmem:[#allocation2 + $0x158] sm:$0xff]
        %v378 = vlaneseq
        %v379 = vshrl.u32 %v378, 7
        %v380 = vsub.s32 0, %v379
        %v381 = vrot.slane %v293, %v380
        %v382 = vmul.f32 %v376, %v381
        %v383 = vmul.f32 %v377, %v381
        %v384 = vadd.f32 %v374, %v382
        %v385 = vadd.f32 %v375, %v383
        %v386 = vld [vmem:[#allocation2 + $0x160] sm:$0xff]
        %v387 = vld [vmem:[#allocation2 + $0x168] sm:$0xff]
        %v388 = vlaneseq
        %v389 = vshrl.u32 %v388, 7
        %v390 = vsub.s32 1, %v389
        %v391 = vrot.slane %v293, %v390
        %v392 = vmul.f32 %v386, %v391
        %v393 = vmul.f32 %v387, %v391
        %v394 = vadd.f32 %v384, %v392
        %v395 = vadd.f32 %v385, %v393
        %v396 = vmul.f32 %v394, 0.5
        %v397 = vmul.f32 %v395, 0.5
        %v398 = vtanh.pop %v396
        %v399 = vtanh.pop %v397
        %v400 = vmul.f32 %v398, 0.5
        %v401 = vmul.f32 %v399, 0.5
        %v402 = vadd.f32 %v400, 0.5
        %v403 = vadd.f32 %v401, 0.5
        %v404 = vld [vmem:[#allocation2 + $0x180] sm:$0xff]
        %v405 = vld [vmem:[#allocation2 + $0x188] sm:$0xff]
        %v406 = vmul.f32 %v404, %v402
        %v407 = vmul.f32 %v405, %v403
        %v408 = vadd.f32 %v406, %v407
        %v409 = vrot.slane %v408, 4
        %v410 = vadd.f32 %v408, %v409
        %v411 = vrot.slane %v410, 2
        %v412 = vadd.f32 %v410, %v411
        %v413 = vrot.slane %v412, 1
        %v414 = vadd.f32 %v412, %v413
        %v415 = vadd.f32 %v414, %v162
        %416 = vst [vmem:[%s160] sm:$0x1] %v415
        %v417 = vld [vmem:[%s154 + $0x1] sm:$0x1]
        %v418 = vld [vmem:[#allocation2] sm:$0xff]
        %v419 = vld [vmem:[#allocation2 + $0x8] sm:$0xff]
        %v420 = vlaneseq
        %v421 = vshrl.u32 %v420, 7
        %v422 = vsub.s32 0, %v421
        %v423 = vrot.slane %v417, %v422
        %v424 = vmul.f32 %v418, %v423
        %v425 = vmul.f32 %v419, %v423
        %v426 = vld [vmem:[#allocation2 + $0x10] sm:$0xff]
        %v427 = vld [vmem:[#allocation2 + $0x18] sm:$0xff]
        %v428 = vadd.f32 %v424, %v426
        %v429 = vadd.f32 %v425, %v427
        %v430 = vmul.f32 %v428, 0.5
        %v431 = vmul.f32 %v429, 0.5
        %v432 = vtanh.pop %v430
        %v433 = vtanh.pop %v431
        %v434 = vmul.f32 %v432, 0.5
        %v435 = vmul.f32 %v433, 0.5
        %v436 = vadd.f32 %v434, 0.5
        %v437 = vadd.f32 %v435, 0.5
        %v438 = vld [vmem:[#allocation2 + $0xc0] sm:$0xff]
        %v439 = vld [vmem:[#allocation2 + $0xc8] sm:$0xff]
        %v440 = vld [vmem:[#allocation2 + $0x20] sm:$0xff]
        %v441 = vld [vmem:[#allocation2 + $0x28] sm:$0xff]
        %v442 = vlaneseq
        %v443 = vshrl.u32 %v442, 7
        %v444 = vsub.s32 0, %v443
        %v445 = vrot.slane %v436, %v444
        %v446 = vmul.f32 %v440, %v445
        %v447 = vmul.f32 %v441, %v445
        %v448 = vadd.f32 %v438, %v446
        %v449 = vadd.f32 %v439, %v447
        %v450 = vld [vmem:[#allocation2 + $0x30] sm:$0xff]
        %v451 = vld [vmem:[#allocation2 + $0x38] sm:$0xff]
        %v452 = vlaneseq
        %v453 = vshrl.u32 %v452, 7
        %v454 = vsub.s32 1, %v453
        %v455 = vrot.slane %v436, %v454
        %v456 = vmul.f32 %v450, %v455
        %v457 = vmul.f32 %v451, %v455
        %v458 = vadd.f32 %v448, %v456
        %v459 = vadd.f32 %v449, %v457
        %v460 = vld [vmem:[#allocation2 + $0x40] sm:$0xff]
        %v461 = vld [vmem:[#allocation2 + $0x48] sm:$0xff]
        %v462 = vlaneseq
        %v463 = vshrl.u32 %v462, 7
        %v464 = vsub.s32 2, %v463
        %v465 = vrot.slane %v436, %v464
        %v466 = vmul.f32 %v460, %v465
        %v467 = vmul.f32 %v461, %v465
        %v468 = vadd.f32 %v458, %v466
        %v469 = vadd.f32 %v459, %v467
        %v470 = vld [vmem:[#allocation2 + $0x50] sm:$0xff]
        %v471 = vld [vmem:[#allocation2 + $0x58] sm:$0xff]
        %v472 = vlaneseq
        %v473 = vshrl.u32 %v472, 7
        %v474 = vsub.s32 3, %v473
        %v475 = vrot.slane %v436, %v474
        %v476 = vmul.f32 %v470, %v475
        %v477 = vmul.f32 %v471, %v475
        %v478 = vadd.f32 %v468, %v476
        %v479 = vadd.f32 %v469, %v477
        %v480 = vld [vmem:[#allocation2 + $0x60] sm:$0xff]
        %v481 = vld [vmem:[#allocation2 + $0x68] sm:$0xff]
        %v482 = vlaneseq
        %v483 = vshrl.u32 %v482, 7
        %v484 = vsub.s32 4, %v483
        %v485 = vrot.slane %v436, %v484
        %v486 = vmul.f32 %v480, %v485
        %v487 = vmul.f32 %v481, %v485
        %v488 = vadd.f32 %v478, %v486
        %v489 = vadd.f32 %v479, %v487
        %v490 = vld [vmem:[#allocation2 + $0x70] sm:$0xff]
        %v491 = vld [vmem:[#allocation2 + $0x78] sm:$0xff]
        %v492 = vlaneseq
        %v493 = vshrl.u32 %v492, 7
        %v494 = vsub.s32 5, %v493
        %v495 = vrot.slane %v436, %v494
        %v496 = vmul.f32 %v490, %v495
        %v497 = vmul.f32 %v491, %v495
        %v498 = vadd.f32 %v488, %v496
        %v499 = vadd.f32 %v489, %v497
        %v500 = vld [vmem:[#allocation2 + $0x80] sm:$0xff]
        %v501 = vld [vmem:[#allocation2 + $0x88] sm:$0xff]
        %v502 = vlaneseq
        %v503 = vshrl.u32 %v502, 7
        %v504 = vsub.s32 6, %v503
        %v505 = vrot.slane %v436, %v504
        %v506 = vmul.f32 %v500, %v505
        %v507 = vmul.f32 %v501, %v505
        %v508 = vadd.f32 %v498, %v506
        %v509 = vadd.f32 %v499, %v507
        %v510 = vld [vmem:[#allocation2 + $0x90] sm:$0xff]
        %v511 = vld [vmem:[#allocation2 + $0x98] sm:$0xff]
        %v512 = vlaneseq
        %v513 = vshrl.u32 %v512, 7
        %v514 = vsub.s32 7, %v513
        %v515 = vrot.slane %v436, %v514
        %v516 = vmul.f32 %v510, %v515
        %v517 = vmul.f32 %v511, %v515
        %v518 = vadd.f32 %v508, %v516
        %v519 = vadd.f32 %v509, %v517
        %v520 = vld [vmem:[#allocation2 + $0xa0] sm:$0xff]
        %v521 = vld [vmem:[#allocation2 + $0xa8] sm:$0xff]
        %v522 = vlaneseq
        %v523 = vshrl.u32 %v522, 7
        %v524 = vsub.s32 0, %v523
        %v525 = vrot.slane %v437, %v524
        %v526 = vmul.f32 %v520, %v525
        %v527 = vmul.f32 %v521, %v525
        %v528 = vadd.f32 %v518, %v526
        %v529 = vadd.f32 %v519, %v527
        %v530 = vld [vmem:[#allocation2 + $0xb0] sm:$0xff]
        %v531 = vld [vmem:[#allocation2 + $0xb8] sm:$0xff]
        %v532 = vlaneseq
        %v533 = vshrl.u32 %v532, 7
        %v534 = vsub.s32 1, %v533
        %v535 = vrot.slane %v437, %v534
        %v536 = vmul.f32 %v530, %v535
        %v537 = vmul.f32 %v531, %v535
        %v538 = vadd.f32 %v528, %v536
        %v539 = vadd.f32 %v529, %v537
        %v540 = vmul.f32 %v538, 0.5
        %v541 = vmul.f32 %v539, 0.5
        %v542 = vtanh.pop %v540
        %v543 = vtanh.pop %v541
        %v544 = vmul.f32 %v542, 0.5
        %v545 = vmul.f32 %v543, 0.5
        %v546 = vadd.f32 %v544, 0.5
        %v547 = vadd.f32 %v545, 0.5
        %v548 = vld [vmem:[#allocation2 + $0x170] sm:$0xff]
        %v549 = vld [vmem:[#allocation2 + $0x178] sm:$0xff]
        %v550 = vld [vmem:[#allocation2 + $0xd0] sm:$0xff]
        %v551 = vld [vmem:[#allocation2 + $0xd8] sm:$0xff]
        %v552 = vlaneseq
        %v553 = vshrl.u32 %v552, 7
        %v554 = vsub.s32 0, %v553
        %v555 = vrot.slane %v546, %v554
        %v556 = vmul.f32 %v550, %v555
        %v557 = vmul.f32 %v551, %v555
        %v558 = vadd.f32 %v548, %v556
        %v559 = vadd.f32 %v549, %v557
        %v560 = vld [vmem:[#allocation2 + $0xe0] sm:$0xff]
        %v561 = vld [vmem:[#allocation2 + $0xe8] sm:$0xff]
        %v562 = vlaneseq
        %v563 = vshrl.u32 %v562, 7
        %v564 = vsub.s32 1, %v563
        %v565 = vrot.slane %v546, %v564
        %v566 = vmul.f32 %v560, %v565
        %v567 = vmul.f32 %v561, %v565
        %v568 = vadd.f32 %v558, %v566
        %v569 = vadd.f32 %v559, %v567
        %v570 = vld [vmem:[#allocation2 + $0xf0] sm:$0xff]
        %v571 = vld [vmem:[#allocation2 + $0xf8] sm:$0xff]
        %v572 = vlaneseq
        %v573 = vshrl.u32 %v572, 7
        %v574 = vsub.s32 2, %v573
        %v575 = vrot.slane %v546, %v574
        %v576 = vmul.f32 %v570, %v575
        %v577 = vmul.f32 %v571, %v575
        %v578 = vadd.f32 %v568, %v576
        %v579 = vadd.f32 %v569, %v577
        %v580 = vld [vmem:[#allocation2 + $0x100] sm:$0xff]
        %v581 = vld [vmem:[#allocation2 + $0x108] sm:$0xff]
        %v582 = vlaneseq
        %v583 = vshrl.u32 %v582, 7
        %v584 = vsub.s32 3, %v583
        %v585 = vrot.slane %v546, %v584
        %v586 = vmul.f32 %v580, %v585
        %v587 = vmul.f32 %v581, %v585
        %v588 = vadd.f32 %v578, %v586
        %v589 = vadd.f32 %v579, %v587
        %v590 = vld [vmem:[#allocation2 + $0x110] sm:$0xff]
        %v591 = vld [vmem:[#allocation2 + $0x118] sm:$0xff]
        %v592 = vlaneseq
        %v593 = vshrl.u32 %v592, 7
        %v594 = vsub.s32 4, %v593
        %v595 = vrot.slane %v546, %v594
        %v596 = vmul.f32 %v590, %v595
        %v597 = vmul.f32 %v591, %v595
        %v598 = vadd.f32 %v588, %v596
        %v599 = vadd.f32 %v589, %v597
        %v600 = vld [vmem:[#allocation2 + $0x120] sm:$0xff]
        %v601 = vld [vmem:[#allocation2 + $0x128] sm:$0xff]
        %v602 = vlaneseq
        %v603 = vshrl.u32 %v602, 7
        %v604 = vsub.s32 5, %v603
        %v605 = vrot.slane %v546, %v604
        %v606 = vmul.f32 %v600, %v605
        %v607 = vmul.f32 %v601, %v605
        %v608 = vadd.f32 %v598, %v606
        %v609 = vadd.f32 %v599, %v607
        %v610 = vld [vmem:[#allocation2 + $0x130] sm:$0xff]
        %v611 = vld [vmem:[#allocation2 + $0x138] sm:$0xff]
        %v612 = vlaneseq
        %v613 = vshrl.u32 %v612, 7
        %v614 = vsub.s32 6, %v613
        %v615 = vrot.slane %v546, %v614
        %v616 = vmul.f32 %v610, %v615
        %v617 = vmul.f32 %v611, %v615
        %v618 = vadd.f32 %v608, %v616
        %v619 = vadd.f32 %v609, %v617
        %v620 = vld [vmem:[#allocation2 + $0x140] sm:$0xff]
        %v621 = vld [vmem:[#allocation2 + $0x148] sm:$0xff]
        %v622 = vlaneseq
        %v623 = vshrl.u32 %v622, 7
        %v624 = vsub.s32 7, %v623
        %v625 = vrot.slane %v546, %v624
        %v626 = vmul.f32 %v620, %v625
        %v627 = vmul.f32 %v621, %v625
        %v628 = vadd.f32 %v618, %v626
        %v629 = vadd.f32 %v619, %v627
        %v630 = vld [vmem:[#allocation2 + $0x150] sm:$0xff]
        %v631 = vld [vmem:[#allocation2 + $0x158] sm:$0xff]
        %v632 = vlaneseq
        %v633 = vshrl.u32 %v632, 7
        %v634 = vsub.s32 0, %v633
        %v635 = vrot.slane %v547, %v634
        %v636 = vmul.f32 %v630, %v635
        %v637 = vmul.f32 %v631, %v635
        %v638 = vadd.f32 %v628, %v636
        %v639 = vadd.f32 %v629, %v637
        %v640 = vld [vmem:[#allocation2 + $0x160] sm:$0xff]
        %v641 = vld [vmem:[#allocation2 + $0x168] sm:$0xff]
        %v642 = vlaneseq
        %v643 = vshrl.u32 %v642, 7
        %v644 = vsub.s32 1, %v643
        %v645 = vrot.slane %v547, %v644
        %v646 = vmul.f32 %v640, %v645
        %v647 = vmul.f32 %v641, %v645
        %v648 = vadd.f32 %v638, %v646
        %v649 = vadd.f32 %v639, %v647
        %v650 = vmul.f32 %v648, 0.5
        %v651 = vmul.f32 %v649, 0.5
        %v652 = vtanh.pop %v650
        %v653 = vtanh.pop %v651
        %v654 = vmul.f32 %v652, 0.5
        %v655 = vmul.f32 %v653, 0.5
        %v656 = vadd.f32 %v654, 0.5
        %v657 = vadd.f32 %v655, 0.5
        %v658 = vld [vmem:[#allocation2 + $0x180] sm:$0xff]
        %v659 = vld [vmem:[#allocation2 + $0x188] sm:$0xff]
        %v660 = vmul.f32 %v658, %v656
        %v661 = vmul.f32 %v659, %v657
        %v662 = vadd.f32 %v660, %v661
        %v663 = vrot.slane %v662, 4
        %v664 = vadd.f32 %v662, %v663
        %v665 = vrot.slane %v664, 2
        %v666 = vadd.f32 %v664, %v665
        %v667 = vrot.slane %v666, 1
        %v668 = vadd.f32 %v666, %v667
        %v669 = vadd.f32 %v668, %v162
        %670 = vst [vmem:[%s160 + $0x1] sm:$0x1] %v669
        %v671 = vld [vmem:[%s154 + $0x2] sm:$0x1]
        %v672 = vld [vmem:[#allocation2] sm:$0xff]
        %v673 = vld [vmem:[#allocation2 + $0x8] sm:$0xff]
        %v674 = vlaneseq
        %v675 = vshrl.u32 %v674, 7
        %v676 = vsub.s32 0, %v675
        %v677 = vrot.slane %v671, %v676
        %v678 = vmul.f32 %v672, %v677
        %v679 = vmul.f32 %v673, %v677
        %v680 = vld [vmem:[#allocation2 + $0x10] sm:$0xff]
        %v681 = vld [vmem:[#allocation2 + $0x18] sm:$0xff]
        %v682 = vadd.f32 %v678, %v680
        %v683 = vadd.f32 %v679, %v681
        %v684 = vmul.f32 %v682, 0.5
        %v685 = vmul.f32 %v683, 0.5
        %v686 = vtanh.pop %v684
        %v687 = vtanh.pop %v685
        %v688 = vmul.f32 %v686, 0.5
        %v689 = vmul.f32 %v687, 0.5
        %v690 = vadd.f32 %v688, 0.5
        %v691 = vadd.f32 %v689, 0.5
        %v692 = vld [vmem:[#allocation2 + $0xc0] sm:$0xff]
        %v693 = vld [vmem:[#allocation2 + $0xc8] sm:$0xff]
        %v694 = vld [vmem:[#allocation2 + $0x20] sm:$0xff]
        %v695 = vld [vmem:[#allocation2 + $0x28] sm:$0xff]
        %v696 = vlaneseq
        %v697 = vshrl.u32 %v696, 7
        %v698 = vsub.s32 0, %v697
        %v699 = vrot.slane %v690, %v698
        %v700 = vmul.f32 %v694, %v699
        %v701 = vmul.f32 %v695, %v699
        %v702 = vadd.f32 %v692, %v700
        %v703 = vadd.f32 %v693, %v701
        %v704 = vld [vmem:[#allocation2 + $0x30] sm:$0xff]
        %v705 = vld [vmem:[#allocation2 + $0x38] sm:$0xff]
        %v706 = vlaneseq
        %v707 = vshrl.u32 %v706, 7
        %v708 = vsub.s32 1, %v707
        %v709 = vrot.slane %v690, %v708
        %v710 = vmul.f32 %v704, %v709
        %v711 = vmul.f32 %v705, %v709
        %v712 = vadd.f32 %v702, %v710
        %v713 = vadd.f32 %v703, %v711
        %v714 = vld [vmem:[#allocation2 + $0x40] sm:$0xff]
        %v715 = vld [vmem:[#allocation2 + $0x48] sm:$0xff]
        %v716 = vlaneseq
        %v717 = vshrl.u32 %v716, 7
        %v718 = vsub.s32 2, %v717
        %v719 = vrot.slane %v690, %v718
        %v720 = vmul.f32 %v714, %v719
        %v721 = vmul.f32 %v715, %v719
        %v722 = vadd.f32 %v712, %v720
        %v723 = vadd.f32 %v713, %v721
        %v724 = vld [vmem:[#allocation2 + $0x50] sm:$0xff]
        %v725 = vld [vmem:[#allocation2 + $0x58] sm:$0xff]
        %v726 = vlaneseq
        %v727 = vshrl.u32 %v726, 7
        %v728 = vsub.s32 3, %v727
        %v729 = vrot.slane %v690, %v728
        %v730 = vmul.f32 %v724, %v729
        %v731 = vmul.f32 %v725, %v729
        %v732 = vadd.f32 %v722, %v730
        %v733 = vadd.f32 %v723, %v731
        %v734 = vld [vmem:[#allocation2 + $0x60] sm:$0xff]
        %v735 = vld [vmem:[#allocation2 + $0x68] sm:$0xff]
        %v736 = vlaneseq
        %v737 = vshrl.u32 %v736, 7
        %v738 = vsub.s32 4, %v737
        %v739 = vrot.slane %v690, %v738
        %v740 = vmul.f32 %v734, %v739
        %v741 = vmul.f32 %v735, %v739
        %v742 = vadd.f32 %v732, %v740
        %v743 = vadd.f32 %v733, %v741
        %v744 = vld [vmem:[#allocation2 + $0x70] sm:$0xff]
        %v745 = vld [vmem:[#allocation2 + $0x78] sm:$0xff]
        %v746 = vlaneseq
        %v747 = vshrl.u32 %v746, 7
        %v748 = vsub.s32 5, %v747
        %v749 = vrot.slane %v690, %v748
        %v750 = vmul.f32 %v744, %v749
        %v751 = vmul.f32 %v745, %v749
        %v752 = vadd.f32 %v742, %v750
        %v753 = vadd.f32 %v743, %v751
        %v754 = vld [vmem:[#allocation2 + $0x80] sm:$0xff]
        %v755 = vld [vmem:[#allocation2 + $0x88] sm:$0xff]
        %v756 = vlaneseq
        %v757 = vshrl.u32 %v756, 7
        %v758 = vsub.s32 6, %v757
        %v759 = vrot.slane %v690, %v758
        %v760 = vmul.f32 %v754, %v759
        %v761 = vmul.f32 %v755, %v759
        %v762 = vadd.f32 %v752, %v760
        %v763 = vadd.f32 %v753, %v761
        %v764 = vld [vmem:[#allocation2 + $0x90] sm:$0xff]
        %v765 = vld [vmem:[#allocation2 + $0x98] sm:$0xff]
        %v766 = vlaneseq
        %v767 = vshrl.u32 %v766, 7
        %v768 = vsub.s32 7, %v767
        %v769 = vrot.slane %v690, %v768
        %v770 = vmul.f32 %v764, %v769
        %v771 = vmul.f32 %v765, %v769
        %v772 = vadd.f32 %v762, %v770
        %v773 = vadd.f32 %v763, %v771
        %v774 = vld [vmem:[#allocation2 + $0xa0] sm:$0xff]
        %v775 = vld [vmem:[#allocation2 + $0xa8] sm:$0xff]
        %v776 = vlaneseq
        %v777 = vshrl.u32 %v776, 7
        %v778 = vsub.s32 0, %v777
        %v779 = vrot.slane %v691, %v778
        %v780 = vmul.f32 %v774, %v779
        %v781 = vmul.f32 %v775, %v779
        %v782 = vadd.f32 %v772, %v780
        %v783 = vadd.f32 %v773, %v781
        %v784 = vld [vmem:[#allocation2 + $0xb0] sm:$0xff]
        %v785 = vld [vmem:[#allocation2 + $0xb8] sm:$0xff]
        %v786 = vlaneseq
        %v787 = vshrl.u32 %v786, 7
        %v788 = vsub.s32 1, %v787
        %v789 = vrot.slane %v691, %v788
        %v790 = vmul.f32 %v784, %v789
        %v791 = vmul.f32 %v785, %v789
        %v792 = vadd.f32 %v782, %v790
        %v793 = vadd.f32 %v783, %v791
        %v794 = vmul.f32 %v792, 0.5
        %v795 = vmul.f32 %v793, 0.5
        %v796 = vtanh.pop %v794
        %v797 = vtanh.pop %v795
        %v798 = vmul.f32 %v796, 0.5
        %v799 = vmul.f32 %v797, 0.5
        %v800 = vadd.f32 %v798, 0.5
        %v801 = vadd.f32 %v799, 0.5
        %v802 = vld [vmem:[#allocation2 + $0x170] sm:$0xff]
        %v803 = vld [vmem:[#allocation2 + $0x178] sm:$0xff]
        %v804 = vld [vmem:[#allocation2 + $0xd0] sm:$0xff]
        %v805 = vld [vmem:[#allocation2 + $0xd8] sm:$0xff]
        %v806 = vlaneseq
        %v807 = vshrl.u32 %v806, 7
        %v808 = vsub.s32 0, %v807
        %v809 = vrot.slane %v800, %v808
        %v810 = vmul.f32 %v804, %v809
        %v811 = vmul.f32 %v805, %v809
        %v812 = vadd.f32 %v802, %v810
        %v813 = vadd.f32 %v803, %v811
        %v814 = vld [vmem:[#allocation2 + $0xe0] sm:$0xff]
        %v815 = vld [vmem:[#allocation2 + $0xe8] sm:$0xff]
        %v816 = vlaneseq
        %v817 = vshrl.u32 %v816, 7
        %v818 = vsub.s32 1, %v817
        %v819 = vrot.slane %v800, %v818
        %v820 = vmul.f32 %v814, %v819
        %v821 = vmul.f32 %v815, %v819
        %v822 = vadd.f32 %v812, %v820
        %v823 = vadd.f32 %v813, %v821
        %v824 = vld [vmem:[#allocation2 + $0xf0] sm:$0xff]
        %v825 = vld [vmem:[#allocation2 + $0xf8] sm:$0xff]
        %v826 = vlaneseq
        %v827 = vshrl.u32 %v826, 7
        %v828 = vsub.s32 2, %v827
        %v829 = vrot.slane %v800, %v828
        %v830 = vmul.f32 %v824, %v829
        %v831 = vmul.f32 %v825, %v829
        %v832 = vadd.f32 %v822, %v830
        %v833 = vadd.f32 %v823, %v831
        %v834 = vld [vmem:[#allocation2 + $0x100] sm:$0xff]
        %v835 = vld [vmem:[#allocation2 + $0x108] sm:$0xff]
        %v836 = vlaneseq
        %v837 = vshrl.u32 %v836, 7
        %v838 = vsub.s32 3, %v837
        %v839 = vrot.slane %v800, %v838
        %v840 = vmul.f32 %v834, %v839
        %v841 = vmul.f32 %v835, %v839
        %v842 = vadd.f32 %v832, %v840
        %v843 = vadd.f32 %v833, %v841
        %v844 = vld [vmem:[#allocation2 + $0x110] sm:$0xff]
        %v845 = vld [vmem:[#allocation2 + $0x118] sm:$0xff]
        %v846 = vlaneseq
        %v847 = vshrl.u32 %v846, 7
        %v848 = vsub.s32 4, %v847
        %v849 = vrot.slane %v800, %v848
        %v850 = vmul.f32 %v844, %v849
        %v851 = vmul.f32 %v845, %v849
        %v852 = vadd.f32 %v842, %v850
        %v853 = vadd.f32 %v843, %v851
        %v854 = vld [vmem:[#allocation2 + $0x120] sm:$0xff]
        %v855 = vld [vmem:[#allocation2 + $0x128] sm:$0xff]
        %v856 = vlaneseq
        %v857 = vshrl.u32 %v856, 7
        %v858 = vsub.s32 5, %v857
        %v859 = vrot.slane %v800, %v858
        %v860 = vmul.f32 %v854, %v859
        %v861 = vmul.f32 %v855, %v859
        %v862 = vadd.f32 %v852, %v860
        %v863 = vadd.f32 %v853, %v861
        %v864 = vld [vmem:[#allocation2 + $0x130] sm:$0xff]
        %v865 = vld [vmem:[#allocation2 + $0x138] sm:$0xff]
        %v866 = vlaneseq
        %v867 = vshrl.u32 %v866, 7
        %v868 = vsub.s32 6, %v867
        %v869 = vrot.slane %v800, %v868
        %v870 = vmul.f32 %v864, %v869
        %v871 = vmul.f32 %v865, %v869
        %v872 = vadd.f32 %v862, %v870
        %v873 = vadd.f32 %v863, %v871
        %v874 = vld [vmem:[#allocation2 + $0x140] sm:$0xff]
        %v875 = vld [vmem:[#allocation2 + $0x148] sm:$0xff]
        %v876 = vlaneseq
        %v877 = vshrl.u32 %v876, 7
        %v878 = vsub.s32 7, %v877
        %v879 = vrot.slane %v800, %v878
        %v880 = vmul.f32 %v874, %v879
        %v881 = vmul.f32 %v875, %v879
        %v882 = vadd.f32 %v872, %v880
        %v883 = vadd.f32 %v873, %v881
        %v884 = vld [vmem:[#allocation2 + $0x150] sm:$0xff]
        %v885 = vld [vmem:[#allocation2 + $0x158] sm:$0xff]
        %v886 = vlaneseq
        %v887 = vshrl.u32 %v886, 7
        %v888 = vsub.s32 0, %v887
        %v889 = vrot.slane %v801, %v888
        %v890 = vmul.f32 %v884, %v889
        %v891 = vmul.f32 %v885, %v889
        %v892 = vadd.f32 %v882, %v890
        %v893 = vadd.f32 %v883, %v891
        %v894 = vld [vmem:[#allocation2 + $0x160] sm:$0xff]
        %v895 = vld [vmem:[#allocation2 + $0x168] sm:$0xff]
        %v896 = vlaneseq
        %v897 = vshrl.u32 %v896, 7
        %v898 = vsub.s32 1, %v897
        %v899 = vrot.slane %v801, %v898
        %v900 = vmul.f32 %v894, %v899
        %v901 = vmul.f32 %v895, %v899
        %v902 = vadd.f32 %v892, %v900
        %v903 = vadd.f32 %v893, %v901
        %v904 = vmul.f32 %v902, 0.5
        %v905 = vmul.f32 %v903, 0.5
        %v906 = vtanh.pop %v904
        %v907 = vtanh.pop %v905
        %v908 = vmul.f32 %v906, 0.5
        %v909 = vmul.f32 %v907, 0.5
        %v910 = vadd.f32 %v908, 0.5
        %v911 = vadd.f32 %v909, 0.5
        %v912 = vld [vmem:[#allocation2 + $0x180] sm:$0xff]
        %v913 = vld [vmem:[#allocation2 + $0x188] sm:$0xff]
        %v914 = vmul.f32 %v912, %v910
        %v915 = vmul.f32 %v913, %v911
        %v916 = vadd.f32 %v914, %v915
        %v917 = vrot.slane %v916, 4
        %v918 = vadd.f32 %v916, %v917
        %v919 = vrot.slane %v918, 2
        %v920 = vadd.f32 %v918, %v919
        %v921 = vrot.slane %v920, 1
        %v922 = vadd.f32 %v920, %v921
        %v923 = vadd.f32 %v922, %v162
        %924 = vst [vmem:[%s160 + $0x2] sm:$0x1] %v923
        %v925 = vld [vmem:[%s154 + $0x3] sm:$0x1]
        %v926 = vld [vmem:[#allocation2] sm:$0xff]
        %v927 = vld [vmem:[#allocation2 + $0x8] sm:$0xff]
        %v928 = vlaneseq
        %v929 = vshrl.u32 %v928, 7
        %v930 = vsub.s32 0, %v929
        %v931 = vrot.slane %v925, %v930
        %v932 = vmul.f32 %v926, %v931
        %v933 = vmul.f32 %v927, %v931
        %v934 = vld [vmem:[#allocation2 + $0x10] sm:$0xff]
        %v935 = vld [vmem:[#allocation2 + $0x18] sm:$0xff]
        %v936 = vadd.f32 %v932, %v934
        %v937 = vadd.f32 %v933, %v935
        %v938 = vmul.f32 %v936, 0.5
        %v939 = vmul.f32 %v937, 0.5
        %v940 = vtanh.pop %v938
        %v941 = vtanh.pop %v939
        %v942 = vmul.f32 %v940, 0.5
        %v943 = vmul.f32 %v941, 0.5
        %v944 = vadd.f32 %v942, 0.5
        %v945 = vadd.f32 %v943, 0.5
        %v946 = vld [vmem:[#allocation2 + $0xc0] sm:$0xff]
        %v947 = vld [vmem:[#allocation2 + $0xc8] sm:$0xff]
        %v948 = vld [vmem:[#allocation2 + $0x20] sm:$0xff]
        %v949 = vld [vmem:[#allocation2 + $0x28] sm:$0xff]
        %v950 = vlaneseq
        %v951 = vshrl.u32 %v950, 7
        %v952 = vsub.s32 0, %v951
        %v953 = vrot.slane %v944, %v952
        %v954 = vmul.f32 %v948, %v953
        %v955 = vmul.f32 %v949, %v953
        %v956 = vadd.f32 %v946, %v954
        %v957 = vadd.f32 %v947, %v955
        %v958 = vld [vmem:[#allocation2 + $0x30] sm:$0xff]
        %v959 = vld [vmem:[#allocation2 + $0x38] sm:$0xff]
        %v960 = vlaneseq
        %v961 = vshrl.u32 %v960, 7
        %v962 = vsub.s32 1, %v961
        %v963 = vrot.slane %v944, %v962
        %v964 = vmul.f32 %v958, %v963
        %v965 = vmul.f32 %v959, %v963
        %v966 = vadd.f32 %v956, %v964
        %v967 = vadd.f32 %v957, %v965
        %v968 = vld [vmem:[#allocation2 + $0x40] sm:$0xff]
        %v969 = vld [vmem:[#allocation2 + $0x48] sm:$0xff]
        %v970 = vlaneseq
        %v971 = vshrl.u32 %v970, 7
        %v972 = vsub.s32 2, %v971
        %v973 = vrot.slane %v944, %v972
        %v974 = vmul.f32 %v968, %v973
        %v975 = vmul.f32 %v969, %v973
        %v976 = vadd.f32 %v966, %v974
        %v977 = vadd.f32 %v967, %v975
        %v978 = vld [vmem:[#allocation2 + $0x50] sm:$0xff]
        %v979 = vld [vmem:[#allocation2 + $0x58] sm:$0xff]
        %v980 = vlaneseq
        %v981 = vshrl.u32 %v980, 7
        %v982 = vsub.s32 3, %v981
        %v983 = vrot.slane %v944, %v982
        %v984 = vmul.f32 %v978, %v983
        %v985 = vmul.f32 %v979, %v983
        %v986 = vadd.f32 %v976, %v984
        %v987 = vadd.f32 %v977, %v985
        %v988 = vld [vmem:[#allocation2 + $0x60] sm:$0xff]
        %v989 = vld [vmem:[#allocation2 + $0x68] sm:$0xff]
        %v990 = vlaneseq
        %v991 = vshrl.u32 %v990, 7
        %v992 = vsub.s32 4, %v991
        %v993 = vrot.slane %v944, %v992
        %v994 = vmul.f32 %v988, %v993
        %v995 = vmul.f32 %v989, %v993
        %v996 = vadd.f32 %v986, %v994
        %v997 = vadd.f32 %v987, %v995
        %v998 = vld [vmem:[#allocation2 + $0x70] sm:$0xff]
        %v999 = vld [vmem:[#allocation2 + $0x78] sm:$0xff]
        %v1000 = vlaneseq
        %v1001 = vshrl.u32 %v1000, 7
        %v1002 = vsub.s32 5, %v1001
        %v1003 = vrot.slane %v944, %v1002
        %v1004 = vmul.f32 %v998, %v1003
        %v1005 = vmul.f32 %v999, %v1003
        %v1006 = vadd.f32 %v996, %v1004
        %v1007 = vadd.f32 %v997, %v1005
        %v1008 = vld [vmem:[#allocation2 + $0x80] sm:$0xff]
        %v1009 = vld [vmem:[#allocation2 + $0x88] sm:$0xff]
        %v1010 = vlaneseq
        %v1011 = vshrl.u32 %v1010, 7
        %v1012 = vsub.s32 6, %v1011
        %v1013 = vrot.slane %v944, %v1012
        %v1014 = vmul.f32 %v1008, %v1013
        %v1015 = vmul.f32 %v1009, %v1013
        %v1016 = vadd.f32 %v1006, %v1014
        %v1017 = vadd.f32 %v1007, %v1015
        %v1018 = vld [vmem:[#allocation2 + $0x90] sm:$0xff]
        %v1019 = vld [vmem:[#allocation2 + $0x98] sm:$0xff]
        %v1020 = vlaneseq
        %v1021 = vshrl.u32 %v1020, 7
        %v1022 = vsub.s32 7, %v1021
        %v1023 = vrot.slane %v944, %v1022
        %v1024 = vmul.f32 %v1018, %v1023
        %v1025 = vmul.f32 %v1019, %v1023
        %v1026 = vadd.f32 %v1016, %v1024
        %v1027 = vadd.f32 %v1017, %v1025
        %v1028 = vld [vmem:[#allocation2 + $0xa0] sm:$0xff]
        %v1029 = vld [vmem:[#allocation2 + $0xa8] sm:$0xff]
        %v1030 = vlaneseq
        %v1031 = vshrl.u32 %v1030, 7
        %v1032 = vsub.s32 0, %v1031
        %v1033 = vrot.slane %v945, %v1032
        %v1034 = vmul.f32 %v1028, %v1033
        %v1035 = vmul.f32 %v1029, %v1033
        %v1036 = vadd.f32 %v1026, %v1034
        %v1037 = vadd.f32 %v1027, %v1035
        %v1038 = vld [vmem:[#allocation2 + $0xb0] sm:$0xff]
        %v1039 = vld [vmem:[#allocation2 + $0xb8] sm:$0xff]
        %v1040 = vlaneseq
        %v1041 = vshrl.u32 %v1040, 7
        %v1042 = vsub.s32 1, %v1041
        %v1043 = vrot.slane %v945, %v1042
        %v1044 = vmul.f32 %v1038, %v1043
        %v1045 = vmul.f32 %v1039, %v1043
        %v1046 = vadd.f32 %v1036, %v1044
        %v1047 = vadd.f32 %v1037, %v1045
        %v1048 = vmul.f32 %v1046, 0.5
        %v1049 = vmul.f32 %v1047, 0.5
        %v1050 = vtanh.pop %v1048
        %v1051 = vtanh.pop %v1049
        %v1052 = vmul.f32 %v1050, 0.5
        %v1053 = vmul.f32 %v1051, 0.5
        %v1054 = vadd.f32 %v1052, 0.5
        %v1055 = vadd.f32 %v1053, 0.5
        %v1056 = vld [vmem:[#allocation2 + $0x170] sm:$0xff]
        %v1057 = vld [vmem:[#allocation2 + $0x178] sm:$0xff]
        %v1058 = vld [vmem:[#allocation2 + $0xd0] sm:$0xff]
        %v1059 = vld [vmem:[#allocation2 + $0xd8] sm:$0xff]
        %v1060 = vlaneseq
        %v1061 = vshrl.u32 %v1060, 7
        %v1062 = vsub.s32 0, %v1061
        %v1063 = vrot.slane %v1054, %v1062
        %v1064 = vmul.f32 %v1058, %v1063
        %v1065 = vmul.f32 %v1059, %v1063
        %v1066 = vadd.f32 %v1056, %v1064
        %v1067 = vadd.f32 %v1057, %v1065
        %v1068 = vld [vmem:[#allocation2 + $0xe0] sm:$0xff]
        %v1069 = vld [vmem:[#allocation2 + $0xe8] sm:$0xff]
        %v1070 = vlaneseq
        %v1071 = vshrl.u32 %v1070, 7
        %v1072 = vsub.s32 1, %v1071
        %v1073 = vrot.slane %v1054, %v1072
        %v1074 = vmul.f32 %v1068, %v1073
        %v1075 = vmul.f32 %v1069, %v1073
        %v1076 = vadd.f32 %v1066, %v1074
        %v1077 = vadd.f32 %v1067, %v1075
        %v1078 = vld [vmem:[#allocation2 + $0xf0] sm:$0xff]
        %v1079 = vld [vmem:[#allocation2 + $0xf8] sm:$0xff]
        %v1080 = vlaneseq
        %v1081 = vshrl.u32 %v1080, 7
        %v1082 = vsub.s32 2, %v1081
        %v1083 = vrot.slane %v1054, %v1082
        %v1084 = vmul.f32 %v1078, %v1083
        %v1085 = vmul.f32 %v1079, %v1083
        %v1086 = vadd.f32 %v1076, %v1084
        %v1087 = vadd.f32 %v1077, %v1085
        %v1088 = vld [vmem:[#allocation2 + $0x100] sm:$0xff]
        %v1089 = vld [vmem:[#allocation2 + $0x108] sm:$0xff]
        %v1090 = vlaneseq
        %v1091 = vshrl.u32 %v1090, 7
        %v1092 = vsub.s32 3, %v1091
        %v1093 = vrot.slane %v1054, %v1092
        %v1094 = vmul.f32 %v1088, %v1093
        %v1095 = vmul.f32 %v1089, %v1093
        %v1096 = vadd.f32 %v1086, %v1094
        %v1097 = vadd.f32 %v1087, %v1095
        %v1098 = vld [vmem:[#allocation2 + $0x110] sm:$0xff]
        %v1099 = vld [vmem:[#allocation2 + $0x118] sm:$0xff]
        %v1100 = vlaneseq
        %v1101 = vshrl.u32 %v1100, 7
        %v1102 = vsub.s32 4, %v1101
        %v1103 = vrot.slane %v1054, %v1102
        %v1104 = vmul.f32 %v1098, %v1103
        %v1105 = vmul.f32 %v1099, %v1103
        %v1106 = vadd.f32 %v1096, %v1104
        %v1107 = vadd.f32 %v1097, %v1105
        %v1108 = vld [vmem:[#allocation2 + $0x120] sm:$0xff]
        %v1109 = vld [vmem:[#allocation2 + $0x128] sm:$0xff]
        %v1110 = vlaneseq
        %v1111 = vshrl.u32 %v1110, 7
        %v1112 = vsub.s32 5, %v1111
        %v1113 = vrot.slane %v1054, %v1112
        %v1114 = vmul.f32 %v1108, %v1113
        %v1115 = vmul.f32 %v1109, %v1113
        %v1116 = vadd.f32 %v1106, %v1114
        %v1117 = vadd.f32 %v1107, %v1115
        %v1118 = vld [vmem:[#allocation2 + $0x130] sm:$0xff]
        %v1119 = vld [vmem:[#allocation2 + $0x138] sm:$0xff]
        %v1120 = vlaneseq
        %v1121 = vshrl.u32 %v1120, 7
        %v1122 = vsub.s32 6, %v1121
        %v1123 = vrot.slane %v1054, %v1122
        %v1124 = vmul.f32 %v1118, %v1123
        %v1125 = vmul.f32 %v1119, %v1123
        %v1126 = vadd.f32 %v1116, %v1124
        %v1127 = vadd.f32 %v1117, %v1125
        %v1128 = vld [vmem:[#allocation2 + $0x140] sm:$0xff]
        %v1129 = vld [vmem:[#allocation2 + $0x148] sm:$0xff]
        %v1130 = vlaneseq
        %v1131 = vshrl.u32 %v1130, 7
        %v1132 = vsub.s32 7, %v1131
        %v1133 = vrot.slane %v1054, %v1132
        %v1134 = vmul.f32 %v1128, %v1133
        %v1135 = vmul.f32 %v1129, %v1133
        %v1136 = vadd.f32 %v1126, %v1134
        %v1137 = vadd.f32 %v1127, %v1135
        %v1138 = vld [vmem:[#allocation2 + $0x150] sm:$0xff]
        %v1139 = vld [vmem:[#allocation2 + $0x158] sm:$0xff]
        %v1140 = vlaneseq
        %v1141 = vshrl.u32 %v1140, 7
        %v1142 = vsub.s32 0, %v1141
        %v1143 = vrot.slane %v1055, %v1142
        %v1144 = vmul.f32 %v1138, %v1143
        %v1145 = vmul.f32 %v1139, %v1143
        %v1146 = vadd.f32 %v1136, %v1144
        %v1147 = vadd.f32 %v1137, %v1145
        %v1148 = vld [vmem:[#allocation2 + $0x160] sm:$0xff]
        %v1149 = vld [vmem:[#allocation2 + $0x168] sm:$0xff]
        %v1150 = vlaneseq
        %v1151 = vshrl.u32 %v1150, 7
        %v1152 = vsub.s32 1, %v1151
        %v1153 = vrot.slane %v1055, %v1152
        %v1154 = vmul.f32 %v1148, %v1153
        %v1155 = vmul.f32 %v1149, %v1153
        %v1156 = vadd.f32 %v1146, %v1154
        %v1157 = vadd.f32 %v1147, %v1155
        %v1158 = vmul.f32 %v1156, 0.5
        %v1159 = vmul.f32 %v1157, 0.5
        %v1160 = vtanh.pop %v1158
        %v1161 = vtanh.pop %v1159
        %v1162 = vmul.f32 %v1160, 0.5
        %v1163 = vmul.f32 %v1161, 0.5
        %v1164 = vadd.f32 %v1162, 0.5
        %v1165 = vadd.f32 %v1163, 0.5
        %v1166 = vld [vmem:[#allocation2 + $0x180] sm:$0xff]
        %v1167 = vld [vmem:[#allocation2 + $0x188] sm:$0xff]
        %v1168 = vmul.f32 %v1166, %v1164
        %v1169 = vmul.f32 %v1167, %v1165
        %v1170 = vadd.f32 %v1168, %v1169
        %v1171 = vrot.slane %v1170, 4
        %v1172 = vadd.f32 %v1170, %v1171
        %v1173 = vrot.slane %v1172, 2
        %v1174 = vadd.f32 %v1172, %v1173
        %v1175 = vrot.slane %v1174, 1
        %v1176 = vadd.f32 %v1174, %v1175
        %v1177 = vadd.f32 %v1176, %v162
        %1178 = vst [vmem:[%s160 + $0x3] sm:$0x1] %v1177
        %v1179 = vld [vmem:[%s154 + $0x4] sm:$0x1]
        %v1180 = vld [vmem:[#allocation2] sm:$0xff]
        %v1181 = vld [vmem:[#allocation2 + $0x8] sm:$0xff]
        %v1182 = vlaneseq
        %v1183 = vshrl.u32 %v1182, 7
        %v1184 = vsub.s32 0, %v1183
        %v1185 = vrot.slane %v1179, %v1184
        %v1186 = vmul.f32 %v1180, %v1185
        %v1187 = vmul.f32 %v1181, %v1185
        %v1188 = vld [vmem:[#allocation2 + $0x10] sm:$0xff]
        %v1189 = vld [vmem:[#allocation2 + $0x18] sm:$0xff]
        %v1190 = vadd.f32 %v1186, %v1188
        %v1191 = vadd.f32 %v1187, %v1189
        %v1192 = vmul.f32 %v1190, 0.5
        %v1193 = vmul.f32 %v1191, 0.5
        %v1194 = vtanh.pop %v1192
        %v1195 = vtanh.pop %v1193
        %v1196 = vmul.f32 %v1194, 0.5
        %v1197 = vmul.f32 %v1195, 0.5
        %v1198 = vadd.f32 %v1196, 0.5
        %v1199 = vadd.f32 %v1197, 0.5
        %v1200 = vld [vmem:[#allocation2 + $0xc0] sm:$0xff]
        %v1201 = vld [vmem:[#allocation2 + $0xc8] sm:$0xff]
        %v1202 = vld [vmem:[#allocation2 + $0x20] sm:$0xff]
        %v1203 = vld [vmem:[#allocation2 + $0x28] sm:$0xff]
        %v1204 = vlaneseq
        %v1205 = vshrl.u32 %v1204, 7
        %v1206 = vsub.s32 0, %v1205
        %v1207 = vrot.slane %v1198, %v1206
        %v1208 = vmul.f32 %v1202, %v1207
        %v1209 = vmul.f32 %v1203, %v1207
        %v1210 = vadd.f32 %v1200, %v1208
        %v1211 = vadd.f32 %v1201, %v1209
        %v1212 = vld [vmem:[#allocation2 + $0x30] sm:$0xff]
        %v1213 = vld [vmem:[#allocation2 + $0x38] sm:$0xff]
        %v1214 = vlaneseq
        %v1215 = vshrl.u32 %v1214, 7
        %v1216 = vsub.s32 1, %v1215
        %v1217 = vrot.slane %v1198, %v1216
        %v1218 = vmul.f32 %v1212, %v1217
        %v1219 = vmul.f32 %v1213, %v1217
        %v1220 = vadd.f32 %v1210, %v1218
        %v1221 = vadd.f32 %v1211, %v1219
        %v1222 = vld [vmem:[#allocation2 + $0x40] sm:$0xff]
        %v1223 = vld [vmem:[#allocation2 + $0x48] sm:$0xff]
        %v1224 = vlaneseq
        %v1225 = vshrl.u32 %v1224, 7
        %v1226 = vsub.s32 2, %v1225
        %v1227 = vrot.slane %v1198, %v1226
        %v1228 = vmul.f32 %v1222, %v1227
        %v1229 = vmul.f32 %v1223, %v1227
        %v1230 = vadd.f32 %v1220, %v1228
        %v1231 = vadd.f32 %v1221, %v1229
        %v1232 = vld [vmem:[#allocation2 + $0x50] sm:$0xff]
        %v1233 = vld [vmem:[#allocation2 + $0x58] sm:$0xff]
        %v1234 = vlaneseq
        %v1235 = vshrl.u32 %v1234, 7
        %v1236 = vsub.s32 3, %v1235
        %v1237 = vrot.slane %v1198, %v1236
        %v1238 = vmul.f32 %v1232, %v1237
        %v1239 = vmul.f32 %v1233, %v1237
        %v1240 = vadd.f32 %v1230, %v1238
        %v1241 = vadd.f32 %v1231, %v1239
        %v1242 = vld [vmem:[#allocation2 + $0x60] sm:$0xff]
        %v1243 = vld [vmem:[#allocation2 + $0x68] sm:$0xff]
        %v1244 = vlaneseq
        %v1245 = vshrl.u32 %v1244, 7
        %v1246 = vsub.s32 4, %v1245
        %v1247 = vrot.slane %v1198, %v1246
        %v1248 = vmul.f32 %v1242, %v1247
        %v1249 = vmul.f32 %v1243, %v1247
        %v1250 = vadd.f32 %v1240, %v1248
        %v1251 = vadd.f32 %v1241, %v1249
        %v1252 = vld [vmem:[#allocation2 + $0x70] sm:$0xff]
        %v1253 = vld [vmem:[#allocation2 + $0x78] sm:$0xff]
        %v1254 = vlaneseq
        %v1255 = vshrl.u32 %v1254, 7
        %v1256 = vsub.s32 5, %v1255
        %v1257 = vrot.slane %v1198, %v1256
        %v1258 = vmul.f32 %v1252, %v1257
        %v1259 = vmul.f32 %v1253, %v1257
        %v1260 = vadd.f32 %v1250, %v1258
        %v1261 = vadd.f32 %v1251, %v1259
        %v1262 = vld [vmem:[#allocation2 + $0x80] sm:$0xff]
        %v1263 = vld [vmem:[#allocation2 + $0x88] sm:$0xff]
        %v1264 = vlaneseq
        %v1265 = vshrl.u32 %v1264, 7
        %v1266 = vsub.s32 6, %v1265
        %v1267 = vrot.slane %v1198, %v1266
        %v1268 = vmul.f32 %v1262, %v1267
        %v1269 = vmul.f32 %v1263, %v1267
        %v1270 = vadd.f32 %v1260, %v1268
        %v1271 = vadd.f32 %v1261, %v1269
        %v1272 = vld [vmem:[#allocation2 + $0x90] sm:$0xff]
        %v1273 = vld [vmem:[#allocation2 + $0x98] sm:$0xff]
        %v1274 = vlaneseq
        %v1275 = vshrl.u32 %v1274, 7
        %v1276 = vsub.s32 7, %v1275
        %v1277 = vrot.slane %v1198, %v1276
        %v1278 = vmul.f32 %v1272, %v1277
        %v1279 = vmul.f32 %v1273, %v1277
        %v1280 = vadd.f32 %v1270, %v1278
        %v1281 = vadd.f32 %v1271, %v1279
        %v1282 = vld [vmem:[#allocation2 + $0xa0] sm:$0xff]
        %v1283 = vld [vmem:[#allocation2 + $0xa8] sm:$0xff]
        %v1284 = vlaneseq
        %v1285 = vshrl.u32 %v1284, 7
        %v1286 = vsub.s32 0, %v1285
        %v1287 = vrot.slane %v1199, %v1286
        %v1288 = vmul.f32 %v1282, %v1287
        %v1289 = vmul.f32 %v1283, %v1287
        %v1290 = vadd.f32 %v1280, %v1288
        %v1291 = vadd.f32 %v1281, %v1289
        %v1292 = vld [vmem:[#allocation2 + $0xb0] sm:$0xff]
        %v1293 = vld [vmem:[#allocation2 + $0xb8] sm:$0xff]
        %v1294 = vlaneseq
        %v1295 = vshrl.u32 %v1294, 7
        %v1296 = vsub.s32 1, %v1295
        %v1297 = vrot.slane %v1199, %v1296
        %v1298 = vmul.f32 %v1292, %v1297
        %v1299 = vmul.f32 %v1293, %v1297
        %v1300 = vadd.f32 %v1290, %v1298
        %v1301 = vadd.f32 %v1291, %v1299
        %v1302 = vmul.f32 %v1300, 0.5
        %v1303 = vmul.f32 %v1301, 0.5
        %v1304 = vtanh.pop %v1302
        %v1305 = vtanh.pop %v1303
        %v1306 = vmul.f32 %v1304, 0.5
        %v1307 = vmul.f32 %v1305, 0.5
        %v1308 = vadd.f32 %v1306, 0.5
        %v1309 = vadd.f32 %v1307, 0.5
        %v1310 = vld [vmem:[#allocation2 + $0x170] sm:$0xff]
        %v1311 = vld [vmem:[#allocation2 + $0x178] sm:$0xff]
        %v1312 = vld [vmem:[#allocation2 + $0xd0] sm:$0xff]
        %v1313 = vld [vmem:[#allocation2 + $0xd8] sm:$0xff]
        %v1314 = vlaneseq
        %v1315 = vshrl.u32 %v1314, 7
        %v1316 = vsub.s32 0, %v1315
        %v1317 = vrot.slane %v1308, %v1316
        %v1318 = vmul.f32 %v1312, %v1317
        %v1319 = vmul.f32 %v1313, %v1317
        %v1320 = vadd.f32 %v1310, %v1318
        %v1321 = vadd.f32 %v1311, %v1319
        %v1322 = vld [vmem:[#allocation2 + $0xe0] sm:$0xff]
        %v1323 = vld [vmem:[#allocation2 + $0xe8] sm:$0xff]
        %v1324 = vlaneseq
        %v1325 = vshrl.u32 %v1324, 7
        %v1326 = vsub.s32 1, %v1325
        %v1327 = vrot.slane %v1308, %v1326
        %v1328 = vmul.f32 %v1322, %v1327
        %v1329 = vmul.f32 %v1323, %v1327
        %v1330 = vadd.f32 %v1320, %v1328
        %v1331 = vadd.f32 %v1321, %v1329
        %v1332 = vld [vmem:[#allocation2 + $0xf0] sm:$0xff]
        %v1333 = vld [vmem:[#allocation2 + $0xf8] sm:$0xff]
        %v1334 = vlaneseq
        %v1335 = vshrl.u32 %v1334, 7
        %v1336 = vsub.s32 2, %v1335
        %v1337 = vrot.slane %v1308, %v1336
        %v1338 = vmul.f32 %v1332, %v1337
        %v1339 = vmul.f32 %v1333, %v1337
        %v1340 = vadd.f32 %v1330, %v1338
        %v1341 = vadd.f32 %v1331, %v1339
        %v1342 = vld [vmem:[#allocation2 + $0x100] sm:$0xff]
        %v1343 = vld [vmem:[#allocation2 + $0x108] sm:$0xff]
        %v1344 = vlaneseq
        %v1345 = vshrl.u32 %v1344, 7
        %v1346 = vsub.s32 3, %v1345
        %v1347 = vrot.slane %v1308, %v1346
        %v1348 = vmul.f32 %v1342, %v1347
        %v1349 = vmul.f32 %v1343, %v1347
        %v1350 = vadd.f32 %v1340, %v1348
        %v1351 = vadd.f32 %v1341, %v1349
        %v1352 = vld [vmem:[#allocation2 + $0x110] sm:$0xff]
        %v1353 = vld [vmem:[#allocation2 + $0x118] sm:$0xff]
        %v1354 = vlaneseq
        %v1355 = vshrl.u32 %v1354, 7
        %v1356 = vsub.s32 4, %v1355
        %v1357 = vrot.slane %v1308, %v1356
        %v1358 = vmul.f32 %v1352, %v1357
        %v1359 = vmul.f32 %v1353, %v1357
        %v1360 = vadd.f32 %v1350, %v1358
        %v1361 = vadd.f32 %v1351, %v1359
        %v1362 = vld [vmem:[#allocation2 + $0x120] sm:$0xff]
        %v1363 = vld [vmem:[#allocation2 + $0x128] sm:$0xff]
        %v1364 = vlaneseq
        %v1365 = vshrl.u32 %v1364, 7
        %v1366 = vsub.s32 5, %v1365
        %v1367 = vrot.slane %v1308, %v1366
        %v1368 = vmul.f32 %v1362, %v1367
        %v1369 = vmul.f32 %v1363, %v1367
        %v1370 = vadd.f32 %v1360, %v1368
        %v1371 = vadd.f32 %v1361, %v1369
        %v1372 = vld [vmem:[#allocation2 + $0x130] sm:$0xff]
        %v1373 = vld [vmem:[#allocation2 + $0x138] sm:$0xff]
        %v1374 = vlaneseq
        %v1375 = vshrl.u32 %v1374, 7
        %v1376 = vsub.s32 6, %v1375
        %v1377 = vrot.slane %v1308, %v1376
        %v1378 = vmul.f32 %v1372, %v1377
        %v1379 = vmul.f32 %v1373, %v1377
        %v1380 = vadd.f32 %v1370, %v1378
        %v1381 = vadd.f32 %v1371, %v1379
        %v1382 = vld [vmem:[#allocation2 + $0x140] sm:$0xff]
        %v1383 = vld [vmem:[#allocation2 + $0x148] sm:$0xff]
        %v1384 = vlaneseq
        %v1385 = vshrl.u32 %v1384, 7
        %v1386 = vsub.s32 7, %v1385
        %v1387 = vrot.slane %v1308, %v1386
        %v1388 = vmul.f32 %v1382, %v1387
        %v1389 = vmul.f32 %v1383, %v1387
        %v1390 = vadd.f32 %v1380, %v1388
        %v1391 = vadd.f32 %v1381, %v1389
        %v1392 = vld [vmem:[#allocation2 + $0x150] sm:$0xff]
        %v1393 = vld [vmem:[#allocation2 + $0x158] sm:$0xff]
        %v1394 = vlaneseq
        %v1395 = vshrl.u32 %v1394, 7
        %v1396 = vsub.s32 0, %v1395
        %v1397 = vrot.slane %v1309, %v1396
        %v1398 = vmul.f32 %v1392, %v1397
        %v1399 = vmul.f32 %v1393, %v1397
        %v1400 = vadd.f32 %v1390, %v1398
        %v1401 = vadd.f32 %v1391, %v1399
        %v1402 = vld [vmem:[#allocation2 + $0x160] sm:$0xff]
        %v1403 = vld [vmem:[#allocation2 + $0x168] sm:$0xff]
        %v1404 = vlaneseq
        %v1405 = vshrl.u32 %v1404, 7
        %v1406 = vsub.s32 1, %v1405
        %v1407 = vrot.slane %v1309, %v1406
        %v1408 = vmul.f32 %v1402, %v1407
        %v1409 = vmul.f32 %v1403, %v1407
        %v1410 = vadd.f32 %v1400, %v1408
        %v1411 = vadd.f32 %v1401, %v1409
        %v1412 = vmul.f32 %v1410, 0.5
        %v1413 = vmul.f32 %v1411, 0.5
        %v1414 = vtanh.pop %v1412
        %v1415 = vtanh.pop %v1413
        %v1416 = vmul.f32 %v1414, 0.5
        %v1417 = vmul.f32 %v1415, 0.5
        %v1418 = vadd.f32 %v1416, 0.5
        %v1419 = vadd.f32 %v1417, 0.5
        %v1420 = vld [vmem:[#allocation2 + $0x180] sm:$0xff]
        %v1421 = vld [vmem:[#allocation2 + $0x188] sm:$0xff]
        %v1422 = vmul.f32 %v1420, %v1418
        %v1423 = vmul.f32 %v1421, %v1419
        %v1424 = vadd.f32 %v1422, %v1423
        %v1425 = vrot.slane %v1424, 4
        %v1426 = vadd.f32 %v1424, %v1425
        %v1427 = vrot.slane %v1426, 2
        %v1428 = vadd.f32 %v1426, %v1427
        %v1429 = vrot.slane %v1428, 1
        %v1430 = vadd.f32 %v1428, %v1429
        %v1431 = vadd.f32 %v1430, %v162
        %1432 = vst [vmem:[%s160 + $0x4] sm:$0x1] %v1431
        %v1433 = vld [vmem:[%s154 + $0x5] sm:$0x1]
        %v1434 = vld [vmem:[#allocation2] sm:$0xff]
        %v1435 = vld [vmem:[#allocation2 + $0x8] sm:$0xff]
        %v1436 = vlaneseq
        %v1437 = vshrl.u32 %v1436, 7
        %v1438 = vsub.s32 0, %v1437
        %v1439 = vrot.slane %v1433, %v1438
        %v1440 = vmul.f32 %v1434, %v1439
        %v1441 = vmul.f32 %v1435, %v1439
        %v1442 = vld [vmem:[#allocation2 + $0x10] sm:$0xff]
        %v1443 = vld [vmem:[#allocation2 + $0x18] sm:$0xff]
        %v1444 = vadd.f32 %v1440, %v1442
        %v1445 = vadd.f32 %v1441, %v1443
        %v1446 = vmul.f32 %v1444, 0.5
        %v1447 = vmul.f32 %v1445, 0.5
        %v1448 = vtanh.pop %v1446
        %v1449 = vtanh.pop %v1447
        %v1450 = vmul.f32 %v1448, 0.5
        %v1451 = vmul.f32 %v1449, 0.5
        %v1452 = vadd.f32 %v1450, 0.5
        %v1453 = vadd.f32 %v1451, 0.5
        %v1454 = vld [vmem:[#allocation2 + $0xc0] sm:$0xff]
        %v1455 = vld [vmem:[#allocation2 + $0xc8] sm:$0xff]
        %v1456 = vld [vmem:[#allocation2 + $0x20] sm:$0xff]
        %v1457 = vld [vmem:[#allocation2 + $0x28] sm:$0xff]
        %v1458 = vlaneseq
        %v1459 = vshrl.u32 %v1458, 7
        %v1460 = vsub.s32 0, %v1459
        %v1461 = vrot.slane %v1452, %v1460
        %v1462 = vmul.f32 %v1456, %v1461
        %v1463 = vmul.f32 %v1457, %v1461
        %v1464 = vadd.f32 %v1454, %v1462
        %v1465 = vadd.f32 %v1455, %v1463
        %v1466 = vld [vmem:[#allocation2 + $0x30] sm:$0xff]
        %v1467 = vld [vmem:[#allocation2 + $0x38] sm:$0xff]
        %v1468 = vlaneseq
        %v1469 = vshrl.u32 %v1468, 7
        %v1470 = vsub.s32 1, %v1469
        %v1471 = vrot.slane %v1452, %v1470
        %v1472 = vmul.f32 %v1466, %v1471
        %v1473 = vmul.f32 %v1467, %v1471
        %v1474 = vadd.f32 %v1464, %v1472
        %v1475 = vadd.f32 %v1465, %v1473
        %v1476 = vld [vmem:[#allocation2 + $0x40] sm:$0xff]
        %v1477 = vld [vmem:[#allocation2 + $0x48] sm:$0xff]
        %v1478 = vlaneseq
        %v1479 = vshrl.u32 %v1478, 7
        %v1480 = vsub.s32 2, %v1479
        %v1481 = vrot.slane %v1452, %v1480
        %v1482 = vmul.f32 %v1476, %v1481
        %v1483 = vmul.f32 %v1477, %v1481
        %v1484 = vadd.f32 %v1474, %v1482
        %v1485 = vadd.f32 %v1475, %v1483
        %v1486 = vld [vmem:[#allocation2 + $0x50] sm:$0xff]
        %v1487 = vld [vmem:[#allocation2 + $0x58] sm:$0xff]
        %v1488 = vlaneseq
        %v1489 = vshrl.u32 %v1488, 7
        %v1490 = vsub.s32 3, %v1489
        %v1491 = vrot.slane %v1452, %v1490
        %v1492 = vmul.f32 %v1486, %v1491
        %v1493 = vmul.f32 %v1487, %v1491
        %v1494 = vadd.f32 %v1484, %v1492
        %v1495 = vadd.f32 %v1485, %v1493
        %v1496 = vld [vmem:[#allocation2 + $0x60] sm:$0xff]
        %v1497 = vld [vmem:[#allocation2 + $0x68] sm:$0xff]
        %v1498 = vlaneseq
        %v1499 = vshrl.u32 %v1498, 7
        %v1500 = vsub.s32 4, %v1499
        %v1501 = vrot.slane %v1452, %v1500
        %v1502 = vmul.f32 %v1496, %v1501
        %v1503 = vmul.f32 %v1497, %v1501
        %v1504 = vadd.f32 %v1494, %v1502
        %v1505 = vadd.f32 %v1495, %v1503
        %v1506 = vld [vmem:[#allocation2 + $0x70] sm:$0xff]
        %v1507 = vld [vmem:[#allocation2 + $0x78] sm:$0xff]
        %v1508 = vlaneseq
        %v1509 = vshrl.u32 %v1508, 7
        %v1510 = vsub.s32 5, %v1509
        %v1511 = vrot.slane %v1452, %v1510
        %v1512 = vmul.f32 %v1506, %v1511
        %v1513 = vmul.f32 %v1507, %v1511
        %v1514 = vadd.f32 %v1504, %v1512
        %v1515 = vadd.f32 %v1505, %v1513
        %v1516 = vld [vmem:[#allocation2 + $0x80] sm:$0xff]
        %v1517 = vld [vmem:[#allocation2 + $0x88] sm:$0xff]
        %v1518 = vlaneseq
        %v1519 = vshrl.u32 %v1518, 7
        %v1520 = vsub.s32 6, %v1519
        %v1521 = vrot.slane %v1452, %v1520
        %v1522 = vmul.f32 %v1516, %v1521
        %v1523 = vmul.f32 %v1517, %v1521
        %v1524 = vadd.f32 %v1514, %v1522
        %v1525 = vadd.f32 %v1515, %v1523
        %v1526 = vld [vmem:[#allocation2 + $0x90] sm:$0xff]
        %v1527 = vld [vmem:[#allocation2 + $0x98] sm:$0xff]
        %v1528 = vlaneseq
        %v1529 = vshrl.u32 %v1528, 7
        %v1530 = vsub.s32 7, %v1529
        %v1531 = vrot.slane %v1452, %v1530
        %v1532 = vmul.f32 %v1526, %v1531
        %v1533 = vmul.f32 %v1527, %v1531
        %v1534 = vadd.f32 %v1524, %v1532
        %v1535 = vadd.f32 %v1525, %v1533
        %v1536 = vld [vmem:[#allocation2 + $0xa0] sm:$0xff]
        %v1537 = vld [vmem:[#allocation2 + $0xa8] sm:$0xff]
        %v1538 = vlaneseq
        %v1539 = vshrl.u32 %v1538, 7
        %v1540 = vsub.s32 0, %v1539
        %v1541 = vrot.slane %v1453, %v1540
        %v1542 = vmul.f32 %v1536, %v1541
        %v1543 = vmul.f32 %v1537, %v1541
        %v1544 = vadd.f32 %v1534, %v1542
        %v1545 = vadd.f32 %v1535, %v1543
        %v1546 = vld [vmem:[#allocation2 + $0xb0] sm:$0xff]
        %v1547 = vld [vmem:[#allocation2 + $0xb8] sm:$0xff]
        %v1548 = vlaneseq
        %v1549 = vshrl.u32 %v1548, 7
        %v1550 = vsub.s32 1, %v1549
        %v1551 = vrot.slane %v1453, %v1550
        %v1552 = vmul.f32 %v1546, %v1551
        %v1553 = vmul.f32 %v1547, %v1551
        %v1554 = vadd.f32 %v1544, %v1552
        %v1555 = vadd.f32 %v1545, %v1553
        %v1556 = vmul.f32 %v1554, 0.5
        %v1557 = vmul.f32 %v1555, 0.5
        %v1558 = vtanh.pop %v1556
        %v1559 = vtanh.pop %v1557
        %v1560 = vmul.f32 %v1558, 0.5
        %v1561 = vmul.f32 %v1559, 0.5
        %v1562 = vadd.f32 %v1560, 0.5
        %v1563 = vadd.f32 %v1561, 0.5
        %v1564 = vld [vmem:[#allocation2 + $0x170] sm:$0xff]
        %v1565 = vld [vmem:[#allocation2 + $0x178] sm:$0xff]
        %v1566 = vld [vmem:[#allocation2 + $0xd0] sm:$0xff]
        %v1567 = vld [vmem:[#allocation2 + $0xd8] sm:$0xff]
        %v1568 = vlaneseq
        %v1569 = vshrl.u32 %v1568, 7
        %v1570 = vsub.s32 0, %v1569
        %v1571 = vrot.slane %v1562, %v1570
        %v1572 = vmul.f32 %v1566, %v1571
        %v1573 = vmul.f32 %v1567, %v1571
        %v1574 = vadd.f32 %v1564, %v1572
        %v1575 = vadd.f32 %v1565, %v1573
        %v1576 = vld [vmem:[#allocation2 + $0xe0] sm:$0xff]
        %v1577 = vld [vmem:[#allocation2 + $0xe8] sm:$0xff]
        %v1578 = vlaneseq
        %v1579 = vshrl.u32 %v1578, 7
        %v1580 = vsub.s32 1, %v1579
        %v1581 = vrot.slane %v1562, %v1580
        %v1582 = vmul.f32 %v1576, %v1581
        %v1583 = vmul.f32 %v1577, %v1581
        %v1584 = vadd.f32 %v1574, %v1582
        %v1585 = vadd.f32 %v1575, %v1583
        %v1586 = vld [vmem:[#allocation2 + $0xf0] sm:$0xff]
        %v1587 = vld [vmem:[#allocation2 + $0xf8] sm:$0xff]
        %v1588 = vlaneseq
        %v1589 = vshrl.u32 %v1588, 7
        %v1590 = vsub.s32 2, %v1589
        %v1591 = vrot.slane %v1562, %v1590
        %v1592 = vmul.f32 %v1586, %v1591
        %v1593 = vmul.f32 %v1587, %v1591
        %v1594 = vadd.f32 %v1584, %v1592
        %v1595 = vadd.f32 %v1585, %v1593
        %v1596 = vld [vmem:[#allocation2 + $0x100] sm:$0xff]
        %v1597 = vld [vmem:[#allocation2 + $0x108] sm:$0xff]
        %v1598 = vlaneseq
        %v1599 = vshrl.u32 %v1598, 7
        %v1600 = vsub.s32 3, %v1599
        %v1601 = vrot.slane %v1562, %v1600
        %v1602 = vmul.f32 %v1596, %v1601
        %v1603 = vmul.f32 %v1597, %v1601
        %v1604 = vadd.f32 %v1594, %v1602
        %v1605 = vadd.f32 %v1595, %v1603
        %v1606 = vld [vmem:[#allocation2 + $0x110] sm:$0xff]
        %v1607 = vld [vmem:[#allocation2 + $0x118] sm:$0xff]
        %v1608 = vlaneseq
        %v1609 = vshrl.u32 %v1608, 7
        %v1610 = vsub.s32 4, %v1609
        %v1611 = vrot.slane %v1562, %v1610
        %v1612 = vmul.f32 %v1606, %v1611
        %v1613 = vmul.f32 %v1607, %v1611
        %v1614 = vadd.f32 %v1604, %v1612
        %v1615 = vadd.f32 %v1605, %v1613
        %v1616 = vld [vmem:[#allocation2 + $0x120] sm:$0xff]
        %v1617 = vld [vmem:[#allocation2 + $0x128] sm:$0xff]
        %v1618 = vlaneseq
        %v1619 = vshrl.u32 %v1618, 7
        %v1620 = vsub.s32 5, %v1619
        %v1621 = vrot.slane %v1562, %v1620
        %v1622 = vmul.f32 %v1616, %v1621
        %v1623 = vmul.f32 %v1617, %v1621
        %v1624 = vadd.f32 %v1614, %v1622
        %v1625 = vadd.f32 %v1615, %v1623
        %v1626 = vld [vmem:[#allocation2 + $0x130] sm:$0xff]
        %v1627 = vld [vmem:[#allocation2 + $0x138] sm:$0xff]
        %v1628 = vlaneseq
        %v1629 = vshrl.u32 %v1628, 7
        %v1630 = vsub.s32 6, %v1629
        %v1631 = vrot.slane %v1562, %v1630
        %v1632 = vmul.f32 %v1626, %v1631
        %v1633 = vmul.f32 %v1627, %v1631
        %v1634 = vadd.f32 %v1624, %v1632
        %v1635 = vadd.f32 %v1625, %v1633
        %v1636 = vld [vmem:[#allocation2 + $0x140] sm:$0xff]
        %v1637 = vld [vmem:[#allocation2 + $0x148] sm:$0xff]
        %v1638 = vlaneseq
        %v1639 = vshrl.u32 %v1638, 7
        %v1640 = vsub.s32 7, %v1639
        %v1641 = vrot.slane %v1562, %v1640
        %v1642 = vmul.f32 %v1636, %v1641
        %v1643 = vmul.f32 %v1637, %v1641
        %v1644 = vadd.f32 %v1634, %v1642
        %v1645 = vadd.f32 %v1635, %v1643
        %v1646 = vld [vmem:[#allocation2 + $0x150] sm:$0xff]
        %v1647 = vld [vmem:[#allocation2 + $0x158] sm:$0xff]
        %v1648 = vlaneseq
        %v1649 = vshrl.u32 %v1648, 7
        %v1650 = vsub.s32 0, %v1649
        %v1651 = vrot.slane %v1563, %v1650
        %v1652 = vmul.f32 %v1646, %v1651
        %v1653 = vmul.f32 %v1647, %v1651
        %v1654 = vadd.f32 %v1644, %v1652
        %v1655 = vadd.f32 %v1645, %v1653
        %v1656 = vld [vmem:[#allocation2 + $0x160] sm:$0xff]
        %v1657 = vld [vmem:[#allocation2 + $0x168] sm:$0xff]
        %v1658 = vlaneseq
        %v1659 = vshrl.u32 %v1658, 7
        %v1660 = vsub.s32 1, %v1659
        %v1661 = vrot.slane %v1563, %v1660
        %v1662 = vmul.f32 %v1656, %v1661
        %v1663 = vmul.f32 %v1657, %v1661
        %v1664 = vadd.f32 %v1654, %v1662
        %v1665 = vadd.f32 %v1655, %v1663
        %v1666 = vmul.f32 %v1664, 0.5
        %v1667 = vmul.f32 %v1665, 0.5
        %v1668 = vtanh.pop %v1666
        %v1669 = vtanh.pop %v1667
        %v1670 = vmul.f32 %v1668, 0.5
        %v1671 = vmul.f32 %v1669, 0.5
        %v1672 = vadd.f32 %v1670, 0.5
        %v1673 = vadd.f32 %v1671, 0.5
        %v1674 = vld [vmem:[#allocation2 + $0x180] sm:$0xff]
        %v1675 = vld [vmem:[#allocation2 + $0x188] sm:$0xff]
        %v1676 = vmul.f32 %v1674, %v1672
        %v1677 = vmul.f32 %v1675, %v1673
        %v1678 = vadd.f32 %v1676, %v1677
        %v1679 = vrot.slane %v1678, 4
        %v1680 = vadd.f32 %v1678, %v1679
        %v1681 = vrot.slane %v1680, 2
        %v1682 = vadd.f32 %v1680, %v1681
        %v1683 = vrot.slane %v1682, 1
        %v1684 = vadd.f32 %v1682, %v1683
        %v1685 = vadd.f32 %v1684, %v162
        %1686 = vst [vmem:[%s160 + $0x5] sm:$0x1] %v1685
        %v1687 = vld [vmem:[%s154 + $0x6] sm:$0x1]
        %v1688 = vld [vmem:[#allocation2] sm:$0xff]
        %v1689 = vld [vmem:[#allocation2 + $0x8] sm:$0xff]
        %v1690 = vlaneseq
        %v1691 = vshrl.u32 %v1690, 7
        %v1692 = vsub.s32 0, %v1691
        %v1693 = vrot.slane %v1687, %v1692
        %v1694 = vmul.f32 %v1688, %v1693
        %v1695 = vmul.f32 %v1689, %v1693
        %v1696 = vld [vmem:[#allocation2 + $0x10] sm:$0xff]
        %v1697 = vld [vmem:[#allocation2 + $0x18] sm:$0xff]
        %v1698 = vadd.f32 %v1694, %v1696
        %v1699 = vadd.f32 %v1695, %v1697
        %v1700 = vmul.f32 %v1698, 0.5
        %v1701 = vmul.f32 %v1699, 0.5
        %v1702 = vtanh.pop %v1700
        %v1703 = vtanh.pop %v1701
        %v1704 = vmul.f32 %v1702, 0.5
        %v1705 = vmul.f32 %v1703, 0.5
        %v1706 = vadd.f32 %v1704, 0.5
        %v1707 = vadd.f32 %v1705, 0.5
        %v1708 = vld [vmem:[#allocation2 + $0xc0] sm:$0xff]
        %v1709 = vld [vmem:[#allocation2 + $0xc8] sm:$0xff]
        %v1710 = vld [vmem:[#allocation2 + $0x20] sm:$0xff]
        %v1711 = vld [vmem:[#allocation2 + $0x28] sm:$0xff]
        %v1712 = vlaneseq
        %v1713 = vshrl.u32 %v1712, 7
        %v1714 = vsub.s32 0, %v1713
        %v1715 = vrot.slane %v1706, %v1714
        %v1716 = vmul.f32 %v1710, %v1715
        %v1717 = vmul.f32 %v1711, %v1715
        %v1718 = vadd.f32 %v1708, %v1716
        %v1719 = vadd.f32 %v1709, %v1717
        %v1720 = vld [vmem:[#allocation2 + $0x30] sm:$0xff]
        %v1721 = vld [vmem:[#allocation2 + $0x38] sm:$0xff]
        %v1722 = vlaneseq
        %v1723 = vshrl.u32 %v1722, 7
        %v1724 = vsub.s32 1, %v1723
        %v1725 = vrot.slane %v1706, %v1724
        %v1726 = vmul.f32 %v1720, %v1725
        %v1727 = vmul.f32 %v1721, %v1725
        %v1728 = vadd.f32 %v1718, %v1726
        %v1729 = vadd.f32 %v1719, %v1727
        %v1730 = vld [vmem:[#allocation2 + $0x40] sm:$0xff]
        %v1731 = vld [vmem:[#allocation2 + $0x48] sm:$0xff]
        %v1732 = vlaneseq
        %v1733 = vshrl.u32 %v1732, 7
        %v1734 = vsub.s32 2, %v1733
        %v1735 = vrot.slane %v1706, %v1734
        %v1736 = vmul.f32 %v1730, %v1735
        %v1737 = vmul.f32 %v1731, %v1735
        %v1738 = vadd.f32 %v1728, %v1736
        %v1739 = vadd.f32 %v1729, %v1737
        %v1740 = vld [vmem:[#allocation2 + $0x50] sm:$0xff]
        %v1741 = vld [vmem:[#allocation2 + $0x58] sm:$0xff]
        %v1742 = vlaneseq
        %v1743 = vshrl.u32 %v1742, 7
        %v1744 = vsub.s32 3, %v1743
        %v1745 = vrot.slane %v1706, %v1744
        %v1746 = vmul.f32 %v1740, %v1745
        %v1747 = vmul.f32 %v1741, %v1745
        %v1748 = vadd.f32 %v1738, %v1746
        %v1749 = vadd.f32 %v1739, %v1747
        %v1750 = vld [vmem:[#allocation2 + $0x60] sm:$0xff]
        %v1751 = vld [vmem:[#allocation2 + $0x68] sm:$0xff]
        %v1752 = vlaneseq
        %v1753 = vshrl.u32 %v1752, 7
        %v1754 = vsub.s32 4, %v1753
        %v1755 = vrot.slane %v1706, %v1754
        %v1756 = vmul.f32 %v1750, %v1755
        %v1757 = vmul.f32 %v1751, %v1755
        %v1758 = vadd.f32 %v1748, %v1756
        %v1759 = vadd.f32 %v1749, %v1757
        %v1760 = vld [vmem:[#allocation2 + $0x70] sm:$0xff]
        %v1761 = vld [vmem:[#allocation2 + $0x78] sm:$0xff]
        %v1762 = vlaneseq
        %v1763 = vshrl.u32 %v1762, 7
        %v1764 = vsub.s32 5, %v1763
        %v1765 = vrot.slane %v1706, %v1764
        %v1766 = vmul.f32 %v1760, %v1765
        %v1767 = vmul.f32 %v1761, %v1765
        %v1768 = vadd.f32 %v1758, %v1766
        %v1769 = vadd.f32 %v1759, %v1767
        %v1770 = vld [vmem:[#allocation2 + $0x80] sm:$0xff]
        %v1771 = vld [vmem:[#allocation2 + $0x88] sm:$0xff]
        %v1772 = vlaneseq
        %v1773 = vshrl.u32 %v1772, 7
        %v1774 = vsub.s32 6, %v1773
        %v1775 = vrot.slane %v1706, %v1774
        %v1776 = vmul.f32 %v1770, %v1775
        %v1777 = vmul.f32 %v1771, %v1775
        %v1778 = vadd.f32 %v1768, %v1776
        %v1779 = vadd.f32 %v1769, %v1777
        %v1780 = vld [vmem:[#allocation2 + $0x90] sm:$0xff]
        %v1781 = vld [vmem:[#allocation2 + $0x98] sm:$0xff]
        %v1782 = vlaneseq
        %v1783 = vshrl.u32 %v1782, 7
        %v1784 = vsub.s32 7, %v1783
        %v1785 = vrot.slane %v1706, %v1784
        %v1786 = vmul.f32 %v1780, %v1785
        %v1787 = vmul.f32 %v1781, %v1785
        %v1788 = vadd.f32 %v1778, %v1786
        %v1789 = vadd.f32 %v1779, %v1787
        %v1790 = vld [vmem:[#allocation2 + $0xa0] sm:$0xff]
        %v1791 = vld [vmem:[#allocation2 + $0xa8] sm:$0xff]
        %v1792 = vlaneseq
        %v1793 = vshrl.u32 %v1792, 7
        %v1794 = vsub.s32 0, %v1793
        %v1795 = vrot.slane %v1707, %v1794
        %v1796 = vmul.f32 %v1790, %v1795
        %v1797 = vmul.f32 %v1791, %v1795
        %v1798 = vadd.f32 %v1788, %v1796
        %v1799 = vadd.f32 %v1789, %v1797
        %v1800 = vld [vmem:[#allocation2 + $0xb0] sm:$0xff]
        %v1801 = vld [vmem:[#allocation2 + $0xb8] sm:$0xff]
        %v1802 = vlaneseq
        %v1803 = vshrl.u32 %v1802, 7
        %v1804 = vsub.s32 1, %v1803
        %v1805 = vrot.slane %v1707, %v1804
        %v1806 = vmul.f32 %v1800, %v1805
        %v1807 = vmul.f32 %v1801, %v1805
        %v1808 = vadd.f32 %v1798, %v1806
        %v1809 = vadd.f32 %v1799, %v1807
        %v1810 = vmul.f32 %v1808, 0.5
        %v1811 = vmul.f32 %v1809, 0.5
        %v1812 = vtanh.pop %v1810
        %v1813 = vtanh.pop %v1811
        %v1814 = vmul.f32 %v1812, 0.5
        %v1815 = vmul.f32 %v1813, 0.5
        %v1816 = vadd.f32 %v1814, 0.5
        %v1817 = vadd.f32 %v1815, 0.5
        %v1818 = vld [vmem:[#allocation2 + $0x170] sm:$0xff]
        %v1819 = vld [vmem:[#allocation2 + $0x178] sm:$0xff]
        %v1820 = vld [vmem:[#allocation2 + $0xd0] sm:$0xff]
        %v1821 = vld [vmem:[#allocation2 + $0xd8] sm:$0xff]
        %v1822 = vlaneseq
        %v1823 = vshrl.u32 %v1822, 7
        %v1824 = vsub.s32 0, %v1823
        %v1825 = vrot.slane %v1816, %v1824
        %v1826 = vmul.f32 %v1820, %v1825
        %v1827 = vmul.f32 %v1821, %v1825
        %v1828 = vadd.f32 %v1818, %v1826
        %v1829 = vadd.f32 %v1819, %v1827
        %v1830 = vld [vmem:[#allocation2 + $0xe0] sm:$0xff]
        %v1831 = vld [vmem:[#allocation2 + $0xe8] sm:$0xff]
        %v1832 = vlaneseq
        %v1833 = vshrl.u32 %v1832, 7
        %v1834 = vsub.s32 1, %v1833
        %v1835 = vrot.slane %v1816, %v1834
        %v1836 = vmul.f32 %v1830, %v1835
        %v1837 = vmul.f32 %v1831, %v1835
        %v1838 = vadd.f32 %v1828, %v1836
        %v1839 = vadd.f32 %v1829, %v1837
        %v1840 = vld [vmem:[#allocation2 + $0xf0] sm:$0xff]
        %v1841 = vld [vmem:[#allocation2 + $0xf8] sm:$0xff]
        %v1842 = vlaneseq
        %v1843 = vshrl.u32 %v1842, 7
        %v1844 = vsub.s32 2, %v1843
        %v1845 = vrot.slane %v1816, %v1844
        %v1846 = vmul.f32 %v1840, %v1845
        %v1847 = vmul.f32 %v1841, %v1845
        %v1848 = vadd.f32 %v1838, %v1846
        %v1849 = vadd.f32 %v1839, %v1847
        %v1850 = vld [vmem:[#allocation2 + $0x100] sm:$0xff]
        %v1851 = vld [vmem:[#allocation2 + $0x108] sm:$0xff]
        %v1852 = vlaneseq
        %v1853 = vshrl.u32 %v1852, 7
        %v1854 = vsub.s32 3, %v1853
        %v1855 = vrot.slane %v1816, %v1854
        %v1856 = vmul.f32 %v1850, %v1855
        %v1857 = vmul.f32 %v1851, %v1855
        %v1858 = vadd.f32 %v1848, %v1856
        %v1859 = vadd.f32 %v1849, %v1857
        %v1860 = vld [vmem:[#allocation2 + $0x110] sm:$0xff]
        %v1861 = vld [vmem:[#allocation2 + $0x118] sm:$0xff]
        %v1862 = vlaneseq
        %v1863 = vshrl.u32 %v1862, 7
        %v1864 = vsub.s32 4, %v1863
        %v1865 = vrot.slane %v1816, %v1864
        %v1866 = vmul.f32 %v1860, %v1865
        %v1867 = vmul.f32 %v1861, %v1865
        %v1868 = vadd.f32 %v1858, %v1866
        %v1869 = vadd.f32 %v1859, %v1867
        %v1870 = vld [vmem:[#allocation2 + $0x120] sm:$0xff]
        %v1871 = vld [vmem:[#allocation2 + $0x128] sm:$0xff]
        %v1872 = vlaneseq
        %v1873 = vshrl.u32 %v1872, 7
        %v1874 = vsub.s32 5, %v1873
        %v1875 = vrot.slane %v1816, %v1874
        %v1876 = vmul.f32 %v1870, %v1875
        %v1877 = vmul.f32 %v1871, %v1875
        %v1878 = vadd.f32 %v1868, %v1876
        %v1879 = vadd.f32 %v1869, %v1877
        %v1880 = vld [vmem:[#allocation2 + $0x130] sm:$0xff]
        %v1881 = vld [vmem:[#allocation2 + $0x138] sm:$0xff]
        %v1882 = vlaneseq
        %v1883 = vshrl.u32 %v1882, 7
        %v1884 = vsub.s32 6, %v1883
        %v1885 = vrot.slane %v1816, %v1884
        %v1886 = vmul.f32 %v1880, %v1885
        %v1887 = vmul.f32 %v1881, %v1885
        %v1888 = vadd.f32 %v1878, %v1886
        %v1889 = vadd.f32 %v1879, %v1887
        %v1890 = vld [vmem:[#allocation2 + $0x140] sm:$0xff]
        %v1891 = vld [vmem:[#allocation2 + $0x148] sm:$0xff]
        %v1892 = vlaneseq
        %v1893 = vshrl.u32 %v1892, 7
        %v1894 = vsub.s32 7, %v1893
        %v1895 = vrot.slane %v1816, %v1894
        %v1896 = vmul.f32 %v1890, %v1895
        %v1897 = vmul.f32 %v1891, %v1895
        %v1898 = vadd.f32 %v1888, %v1896
        %v1899 = vadd.f32 %v1889, %v1897
        %v1900 = vld [vmem:[#allocation2 + $0x150] sm:$0xff]
        %v1901 = vld [vmem:[#allocation2 + $0x158] sm:$0xff]
        %v1902 = vlaneseq
        %v1903 = vshrl.u32 %v1902, 7
        %v1904 = vsub.s32 0, %v1903
        %v1905 = vrot.slane %v1817, %v1904
        %v1906 = vmul.f32 %v1900, %v1905
        %v1907 = vmul.f32 %v1901, %v1905
        %v1908 = vadd.f32 %v1898, %v1906
        %v1909 = vadd.f32 %v1899, %v1907
        %v1910 = vld [vmem:[#allocation2 + $0x160] sm:$0xff]
        %v1911 = vld [vmem:[#allocation2 + $0x168] sm:$0xff]
        %v1912 = vlaneseq
        %v1913 = vshrl.u32 %v1912, 7
        %v1914 = vsub.s32 1, %v1913
        %v1915 = vrot.slane %v1817, %v1914
        %v1916 = vmul.f32 %v1910, %v1915
        %v1917 = vmul.f32 %v1911, %v1915
        %v1918 = vadd.f32 %v1908, %v1916
        %v1919 = vadd.f32 %v1909, %v1917
        %v1920 = vmul.f32 %v1918, 0.5
        %v1921 = vmul.f32 %v1919, 0.5
        %v1922 = vtanh.pop %v1920
        %v1923 = vtanh.pop %v1921
        %v1924 = vmul.f32 %v1922, 0.5
        %v1925 = vmul.f32 %v1923, 0.5
        %v1926 = vadd.f32 %v1924, 0.5
        %v1927 = vadd.f32 %v1925, 0.5
        %v1928 = vld [vmem:[#allocation2 + $0x180] sm:$0xff]
        %v1929 = vld [vmem:[#allocation2 + $0x188] sm:$0xff]
        %v1930 = vmul.f32 %v1928, %v1926
        %v1931 = vmul.f32 %v1929, %v1927
        %v1932 = vadd.f32 %v1930, %v1931
        %v1933 = vrot.slane %v1932, 4
        %v1934 = vadd.f32 %v1932, %v1933
        %v1935 = vrot.slane %v1934, 2
        %v1936 = vadd.f32 %v1934, %v1935
        %v1937 = vrot.slane %v1936, 1
        %v1938 = vadd.f32 %v1936, %v1937
        %v1939 = vadd.f32 %v1938, %v162
        %1940 = vst [vmem:[%s160 + $0x6] sm:$0x1] %v1939
        %v1941 = vld [vmem:[%s154 + $0x7] sm:$0x1]
        %v1942 = vld [vmem:[#allocation2] sm:$0xff]
        %v1943 = vld [vmem:[#allocation2 + $0x8] sm:$0xff]
        %v1944 = vlaneseq
        %v1945 = vshrl.u32 %v1944, 7
        %v1946 = vsub.s32 0, %v1945
        %v1947 = vrot.slane %v1941, %v1946
        %v1948 = vmul.f32 %v1942, %v1947
        %v1949 = vmul.f32 %v1943, %v1947
        %v1950 = vld [vmem:[#allocation2 + $0x10] sm:$0xff]
        %v1951 = vld [vmem:[#allocation2 + $0x18] sm:$0xff]
        %v1952 = vadd.f32 %v1948, %v1950
        %v1953 = vadd.f32 %v1949, %v1951
        %v1954 = vmul.f32 %v1952, 0.5
        %v1955 = vmul.f32 %v1953, 0.5
        %v1956 = vtanh.pop %v1954
        %v1957 = vtanh.pop %v1955
        %v1958 = vmul.f32 %v1956, 0.5
        %v1959 = vmul.f32 %v1957, 0.5
        %v1960 = vadd.f32 %v1958, 0.5
        %v1961 = vadd.f32 %v1959, 0.5
        %v1962 = vld [vmem:[#allocation2 + $0xc0] sm:$0xff]
        %v1963 = vld [vmem:[#allocation2 + $0xc8] sm:$0xff]
        %v1964 = vld [vmem:[#allocation2 + $0x20] sm:$0xff]
        %v1965 = vld [vmem:[#allocation2 + $0x28] sm:$0xff]
        %v1966 = vlaneseq
        %v1967 = vshrl.u32 %v1966, 7
        %v1968 = vsub.s32 0, %v1967
        %v1969 = vrot.slane %v1960, %v1968
        %v1970 = vmul.f32 %v1964, %v1969
        %v1971 = vmul.f32 %v1965, %v1969
        %v1972 = vadd.f32 %v1962, %v1970
        %v1973 = vadd.f32 %v1963, %v1971
        %v1974 = vld [vmem:[#allocation2 + $0x30] sm:$0xff]
        %v1975 = vld [vmem:[#allocation2 + $0x38] sm:$0xff]
        %v1976 = vlaneseq
        %v1977 = vshrl.u32 %v1976, 7
        %v1978 = vsub.s32 1, %v1977
        %v1979 = vrot.slane %v1960, %v1978
        %v1980 = vmul.f32 %v1974, %v1979
        %v1981 = vmul.f32 %v1975, %v1979
        %v1982 = vadd.f32 %v1972, %v1980
        %v1983 = vadd.f32 %v1973, %v1981
        %v1984 = vld [vmem:[#allocation2 + $0x40] sm:$0xff]
        %v1985 = vld [vmem:[#allocation2 + $0x48] sm:$0xff]
        %v1986 = vlaneseq
        %v1987 = vshrl.u32 %v1986, 7
        %v1988 = vsub.s32 2, %v1987
        %v1989 = vrot.slane %v1960, %v1988
        %v1990 = vmul.f32 %v1984, %v1989
        %v1991 = vmul.f32 %v1985, %v1989
        %v1992 = vadd.f32 %v1982, %v1990
        %v1993 = vadd.f32 %v1983, %v1991
        %v1994 = vld [vmem:[#allocation2 + $0x50] sm:$0xff]
        %v1995 = vld [vmem:[#allocation2 + $0x58] sm:$0xff]
        %v1996 = vlaneseq
        %v1997 = vshrl.u32 %v1996, 7
        %v1998 = vsub.s32 3, %v1997
        %v1999 = vrot.slane %v1960, %v1998
        %v2000 = vmul.f32 %v1994, %v1999
        %v2001 = vmul.f32 %v1995, %v1999
        %v2002 = vadd.f32 %v1992, %v2000
        %v2003 = vadd.f32 %v1993, %v2001
        %v2004 = vld [vmem:[#allocation2 + $0x60] sm:$0xff]
        %v2005 = vld [vmem:[#allocation2 + $0x68] sm:$0xff]
        %v2006 = vlaneseq
        %v2007 = vshrl.u32 %v2006, 7
        %v2008 = vsub.s32 4, %v2007
        %v2009 = vrot.slane %v1960, %v2008
        %v2010 = vmul.f32 %v2004, %v2009
        %v2011 = vmul.f32 %v2005, %v2009
        %v2012 = vadd.f32 %v2002, %v2010
        %v2013 = vadd.f32 %v2003, %v2011
        %v2014 = vld [vmem:[#allocation2 + $0x70] sm:$0xff]
        %v2015 = vld [vmem:[#allocation2 + $0x78] sm:$0xff]
        %v2016 = vlaneseq
        %v2017 = vshrl.u32 %v2016, 7
        %v2018 = vsub.s32 5, %v2017
        %v2019 = vrot.slane %v1960, %v2018
        %v2020 = vmul.f32 %v2014, %v2019
        %v2021 = vmul.f32 %v2015, %v2019
        %v2022 = vadd.f32 %v2012, %v2020
        %v2023 = vadd.f32 %v2013, %v2021
        %v2024 = vld [vmem:[#allocation2 + $0x80] sm:$0xff]
        %v2025 = vld [vmem:[#allocation2 + $0x88] sm:$0xff]
        %v2026 = vlaneseq
        %v2027 = vshrl.u32 %v2026, 7
        %v2028 = vsub.s32 6, %v2027
        %v2029 = vrot.slane %v1960, %v2028
        %v2030 = vmul.f32 %v2024, %v2029
        %v2031 = vmul.f32 %v2025, %v2029
        %v2032 = vadd.f32 %v2022, %v2030
        %v2033 = vadd.f32 %v2023, %v2031
        %v2034 = vld [vmem:[#allocation2 + $0x90] sm:$0xff]
        %v2035 = vld [vmem:[#allocation2 + $0x98] sm:$0xff]
        %v2036 = vlaneseq
        %v2037 = vshrl.u32 %v2036, 7
        %v2038 = vsub.s32 7, %v2037
        %v2039 = vrot.slane %v1960, %v2038
        %v2040 = vmul.f32 %v2034, %v2039
        %v2041 = vmul.f32 %v2035, %v2039
        %v2042 = vadd.f32 %v2032, %v2040
        %v2043 = vadd.f32 %v2033, %v2041
        %v2044 = vld [vmem:[#allocation2 + $0xa0] sm:$0xff]
        %v2045 = vld [vmem:[#allocation2 + $0xa8] sm:$0xff]
        %v2046 = vlaneseq
        %v2047 = vshrl.u32 %v2046, 7
        %v2048 = vsub.s32 0, %v2047
        %v2049 = vrot.slane %v1961, %v2048
        %v2050 = vmul.f32 %v2044, %v2049
        %v2051 = vmul.f32 %v2045, %v2049
        %v2052 = vadd.f32 %v2042, %v2050
        %v2053 = vadd.f32 %v2043, %v2051
        %v2054 = vld [vmem:[#allocation2 + $0xb0] sm:$0xff]
        %v2055 = vld [vmem:[#allocation2 + $0xb8] sm:$0xff]
        %v2056 = vlaneseq
        %v2057 = vshrl.u32 %v2056, 7
        %v2058 = vsub.s32 1, %v2057
        %v2059 = vrot.slane %v1961, %v2058
        %v2060 = vmul.f32 %v2054, %v2059
        %v2061 = vmul.f32 %v2055, %v2059
        %v2062 = vadd.f32 %v2052, %v2060
        %v2063 = vadd.f32 %v2053, %v2061
        %v2064 = vmul.f32 %v2062, 0.5
        %v2065 = vmul.f32 %v2063, 0.5
        %v2066 = vtanh.pop %v2064
        %v2067 = vtanh.pop %v2065
        %v2068 = vmul.f32 %v2066, 0.5
        %v2069 = vmul.f32 %v2067, 0.5
        %v2070 = vadd.f32 %v2068, 0.5
        %v2071 = vadd.f32 %v2069, 0.5
        %v2072 = vld [vmem:[#allocation2 + $0x170] sm:$0xff]
        %v2073 = vld [vmem:[#allocation2 + $0x178] sm:$0xff]
        %v2074 = vld [vmem:[#allocation2 + $0xd0] sm:$0xff]
        %v2075 = vld [vmem:[#allocation2 + $0xd8] sm:$0xff]
        %v2076 = vlaneseq
        %v2077 = vshrl.u32 %v2076, 7
        %v2078 = vsub.s32 0, %v2077
        %v2079 = vrot.slane %v2070, %v2078
        %v2080 = vmul.f32 %v2074, %v2079
        %v2081 = vmul.f32 %v2075, %v2079
        %v2082 = vadd.f32 %v2072, %v2080
        %v2083 = vadd.f32 %v2073, %v2081
        %v2084 = vld [vmem:[#allocation2 + $0xe0] sm:$0xff]
        %v2085 = vld [vmem:[#allocation2 + $0xe8] sm:$0xff]
        %v2086 = vlaneseq
        %v2087 = vshrl.u32 %v2086, 7
        %v2088 = vsub.s32 1, %v2087
        %v2089 = vrot.slane %v2070, %v2088
        %v2090 = vmul.f32 %v2084, %v2089
        %v2091 = vmul.f32 %v2085, %v2089
        %v2092 = vadd.f32 %v2082, %v2090
        %v2093 = vadd.f32 %v2083, %v2091
        %v2094 = vld [vmem:[#allocation2 + $0xf0] sm:$0xff]
        %v2095 = vld [vmem:[#allocation2 + $0xf8] sm:$0xff]
        %v2096 = vlaneseq
        %v2097 = vshrl.u32 %v2096, 7
        %v2098 = vsub.s32 2, %v2097
        %v2099 = vrot.slane %v2070, %v2098
        %v2100 = vmul.f32 %v2094, %v2099
        %v2101 = vmul.f32 %v2095, %v2099
        %v2102 = vadd.f32 %v2092, %v2100
        %v2103 = vadd.f32 %v2093, %v2101
        %v2104 = vld [vmem:[#allocation2 + $0x100] sm:$0xff]
        %v2105 = vld [vmem:[#allocation2 + $0x108] sm:$0xff]
        %v2106 = vlaneseq
        %v2107 = vshrl.u32 %v2106, 7
        %v2108 = vsub.s32 3, %v2107
        %v2109 = vrot.slane %v2070, %v2108
        %v2110 = vmul.f32 %v2104, %v2109
        %v2111 = vmul.f32 %v2105, %v2109
        %v2112 = vadd.f32 %v2102, %v2110
        %v2113 = vadd.f32 %v2103, %v2111
        %v2114 = vld [vmem:[#allocation2 + $0x110] sm:$0xff]
        %v2115 = vld [vmem:[#allocation2 + $0x118] sm:$0xff]
        %v2116 = vlaneseq
        %v2117 = vshrl.u32 %v2116, 7
        %v2118 = vsub.s32 4, %v2117
        %v2119 = vrot.slane %v2070, %v2118
        %v2120 = vmul.f32 %v2114, %v2119
        %v2121 = vmul.f32 %v2115, %v2119
        %v2122 = vadd.f32 %v2112, %v2120
        %v2123 = vadd.f32 %v2113, %v2121
        %v2124 = vld [vmem:[#allocation2 + $0x120] sm:$0xff]
        %v2125 = vld [vmem:[#allocation2 + $0x128] sm:$0xff]
        %v2126 = vlaneseq
        %v2127 = vshrl.u32 %v2126, 7
        %v2128 = vsub.s32 5, %v2127
        %v2129 = vrot.slane %v2070, %v2128
        %v2130 = vmul.f32 %v2124, %v2129
        %v2131 = vmul.f32 %v2125, %v2129
        %v2132 = vadd.f32 %v2122, %v2130
        %v2133 = vadd.f32 %v2123, %v2131
        %v2134 = vld [vmem:[#allocation2 + $0x130] sm:$0xff]
        %v2135 = vld [vmem:[#allocation2 + $0x138] sm:$0xff]
        %v2136 = vlaneseq
        %v2137 = vshrl.u32 %v2136, 7
        %v2138 = vsub.s32 6, %v2137
        %v2139 = vrot.slane %v2070, %v2138
        %v2140 = vmul.f32 %v2134, %v2139
        %v2141 = vmul.f32 %v2135, %v2139
        %v2142 = vadd.f32 %v2132, %v2140
        %v2143 = vadd.f32 %v2133, %v2141
        %v2144 = vld [vmem:[#allocation2 + $0x140] sm:$0xff]
        %v2145 = vld [vmem:[#allocation2 + $0x148] sm:$0xff]
        %v2146 = vlaneseq
        %v2147 = vshrl.u32 %v2146, 7
        %v2148 = vsub.s32 7, %v2147
        %v2149 = vrot.slane %v2070, %v2148
        %v2150 = vmul.f32 %v2144, %v2149
        %v2151 = vmul.f32 %v2145, %v2149
        %v2152 = vadd.f32 %v2142, %v2150
        %v2153 = vadd.f32 %v2143, %v2151
        %v2154 = vld [vmem:[#allocation2 + $0x150] sm:$0xff]
        %v2155 = vld [vmem:[#allocation2 + $0x158] sm:$0xff]
        %v2156 = vlaneseq
        %v2157 = vshrl.u32 %v2156, 7
        %v2158 = vsub.s32 0, %v2157
        %v2159 = vrot.slane %v2071, %v2158
        %v2160 = vmul.f32 %v2154, %v2159
        %v2161 = vmul.f32 %v2155, %v2159
        %v2162 = vadd.f32 %v2152, %v2160
        %v2163 = vadd.f32 %v2153, %v2161
        %v2164 = vld [vmem:[#allocation2 + $0x160] sm:$0xff]
        %v2165 = vld [vmem:[#allocation2 + $0x168] sm:$0xff]
        %v2166 = vlaneseq
        %v2167 = vshrl.u32 %v2166, 7
        %v2168 = vsub.s32 1, %v2167
        %v2169 = vrot.slane %v2071, %v2168
        %v2170 = vmul.f32 %v2164, %v2169
        %v2171 = vmul.f32 %v2165, %v2169
        %v2172 = vadd.f32 %v2162, %v2170
        %v2173 = vadd.f32 %v2163, %v2171
        %v2174 = vmul.f32 %v2172, 0.5
        %v2175 = vmul.f32 %v2173, 0.5
        %v2176 = vtanh.pop %v2174
        %v2177 = vtanh.pop %v2175
        %v2178 = vmul.f32 %v2176, 0.5
        %v2179 = vmul.f32 %v2177, 0.5
        %v2180 = vadd.f32 %v2178, 0.5
        %v2181 = vadd.f32 %v2179, 0.5
        %v2182 = vld [vmem:[#allocation2 + $0x180] sm:$0xff]
        %v2183 = vld [vmem:[#allocation2 + $0x188] sm:$0xff]
        %v2184 = vmul.f32 %v2182, %v2180
        %v2185 = vmul.f32 %v2183, %v2181
        %v2186 = vadd.f32 %v2184, %v2185
        %v2187 = vrot.slane %v2186, 4
        %v2188 = vadd.f32 %v2186, %v2187
        %v2189 = vrot.slane %v2188, 2
        %v2190 = vadd.f32 %v2188, %v2189
        %v2191 = vrot.slane %v2190, 1
        %v2192 = vadd.f32 %v2190, %v2191
        %v2193 = vadd.f32 %v2192, %v162
        %2194 = vst [vmem:[%s160 + $0x7] sm:$0x1] %v2193
        %v2195 = vld [vmem:[%s154 + $0x8] sm:$0x1]
        %v2196 = vld [vmem:[#allocation2] sm:$0xff]
        %v2197 = vld [vmem:[#allocation2 + $0x8] sm:$0xff]
        %v2198 = vlaneseq
        %v2199 = vshrl.u32 %v2198, 7
        %v2200 = vsub.s32 0, %v2199
        %v2201 = vrot.slane %v2195, %v2200
        %v2202 = vmul.f32 %v2196, %v2201
        %v2203 = vmul.f32 %v2197, %v2201
        %v2204 = vld [vmem:[#allocation2 + $0x10] sm:$0xff]
        %v2205 = vld [vmem:[#allocation2 + $0x18] sm:$0xff]
        %v2206 = vadd.f32 %v2202, %v2204
        %v2207 = vadd.f32 %v2203, %v2205
        %v2208 = vmul.f32 %v2206, 0.5
        %v2209 = vmul.f32 %v2207, 0.5
        %v2210 = vtanh.pop %v2208
        %v2211 = vtanh.pop %v2209
        %v2212 = vmul.f32 %v2210, 0.5
        %v2213 = vmul.f32 %v2211, 0.5
        %v2214 = vadd.f32 %v2212, 0.5
        %v2215 = vadd.f32 %v2213, 0.5
        %v2216 = vld [vmem:[#allocation2 + $0xc0] sm:$0xff]
        %v2217 = vld [vmem:[#allocation2 + $0xc8] sm:$0xff]
        %v2218 = vld [vmem:[#allocation2 + $0x20] sm:$0xff]
        %v2219 = vld [vmem:[#allocation2 + $0x28] sm:$0xff]
        %v2220 = vlaneseq
        %v2221 = vshrl.u32 %v2220, 7
        %v2222 = vsub.s32 0, %v2221
        %v2223 = vrot.slane %v2214, %v2222
        %v2224 = vmul.f32 %v2218, %v2223
        %v2225 = vmul.f32 %v2219, %v2223
        %v2226 = vadd.f32 %v2216, %v2224
        %v2227 = vadd.f32 %v2217, %v2225
        %v2228 = vld [vmem:[#allocation2 + $0x30] sm:$0xff]
        %v2229 = vld [vmem:[#allocation2 + $0x38] sm:$0xff]
        %v2230 = vlaneseq
        %v2231 = vshrl.u32 %v2230, 7
        %v2232 = vsub.s32 1, %v2231
        %v2233 = vrot.slane %v2214, %v2232
        %v2234 = vmul.f32 %v2228, %v2233
        %v2235 = vmul.f32 %v2229, %v2233
        %v2236 = vadd.f32 %v2226, %v2234
        %v2237 = vadd.f32 %v2227, %v2235
        %v2238 = vld [vmem:[#allocation2 + $0x40] sm:$0xff]
        %v2239 = vld [vmem:[#allocation2 + $0x48] sm:$0xff]
        %v2240 = vlaneseq
        %v2241 = vshrl.u32 %v2240, 7
        %v2242 = vsub.s32 2, %v2241
        %v2243 = vrot.slane %v2214, %v2242
        %v2244 = vmul.f32 %v2238, %v2243
        %v2245 = vmul.f32 %v2239, %v2243
        %v2246 = vadd.f32 %v2236, %v2244
        %v2247 = vadd.f32 %v2237, %v2245
        %v2248 = vld [vmem:[#allocation2 + $0x50] sm:$0xff]
        %v2249 = vld [vmem:[#allocation2 + $0x58] sm:$0xff]
        %v2250 = vlaneseq
        %v2251 = vshrl.u32 %v2250, 7
        %v2252 = vsub.s32 3, %v2251
        %v2253 = vrot.slane %v2214, %v2252
        %v2254 = vmul.f32 %v2248, %v2253
        %v2255 = vmul.f32 %v2249, %v2253
        %v2256 = vadd.f32 %v2246, %v2254
        %v2257 = vadd.f32 %v2247, %v2255
        %v2258 = vld [vmem:[#allocation2 + $0x60] sm:$0xff]
        %v2259 = vld [vmem:[#allocation2 + $0x68] sm:$0xff]
        %v2260 = vlaneseq
        %v2261 = vshrl.u32 %v2260, 7
        %v2262 = vsub.s32 4, %v2261
        %v2263 = vrot.slane %v2214, %v2262
        %v2264 = vmul.f32 %v2258, %v2263
        %v2265 = vmul.f32 %v2259, %v2263
        %v2266 = vadd.f32 %v2256, %v2264
        %v2267 = vadd.f32 %v2257, %v2265
        %v2268 = vld [vmem:[#allocation2 + $0x70] sm:$0xff]
        %v2269 = vld [vmem:[#allocation2 + $0x78] sm:$0xff]
        %v2270 = vlaneseq
        %v2271 = vshrl.u32 %v2270, 7
        %v2272 = vsub.s32 5, %v2271
        %v2273 = vrot.slane %v2214, %v2272
        %v2274 = vmul.f32 %v2268, %v2273
        %v2275 = vmul.f32 %v2269, %v2273
        %v2276 = vadd.f32 %v2266, %v2274
        %v2277 = vadd.f32 %v2267, %v2275
        %v2278 = vld [vmem:[#allocation2 + $0x80] sm:$0xff]
        %v2279 = vld [vmem:[#allocation2 + $0x88] sm:$0xff]
        %v2280 = vlaneseq
        %v2281 = vshrl.u32 %v2280, 7
        %v2282 = vsub.s32 6, %v2281
        %v2283 = vrot.slane %v2214, %v2282
        %v2284 = vmul.f32 %v2278, %v2283
        %v2285 = vmul.f32 %v2279, %v2283
        %v2286 = vadd.f32 %v2276, %v2284
        %v2287 = vadd.f32 %v2277, %v2285
        %v2288 = vld [vmem:[#allocation2 + $0x90] sm:$0xff]
        %v2289 = vld [vmem:[#allocation2 + $0x98] sm:$0xff]
        %v2290 = vlaneseq
        %v2291 = vshrl.u32 %v2290, 7
        %v2292 = vsub.s32 7, %v2291
        %v2293 = vrot.slane %v2214, %v2292
        %v2294 = vmul.f32 %v2288, %v2293
        %v2295 = vmul.f32 %v2289, %v2293
        %v2296 = vadd.f32 %v2286, %v2294
        %v2297 = vadd.f32 %v2287, %v2295
        %v2298 = vld [vmem:[#allocation2 + $0xa0] sm:$0xff]
        %v2299 = vld [vmem:[#allocation2 + $0xa8] sm:$0xff]
        %v2300 = vlaneseq
        %v2301 = vshrl.u32 %v2300, 7
        %v2302 = vsub.s32 0, %v2301
        %v2303 = vrot.slane %v2215, %v2302
        %v2304 = vmul.f32 %v2298, %v2303
        %v2305 = vmul.f32 %v2299, %v2303
        %v2306 = vadd.f32 %v2296, %v2304
        %v2307 = vadd.f32 %v2297, %v2305
        %v2308 = vld [vmem:[#allocation2 + $0xb0] sm:$0xff]
        %v2309 = vld [vmem:[#allocation2 + $0xb8] sm:$0xff]
        %v2310 = vlaneseq
        %v2311 = vshrl.u32 %v2310, 7
        %v2312 = vsub.s32 1, %v2311
        %v2313 = vrot.slane %v2215, %v2312
        %v2314 = vmul.f32 %v2308, %v2313
        %v2315 = vmul.f32 %v2309, %v2313
        %v2316 = vadd.f32 %v2306, %v2314
        %v2317 = vadd.f32 %v2307, %v2315
        %v2318 = vmul.f32 %v2316, 0.5
        %v2319 = vmul.f32 %v2317, 0.5
        %v2320 = vtanh.pop %v2318
        %v2321 = vtanh.pop %v2319
        %v2322 = vmul.f32 %v2320, 0.5
        %v2323 = vmul.f32 %v2321, 0.5
        %v2324 = vadd.f32 %v2322, 0.5
        %v2325 = vadd.f32 %v2323, 0.5
        %v2326 = vld [vmem:[#allocation2 + $0x170] sm:$0xff]
        %v2327 = vld [vmem:[#allocation2 + $0x178] sm:$0xff]
        %v2328 = vld [vmem:[#allocation2 + $0xd0] sm:$0xff]
        %v2329 = vld [vmem:[#allocation2 + $0xd8] sm:$0xff]
        %v2330 = vlaneseq
        %v2331 = vshrl.u32 %v2330, 7
        %v2332 = vsub.s32 0, %v2331
        %v2333 = vrot.slane %v2324, %v2332
        %v2334 = vmul.f32 %v2328, %v2333
        %v2335 = vmul.f32 %v2329, %v2333
        %v2336 = vadd.f32 %v2326, %v2334
        %v2337 = vadd.f32 %v2327, %v2335
        %v2338 = vld [vmem:[#allocation2 + $0xe0] sm:$0xff]
        %v2339 = vld [vmem:[#allocation2 + $0xe8] sm:$0xff]
        %v2340 = vlaneseq
        %v2341 = vshrl.u32 %v2340, 7
        %v2342 = vsub.s32 1, %v2341
        %v2343 = vrot.slane %v2324, %v2342
        %v2344 = vmul.f32 %v2338, %v2343
        %v2345 = vmul.f32 %v2339, %v2343
        %v2346 = vadd.f32 %v2336, %v2344
        %v2347 = vadd.f32 %v2337, %v2345
        %v2348 = vld [vmem:[#allocation2 + $0xf0] sm:$0xff]
        %v2349 = vld [vmem:[#allocation2 + $0xf8] sm:$0xff]
        %v2350 = vlaneseq
        %v2351 = vshrl.u32 %v2350, 7
        %v2352 = vsub.s32 2, %v2351
        %v2353 = vrot.slane %v2324, %v2352
        %v2354 = vmul.f32 %v2348, %v2353
        %v2355 = vmul.f32 %v2349, %v2353
        %v2356 = vadd.f32 %v2346, %v2354
        %v2357 = vadd.f32 %v2347, %v2355
        %v2358 = vld [vmem:[#allocation2 + $0x100] sm:$0xff]
        %v2359 = vld [vmem:[#allocation2 + $0x108] sm:$0xff]
        %v2360 = vlaneseq
        %v2361 = vshrl.u32 %v2360, 7
        %v2362 = vsub.s32 3, %v2361
        %v2363 = vrot.slane %v2324, %v2362
        %v2364 = vmul.f32 %v2358, %v2363
        %v2365 = vmul.f32 %v2359, %v2363
        %v2366 = vadd.f32 %v2356, %v2364
        %v2367 = vadd.f32 %v2357, %v2365
        %v2368 = vld [vmem:[#allocation2 + $0x110] sm:$0xff]
        %v2369 = vld [vmem:[#allocation2 + $0x118] sm:$0xff]
        %v2370 = vlaneseq
        %v2371 = vshrl.u32 %v2370, 7
        %v2372 = vsub.s32 4, %v2371
        %v2373 = vrot.slane %v2324, %v2372
        %v2374 = vmul.f32 %v2368, %v2373
        %v2375 = vmul.f32 %v2369, %v2373
        %v2376 = vadd.f32 %v2366, %v2374
        %v2377 = vadd.f32 %v2367, %v2375
        %v2378 = vld [vmem:[#allocation2 + $0x120] sm:$0xff]
        %v2379 = vld [vmem:[#allocation2 + $0x128] sm:$0xff]
        %v2380 = vlaneseq
        %v2381 = vshrl.u32 %v2380, 7
        %v2382 = vsub.s32 5, %v2381
        %v2383 = vrot.slane %v2324, %v2382
        %v2384 = vmul.f32 %v2378, %v2383
        %v2385 = vmul.f32 %v2379, %v2383
        %v2386 = vadd.f32 %v2376, %v2384
        %v2387 = vadd.f32 %v2377, %v2385
        %v2388 = vld [vmem:[#allocation2 + $0x130] sm:$0xff]
        %v2389 = vld [vmem:[#allocation2 + $0x138] sm:$0xff]
        %v2390 = vlaneseq
        %v2391 = vshrl.u32 %v2390, 7
        %v2392 = vsub.s32 6, %v2391
        %v2393 = vrot.slane %v2324, %v2392
        %v2394 = vmul.f32 %v2388, %v2393
        %v2395 = vmul.f32 %v2389, %v2393
        %v2396 = vadd.f32 %v2386, %v2394
        %v2397 = vadd.f32 %v2387, %v2395
        %v2398 = vld [vmem:[#allocation2 + $0x140] sm:$0xff]
        %v2399 = vld [vmem:[#allocation2 + $0x148] sm:$0xff]
        %v2400 = vlaneseq
        %v2401 = vshrl.u32 %v2400, 7
        %v2402 = vsub.s32 7, %v2401
        %v2403 = vrot.slane %v2324, %v2402
        %v2404 = vmul.f32 %v2398, %v2403
        %v2405 = vmul.f32 %v2399, %v2403
        %v2406 = vadd.f32 %v2396, %v2404
        %v2407 = vadd.f32 %v2397, %v2405
        %v2408 = vld [vmem:[#allocation2 + $0x150] sm:$0xff]
        %v2409 = vld [vmem:[#allocation2 + $0x158] sm:$0xff]
        %v2410 = vlaneseq
        %v2411 = vshrl.u32 %v2410, 7
        %v2412 = vsub.s32 0, %v2411
        %v2413 = vrot.slane %v2325, %v2412
        %v2414 = vmul.f32 %v2408, %v2413
        %v2415 = vmul.f32 %v2409, %v2413
        %v2416 = vadd.f32 %v2406, %v2414
        %v2417 = vadd.f32 %v2407, %v2415
        %v2418 = vld [vmem:[#allocation2 + $0x160] sm:$0xff]
        %v2419 = vld [vmem:[#allocation2 + $0x168] sm:$0xff]
        %v2420 = vlaneseq
        %v2421 = vshrl.u32 %v2420, 7
        %v2422 = vsub.s32 1, %v2421
        %v2423 = vrot.slane %v2325, %v2422
        %v2424 = vmul.f32 %v2418, %v2423
        %v2425 = vmul.f32 %v2419, %v2423
        %v2426 = vadd.f32 %v2416, %v2424
        %v2427 = vadd.f32 %v2417, %v2425
        %v2428 = vmul.f32 %v2426, 0.5
        %v2429 = vmul.f32 %v2427, 0.5
        %v2430 = vtanh.pop %v2428
        %v2431 = vtanh.pop %v2429
        %v2432 = vmul.f32 %v2430, 0.5
        %v2433 = vmul.f32 %v2431, 0.5
        %v2434 = vadd.f32 %v2432, 0.5
        %v2435 = vadd.f32 %v2433, 0.5
        %v2436 = vld [vmem:[#allocation2 + $0x180] sm:$0xff]
        %v2437 = vld [vmem:[#allocation2 + $0x188] sm:$0xff]
        %v2438 = vmul.f32 %v2436, %v2434
        %v2439 = vmul.f32 %v2437, %v2435
        %v2440 = vadd.f32 %v2438, %v2439
        %v2441 = vrot.slane %v2440, 4
        %v2442 = vadd.f32 %v2440, %v2441
        %v2443 = vrot.slane %v2442, 2
        %v2444 = vadd.f32 %v2442, %v2443
        %v2445 = vrot.slane %v2444, 1
        %v2446 = vadd.f32 %v2444, %v2445
        %v2447 = vadd.f32 %v2446, %v162
        %2448 = vst [vmem:[%s160 + $0x8] sm:$0x1] %v2447
        %v2449 = vld [vmem:[%s154 + $0x9] sm:$0x1]
        %v2450 = vld [vmem:[#allocation2] sm:$0xff]
        %v2451 = vld [vmem:[#allocation2 + $0x8] sm:$0xff]
        %v2452 = vlaneseq
        %v2453 = vshrl.u32 %v2452, 7
        %v2454 = vsub.s32 0, %v2453
        %v2455 = vrot.slane %v2449, %v2454
        %v2456 = vmul.f32 %v2450, %v2455
        %v2457 = vmul.f32 %v2451, %v2455
        %v2458 = vld [vmem:[#allocation2 + $0x10] sm:$0xff]
        %v2459 = vld [vmem:[#allocation2 + $0x18] sm:$0xff]
        %v2460 = vadd.f32 %v2456, %v2458
        %v2461 = vadd.f32 %v2457, %v2459
        %v2462 = vmul.f32 %v2460, 0.5
        %v2463 = vmul.f32 %v2461, 0.5
        %v2464 = vtanh.pop %v2462
        %v2465 = vtanh.pop %v2463
        %v2466 = vmul.f32 %v2464, 0.5
        %v2467 = vmul.f32 %v2465, 0.5
        %v2468 = vadd.f32 %v2466, 0.5
        %v2469 = vadd.f32 %v2467, 0.5
        %v2470 = vld [vmem:[#allocation2 + $0xc0] sm:$0xff]
        %v2471 = vld [vmem:[#allocation2 + $0xc8] sm:$0xff]
        %v2472 = vld [vmem:[#allocation2 + $0x20] sm:$0xff]
        %v2473 = vld [vmem:[#allocation2 + $0x28] sm:$0xff]
        %v2474 = vlaneseq
        %v2475 = vshrl.u32 %v2474, 7
        %v2476 = vsub.s32 0, %v2475
        %v2477 = vrot.slane %v2468, %v2476
        %v2478 = vmul.f32 %v2472, %v2477
        %v2479 = vmul.f32 %v2473, %v2477
        %v2480 = vadd.f32 %v2470, %v2478
        %v2481 = vadd.f32 %v2471, %v2479
        %v2482 = vld [vmem:[#allocation2 + $0x30] sm:$0xff]
        %v2483 = vld [vmem:[#allocation2 + $0x38] sm:$0xff]
        %v2484 = vlaneseq
        %v2485 = vshrl.u32 %v2484, 7
        %v2486 = vsub.s32 1, %v2485
        %v2487 = vrot.slane %v2468, %v2486
        %v2488 = vmul.f32 %v2482, %v2487
        %v2489 = vmul.f32 %v2483, %v2487
        %v2490 = vadd.f32 %v2480, %v2488
        %v2491 = vadd.f32 %v2481, %v2489
        %v2492 = vld [vmem:[#allocation2 + $0x40] sm:$0xff]
        %v2493 = vld [vmem:[#allocation2 + $0x48] sm:$0xff]
        %v2494 = vlaneseq
        %v2495 = vshrl.u32 %v2494, 7
        %v2496 = vsub.s32 2, %v2495
        %v2497 = vrot.slane %v2468, %v2496
        %v2498 = vmul.f32 %v2492, %v2497
        %v2499 = vmul.f32 %v2493, %v2497
        %v2500 = vadd.f32 %v2490, %v2498
        %v2501 = vadd.f32 %v2491, %v2499
        %v2502 = vld [vmem:[#allocation2 + $0x50] sm:$0xff]
        %v2503 = vld [vmem:[#allocation2 + $0x58] sm:$0xff]
        %v2504 = vlaneseq
        %v2505 = vshrl.u32 %v2504, 7
        %v2506 = vsub.s32 3, %v2505
        %v2507 = vrot.slane %v2468, %v2506
        %v2508 = vmul.f32 %v2502, %v2507
        %v2509 = vmul.f32 %v2503, %v2507
        %v2510 = vadd.f32 %v2500, %v2508
        %v2511 = vadd.f32 %v2501, %v2509
        %v2512 = vld [vmem:[#allocation2 + $0x60] sm:$0xff]
        %v2513 = vld [vmem:[#allocation2 + $0x68] sm:$0xff]
        %v2514 = vlaneseq
        %v2515 = vshrl.u32 %v2514, 7
        %v2516 = vsub.s32 4, %v2515
        %v2517 = vrot.slane %v2468, %v2516
        %v2518 = vmul.f32 %v2512, %v2517
        %v2519 = vmul.f32 %v2513, %v2517
        %v2520 = vadd.f32 %v2510, %v2518
        %v2521 = vadd.f32 %v2511, %v2519
        %v2522 = vld [vmem:[#allocation2 + $0x70] sm:$0xff]
        %v2523 = vld [vmem:[#allocation2 + $0x78] sm:$0xff]
        %v2524 = vlaneseq
        %v2525 = vshrl.u32 %v2524, 7
        %v2526 = vsub.s32 5, %v2525
        %v2527 = vrot.slane %v2468, %v2526
        %v2528 = vmul.f32 %v2522, %v2527
        %v2529 = vmul.f32 %v2523, %v2527
        %v2530 = vadd.f32 %v2520, %v2528
        %v2531 = vadd.f32 %v2521, %v2529
        %v2532 = vld [vmem:[#allocation2 + $0x80] sm:$0xff]
        %v2533 = vld [vmem:[#allocation2 + $0x88] sm:$0xff]
        %v2534 = vlaneseq
        %v2535 = vshrl.u32 %v2534, 7
        %v2536 = vsub.s32 6, %v2535
        %v2537 = vrot.slane %v2468, %v2536
        %v2538 = vmul.f32 %v2532, %v2537
        %v2539 = vmul.f32 %v2533, %v2537
        %v2540 = vadd.f32 %v2530, %v2538
        %v2541 = vadd.f32 %v2531, %v2539
        %v2542 = vld [vmem:[#allocation2 + $0x90] sm:$0xff]
        %v2543 = vld [vmem:[#allocation2 + $0x98] sm:$0xff]
        %v2544 = vlaneseq
        %v2545 = vshrl.u32 %v2544, 7
        %v2546 = vsub.s32 7, %v2545
        %v2547 = vrot.slane %v2468, %v2546
        %v2548 = vmul.f32 %v2542, %v2547
        %v2549 = vmul.f32 %v2543, %v2547
        %v2550 = vadd.f32 %v2540, %v2548
        %v2551 = vadd.f32 %v2541, %v2549
        %v2552 = vld [vmem:[#allocation2 + $0xa0] sm:$0xff]
        %v2553 = vld [vmem:[#allocation2 + $0xa8] sm:$0xff]
        %v2554 = vlaneseq
        %v2555 = vshrl.u32 %v2554, 7
        %v2556 = vsub.s32 0, %v2555
        %v2557 = vrot.slane %v2469, %v2556
        %v2558 = vmul.f32 %v2552, %v2557
        %v2559 = vmul.f32 %v2553, %v2557
        %v2560 = vadd.f32 %v2550, %v2558
        %v2561 = vadd.f32 %v2551, %v2559
        %v2562 = vld [vmem:[#allocation2 + $0xb0] sm:$0xff]
        %v2563 = vld [vmem:[#allocation2 + $0xb8] sm:$0xff]
        %v2564 = vlaneseq
        %v2565 = vshrl.u32 %v2564, 7
        %v2566 = vsub.s32 1, %v2565
        %v2567 = vrot.slane %v2469, %v2566
        %v2568 = vmul.f32 %v2562, %v2567
        %v2569 = vmul.f32 %v2563, %v2567
        %v2570 = vadd.f32 %v2560, %v2568
        %v2571 = vadd.f32 %v2561, %v2569
        %v2572 = vmul.f32 %v2570, 0.5
        %v2573 = vmul.f32 %v2571, 0.5
        %v2574 = vtanh.pop %v2572
        %v2575 = vtanh.pop %v2573
        %v2576 = vmul.f32 %v2574, 0.5
        %v2577 = vmul.f32 %v2575, 0.5
        %v2578 = vadd.f32 %v2576, 0.5
        %v2579 = vadd.f32 %v2577, 0.5
        %v2580 = vld [vmem:[#allocation2 + $0x170] sm:$0xff]
        %v2581 = vld [vmem:[#allocation2 + $0x178] sm:$0xff]
        %v2582 = vld [vmem:[#allocation2 + $0xd0] sm:$0xff]
        %v2583 = vld [vmem:[#allocation2 + $0xd8] sm:$0xff]
        %v2584 = vlaneseq
        %v2585 = vshrl.u32 %v2584, 7
        %v2586 = vsub.s32 0, %v2585
        %v2587 = vrot.slane %v2578, %v2586
        %v2588 = vmul.f32 %v2582, %v2587
        %v2589 = vmul.f32 %v2583, %v2587
        %v2590 = vadd.f32 %v2580, %v2588
        %v2591 = vadd.f32 %v2581, %v2589
        %v2592 = vld [vmem:[#allocation2 + $0xe0] sm:$0xff]
        %v2593 = vld [vmem:[#allocation2 + $0xe8] sm:$0xff]
        %v2594 = vlaneseq
        %v2595 = vshrl.u32 %v2594, 7
        %v2596 = vsub.s32 1, %v2595
        %v2597 = vrot.slane %v2578, %v2596
        %v2598 = vmul.f32 %v2592, %v2597
        %v2599 = vmul.f32 %v2593, %v2597
        %v2600 = vadd.f32 %v2590, %v2598
        %v2601 = vadd.f32 %v2591, %v2599
        %v2602 = vld [vmem:[#allocation2 + $0xf0] sm:$0xff]
        %v2603 = vld [vmem:[#allocation2 + $0xf8] sm:$0xff]
        %v2604 = vlaneseq
        %v2605 = vshrl.u32 %v2604, 7
        %v2606 = vsub.s32 2, %v2605
        %v2607 = vrot.slane %v2578, %v2606
        %v2608 = vmul.f32 %v2602, %v2607
        %v2609 = vmul.f32 %v2603, %v2607
        %v2610 = vadd.f32 %v2600, %v2608
        %v2611 = vadd.f32 %v2601, %v2609
        %v2612 = vld [vmem:[#allocation2 + $0x100] sm:$0xff]
        %v2613 = vld [vmem:[#allocation2 + $0x108] sm:$0xff]
        %v2614 = vlaneseq
        %v2615 = vshrl.u32 %v2614, 7
        %v2616 = vsub.s32 3, %v2615
        %v2617 = vrot.slane %v2578, %v2616
        %v2618 = vmul.f32 %v2612, %v2617
        %v2619 = vmul.f32 %v2613, %v2617
        %v2620 = vadd.f32 %v2610, %v2618
        %v2621 = vadd.f32 %v2611, %v2619
        %v2622 = vld [vmem:[#allocation2 + $0x110] sm:$0xff]
        %v2623 = vld [vmem:[#allocation2 + $0x118] sm:$0xff]
        %v2624 = vlaneseq
        %v2625 = vshrl.u32 %v2624, 7
        %v2626 = vsub.s32 4, %v2625
        %v2627 = vrot.slane %v2578, %v2626
        %v2628 = vmul.f32 %v2622, %v2627
        %v2629 = vmul.f32 %v2623, %v2627
        %v2630 = vadd.f32 %v2620, %v2628
        %v2631 = vadd.f32 %v2621, %v2629
        %v2632 = vld [vmem:[#allocation2 + $0x120] sm:$0xff]
        %v2633 = vld [vmem:[#allocation2 + $0x128] sm:$0xff]
        %v2634 = vlaneseq
        %v2635 = vshrl.u32 %v2634, 7
        %v2636 = vsub.s32 5, %v2635
        %v2637 = vrot.slane %v2578, %v2636
        %v2638 = vmul.f32 %v2632, %v2637
        %v2639 = vmul.f32 %v2633, %v2637
        %v2640 = vadd.f32 %v2630, %v2638
        %v2641 = vadd.f32 %v2631, %v2639
        %v2642 = vld [vmem:[#allocation2 + $0x130] sm:$0xff]
        %v2643 = vld [vmem:[#allocation2 + $0x138] sm:$0xff]
        %v2644 = vlaneseq
        %v2645 = vshrl.u32 %v2644, 7
        %v2646 = vsub.s32 6, %v2645
        %v2647 = vrot.slane %v2578, %v2646
        %v2648 = vmul.f32 %v2642, %v2647
        %v2649 = vmul.f32 %v2643, %v2647
        %v2650 = vadd.f32 %v2640, %v2648
        %v2651 = vadd.f32 %v2641, %v2649
        %v2652 = vld [vmem:[#allocation2 + $0x140] sm:$0xff]
        %v2653 = vld [vmem:[#allocation2 + $0x148] sm:$0xff]
        %v2654 = vlaneseq
        %v2655 = vshrl.u32 %v2654, 7
        %v2656 = vsub.s32 7, %v2655
        %v2657 = vrot.slane %v2578, %v2656
        %v2658 = vmul.f32 %v2652, %v2657
        %v2659 = vmul.f32 %v2653, %v2657
        %v2660 = vadd.f32 %v2650, %v2658
        %v2661 = vadd.f32 %v2651, %v2659
        %v2662 = vld [vmem:[#allocation2 + $0x150] sm:$0xff]
        %v2663 = vld [vmem:[#allocation2 + $0x158] sm:$0xff]
        %v2664 = vlaneseq
        %v2665 = vshrl.u32 %v2664, 7
        %v2666 = vsub.s32 0, %v2665
        %v2667 = vrot.slane %v2579, %v2666
        %v2668 = vmul.f32 %v2662, %v2667
        %v2669 = vmul.f32 %v2663, %v2667
        %v2670 = vadd.f32 %v2660, %v2668
        %v2671 = vadd.f32 %v2661, %v2669
        %v2672 = vld [vmem:[#allocation2 + $0x160] sm:$0xff]
        %v2673 = vld [vmem:[#allocation2 + $0x168] sm:$0xff]
        %v2674 = vlaneseq
        %v2675 = vshrl.u32 %v2674, 7
        %v2676 = vsub.s32 1, %v2675
        %v2677 = vrot.slane %v2579, %v2676
        %v2678 = vmul.f32 %v2672, %v2677
        %v2679 = vmul.f32 %v2673, %v2677
        %v2680 = vadd.f32 %v2670, %v2678
        %v2681 = vadd.f32 %v2671, %v2679
        %v2682 = vmul.f32 %v2680, 0.5
        %v2683 = vmul.f32 %v2681, 0.5
        %v2684 = vtanh.pop %v2682
        %v2685 = vtanh.pop %v2683
        %v2686 = vmul.f32 %v2684, 0.5
        %v2687 = vmul.f32 %v2685, 0.5
        %v2688 = vadd.f32 %v2686, 0.5
        %v2689 = vadd.f32 %v2687, 0.5
        %v2690 = vld [vmem:[#allocation2 + $0x180] sm:$0xff]
        %v2691 = vld [vmem:[#allocation2 + $0x188] sm:$0xff]
        %v2692 = vmul.f32 %v2690, %v2688
        %v2693 = vmul.f32 %v2691, %v2689
        %v2694 = vadd.f32 %v2692, %v2693
        %v2695 = vrot.slane %v2694, 4
        %v2696 = vadd.f32 %v2694, %v2695
        %v2697 = vrot.slane %v2696, 2
        %v2698 = vadd.f32 %v2696, %v2697
        %v2699 = vrot.slane %v2698, 1
        %v2700 = vadd.f32 %v2698, %v2699
        %v2701 = vadd.f32 %v2700, %v162
        %2702 = vst [vmem:[%s160 + $0x9] sm:$0x1] %v2701
        %v2703 = vld [vmem:[%s154 + $0xa] sm:$0x1]
        %v2704 = vld [vmem:[#allocation2] sm:$0xff]
        %v2705 = vld [vmem:[#allocation2 + $0x8] sm:$0xff]
        %v2706 = vlaneseq
        %v2707 = vshrl.u32 %v2706, 7
        %v2708 = vsub.s32 0, %v2707
        %v2709 = vrot.slane %v2703, %v2708
        %v2710 = vmul.f32 %v2704, %v2709
        %v2711 = vmul.f32 %v2705, %v2709
        %v2712 = vld [vmem:[#allocation2 + $0x10] sm:$0xff]
        %v2713 = vld [vmem:[#allocation2 + $0x18] sm:$0xff]
        %v2714 = vadd.f32 %v2710, %v2712
        %v2715 = vadd.f32 %v2711, %v2713
        %v2716 = vmul.f32 %v2714, 0.5
        %v2717 = vmul.f32 %v2715, 0.5
        %v2718 = vtanh.pop %v2716
        %v2719 = vtanh.pop %v2717
        %v2720 = vmul.f32 %v2718, 0.5
        %v2721 = vmul.f32 %v2719, 0.5
        %v2722 = vadd.f32 %v2720, 0.5
        %v2723 = vadd.f32 %v2721, 0.5
        %v2724 = vld [vmem:[#allocation2 + $0xc0] sm:$0xff]
        %v2725 = vld [vmem:[#allocation2 + $0xc8] sm:$0xff]
        %v2726 = vld [vmem:[#allocation2 + $0x20] sm:$0xff]
        %v2727 = vld [vmem:[#allocation2 + $0x28] sm:$0xff]
        %v2728 = vlaneseq
        %v2729 = vshrl.u32 %v2728, 7
        %v2730 = vsub.s32 0, %v2729
        %v2731 = vrot.slane %v2722, %v2730
        %v2732 = vmul.f32 %v2726, %v2731
        %v2733 = vmul.f32 %v2727, %v2731
        %v2734 = vadd.f32 %v2724, %v2732
        %v2735 = vadd.f32 %v2725, %v2733
        %v2736 = vld [vmem:[#allocation2 + $0x30] sm:$0xff]
        %v2737 = vld [vmem:[#allocation2 + $0x38] sm:$0xff]
        %v2738 = vlaneseq
        %v2739 = vshrl.u32 %v2738, 7
        %v2740 = vsub.s32 1, %v2739
        %v2741 = vrot.slane %v2722, %v2740
        %v2742 = vmul.f32 %v2736, %v2741
        %v2743 = vmul.f32 %v2737, %v2741
        %v2744 = vadd.f32 %v2734, %v2742
        %v2745 = vadd.f32 %v2735, %v2743
        %v2746 = vld [vmem:[#allocation2 + $0x40] sm:$0xff]
        %v2747 = vld [vmem:[#allocation2 + $0x48] sm:$0xff]
        %v2748 = vlaneseq
        %v2749 = vshrl.u32 %v2748, 7
        %v2750 = vsub.s32 2, %v2749
        %v2751 = vrot.slane %v2722, %v2750
        %v2752 = vmul.f32 %v2746, %v2751
        %v2753 = vmul.f32 %v2747, %v2751
        %v2754 = vadd.f32 %v2744, %v2752
        %v2755 = vadd.f32 %v2745, %v2753
        %v2756 = vld [vmem:[#allocation2 + $0x50] sm:$0xff]
        %v2757 = vld [vmem:[#allocation2 + $0x58] sm:$0xff]
        %v2758 = vlaneseq
        %v2759 = vshrl.u32 %v2758, 7
        %v2760 = vsub.s32 3, %v2759
        %v2761 = vrot.slane %v2722, %v2760
        %v2762 = vmul.f32 %v2756, %v2761
        %v2763 = vmul.f32 %v2757, %v2761
        %v2764 = vadd.f32 %v2754, %v2762
        %v2765 = vadd.f32 %v2755, %v2763
        %v2766 = vld [vmem:[#allocation2 + $0x60] sm:$0xff]
        %v2767 = vld [vmem:[#allocation2 + $0x68] sm:$0xff]
        %v2768 = vlaneseq
        %v2769 = vshrl.u32 %v2768, 7
        %v2770 = vsub.s32 4, %v2769
        %v2771 = vrot.slane %v2722, %v2770
        %v2772 = vmul.f32 %v2766, %v2771
        %v2773 = vmul.f32 %v2767, %v2771
        %v2774 = vadd.f32 %v2764, %v2772
        %v2775 = vadd.f32 %v2765, %v2773
        %v2776 = vld [vmem:[#allocation2 + $0x70] sm:$0xff]
        %v2777 = vld [vmem:[#allocation2 + $0x78] sm:$0xff]
        %v2778 = vlaneseq
        %v2779 = vshrl.u32 %v2778, 7
        %v2780 = vsub.s32 5, %v2779
        %v2781 = vrot.slane %v2722, %v2780
        %v2782 = vmul.f32 %v2776, %v2781
        %v2783 = vmul.f32 %v2777, %v2781
        %v2784 = vadd.f32 %v2774, %v2782
        %v2785 = vadd.f32 %v2775, %v2783
        %v2786 = vld [vmem:[#allocation2 + $0x80] sm:$0xff]
        %v2787 = vld [vmem:[#allocation2 + $0x88] sm:$0xff]
        %v2788 = vlaneseq
        %v2789 = vshrl.u32 %v2788, 7
        %v2790 = vsub.s32 6, %v2789
        %v2791 = vrot.slane %v2722, %v2790
        %v2792 = vmul.f32 %v2786, %v2791
        %v2793 = vmul.f32 %v2787, %v2791
        %v2794 = vadd.f32 %v2784, %v2792
        %v2795 = vadd.f32 %v2785, %v2793
        %v2796 = vld [vmem:[#allocation2 + $0x90] sm:$0xff]
        %v2797 = vld [vmem:[#allocation2 + $0x98] sm:$0xff]
        %v2798 = vlaneseq
        %v2799 = vshrl.u32 %v2798, 7
        %v2800 = vsub.s32 7, %v2799
        %v2801 = vrot.slane %v2722, %v2800
        %v2802 = vmul.f32 %v2796, %v2801
        %v2803 = vmul.f32 %v2797, %v2801
        %v2804 = vadd.f32 %v2794, %v2802
        %v2805 = vadd.f32 %v2795, %v2803
        %v2806 = vld [vmem:[#allocation2 + $0xa0] sm:$0xff]
        %v2807 = vld [vmem:[#allocation2 + $0xa8] sm:$0xff]
        %v2808 = vlaneseq
        %v2809 = vshrl.u32 %v2808, 7
        %v2810 = vsub.s32 0, %v2809
        %v2811 = vrot.slane %v2723, %v2810
        %v2812 = vmul.f32 %v2806, %v2811
        %v2813 = vmul.f32 %v2807, %v2811
        %v2814 = vadd.f32 %v2804, %v2812
        %v2815 = vadd.f32 %v2805, %v2813
        %v2816 = vld [vmem:[#allocation2 + $0xb0] sm:$0xff]
        %v2817 = vld [vmem:[#allocation2 + $0xb8] sm:$0xff]
        %v2818 = vlaneseq
        %v2819 = vshrl.u32 %v2818, 7
        %v2820 = vsub.s32 1, %v2819
        %v2821 = vrot.slane %v2723, %v2820
        %v2822 = vmul.f32 %v2816, %v2821
        %v2823 = vmul.f32 %v2817, %v2821
        %v2824 = vadd.f32 %v2814, %v2822
        %v2825 = vadd.f32 %v2815, %v2823
        %v2826 = vmul.f32 %v2824, 0.5
        %v2827 = vmul.f32 %v2825, 0.5
        %v2828 = vtanh.pop %v2826
        %v2829 = vtanh.pop %v2827
        %v2830 = vmul.f32 %v2828, 0.5
        %v2831 = vmul.f32 %v2829, 0.5
        %v2832 = vadd.f32 %v2830, 0.5
        %v2833 = vadd.f32 %v2831, 0.5
        %v2834 = vld [vmem:[#allocation2 + $0x170] sm:$0xff]
        %v2835 = vld [vmem:[#allocation2 + $0x178] sm:$0xff]
        %v2836 = vld [vmem:[#allocation2 + $0xd0] sm:$0xff]
        %v2837 = vld [vmem:[#allocation2 + $0xd8] sm:$0xff]
        %v2838 = vlaneseq
        %v2839 = vshrl.u32 %v2838, 7
        %v2840 = vsub.s32 0, %v2839
        %v2841 = vrot.slane %v2832, %v2840
        %v2842 = vmul.f32 %v2836, %v2841
        %v2843 = vmul.f32 %v2837, %v2841
        %v2844 = vadd.f32 %v2834, %v2842
        %v2845 = vadd.f32 %v2835, %v2843
        %v2846 = vld [vmem:[#allocation2 + $0xe0] sm:$0xff]
        %v2847 = vld [vmem:[#allocation2 + $0xe8] sm:$0xff]
        %v2848 = vlaneseq
        %v2849 = vshrl.u32 %v2848, 7
        %v2850 = vsub.s32 1, %v2849
        %v2851 = vrot.slane %v2832, %v2850
        %v2852 = vmul.f32 %v2846, %v2851
        %v2853 = vmul.f32 %v2847, %v2851
        %v2854 = vadd.f32 %v2844, %v2852
        %v2855 = vadd.f32 %v2845, %v2853
        %v2856 = vld [vmem:[#allocation2 + $0xf0] sm:$0xff]
        %v2857 = vld [vmem:[#allocation2 + $0xf8] sm:$0xff]
        %v2858 = vlaneseq
        %v2859 = vshrl.u32 %v2858, 7
        %v2860 = vsub.s32 2, %v2859
        %v2861 = vrot.slane %v2832, %v2860
        %v2862 = vmul.f32 %v2856, %v2861
        %v2863 = vmul.f32 %v2857, %v2861
        %v2864 = vadd.f32 %v2854, %v2862
        %v2865 = vadd.f32 %v2855, %v2863
        %v2866 = vld [vmem:[#allocation2 + $0x100] sm:$0xff]
        %v2867 = vld [vmem:[#allocation2 + $0x108] sm:$0xff]
        %v2868 = vlaneseq
        %v2869 = vshrl.u32 %v2868, 7
        %v2870 = vsub.s32 3, %v2869
        %v2871 = vrot.slane %v2832, %v2870
        %v2872 = vmul.f32 %v2866, %v2871
        %v2873 = vmul.f32 %v2867, %v2871
        %v2874 = vadd.f32 %v2864, %v2872
        %v2875 = vadd.f32 %v2865, %v2873
        %v2876 = vld [vmem:[#allocation2 + $0x110] sm:$0xff]
        %v2877 = vld [vmem:[#allocation2 + $0x118] sm:$0xff]
        %v2878 = vlaneseq
        %v2879 = vshrl.u32 %v2878, 7
        %v2880 = vsub.s32 4, %v2879
        %v2881 = vrot.slane %v2832, %v2880
        %v2882 = vmul.f32 %v2876, %v2881
        %v2883 = vmul.f32 %v2877, %v2881
        %v2884 = vadd.f32 %v2874, %v2882
        %v2885 = vadd.f32 %v2875, %v2883
        %v2886 = vld [vmem:[#allocation2 + $0x120] sm:$0xff]
        %v2887 = vld [vmem:[#allocation2 + $0x128] sm:$0xff]
        %v2888 = vlaneseq
        %v2889 = vshrl.u32 %v2888, 7
        %v2890 = vsub.s32 5, %v2889
        %v2891 = vrot.slane %v2832, %v2890
        %v2892 = vmul.f32 %v2886, %v2891
        %v2893 = vmul.f32 %v2887, %v2891
        %v2894 = vadd.f32 %v2884, %v2892
        %v2895 = vadd.f32 %v2885, %v2893
        %v2896 = vld [vmem:[#allocation2 + $0x130] sm:$0xff]
        %v2897 = vld [vmem:[#allocation2 + $0x138] sm:$0xff]
        %v2898 = vlaneseq
        %v2899 = vshrl.u32 %v2898, 7
        %v2900 = vsub.s32 6, %v2899
        %v2901 = vrot.slane %v2832, %v2900
        %v2902 = vmul.f32 %v2896, %v2901
        %v2903 = vmul.f32 %v2897, %v2901
        %v2904 = vadd.f32 %v2894, %v2902
        %v2905 = vadd.f32 %v2895, %v2903
        %v2906 = vld [vmem:[#allocation2 + $0x140] sm:$0xff]
        %v2907 = vld [vmem:[#allocation2 + $0x148] sm:$0xff]
        %v2908 = vlaneseq
        %v2909 = vshrl.u32 %v2908, 7
        %v2910 = vsub.s32 7, %v2909
        %v2911 = vrot.slane %v2832, %v2910
        %v2912 = vmul.f32 %v2906, %v2911
        %v2913 = vmul.f32 %v2907, %v2911
        %v2914 = vadd.f32 %v2904, %v2912
        %v2915 = vadd.f32 %v2905, %v2913
        %v2916 = vld [vmem:[#allocation2 + $0x150] sm:$0xff]
        %v2917 = vld [vmem:[#allocation2 + $0x158] sm:$0xff]
        %v2918 = vlaneseq
        %v2919 = vshrl.u32 %v2918, 7
        %v2920 = vsub.s32 0, %v2919
        %v2921 = vrot.slane %v2833, %v2920
        %v2922 = vmul.f32 %v2916, %v2921
        %v2923 = vmul.f32 %v2917, %v2921
        %v2924 = vadd.f32 %v2914, %v2922
        %v2925 = vadd.f32 %v2915, %v2923
        %v2926 = vld [vmem:[#allocation2 + $0x160] sm:$0xff]
        %v2927 = vld [vmem:[#allocation2 + $0x168] sm:$0xff]
        %v2928 = vlaneseq
        %v2929 = vshrl.u32 %v2928, 7
        %v2930 = vsub.s32 1, %v2929
        %v2931 = vrot.slane %v2833, %v2930
        %v2932 = vmul.f32 %v2926, %v2931
        %v2933 = vmul.f32 %v2927, %v2931
        %v2934 = vadd.f32 %v2924, %v2932
        %v2935 = vadd.f32 %v2925, %v2933
        %v2936 = vmul.f32 %v2934, 0.5
        %v2937 = vmul.f32 %v2935, 0.5
        %v2938 = vtanh.pop %v2936
        %v2939 = vtanh.pop %v2937
        %v2940 = vmul.f32 %v2938, 0.5
        %v2941 = vmul.f32 %v2939, 0.5
        %v2942 = vadd.f32 %v2940, 0.5
        %v2943 = vadd.f32 %v2941, 0.5
        %v2944 = vld [vmem:[#allocation2 + $0x180] sm:$0xff]
        %v2945 = vld [vmem:[#allocation2 + $0x188] sm:$0xff]
        %v2946 = vmul.f32 %v2944, %v2942
        %v2947 = vmul.f32 %v2945, %v2943
        %v2948 = vadd.f32 %v2946, %v2947
        %v2949 = vrot.slane %v2948, 4
        %v2950 = vadd.f32 %v2948, %v2949
        %v2951 = vrot.slane %v2950, 2
        %v2952 = vadd.f32 %v2950, %v2951
        %v2953 = vrot.slane %v2952, 1
        %v2954 = vadd.f32 %v2952, %v2953
        %v2955 = vadd.f32 %v2954, %v162
        %2956 = vst [vmem:[%s160 + $0xa] sm:$0x1] %v2955
        %v2957 = vld [vmem:[%s154 + $0xb] sm:$0x1]
        %v2958 = vld [vmem:[#allocation2] sm:$0xff]
        %v2959 = vld [vmem:[#allocation2 + $0x8] sm:$0xff]
        %v2960 = vlaneseq
        %v2961 = vshrl.u32 %v2960, 7
        %v2962 = vsub.s32 0, %v2961
        %v2963 = vrot.slane %v2957, %v2962
        %v2964 = vmul.f32 %v2958, %v2963
        %v2965 = vmul.f32 %v2959, %v2963
        %v2966 = vld [vmem:[#allocation2 + $0x10] sm:$0xff]
        %v2967 = vld [vmem:[#allocation2 + $0x18] sm:$0xff]
        %v2968 = vadd.f32 %v2964, %v2966
        %v2969 = vadd.f32 %v2965, %v2967
        %v2970 = vmul.f32 %v2968, 0.5
        %v2971 = vmul.f32 %v2969, 0.5
        %v2972 = vtanh.pop %v2970
        %v2973 = vtanh.pop %v2971
        %v2974 = vmul.f32 %v2972, 0.5
        %v2975 = vmul.f32 %v2973, 0.5
        %v2976 = vadd.f32 %v2974, 0.5
        %v2977 = vadd.f32 %v2975, 0.5
        %v2978 = vld [vmem:[#allocation2 + $0xc0] sm:$0xff]
        %v2979 = vld [vmem:[#allocation2 + $0xc8] sm:$0xff]
        %v2980 = vld [vmem:[#allocation2 + $0x20] sm:$0xff]
        %v2981 = vld [vmem:[#allocation2 + $0x28] sm:$0xff]
        %v2982 = vlaneseq
        %v2983 = vshrl.u32 %v2982, 7
        %v2984 = vsub.s32 0, %v2983
        %v2985 = vrot.slane %v2976, %v2984
        %v2986 = vmul.f32 %v2980, %v2985
        %v2987 = vmul.f32 %v2981, %v2985
        %v2988 = vadd.f32 %v2978, %v2986
        %v2989 = vadd.f32 %v2979, %v2987
        %v2990 = vld [vmem:[#allocation2 + $0x30] sm:$0xff]
        %v2991 = vld [vmem:[#allocation2 + $0x38] sm:$0xff]
        %v2992 = vlaneseq
        %v2993 = vshrl.u32 %v2992, 7
        %v2994 = vsub.s32 1, %v2993
        %v2995 = vrot.slane %v2976, %v2994
        %v2996 = vmul.f32 %v2990, %v2995
        %v2997 = vmul.f32 %v2991, %v2995
        %v2998 = vadd.f32 %v2988, %v2996
        %v2999 = vadd.f32 %v2989, %v2997
        %v3000 = vld [vmem:[#allocation2 + $0x40] sm:$0xff]
        %v3001 = vld [vmem:[#allocation2 + $0x48] sm:$0xff]
        %v3002 = vlaneseq
        %v3003 = vshrl.u32 %v3002, 7
        %v3004 = vsub.s32 2, %v3003
        %v3005 = vrot.slane %v2976, %v3004
        %v3006 = vmul.f32 %v3000, %v3005
        %v3007 = vmul.f32 %v3001, %v3005
        %v3008 = vadd.f32 %v2998, %v3006
        %v3009 = vadd.f32 %v2999, %v3007
        %v3010 = vld [vmem:[#allocation2 + $0x50] sm:$0xff]
        %v3011 = vld [vmem:[#allocation2 + $0x58] sm:$0xff]
        %v3012 = vlaneseq
        %v3013 = vshrl.u32 %v3012, 7
        %v3014 = vsub.s32 3, %v3013
        %v3015 = vrot.slane %v2976, %v3014
        %v3016 = vmul.f32 %v3010, %v3015
        %v3017 = vmul.f32 %v3011, %v3015
        %v3018 = vadd.f32 %v3008, %v3016
        %v3019 = vadd.f32 %v3009, %v3017
        %v3020 = vld [vmem:[#allocation2 + $0x60] sm:$0xff]
        %v3021 = vld [vmem:[#allocation2 + $0x68] sm:$0xff]
        %v3022 = vlaneseq
        %v3023 = vshrl.u32 %v3022, 7
        %v3024 = vsub.s32 4, %v3023
        %v3025 = vrot.slane %v2976, %v3024
        %v3026 = vmul.f32 %v3020, %v3025
        %v3027 = vmul.f32 %v3021, %v3025
        %v3028 = vadd.f32 %v3018, %v3026
        %v3029 = vadd.f32 %v3019, %v3027
        %v3030 = vld [vmem:[#allocation2 + $0x70] sm:$0xff]
        %v3031 = vld [vmem:[#allocation2 + $0x78] sm:$0xff]
        %v3032 = vlaneseq
        %v3033 = vshrl.u32 %v3032, 7
        %v3034 = vsub.s32 5, %v3033
        %v3035 = vrot.slane %v2976, %v3034
        %v3036 = vmul.f32 %v3030, %v3035
        %v3037 = vmul.f32 %v3031, %v3035
        %v3038 = vadd.f32 %v3028, %v3036
        %v3039 = vadd.f32 %v3029, %v3037
        %v3040 = vld [vmem:[#allocation2 + $0x80] sm:$0xff]
        %v3041 = vld [vmem:[#allocation2 + $0x88] sm:$0xff]
        %v3042 = vlaneseq
        %v3043 = vshrl.u32 %v3042, 7
        %v3044 = vsub.s32 6, %v3043
        %v3045 = vrot.slane %v2976, %v3044
        %v3046 = vmul.f32 %v3040, %v3045
        %v3047 = vmul.f32 %v3041, %v3045
        %v3048 = vadd.f32 %v3038, %v3046
        %v3049 = vadd.f32 %v3039, %v3047
        %v3050 = vld [vmem:[#allocation2 + $0x90] sm:$0xff]
        %v3051 = vld [vmem:[#allocation2 + $0x98] sm:$0xff]
        %v3052 = vlaneseq
        %v3053 = vshrl.u32 %v3052, 7
        %v3054 = vsub.s32 7, %v3053
        %v3055 = vrot.slane %v2976, %v3054
        %v3056 = vmul.f32 %v3050, %v3055
        %v3057 = vmul.f32 %v3051, %v3055
        %v3058 = vadd.f32 %v3048, %v3056
        %v3059 = vadd.f32 %v3049, %v3057
        %v3060 = vld [vmem:[#allocation2 + $0xa0] sm:$0xff]
        %v3061 = vld [vmem:[#allocation2 + $0xa8] sm:$0xff]
        %v3062 = vlaneseq
        %v3063 = vshrl.u32 %v3062, 7
        %v3064 = vsub.s32 0, %v3063
        %v3065 = vrot.slane %v2977, %v3064
        %v3066 = vmul.f32 %v3060, %v3065
        %v3067 = vmul.f32 %v3061, %v3065
        %v3068 = vadd.f32 %v3058, %v3066
        %v3069 = vadd.f32 %v3059, %v3067
        %v3070 = vld [vmem:[#allocation2 + $0xb0] sm:$0xff]
        %v3071 = vld [vmem:[#allocation2 + $0xb8] sm:$0xff]
        %v3072 = vlaneseq
        %v3073 = vshrl.u32 %v3072, 7
        %v3074 = vsub.s32 1, %v3073
        %v3075 = vrot.slane %v2977, %v3074
        %v3076 = vmul.f32 %v3070, %v3075
        %v3077 = vmul.f32 %v3071, %v3075
        %v3078 = vadd.f32 %v3068, %v3076
        %v3079 = vadd.f32 %v3069, %v3077
        %v3080 = vmul.f32 %v3078, 0.5
        %v3081 = vmul.f32 %v3079, 0.5
        %v3082 = vtanh.pop %v3080
        %v3083 = vtanh.pop %v3081
        %v3084 = vmul.f32 %v3082, 0.5
        %v3085 = vmul.f32 %v3083, 0.5
        %v3086 = vadd.f32 %v3084, 0.5
        %v3087 = vadd.f32 %v3085, 0.5
        %v3088 = vld [vmem:[#allocation2 + $0x170] sm:$0xff]
        %v3089 = vld [vmem:[#allocation2 + $0x178] sm:$0xff]
        %v3090 = vld [vmem:[#allocation2 + $0xd0] sm:$0xff]
        %v3091 = vld [vmem:[#allocation2 + $0xd8] sm:$0xff]
        %v3092 = vlaneseq
        %v3093 = vshrl.u32 %v3092, 7
        %v3094 = vsub.s32 0, %v3093
        %v3095 = vrot.slane %v3086, %v3094
        %v3096 = vmul.f32 %v3090, %v3095
        %v3097 = vmul.f32 %v3091, %v3095
        %v3098 = vadd.f32 %v3088, %v3096
        %v3099 = vadd.f32 %v3089, %v3097
        %v3100 = vld [vmem:[#allocation2 + $0xe0] sm:$0xff]
        %v3101 = vld [vmem:[#allocation2 + $0xe8] sm:$0xff]
        %v3102 = vlaneseq
        %v3103 = vshrl.u32 %v3102, 7
        %v3104 = vsub.s32 1, %v3103
        %v3105 = vrot.slane %v3086, %v3104
        %v3106 = vmul.f32 %v3100, %v3105
        %v3107 = vmul.f32 %v3101, %v3105
        %v3108 = vadd.f32 %v3098, %v3106
        %v3109 = vadd.f32 %v3099, %v3107
        %v3110 = vld [vmem:[#allocation2 + $0xf0] sm:$0xff]
        %v3111 = vld [vmem:[#allocation2 + $0xf8] sm:$0xff]
        %v3112 = vlaneseq
        %v3113 = vshrl.u32 %v3112, 7
        %v3114 = vsub.s32 2, %v3113
        %v3115 = vrot.slane %v3086, %v3114
        %v3116 = vmul.f32 %v3110, %v3115
        %v3117 = vmul.f32 %v3111, %v3115
        %v3118 = vadd.f32 %v3108, %v3116
        %v3119 = vadd.f32 %v3109, %v3117
        %v3120 = vld [vmem:[#allocation2 + $0x100] sm:$0xff]
        %v3121 = vld [vmem:[#allocation2 + $0x108] sm:$0xff]
        %v3122 = vlaneseq
        %v3123 = vshrl.u32 %v3122, 7
        %v3124 = vsub.s32 3, %v3123
        %v3125 = vrot.slane %v3086, %v3124
        %v3126 = vmul.f32 %v3120, %v3125
        %v3127 = vmul.f32 %v3121, %v3125
        %v3128 = vadd.f32 %v3118, %v3126
        %v3129 = vadd.f32 %v3119, %v3127
        %v3130 = vld [vmem:[#allocation2 + $0x110] sm:$0xff]
        %v3131 = vld [vmem:[#allocation2 + $0x118] sm:$0xff]
        %v3132 = vlaneseq
        %v3133 = vshrl.u32 %v3132, 7
        %v3134 = vsub.s32 4, %v3133
        %v3135 = vrot.slane %v3086, %v3134
        %v3136 = vmul.f32 %v3130, %v3135
        %v3137 = vmul.f32 %v3131, %v3135
        %v3138 = vadd.f32 %v3128, %v3136
        %v3139 = vadd.f32 %v3129, %v3137
        %v3140 = vld [vmem:[#allocation2 + $0x120] sm:$0xff]
        %v3141 = vld [vmem:[#allocation2 + $0x128] sm:$0xff]
        %v3142 = vlaneseq
        %v3143 = vshrl.u32 %v3142, 7
        %v3144 = vsub.s32 5, %v3143
        %v3145 = vrot.slane %v3086, %v3144
        %v3146 = vmul.f32 %v3140, %v3145
        %v3147 = vmul.f32 %v3141, %v3145
        %v3148 = vadd.f32 %v3138, %v3146
        %v3149 = vadd.f32 %v3139, %v3147
        %v3150 = vld [vmem:[#allocation2 + $0x130] sm:$0xff]
        %v3151 = vld [vmem:[#allocation2 + $0x138] sm:$0xff]
        %v3152 = vlaneseq
        %v3153 = vshrl.u32 %v3152, 7
        %v3154 = vsub.s32 6, %v3153
        %v3155 = vrot.slane %v3086, %v3154
        %v3156 = vmul.f32 %v3150, %v3155
        %v3157 = vmul.f32 %v3151, %v3155
        %v3158 = vadd.f32 %v3148, %v3156
        %v3159 = vadd.f32 %v3149, %v3157
        %v3160 = vld [vmem:[#allocation2 + $0x140] sm:$0xff]
        %v3161 = vld [vmem:[#allocation2 + $0x148] sm:$0xff]
        %v3162 = vlaneseq
        %v3163 = vshrl.u32 %v3162, 7
        %v3164 = vsub.s32 7, %v3163
        %v3165 = vrot.slane %v3086, %v3164
        %v3166 = vmul.f32 %v3160, %v3165
        %v3167 = vmul.f32 %v3161, %v3165
        %v3168 = vadd.f32 %v3158, %v3166
        %v3169 = vadd.f32 %v3159, %v3167
        %v3170 = vld [vmem:[#allocation2 + $0x150] sm:$0xff]
        %v3171 = vld [vmem:[#allocation2 + $0x158] sm:$0xff]
        %v3172 = vlaneseq
        %v3173 = vshrl.u32 %v3172, 7
        %v3174 = vsub.s32 0, %v3173
        %v3175 = vrot.slane %v3087, %v3174
        %v3176 = vmul.f32 %v3170, %v3175
        %v3177 = vmul.f32 %v3171, %v3175
        %v3178 = vadd.f32 %v3168, %v3176
        %v3179 = vadd.f32 %v3169, %v3177
        %v3180 = vld [vmem:[#allocation2 + $0x160] sm:$0xff]
        %v3181 = vld [vmem:[#allocation2 + $0x168] sm:$0xff]
        %v3182 = vlaneseq
        %v3183 = vshrl.u32 %v3182, 7
        %v3184 = vsub.s32 1, %v3183
        %v3185 = vrot.slane %v3087, %v3184
        %v3186 = vmul.f32 %v3180, %v3185
        %v3187 = vmul.f32 %v3181, %v3185
        %v3188 = vadd.f32 %v3178, %v3186
        %v3189 = vadd.f32 %v3179, %v3187
        %v3190 = vmul.f32 %v3188, 0.5
        %v3191 = vmul.f32 %v3189, 0.5
        %v3192 = vtanh.pop %v3190
        %v3193 = vtanh.pop %v3191
        %v3194 = vmul.f32 %v3192, 0.5
        %v3195 = vmul.f32 %v3193, 0.5
        %v3196 = vadd.f32 %v3194, 0.5
        %v3197 = vadd.f32 %v3195, 0.5
        %v3198 = vld [vmem:[#allocation2 + $0x180] sm:$0xff]
        %v3199 = vld [vmem:[#allocation2 + $0x188] sm:$0xff]
        %v3200 = vmul.f32 %v3198, %v3196
        %v3201 = vmul.f32 %v3199, %v3197
        %v3202 = vadd.f32 %v3200, %v3201
        %v3203 = vrot.slane %v3202, 4
        %v3204 = vadd.f32 %v3202, %v3203
        %v3205 = vrot.slane %v3204, 2
        %v3206 = vadd.f32 %v3204, %v3205
        %v3207 = vrot.slane %v3206, 1
        %v3208 = vadd.f32 %v3206, %v3207
        %v3209 = vadd.f32 %v3208, %v162
        %3210 = vst [vmem:[%s160 + $0xb] sm:$0x1] %v3209
        %v3211 = vld [vmem:[%s154 + $0xc] sm:$0x1]
        %v3212 = vld [vmem:[#allocation2] sm:$0xff]
        %v3213 = vld [vmem:[#allocation2 + $0x8] sm:$0xff]
        %v3214 = vlaneseq
        %v3215 = vshrl.u32 %v3214, 7
        %v3216 = vsub.s32 0, %v3215
        %v3217 = vrot.slane %v3211, %v3216
        %v3218 = vmul.f32 %v3212, %v3217
        %v3219 = vmul.f32 %v3213, %v3217
        %v3220 = vld [vmem:[#allocation2 + $0x10] sm:$0xff]
        %v3221 = vld [vmem:[#allocation2 + $0x18] sm:$0xff]
        %v3222 = vadd.f32 %v3218, %v3220
        %v3223 = vadd.f32 %v3219, %v3221
        %v3224 = vmul.f32 %v3222, 0.5
        %v3225 = vmul.f32 %v3223, 0.5
        %v3226 = vtanh.pop %v3224
        %v3227 = vtanh.pop %v3225
        %v3228 = vmul.f32 %v3226, 0.5
        %v3229 = vmul.f32 %v3227, 0.5
        %v3230 = vadd.f32 %v3228, 0.5
        %v3231 = vadd.f32 %v3229, 0.5
        %v3232 = vld [vmem:[#allocation2 + $0xc0] sm:$0xff]
        %v3233 = vld [vmem:[#allocation2 + $0xc8] sm:$0xff]
        %v3234 = vld [vmem:[#allocation2 + $0x20] sm:$0xff]
        %v3235 = vld [vmem:[#allocation2 + $0x28] sm:$0xff]
        %v3236 = vlaneseq
        %v3237 = vshrl.u32 %v3236, 7
        %v3238 = vsub.s32 0, %v3237
        %v3239 = vrot.slane %v3230, %v3238
        %v3240 = vmul.f32 %v3234, %v3239
        %v3241 = vmul.f32 %v3235, %v3239
        %v3242 = vadd.f32 %v3232, %v3240
        %v3243 = vadd.f32 %v3233, %v3241
        %v3244 = vld [vmem:[#allocation2 + $0x30] sm:$0xff]
        %v3245 = vld [vmem:[#allocation2 + $0x38] sm:$0xff]
        %v3246 = vlaneseq
        %v3247 = vshrl.u32 %v3246, 7
        %v3248 = vsub.s32 1, %v3247
        %v3249 = vrot.slane %v3230, %v3248
        %v3250 = vmul.f32 %v3244, %v3249
        %v3251 = vmul.f32 %v3245, %v3249
        %v3252 = vadd.f32 %v3242, %v3250
        %v3253 = vadd.f32 %v3243, %v3251
        %v3254 = vld [vmem:[#allocation2 + $0x40] sm:$0xff]
        %v3255 = vld [vmem:[#allocation2 + $0x48] sm:$0xff]
        %v3256 = vlaneseq
        %v3257 = vshrl.u32 %v3256, 7
        %v3258 = vsub.s32 2, %v3257
        %v3259 = vrot.slane %v3230, %v3258
        %v3260 = vmul.f32 %v3254, %v3259
        %v3261 = vmul.f32 %v3255, %v3259
        %v3262 = vadd.f32 %v3252, %v3260
        %v3263 = vadd.f32 %v3253, %v3261
        %v3264 = vld [vmem:[#allocation2 + $0x50] sm:$0xff]
        %v3265 = vld [vmem:[#allocation2 + $0x58] sm:$0xff]
        %v3266 = vlaneseq
        %v3267 = vshrl.u32 %v3266, 7
        %v3268 = vsub.s32 3, %v3267
        %v3269 = vrot.slane %v3230, %v3268
        %v3270 = vmul.f32 %v3264, %v3269
        %v3271 = vmul.f32 %v3265, %v3269
        %v3272 = vadd.f32 %v3262, %v3270
        %v3273 = vadd.f32 %v3263, %v3271
        %v3274 = vld [vmem:[#allocation2 + $0x60] sm:$0xff]
        %v3275 = vld [vmem:[#allocation2 + $0x68] sm:$0xff]
        %v3276 = vlaneseq
        %v3277 = vshrl.u32 %v3276, 7
        %v3278 = vsub.s32 4, %v3277
        %v3279 = vrot.slane %v3230, %v3278
        %v3280 = vmul.f32 %v3274, %v3279
        %v3281 = vmul.f32 %v3275, %v3279
        %v3282 = vadd.f32 %v3272, %v3280
        %v3283 = vadd.f32 %v3273, %v3281
        %v3284 = vld [vmem:[#allocation2 + $0x70] sm:$0xff]
        %v3285 = vld [vmem:[#allocation2 + $0x78] sm:$0xff]
        %v3286 = vlaneseq
        %v3287 = vshrl.u32 %v3286, 7
        %v3288 = vsub.s32 5, %v3287
        %v3289 = vrot.slane %v3230, %v3288
        %v3290 = vmul.f32 %v3284, %v3289
        %v3291 = vmul.f32 %v3285, %v3289
        %v3292 = vadd.f32 %v3282, %v3290
        %v3293 = vadd.f32 %v3283, %v3291
        %v3294 = vld [vmem:[#allocation2 + $0x80] sm:$0xff]
        %v3295 = vld [vmem:[#allocation2 + $0x88] sm:$0xff]
        %v3296 = vlaneseq
        %v3297 = vshrl.u32 %v3296, 7
        %v3298 = vsub.s32 6, %v3297
        %v3299 = vrot.slane %v3230, %v3298
        %v3300 = vmul.f32 %v3294, %v3299
        %v3301 = vmul.f32 %v3295, %v3299
        %v3302 = vadd.f32 %v3292, %v3300
        %v3303 = vadd.f32 %v3293, %v3301
        %v3304 = vld [vmem:[#allocation2 + $0x90] sm:$0xff]
        %v3305 = vld [vmem:[#allocation2 + $0x98] sm:$0xff]
        %v3306 = vlaneseq
        %v3307 = vshrl.u32 %v3306, 7
        %v3308 = vsub.s32 7, %v3307
        %v3309 = vrot.slane %v3230, %v3308
        %v3310 = vmul.f32 %v3304, %v3309
        %v3311 = vmul.f32 %v3305, %v3309
        %v3312 = vadd.f32 %v3302, %v3310
        %v3313 = vadd.f32 %v3303, %v3311
        %v3314 = vld [vmem:[#allocation2 + $0xa0] sm:$0xff]
        %v3315 = vld [vmem:[#allocation2 + $0xa8] sm:$0xff]
        %v3316 = vlaneseq
        %v3317 = vshrl.u32 %v3316, 7
        %v3318 = vsub.s32 0, %v3317
        %v3319 = vrot.slane %v3231, %v3318
        %v3320 = vmul.f32 %v3314, %v3319
        %v3321 = vmul.f32 %v3315, %v3319
        %v3322 = vadd.f32 %v3312, %v3320
        %v3323 = vadd.f32 %v3313, %v3321
        %v3324 = vld [vmem:[#allocation2 + $0xb0] sm:$0xff]
        %v3325 = vld [vmem:[#allocation2 + $0xb8] sm:$0xff]
        %v3326 = vlaneseq
        %v3327 = vshrl.u32 %v3326, 7
        %v3328 = vsub.s32 1, %v3327
        %v3329 = vrot.slane %v3231, %v3328
        %v3330 = vmul.f32 %v3324, %v3329
        %v3331 = vmul.f32 %v3325, %v3329
        %v3332 = vadd.f32 %v3322, %v3330
        %v3333 = vadd.f32 %v3323, %v3331
        %v3334 = vmul.f32 %v3332, 0.5
        %v3335 = vmul.f32 %v3333, 0.5
        %v3336 = vtanh.pop %v3334
        %v3337 = vtanh.pop %v3335
        %v3338 = vmul.f32 %v3336, 0.5
        %v3339 = vmul.f32 %v3337, 0.5
        %v3340 = vadd.f32 %v3338, 0.5
        %v3341 = vadd.f32 %v3339, 0.5
        %v3342 = vld [vmem:[#allocation2 + $0x170] sm:$0xff]
        %v3343 = vld [vmem:[#allocation2 + $0x178] sm:$0xff]
        %v3344 = vld [vmem:[#allocation2 + $0xd0] sm:$0xff]
        %v3345 = vld [vmem:[#allocation2 + $0xd8] sm:$0xff]
        %v3346 = vlaneseq
        %v3347 = vshrl.u32 %v3346, 7
        %v3348 = vsub.s32 0, %v3347
        %v3349 = vrot.slane %v3340, %v3348
        %v3350 = vmul.f32 %v3344, %v3349
        %v3351 = vmul.f32 %v3345, %v3349
        %v3352 = vadd.f32 %v3342, %v3350
        %v3353 = vadd.f32 %v3343, %v3351
        %v3354 = vld [vmem:[#allocation2 + $0xe0] sm:$0xff]
        %v3355 = vld [vmem:[#allocation2 + $0xe8] sm:$0xff]
        %v3356 = vlaneseq
        %v3357 = vshrl.u32 %v3356, 7
        %v3358 = vsub.s32 1, %v3357
        %v3359 = vrot.slane %v3340, %v3358
        %v3360 = vmul.f32 %v3354, %v3359
        %v3361 = vmul.f32 %v3355, %v3359
        %v3362 = vadd.f32 %v3352, %v3360
        %v3363 = vadd.f32 %v3353, %v3361
        %v3364 = vld [vmem:[#allocation2 + $0xf0] sm:$0xff]
        %v3365 = vld [vmem:[#allocation2 + $0xf8] sm:$0xff]
        %v3366 = vlaneseq
        %v3367 = vshrl.u32 %v3366, 7
        %v3368 = vsub.s32 2, %v3367
        %v3369 = vrot.slane %v3340, %v3368
        %v3370 = vmul.f32 %v3364, %v3369
        %v3371 = vmul.f32 %v3365, %v3369
        %v3372 = vadd.f32 %v3362, %v3370
        %v3373 = vadd.f32 %v3363, %v3371
        %v3374 = vld [vmem:[#allocation2 + $0x100] sm:$0xff]
        %v3375 = vld [vmem:[#allocation2 + $0x108] sm:$0xff]
        %v3376 = vlaneseq
        %v3377 = vshrl.u32 %v3376, 7
        %v3378 = vsub.s32 3, %v3377
        %v3379 = vrot.slane %v3340, %v3378
        %v3380 = vmul.f32 %v3374, %v3379
        %v3381 = vmul.f32 %v3375, %v3379
        %v3382 = vadd.f32 %v3372, %v3380
        %v3383 = vadd.f32 %v3373, %v3381
        %v3384 = vld [vmem:[#allocation2 + $0x110] sm:$0xff]
        %v3385 = vld [vmem:[#allocation2 + $0x118] sm:$0xff]
        %v3386 = vlaneseq
        %v3387 = vshrl.u32 %v3386, 7
        %v3388 = vsub.s32 4, %v3387
        %v3389 = vrot.slane %v3340, %v3388
        %v3390 = vmul.f32 %v3384, %v3389
        %v3391 = vmul.f32 %v3385, %v3389
        %v3392 = vadd.f32 %v3382, %v3390
        %v3393 = vadd.f32 %v3383, %v3391
        %v3394 = vld [vmem:[#allocation2 + $0x120] sm:$0xff]
        %v3395 = vld [vmem:[#allocation2 + $0x128] sm:$0xff]
        %v3396 = vlaneseq
        %v3397 = vshrl.u32 %v3396, 7
        %v3398 = vsub.s32 5, %v3397
        %v3399 = vrot.slane %v3340, %v3398
        %v3400 = vmul.f32 %v3394, %v3399
        %v3401 = vmul.f32 %v3395, %v3399
        %v3402 = vadd.f32 %v3392, %v3400
        %v3403 = vadd.f32 %v3393, %v3401
        %v3404 = vld [vmem:[#allocation2 + $0x130] sm:$0xff]
        %v3405 = vld [vmem:[#allocation2 + $0x138] sm:$0xff]
        %v3406 = vlaneseq
        %v3407 = vshrl.u32 %v3406, 7
        %v3408 = vsub.s32 6, %v3407
        %v3409 = vrot.slane %v3340, %v3408
        %v3410 = vmul.f32 %v3404, %v3409
        %v3411 = vmul.f32 %v3405, %v3409
        %v3412 = vadd.f32 %v3402, %v3410
        %v3413 = vadd.f32 %v3403, %v3411
        %v3414 = vld [vmem:[#allocation2 + $0x140] sm:$0xff]
        %v3415 = vld [vmem:[#allocation2 + $0x148] sm:$0xff]
        %v3416 = vlaneseq
        %v3417 = vshrl.u32 %v3416, 7
        %v3418 = vsub.s32 7, %v3417
        %v3419 = vrot.slane %v3340, %v3418
        %v3420 = vmul.f32 %v3414, %v3419
        %v3421 = vmul.f32 %v3415, %v3419
        %v3422 = vadd.f32 %v3412, %v3420
        %v3423 = vadd.f32 %v3413, %v3421
        %v3424 = vld [vmem:[#allocation2 + $0x150] sm:$0xff]
        %v3425 = vld [vmem:[#allocation2 + $0x158] sm:$0xff]
        %v3426 = vlaneseq
        %v3427 = vshrl.u32 %v3426, 7
        %v3428 = vsub.s32 0, %v3427
        %v3429 = vrot.slane %v3341, %v3428
        %v3430 = vmul.f32 %v3424, %v3429
        %v3431 = vmul.f32 %v3425, %v3429
        %v3432 = vadd.f32 %v3422, %v3430
        %v3433 = vadd.f32 %v3423, %v3431
        %v3434 = vld [vmem:[#allocation2 + $0x160] sm:$0xff]
        %v3435 = vld [vmem:[#allocation2 + $0x168] sm:$0xff]
        %v3436 = vlaneseq
        %v3437 = vshrl.u32 %v3436, 7
        %v3438 = vsub.s32 1, %v3437
        %v3439 = vrot.slane %v3341, %v3438
        %v3440 = vmul.f32 %v3434, %v3439
        %v3441 = vmul.f32 %v3435, %v3439
        %v3442 = vadd.f32 %v3432, %v3440
        %v3443 = vadd.f32 %v3433, %v3441
        %v3444 = vmul.f32 %v3442, 0.5
        %v3445 = vmul.f32 %v3443, 0.5
        %v3446 = vtanh.pop %v3444
        %v3447 = vtanh.pop %v3445
        %v3448 = vmul.f32 %v3446, 0.5
        %v3449 = vmul.f32 %v3447, 0.5
        %v3450 = vadd.f32 %v3448, 0.5
        %v3451 = vadd.f32 %v3449, 0.5
        %v3452 = vld [vmem:[#allocation2 + $0x180] sm:$0xff]
        %v3453 = vld [vmem:[#allocation2 + $0x188] sm:$0xff]
        %v3454 = vmul.f32 %v3452, %v3450
        %v3455 = vmul.f32 %v3453, %v3451
        %v3456 = vadd.f32 %v3454, %v3455
        %v3457 = vrot.slane %v3456, 4
        %v3458 = vadd.f32 %v3456, %v3457
        %v3459 = vrot.slane %v3458, 2
        %v3460 = vadd.f32 %v3458, %v3459
        %v3461 = vrot.slane %v3460, 1
        %v3462 = vadd.f32 %v3460, %v3461
        %v3463 = vadd.f32 %v3462, %v162
        %3464 = vst [vmem:[%s160 + $0xc] sm:$0x1] %v3463
        %v3465 = vld [vmem:[%s154 + $0xd] sm:$0x1]
        %v3466 = vld [vmem:[#allocation2] sm:$0xff]
        %v3467 = vld [vmem:[#allocation2 + $0x8] sm:$0xff]
        %v3468 = vlaneseq
        %v3469 = vshrl.u32 %v3468, 7
        %v3470 = vsub.s32 0, %v3469
        %v3471 = vrot.slane %v3465, %v3470
        %v3472 = vmul.f32 %v3466, %v3471
        %v3473 = vmul.f32 %v3467, %v3471
        %v3474 = vld [vmem:[#allocation2 + $0x10] sm:$0xff]
        %v3475 = vld [vmem:[#allocation2 + $0x18] sm:$0xff]
        %v3476 = vadd.f32 %v3472, %v3474
        %v3477 = vadd.f32 %v3473, %v3475
        %v3478 = vmul.f32 %v3476, 0.5
        %v3479 = vmul.f32 %v3477, 0.5
        %v3480 = vtanh.pop %v3478
        %v3481 = vtanh.pop %v3479
        %v3482 = vmul.f32 %v3480, 0.5
        %v3483 = vmul.f32 %v3481, 0.5
        %v3484 = vadd.f32 %v3482, 0.5
        %v3485 = vadd.f32 %v3483, 0.5
        %v3486 = vld [vmem:[#allocation2 + $0xc0] sm:$0xff]
        %v3487 = vld [vmem:[#allocation2 + $0xc8] sm:$0xff]
        %v3488 = vld [vmem:[#allocation2 + $0x20] sm:$0xff]
        %v3489 = vld [vmem:[#allocation2 + $0x28] sm:$0xff]
        %v3490 = vlaneseq
        %v3491 = vshrl.u32 %v3490, 7
        %v3492 = vsub.s32 0, %v3491
        %v3493 = vrot.slane %v3484, %v3492
        %v3494 = vmul.f32 %v3488, %v3493
        %v3495 = vmul.f32 %v3489, %v3493
        %v3496 = vadd.f32 %v3486, %v3494
        %v3497 = vadd.f32 %v3487, %v3495
        %v3498 = vld [vmem:[#allocation2 + $0x30] sm:$0xff]
        %v3499 = vld [vmem:[#allocation2 + $0x38] sm:$0xff]
        %v3500 = vlaneseq
        %v3501 = vshrl.u32 %v3500, 7
        %v3502 = vsub.s32 1, %v3501
        %v3503 = vrot.slane %v3484, %v3502
        %v3504 = vmul.f32 %v3498, %v3503
        %v3505 = vmul.f32 %v3499, %v3503
        %v3506 = vadd.f32 %v3496, %v3504
        %v3507 = vadd.f32 %v3497, %v3505
        %v3508 = vld [vmem:[#allocation2 + $0x40] sm:$0xff]
        %v3509 = vld [vmem:[#allocation2 + $0x48] sm:$0xff]
        %v3510 = vlaneseq
        %v3511 = vshrl.u32 %v3510, 7
        %v3512 = vsub.s32 2, %v3511
        %v3513 = vrot.slane %v3484, %v3512
        %v3514 = vmul.f32 %v3508, %v3513
        %v3515 = vmul.f32 %v3509, %v3513
        %v3516 = vadd.f32 %v3506, %v3514
        %v3517 = vadd.f32 %v3507, %v3515
        %v3518 = vld [vmem:[#allocation2 + $0x50] sm:$0xff]
        %v3519 = vld [vmem:[#allocation2 + $0x58] sm:$0xff]
        %v3520 = vlaneseq
        %v3521 = vshrl.u32 %v3520, 7
        %v3522 = vsub.s32 3, %v3521
        %v3523 = vrot.slane %v3484, %v3522
        %v3524 = vmul.f32 %v3518, %v3523
        %v3525 = vmul.f32 %v3519, %v3523
        %v3526 = vadd.f32 %v3516, %v3524
        %v3527 = vadd.f32 %v3517, %v3525
        %v3528 = vld [vmem:[#allocation2 + $0x60] sm:$0xff]
        %v3529 = vld [vmem:[#allocation2 + $0x68] sm:$0xff]
        %v3530 = vlaneseq
        %v3531 = vshrl.u32 %v3530, 7
        %v3532 = vsub.s32 4, %v3531
        %v3533 = vrot.slane %v3484, %v3532
        %v3534 = vmul.f32 %v3528, %v3533
        %v3535 = vmul.f32 %v3529, %v3533
        %v3536 = vadd.f32 %v3526, %v3534
        %v3537 = vadd.f32 %v3527, %v3535
        %v3538 = vld [vmem:[#allocation2 + $0x70] sm:$0xff]
        %v3539 = vld [vmem:[#allocation2 + $0x78] sm:$0xff]
        %v3540 = vlaneseq
        %v3541 = vshrl.u32 %v3540, 7
        %v3542 = vsub.s32 5, %v3541
        %v3543 = vrot.slane %v3484, %v3542
        %v3544 = vmul.f32 %v3538, %v3543
        %v3545 = vmul.f32 %v3539, %v3543
        %v3546 = vadd.f32 %v3536, %v3544
        %v3547 = vadd.f32 %v3537, %v3545
        %v3548 = vld [vmem:[#allocation2 + $0x80] sm:$0xff]
        %v3549 = vld [vmem:[#allocation2 + $0x88] sm:$0xff]
        %v3550 = vlaneseq
        %v3551 = vshrl.u32 %v3550, 7
        %v3552 = vsub.s32 6, %v3551
        %v3553 = vrot.slane %v3484, %v3552
        %v3554 = vmul.f32 %v3548, %v3553
        %v3555 = vmul.f32 %v3549, %v3553
        %v3556 = vadd.f32 %v3546, %v3554
        %v3557 = vadd.f32 %v3547, %v3555
        %v3558 = vld [vmem:[#allocation2 + $0x90] sm:$0xff]
        %v3559 = vld [vmem:[#allocation2 + $0x98] sm:$0xff]
        %v3560 = vlaneseq
        %v3561 = vshrl.u32 %v3560, 7
        %v3562 = vsub.s32 7, %v3561
        %v3563 = vrot.slane %v3484, %v3562
        %v3564 = vmul.f32 %v3558, %v3563
        %v3565 = vmul.f32 %v3559, %v3563
        %v3566 = vadd.f32 %v3556, %v3564
        %v3567 = vadd.f32 %v3557, %v3565
        %v3568 = vld [vmem:[#allocation2 + $0xa0] sm:$0xff]
        %v3569 = vld [vmem:[#allocation2 + $0xa8] sm:$0xff]
        %v3570 = vlaneseq
        %v3571 = vshrl.u32 %v3570, 7
        %v3572 = vsub.s32 0, %v3571
        %v3573 = vrot.slane %v3485, %v3572
        %v3574 = vmul.f32 %v3568, %v3573
        %v3575 = vmul.f32 %v3569, %v3573
        %v3576 = vadd.f32 %v3566, %v3574
        %v3577 = vadd.f32 %v3567, %v3575
        %v3578 = vld [vmem:[#allocation2 + $0xb0] sm:$0xff]
        %v3579 = vld [vmem:[#allocation2 + $0xb8] sm:$0xff]
        %v3580 = vlaneseq
        %v3581 = vshrl.u32 %v3580, 7
        %v3582 = vsub.s32 1, %v3581
        %v3583 = vrot.slane %v3485, %v3582
        %v3584 = vmul.f32 %v3578, %v3583
        %v3585 = vmul.f32 %v3579, %v3583
        %v3586 = vadd.f32 %v3576, %v3584
        %v3587 = vadd.f32 %v3577, %v3585
        %v3588 = vmul.f32 %v3586, 0.5
        %v3589 = vmul.f32 %v3587, 0.5
        %v3590 = vtanh.pop %v3588
        %v3591 = vtanh.pop %v3589
        %v3592 = vmul.f32 %v3590, 0.5
        %v3593 = vmul.f32 %v3591, 0.5
        %v3594 = vadd.f32 %v3592, 0.5
        %v3595 = vadd.f32 %v3593, 0.5
        %v3596 = vld [vmem:[#allocation2 + $0x170] sm:$0xff]
        %v3597 = vld [vmem:[#allocation2 + $0x178] sm:$0xff]
        %v3598 = vld [vmem:[#allocation2 + $0xd0] sm:$0xff]
        %v3599 = vld [vmem:[#allocation2 + $0xd8] sm:$0xff]
        %v3600 = vlaneseq
        %v3601 = vshrl.u32 %v3600, 7
        %v3602 = vsub.s32 0, %v3601
        %v3603 = vrot.slane %v3594, %v3602
        %v3604 = vmul.f32 %v3598, %v3603
        %v3605 = vmul.f32 %v3599, %v3603
        %v3606 = vadd.f32 %v3596, %v3604
        %v3607 = vadd.f32 %v3597, %v3605
        %v3608 = vld [vmem:[#allocation2 + $0xe0] sm:$0xff]
        %v3609 = vld [vmem:[#allocation2 + $0xe8] sm:$0xff]
        %v3610 = vlaneseq
        %v3611 = vshrl.u32 %v3610, 7
        %v3612 = vsub.s32 1, %v3611
        %v3613 = vrot.slane %v3594, %v3612
        %v3614 = vmul.f32 %v3608, %v3613
        %v3615 = vmul.f32 %v3609, %v3613
        %v3616 = vadd.f32 %v3606, %v3614
        %v3617 = vadd.f32 %v3607, %v3615
        %v3618 = vld [vmem:[#allocation2 + $0xf0] sm:$0xff]
        %v3619 = vld [vmem:[#allocation2 + $0xf8] sm:$0xff]
        %v3620 = vlaneseq
        %v3621 = vshrl.u32 %v3620, 7
        %v3622 = vsub.s32 2, %v3621
        %v3623 = vrot.slane %v3594, %v3622
        %v3624 = vmul.f32 %v3618, %v3623
        %v3625 = vmul.f32 %v3619, %v3623
        %v3626 = vadd.f32 %v3616, %v3624
        %v3627 = vadd.f32 %v3617, %v3625
        %v3628 = vld [vmem:[#allocation2 + $0x100] sm:$0xff]
        %v3629 = vld [vmem:[#allocation2 + $0x108] sm:$0xff]
        %v3630 = vlaneseq
        %v3631 = vshrl.u32 %v3630, 7
        %v3632 = vsub.s32 3, %v3631
        %v3633 = vrot.slane %v3594, %v3632
        %v3634 = vmul.f32 %v3628, %v3633
        %v3635 = vmul.f32 %v3629, %v3633
        %v3636 = vadd.f32 %v3626, %v3634
        %v3637 = vadd.f32 %v3627, %v3635
        %v3638 = vld [vmem:[#allocation2 + $0x110] sm:$0xff]
        %v3639 = vld [vmem:[#allocation2 + $0x118] sm:$0xff]
        %v3640 = vlaneseq
        %v3641 = vshrl.u32 %v3640, 7
        %v3642 = vsub.s32 4, %v3641
        %v3643 = vrot.slane %v3594, %v3642
        %v3644 = vmul.f32 %v3638, %v3643
        %v3645 = vmul.f32 %v3639, %v3643
        %v3646 = vadd.f32 %v3636, %v3644
        %v3647 = vadd.f32 %v3637, %v3645
        %v3648 = vld [vmem:[#allocation2 + $0x120] sm:$0xff]
        %v3649 = vld [vmem:[#allocation2 + $0x128] sm:$0xff]
        %v3650 = vlaneseq
        %v3651 = vshrl.u32 %v3650, 7
        %v3652 = vsub.s32 5, %v3651
        %v3653 = vrot.slane %v3594, %v3652
        %v3654 = vmul.f32 %v3648, %v3653
        %v3655 = vmul.f32 %v3649, %v3653
        %v3656 = vadd.f32 %v3646, %v3654
        %v3657 = vadd.f32 %v3647, %v3655
        %v3658 = vld [vmem:[#allocation2 + $0x130] sm:$0xff]
        %v3659 = vld [vmem:[#allocation2 + $0x138] sm:$0xff]
        %v3660 = vlaneseq
        %v3661 = vshrl.u32 %v3660, 7
        %v3662 = vsub.s32 6, %v3661
        %v3663 = vrot.slane %v3594, %v3662
        %v3664 = vmul.f32 %v3658, %v3663
        %v3665 = vmul.f32 %v3659, %v3663
        %v3666 = vadd.f32 %v3656, %v3664
        %v3667 = vadd.f32 %v3657, %v3665
        %v3668 = vld [vmem:[#allocation2 + $0x140] sm:$0xff]
        %v3669 = vld [vmem:[#allocation2 + $0x148] sm:$0xff]
        %v3670 = vlaneseq
        %v3671 = vshrl.u32 %v3670, 7
        %v3672 = vsub.s32 7, %v3671
        %v3673 = vrot.slane %v3594, %v3672
        %v3674 = vmul.f32 %v3668, %v3673
        %v3675 = vmul.f32 %v3669, %v3673
        %v3676 = vadd.f32 %v3666, %v3674
        %v3677 = vadd.f32 %v3667, %v3675
        %v3678 = vld [vmem:[#allocation2 + $0x150] sm:$0xff]
        %v3679 = vld [vmem:[#allocation2 + $0x158] sm:$0xff]
        %v3680 = vlaneseq
        %v3681 = vshrl.u32 %v3680, 7
        %v3682 = vsub.s32 0, %v3681
        %v3683 = vrot.slane %v3595, %v3682
        %v3684 = vmul.f32 %v3678, %v3683
        %v3685 = vmul.f32 %v3679, %v3683
        %v3686 = vadd.f32 %v3676, %v3684
        %v3687 = vadd.f32 %v3677, %v3685
        %v3688 = vld [vmem:[#allocation2 + $0x160] sm:$0xff]
        %v3689 = vld [vmem:[#allocation2 + $0x168] sm:$0xff]
        %v3690 = vlaneseq
        %v3691 = vshrl.u32 %v3690, 7
        %v3692 = vsub.s32 1, %v3691
        %v3693 = vrot.slane %v3595, %v3692
        %v3694 = vmul.f32 %v3688, %v3693
        %v3695 = vmul.f32 %v3689, %v3693
        %v3696 = vadd.f32 %v3686, %v3694
        %v3697 = vadd.f32 %v3687, %v3695
        %v3698 = vmul.f32 %v3696, 0.5
        %v3699 = vmul.f32 %v3697, 0.5
        %v3700 = vtanh.pop %v3698
        %v3701 = vtanh.pop %v3699
        %v3702 = vmul.f32 %v3700, 0.5
        %v3703 = vmul.f32 %v3701, 0.5
        %v3704 = vadd.f32 %v3702, 0.5
        %v3705 = vadd.f32 %v3703, 0.5
        %v3706 = vld [vmem:[#allocation2 + $0x180] sm:$0xff]
        %v3707 = vld [vmem:[#allocation2 + $0x188] sm:$0xff]
        %v3708 = vmul.f32 %v3706, %v3704
        %v3709 = vmul.f32 %v3707, %v3705
        %v3710 = vadd.f32 %v3708, %v3709
        %v3711 = vrot.slane %v3710, 4
        %v3712 = vadd.f32 %v3710, %v3711
        %v3713 = vrot.slane %v3712, 2
        %v3714 = vadd.f32 %v3712, %v3713
        %v3715 = vrot.slane %v3714, 1
        %v3716 = vadd.f32 %v3714, %v3715
        %v3717 = vadd.f32 %v3716, %v162
        %3718 = vst [vmem:[%s160 + $0xd] sm:$0x1] %v3717
        %v3719 = vld [vmem:[%s154 + $0xe] sm:$0x1]
        %v3720 = vld [vmem:[#allocation2] sm:$0xff]
        %v3721 = vld [vmem:[#allocation2 + $0x8] sm:$0xff]
        %v3722 = vlaneseq
        %v3723 = vshrl.u32 %v3722, 7
        %v3724 = vsub.s32 0, %v3723
        %v3725 = vrot.slane %v3719, %v3724
        %v3726 = vmul.f32 %v3720, %v3725
        %v3727 = vmul.f32 %v3721, %v3725
        %v3728 = vld [vmem:[#allocation2 + $0x10] sm:$0xff]
        %v3729 = vld [vmem:[#allocation2 + $0x18] sm:$0xff]
        %v3730 = vadd.f32 %v3726, %v3728
        %v3731 = vadd.f32 %v3727, %v3729
        %v3732 = vmul.f32 %v3730, 0.5
        %v3733 = vmul.f32 %v3731, 0.5
        %v3734 = vtanh.pop %v3732
        %v3735 = vtanh.pop %v3733
        %v3736 = vmul.f32 %v3734, 0.5
        %v3737 = vmul.f32 %v3735, 0.5
        %v3738 = vadd.f32 %v3736, 0.5
        %v3739 = vadd.f32 %v3737, 0.5
        %v3740 = vld [vmem:[#allocation2 + $0xc0] sm:$0xff]
        %v3741 = vld [vmem:[#allocation2 + $0xc8] sm:$0xff]
        %v3742 = vld [vmem:[#allocation2 + $0x20] sm:$0xff]
        %v3743 = vld [vmem:[#allocation2 + $0x28] sm:$0xff]
        %v3744 = vlaneseq
        %v3745 = vshrl.u32 %v3744, 7
        %v3746 = vsub.s32 0, %v3745
        %v3747 = vrot.slane %v3738, %v3746
        %v3748 = vmul.f32 %v3742, %v3747
        %v3749 = vmul.f32 %v3743, %v3747
        %v3750 = vadd.f32 %v3740, %v3748
        %v3751 = vadd.f32 %v3741, %v3749
        %v3752 = vld [vmem:[#allocation2 + $0x30] sm:$0xff]
        %v3753 = vld [vmem:[#allocation2 + $0x38] sm:$0xff]
        %v3754 = vlaneseq
        %v3755 = vshrl.u32 %v3754, 7
        %v3756 = vsub.s32 1, %v3755
        %v3757 = vrot.slane %v3738, %v3756
        %v3758 = vmul.f32 %v3752, %v3757
        %v3759 = vmul.f32 %v3753, %v3757
        %v3760 = vadd.f32 %v3750, %v3758
        %v3761 = vadd.f32 %v3751, %v3759
        %v3762 = vld [vmem:[#allocation2 + $0x40] sm:$0xff]
        %v3763 = vld [vmem:[#allocation2 + $0x48] sm:$0xff]
        %v3764 = vlaneseq
        %v3765 = vshrl.u32 %v3764, 7
        %v3766 = vsub.s32 2, %v3765
        %v3767 = vrot.slane %v3738, %v3766
        %v3768 = vmul.f32 %v3762, %v3767
        %v3769 = vmul.f32 %v3763, %v3767
        %v3770 = vadd.f32 %v3760, %v3768
        %v3771 = vadd.f32 %v3761, %v3769
        %v3772 = vld [vmem:[#allocation2 + $0x50] sm:$0xff]
        %v3773 = vld [vmem:[#allocation2 + $0x58] sm:$0xff]
        %v3774 = vlaneseq
        %v3775 = vshrl.u32 %v3774, 7
        %v3776 = vsub.s32 3, %v3775
        %v3777 = vrot.slane %v3738, %v3776
        %v3778 = vmul.f32 %v3772, %v3777
        %v3779 = vmul.f32 %v3773, %v3777
        %v3780 = vadd.f32 %v3770, %v3778
        %v3781 = vadd.f32 %v3771, %v3779
        %v3782 = vld [vmem:[#allocation2 + $0x60] sm:$0xff]
        %v3783 = vld [vmem:[#allocation2 + $0x68] sm:$0xff]
        %v3784 = vlaneseq
        %v3785 = vshrl.u32 %v3784, 7
        %v3786 = vsub.s32 4, %v3785
        %v3787 = vrot.slane %v3738, %v3786
        %v3788 = vmul.f32 %v3782, %v3787
        %v3789 = vmul.f32 %v3783, %v3787
        %v3790 = vadd.f32 %v3780, %v3788
        %v3791 = vadd.f32 %v3781, %v3789
        %v3792 = vld [vmem:[#allocation2 + $0x70] sm:$0xff]
        %v3793 = vld [vmem:[#allocation2 + $0x78] sm:$0xff]
        %v3794 = vlaneseq
        %v3795 = vshrl.u32 %v3794, 7
        %v3796 = vsub.s32 5, %v3795
        %v3797 = vrot.slane %v3738, %v3796
        %v3798 = vmul.f32 %v3792, %v3797
        %v3799 = vmul.f32 %v3793, %v3797
        %v3800 = vadd.f32 %v3790, %v3798
        %v3801 = vadd.f32 %v3791, %v3799
        %v3802 = vld [vmem:[#allocation2 + $0x80] sm:$0xff]
        %v3803 = vld [vmem:[#allocation2 + $0x88] sm:$0xff]
        %v3804 = vlaneseq
        %v3805 = vshrl.u32 %v3804, 7
        %v3806 = vsub.s32 6, %v3805
        %v3807 = vrot.slane %v3738, %v3806
        %v3808 = vmul.f32 %v3802, %v3807
        %v3809 = vmul.f32 %v3803, %v3807
        %v3810 = vadd.f32 %v3800, %v3808
        %v3811 = vadd.f32 %v3801, %v3809
        %v3812 = vld [vmem:[#allocation2 + $0x90] sm:$0xff]
        %v3813 = vld [vmem:[#allocation2 + $0x98] sm:$0xff]
        %v3814 = vlaneseq
        %v3815 = vshrl.u32 %v3814, 7
        %v3816 = vsub.s32 7, %v3815
        %v3817 = vrot.slane %v3738, %v3816
        %v3818 = vmul.f32 %v3812, %v3817
        %v3819 = vmul.f32 %v3813, %v3817
        %v3820 = vadd.f32 %v3810, %v3818
        %v3821 = vadd.f32 %v3811, %v3819
        %v3822 = vld [vmem:[#allocation2 + $0xa0] sm:$0xff]
        %v3823 = vld [vmem:[#allocation2 + $0xa8] sm:$0xff]
        %v3824 = vlaneseq
        %v3825 = vshrl.u32 %v3824, 7
        %v3826 = vsub.s32 0, %v3825
        %v3827 = vrot.slane %v3739, %v3826
        %v3828 = vmul.f32 %v3822, %v3827
        %v3829 = vmul.f32 %v3823, %v3827
        %v3830 = vadd.f32 %v3820, %v3828
        %v3831 = vadd.f32 %v3821, %v3829
        %v3832 = vld [vmem:[#allocation2 + $0xb0] sm:$0xff]
        %v3833 = vld [vmem:[#allocation2 + $0xb8] sm:$0xff]
        %v3834 = vlaneseq
        %v3835 = vshrl.u32 %v3834, 7
        %v3836 = vsub.s32 1, %v3835
        %v3837 = vrot.slane %v3739, %v3836
        %v3838 = vmul.f32 %v3832, %v3837
        %v3839 = vmul.f32 %v3833, %v3837
        %v3840 = vadd.f32 %v3830, %v3838
        %v3841 = vadd.f32 %v3831, %v3839
        %v3842 = vmul.f32 %v3840, 0.5
        %v3843 = vmul.f32 %v3841, 0.5
        %v3844 = vtanh.pop %v3842
        %v3845 = vtanh.pop %v3843
        %v3846 = vmul.f32 %v3844, 0.5
        %v3847 = vmul.f32 %v3845, 0.5
        %v3848 = vadd.f32 %v3846, 0.5
        %v3849 = vadd.f32 %v3847, 0.5
        %v3850 = vld [vmem:[#allocation2 + $0x170] sm:$0xff]
        %v3851 = vld [vmem:[#allocation2 + $0x178] sm:$0xff]
        %v3852 = vld [vmem:[#allocation2 + $0xd0] sm:$0xff]
        %v3853 = vld [vmem:[#allocation2 + $0xd8] sm:$0xff]
        %v3854 = vlaneseq
        %v3855 = vshrl.u32 %v3854, 7
        %v3856 = vsub.s32 0, %v3855
        %v3857 = vrot.slane %v3848, %v3856
        %v3858 = vmul.f32 %v3852, %v3857
        %v3859 = vmul.f32 %v3853, %v3857
        %v3860 = vadd.f32 %v3850, %v3858
        %v3861 = vadd.f32 %v3851, %v3859
        %v3862 = vld [vmem:[#allocation2 + $0xe0] sm:$0xff]
        %v3863 = vld [vmem:[#allocation2 + $0xe8] sm:$0xff]
        %v3864 = vlaneseq
        %v3865 = vshrl.u32 %v3864, 7
        %v3866 = vsub.s32 1, %v3865
        %v3867 = vrot.slane %v3848, %v3866
        %v3868 = vmul.f32 %v3862, %v3867
        %v3869 = vmul.f32 %v3863, %v3867
        %v3870 = vadd.f32 %v3860, %v3868
        %v3871 = vadd.f32 %v3861, %v3869
        %v3872 = vld [vmem:[#allocation2 + $0xf0] sm:$0xff]
        %v3873 = vld [vmem:[#allocation2 + $0xf8] sm:$0xff]
        %v3874 = vlaneseq
        %v3875 = vshrl.u32 %v3874, 7
        %v3876 = vsub.s32 2, %v3875
        %v3877 = vrot.slane %v3848, %v3876
        %v3878 = vmul.f32 %v3872, %v3877
        %v3879 = vmul.f32 %v3873, %v3877
        %v3880 = vadd.f32 %v3870, %v3878
        %v3881 = vadd.f32 %v3871, %v3879
        %v3882 = vld [vmem:[#allocation2 + $0x100] sm:$0xff]
        %v3883 = vld [vmem:[#allocation2 + $0x108] sm:$0xff]
        %v3884 = vlaneseq
        %v3885 = vshrl.u32 %v3884, 7
        %v3886 = vsub.s32 3, %v3885
        %v3887 = vrot.slane %v3848, %v3886
        %v3888 = vmul.f32 %v3882, %v3887
        %v3889 = vmul.f32 %v3883, %v3887
        %v3890 = vadd.f32 %v3880, %v3888
        %v3891 = vadd.f32 %v3881, %v3889
        %v3892 = vld [vmem:[#allocation2 + $0x110] sm:$0xff]
        %v3893 = vld [vmem:[#allocation2 + $0x118] sm:$0xff]
        %v3894 = vlaneseq
        %v3895 = vshrl.u32 %v3894, 7
        %v3896 = vsub.s32 4, %v3895
        %v3897 = vrot.slane %v3848, %v3896
        %v3898 = vmul.f32 %v3892, %v3897
        %v3899 = vmul.f32 %v3893, %v3897
        %v3900 = vadd.f32 %v3890, %v3898
        %v3901 = vadd.f32 %v3891, %v3899
        %v3902 = vld [vmem:[#allocation2 + $0x120] sm:$0xff]
        %v3903 = vld [vmem:[#allocation2 + $0x128] sm:$0xff]
        %v3904 = vlaneseq
        %v3905 = vshrl.u32 %v3904, 7
        %v3906 = vsub.s32 5, %v3905
        %v3907 = vrot.slane %v3848, %v3906
        %v3908 = vmul.f32 %v3902, %v3907
        %v3909 = vmul.f32 %v3903, %v3907
        %v3910 = vadd.f32 %v3900, %v3908
        %v3911 = vadd.f32 %v3901, %v3909
        %v3912 = vld [vmem:[#allocation2 + $0x130] sm:$0xff]
        %v3913 = vld [vmem:[#allocation2 + $0x138] sm:$0xff]
        %v3914 = vlaneseq
        %v3915 = vshrl.u32 %v3914, 7
        %v3916 = vsub.s32 6, %v3915
        %v3917 = vrot.slane %v3848, %v3916
        %v3918 = vmul.f32 %v3912, %v3917
        %v3919 = vmul.f32 %v3913, %v3917
        %v3920 = vadd.f32 %v3910, %v3918
        %v3921 = vadd.f32 %v3911, %v3919
        %v3922 = vld [vmem:[#allocation2 + $0x140] sm:$0xff]
        %v3923 = vld [vmem:[#allocation2 + $0x148] sm:$0xff]
        %v3924 = vlaneseq
        %v3925 = vshrl.u32 %v3924, 7
        %v3926 = vsub.s32 7, %v3925
        %v3927 = vrot.slane %v3848, %v3926
        %v3928 = vmul.f32 %v3922, %v3927
        %v3929 = vmul.f32 %v3923, %v3927
        %v3930 = vadd.f32 %v3920, %v3928
        %v3931 = vadd.f32 %v3921, %v3929
        %v3932 = vld [vmem:[#allocation2 + $0x150] sm:$0xff]
        %v3933 = vld [vmem:[#allocation2 + $0x158] sm:$0xff]
        %v3934 = vlaneseq
        %v3935 = vshrl.u32 %v3934, 7
        %v3936 = vsub.s32 0, %v3935
        %v3937 = vrot.slane %v3849, %v3936
        %v3938 = vmul.f32 %v3932, %v3937
        %v3939 = vmul.f32 %v3933, %v3937
        %v3940 = vadd.f32 %v3930, %v3938
        %v3941 = vadd.f32 %v3931, %v3939
        %v3942 = vld [vmem:[#allocation2 + $0x160] sm:$0xff]
        %v3943 = vld [vmem:[#allocation2 + $0x168] sm:$0xff]
        %v3944 = vlaneseq
        %v3945 = vshrl.u32 %v3944, 7
        %v3946 = vsub.s32 1, %v3945
        %v3947 = vrot.slane %v3849, %v3946
        %v3948 = vmul.f32 %v3942, %v3947
        %v3949 = vmul.f32 %v3943, %v3947
        %v3950 = vadd.f32 %v3940, %v3948
        %v3951 = vadd.f32 %v3941, %v3949
        %v3952 = vmul.f32 %v3950, 0.5
        %v3953 = vmul.f32 %v3951, 0.5
        %v3954 = vtanh.pop %v3952
        %v3955 = vtanh.pop %v3953
        %v3956 = vmul.f32 %v3954, 0.5
        %v3957 = vmul.f32 %v3955, 0.5
        %v3958 = vadd.f32 %v3956, 0.5
        %v3959 = vadd.f32 %v3957, 0.5
        %v3960 = vld [vmem:[#allocation2 + $0x180] sm:$0xff]
        %v3961 = vld [vmem:[#allocation2 + $0x188] sm:$0xff]
        %v3962 = vmul.f32 %v3960, %v3958
        %v3963 = vmul.f32 %v3961, %v3959
        %v3964 = vadd.f32 %v3962, %v3963
        %v3965 = vrot.slane %v3964, 4
        %v3966 = vadd.f32 %v3964, %v3965
        %v3967 = vrot.slane %v3966, 2
        %v3968 = vadd.f32 %v3966, %v3967
        %v3969 = vrot.slane %v3968, 1
        %v3970 = vadd.f32 %v3968, %v3969
        %v3971 = vadd.f32 %v3970, %v162
        %3972 = vst [vmem:[%s160 + $0xe] sm:$0x1] %v3971
        %v3973 = vld [vmem:[%s154 + $0xf] sm:$0x1]
        %v3974 = vld [vmem:[#allocation2] sm:$0xff]
        %v3975 = vld [vmem:[#allocation2 + $0x8] sm:$0xff]
        %v3976 = vlaneseq
        %v3977 = vshrl.u32 %v3976, 7
        %v3978 = vsub.s32 0, %v3977
        %v3979 = vrot.slane %v3973, %v3978
        %v3980 = vmul.f32 %v3974, %v3979
        %v3981 = vmul.f32 %v3975, %v3979
        %v3982 = vld [vmem:[#allocation2 + $0x10] sm:$0xff]
        %v3983 = vld [vmem:[#allocation2 + $0x18] sm:$0xff]
        %v3984 = vadd.f32 %v3980, %v3982
        %v3985 = vadd.f32 %v3981, %v3983
        %v3986 = vmul.f32 %v3984, 0.5
        %v3987 = vmul.f32 %v3985, 0.5
        %v3988 = vtanh.pop %v3986
        %v3989 = vtanh.pop %v3987
        %v3990 = vmul.f32 %v3988, 0.5
        %v3991 = vmul.f32 %v3989, 0.5
        %v3992 = vadd.f32 %v3990, 0.5
        %v3993 = vadd.f32 %v3991, 0.5
        %v3994 = vld [vmem:[#allocation2 + $0xc0] sm:$0xff]
        %v3995 = vld [vmem:[#allocation2 + $0xc8] sm:$0xff]
        %v3996 = vld [vmem:[#allocation2 + $0x20] sm:$0xff]
        %v3997 = vld [vmem:[#allocation2 + $0x28] sm:$0xff]
        %v3998 = vlaneseq
        %v3999 = vshrl.u32 %v3998, 7
        %v4000 = vsub.s32 0, %v3999
        %v4001 = vrot.slane %v3992, %v4000
        %v4002 = vmul.f32 %v3996, %v4001
        %v4003 = vmul.f32 %v3997, %v4001
        %v4004 = vadd.f32 %v3994, %v4002
        %v4005 = vadd.f32 %v3995, %v4003
        %v4006 = vld [vmem:[#allocation2 + $0x30] sm:$0xff]
        %v4007 = vld [vmem:[#allocation2 + $0x38] sm:$0xff]
        %v4008 = vlaneseq
        %v4009 = vshrl.u32 %v4008, 7
        %v4010 = vsub.s32 1, %v4009
        %v4011 = vrot.slane %v3992, %v4010
        %v4012 = vmul.f32 %v4006, %v4011
        %v4013 = vmul.f32 %v4007, %v4011
        %v4014 = vadd.f32 %v4004, %v4012
        %v4015 = vadd.f32 %v4005, %v4013
        %v4016 = vld [vmem:[#allocation2 + $0x40] sm:$0xff]
        %v4017 = vld [vmem:[#allocation2 + $0x48] sm:$0xff]
        %v4018 = vlaneseq
        %v4019 = vshrl.u32 %v4018, 7
        %v4020 = vsub.s32 2, %v4019
        %v4021 = vrot.slane %v3992, %v4020
        %v4022 = vmul.f32 %v4016, %v4021
        %v4023 = vmul.f32 %v4017, %v4021
        %v4024 = vadd.f32 %v4014, %v4022
        %v4025 = vadd.f32 %v4015, %v4023
        %v4026 = vld [vmem:[#allocation2 + $0x50] sm:$0xff]
        %v4027 = vld [vmem:[#allocation2 + $0x58] sm:$0xff]
        %v4028 = vlaneseq
        %v4029 = vshrl.u32 %v4028, 7
        %v4030 = vsub.s32 3, %v4029
        %v4031 = vrot.slane %v3992, %v4030
        %v4032 = vmul.f32 %v4026, %v4031
        %v4033 = vmul.f32 %v4027, %v4031
        %v4034 = vadd.f32 %v4024, %v4032
        %v4035 = vadd.f32 %v4025, %v4033
        %v4036 = vld [vmem:[#allocation2 + $0x60] sm:$0xff]
        %v4037 = vld [vmem:[#allocation2 + $0x68] sm:$0xff]
        %v4038 = vlaneseq
        %v4039 = vshrl.u32 %v4038, 7
        %v4040 = vsub.s32 4, %v4039
        %v4041 = vrot.slane %v3992, %v4040
        %v4042 = vmul.f32 %v4036, %v4041
        %v4043 = vmul.f32 %v4037, %v4041
        %v4044 = vadd.f32 %v4034, %v4042
        %v4045 = vadd.f32 %v4035, %v4043
        %v4046 = vld [vmem:[#allocation2 + $0x70] sm:$0xff]
        %v4047 = vld [vmem:[#allocation2 + $0x78] sm:$0xff]
        %v4048 = vlaneseq
        %v4049 = vshrl.u32 %v4048, 7
        %v4050 = vsub.s32 5, %v4049
        %v4051 = vrot.slane %v3992, %v4050
        %v4052 = vmul.f32 %v4046, %v4051
        %v4053 = vmul.f32 %v4047, %v4051
        %v4054 = vadd.f32 %v4044, %v4052
        %v4055 = vadd.f32 %v4045, %v4053
        %v4056 = vld [vmem:[#allocation2 + $0x80] sm:$0xff]
        %v4057 = vld [vmem:[#allocation2 + $0x88] sm:$0xff]
        %v4058 = vlaneseq
        %v4059 = vshrl.u32 %v4058, 7
        %v4060 = vsub.s32 6, %v4059
        %v4061 = vrot.slane %v3992, %v4060
        %v4062 = vmul.f32 %v4056, %v4061
        %v4063 = vmul.f32 %v4057, %v4061
        %v4064 = vadd.f32 %v4054, %v4062
        %v4065 = vadd.f32 %v4055, %v4063
        %v4066 = vld [vmem:[#allocation2 + $0x90] sm:$0xff]
        %v4067 = vld [vmem:[#allocation2 + $0x98] sm:$0xff]
        %v4068 = vlaneseq
        %v4069 = vshrl.u32 %v4068, 7
        %v4070 = vsub.s32 7, %v4069
        %v4071 = vrot.slane %v3992, %v4070
        %v4072 = vmul.f32 %v4066, %v4071
        %v4073 = vmul.f32 %v4067, %v4071
        %v4074 = vadd.f32 %v4064, %v4072
        %v4075 = vadd.f32 %v4065, %v4073
        %v4076 = vld [vmem:[#allocation2 + $0xa0] sm:$0xff]
        %v4077 = vld [vmem:[#allocation2 + $0xa8] sm:$0xff]
        %v4078 = vlaneseq
        %v4079 = vshrl.u32 %v4078, 7
        %v4080 = vsub.s32 0, %v4079
        %v4081 = vrot.slane %v3993, %v4080
        %v4082 = vmul.f32 %v4076, %v4081
        %v4083 = vmul.f32 %v4077, %v4081
        %v4084 = vadd.f32 %v4074, %v4082
        %v4085 = vadd.f32 %v4075, %v4083
        %v4086 = vld [vmem:[#allocation2 + $0xb0] sm:$0xff]
        %v4087 = vld [vmem:[#allocation2 + $0xb8] sm:$0xff]
        %v4088 = vlaneseq
        %v4089 = vshrl.u32 %v4088, 7
        %v4090 = vsub.s32 1, %v4089
        %v4091 = vrot.slane %v3993, %v4090
        %v4092 = vmul.f32 %v4086, %v4091
        %v4093 = vmul.f32 %v4087, %v4091
        %v4094 = vadd.f32 %v4084, %v4092
        %v4095 = vadd.f32 %v4085, %v4093
        %v4096 = vmul.f32 %v4094, 0.5
        %v4097 = vmul.f32 %v4095, 0.5
        %v4098 = vtanh.pop %v4096
        %v4099 = vtanh.pop %v4097
        %v4100 = vmul.f32 %v4098, 0.5
        %v4101 = vmul.f32 %v4099, 0.5
        %v4102 = vadd.f32 %v4100, 0.5
        %v4103 = vadd.f32 %v4101, 0.5
        %v4104 = vld [vmem:[#allocation2 + $0x170] sm:$0xff]
        %v4105 = vld [vmem:[#allocation2 + $0x178] sm:$0xff]
        %v4106 = vld [vmem:[#allocation2 + $0xd0] sm:$0xff]
        %v4107 = vld [vmem:[#allocation2 + $0xd8] sm:$0xff]
        %v4108 = vlaneseq
        %v4109 = vshrl.u32 %v4108, 7
        %v4110 = vsub.s32 0, %v4109
        %v4111 = vrot.slane %v4102, %v4110
        %v4112 = vmul.f32 %v4106, %v4111
        %v4113 = vmul.f32 %v4107, %v4111
        %v4114 = vadd.f32 %v4104, %v4112
        %v4115 = vadd.f32 %v4105, %v4113
        %v4116 = vld [vmem:[#allocation2 + $0xe0] sm:$0xff]
        %v4117 = vld [vmem:[#allocation2 + $0xe8] sm:$0xff]
        %v4118 = vlaneseq
        %v4119 = vshrl.u32 %v4118, 7
        %v4120 = vsub.s32 1, %v4119
        %v4121 = vrot.slane %v4102, %v4120
        %v4122 = vmul.f32 %v4116, %v4121
        %v4123 = vmul.f32 %v4117, %v4121
        %v4124 = vadd.f32 %v4114, %v4122
        %v4125 = vadd.f32 %v4115, %v4123
        %v4126 = vld [vmem:[#allocation2 + $0xf0] sm:$0xff]
        %v4127 = vld [vmem:[#allocation2 + $0xf8] sm:$0xff]
        %v4128 = vlaneseq
        %v4129 = vshrl.u32 %v4128, 7
        %v4130 = vsub.s32 2, %v4129
        %v4131 = vrot.slane %v4102, %v4130
        %v4132 = vmul.f32 %v4126, %v4131
        %v4133 = vmul.f32 %v4127, %v4131
        %v4134 = vadd.f32 %v4124, %v4132
        %v4135 = vadd.f32 %v4125, %v4133
        %v4136 = vld [vmem:[#allocation2 + $0x100] sm:$0xff]
        %v4137 = vld [vmem:[#allocation2 + $0x108] sm:$0xff]
        %v4138 = vlaneseq
        %v4139 = vshrl.u32 %v4138, 7
        %v4140 = vsub.s32 3, %v4139
        %v4141 = vrot.slane %v4102, %v4140
        %v4142 = vmul.f32 %v4136, %v4141
        %v4143 = vmul.f32 %v4137, %v4141
        %v4144 = vadd.f32 %v4134, %v4142
        %v4145 = vadd.f32 %v4135, %v4143
        %v4146 = vld [vmem:[#allocation2 + $0x110] sm:$0xff]
        %v4147 = vld [vmem:[#allocation2 + $0x118] sm:$0xff]
        %v4148 = vlaneseq
        %v4149 = vshrl.u32 %v4148, 7
        %v4150 = vsub.s32 4, %v4149
        %v4151 = vrot.slane %v4102, %v4150
        %v4152 = vmul.f32 %v4146, %v4151
        %v4153 = vmul.f32 %v4147, %v4151
        %v4154 = vadd.f32 %v4144, %v4152
        %v4155 = vadd.f32 %v4145, %v4153
        %v4156 = vld [vmem:[#allocation2 + $0x120] sm:$0xff]
        %v4157 = vld [vmem:[#allocation2 + $0x128] sm:$0xff]
        %v4158 = vlaneseq
        %v4159 = vshrl.u32 %v4158, 7
        %v4160 = vsub.s32 5, %v4159
        %v4161 = vrot.slane %v4102, %v4160
        %v4162 = vmul.f32 %v4156, %v4161
        %v4163 = vmul.f32 %v4157, %v4161
        %v4164 = vadd.f32 %v4154, %v4162
        %v4165 = vadd.f32 %v4155, %v4163
        %v4166 = vld [vmem:[#allocation2 + $0x130] sm:$0xff]
        %v4167 = vld [vmem:[#allocation2 + $0x138] sm:$0xff]
        %v4168 = vlaneseq
        %v4169 = vshrl.u32 %v4168, 7
        %v4170 = vsub.s32 6, %v4169
        %v4171 = vrot.slane %v4102, %v4170
        %v4172 = vmul.f32 %v4166, %v4171
        %v4173 = vmul.f32 %v4167, %v4171
        %v4174 = vadd.f32 %v4164, %v4172
        %v4175 = vadd.f32 %v4165, %v4173
        %v4176 = vld [vmem:[#allocation2 + $0x140] sm:$0xff]
        %v4177 = vld [vmem:[#allocation2 + $0x148] sm:$0xff]
        %v4178 = vlaneseq
        %v4179 = vshrl.u32 %v4178, 7
        %v4180 = vsub.s32 7, %v4179
        %v4181 = vrot.slane %v4102, %v4180
        %v4182 = vmul.f32 %v4176, %v4181
        %v4183 = vmul.f32 %v4177, %v4181
        %v4184 = vadd.f32 %v4174, %v4182
        %v4185 = vadd.f32 %v4175, %v4183
        %v4186 = vld [vmem:[#allocation2 + $0x150] sm:$0xff]
        %v4187 = vld [vmem:[#allocation2 + $0x158] sm:$0xff]
        %v4188 = vlaneseq
        %v4189 = vshrl.u32 %v4188, 7
        %v4190 = vsub.s32 0, %v4189
        %v4191 = vrot.slane %v4103, %v4190
        %v4192 = vmul.f32 %v4186, %v4191
        %v4193 = vmul.f32 %v4187, %v4191
        %v4194 = vadd.f32 %v4184, %v4192
        %v4195 = vadd.f32 %v4185, %v4193
        %v4196 = vld [vmem:[#allocation2 + $0x160] sm:$0xff]
        %v4197 = vld [vmem:[#allocation2 + $0x168] sm:$0xff]
        %v4198 = vlaneseq
        %v4199 = vshrl.u32 %v4198, 7
        %v4200 = vsub.s32 1, %v4199
        %v4201 = vrot.slane %v4103, %v4200
        %v4202 = vmul.f32 %v4196, %v4201
        %v4203 = vmul.f32 %v4197, %v4201
        %v4204 = vadd.f32 %v4194, %v4202
        %v4205 = vadd.f32 %v4195, %v4203
        %v4206 = vmul.f32 %v4204, 0.5
        %v4207 = vmul.f32 %v4205, 0.5
        %v4208 = vtanh.pop %v4206
        %v4209 = vtanh.pop %v4207
        %v4210 = vmul.f32 %v4208, 0.5
        %v4211 = vmul.f32 %v4209, 0.5
        %v4212 = vadd.f32 %v4210, 0.5
        %v4213 = vadd.f32 %v4211, 0.5
        %v4214 = vld [vmem:[#allocation2 + $0x180] sm:$0xff]
        %v4215 = vld [vmem:[#allocation2 + $0x188] sm:$0xff]
        %v4216 = vmul.f32 %v4214, %v4212
        %v4217 = vmul.f32 %v4215, %v4213
        %v4218 = vadd.f32 %v4216, %v4217
        %v4219 = vrot.slane %v4218, 4
        %v4220 = vadd.f32 %v4218, %v4219
        %v4221 = vrot.slane %v4220, 2
        %v4222 = vadd.f32 %v4220, %v4221
        %v4223 = vrot.slane %v4222, 1
        %v4224 = vadd.f32 %v4222, %v4223
        %v4225 = vadd.f32 %v4224, %v162
        %4226 = vst [vmem:[%s160 + $0xf] sm:$0x1] %v4225
        %s4227 = smul.u32 2, %s14
        %p4228 = scmp.lt.s32.totalorder %s4227, 3
        %s4229 = scalar_select %p4228, %s4227, 3
        %s4230 = smul.addr %s4229, 8
        %s4231 = scalar_lea.vmem %s2, %s4230
        // Predicated region
        $region33: #{approx_nn_forward.1} parent=27 // pred_check
          %p4232 = pneg %p79
        $region34: #{approx_nn_forward.1} parent=27 // pred_check_branch
          %4234 = sbr.rel (%p4232) target = $region36
        $region35: #{approx_nn_forward.1} parent=27 // pred_region
          %s4235 = smul.u32 2, %s14
        $region36: #{approx_nn_forward.1} parent=27 // pred_fallthru
          _
      $region28: #{approx_nn_forward.1} parent=5 // pred_fallthru
        _
      %p4236 = scmp.le.s32.totalorder 2, %s9
      // Predicated region
      $region37: #{approx_nn_forward.1} parent=5 // pred_check
        %p4237 = pneg %p4236
      $region38: #{approx_nn_forward.1} parent=5 // pred_check_branch
        %4239 = sbr.rel (%p4237) target = $region40
      $region39: #{approx_nn_forward.1} parent=5 // pred_region
        %s4240 = ssub.s32 %s9, 2
        // Predicated region
        $region41: #{approx_nn_forward.1} parent=39 // pred_check
          %p4241 = pneg %p85
        $region42: #{approx_nn_forward.1} parent=39 // pred_check_branch
          %4243 = sbr.rel (%p4241) target = $region44
        $region43: #{approx_nn_forward.1} parent=39 // pred_region
          %s4244 = smul.u32 2, %s15
          %p4245 = scmp.lt.s32.totalorder %s4244, 3
          %s4246 = scalar_select %p4245, %s4244, 3
          %s4247 = smul.addr %s4246, 8
          %s4248 = scalar_lea.vmem %s2, %s4247
        $region44: #{approx_nn_forward.1} parent=39 // pred_fallthru
          _
      $region40: #{approx_nn_forward.1} parent=5 // pred_fallthru
        _
    $region6: #{approx_nn_forward.1} parent=1 // loop_footer
      %s13 = sadd.s32 1, %s9
    $region7: #{approx_nn_forward.1} parent=1 // loop_footer_branch
      %8 = sbr.rel target = $region3
    $region8: #{approx_nn_forward.1} parent=1 // loop_exit
      _
    %4249 = vsyncpa [#allocation3], 1
    %s4250 = scalar_lea.sflag [#allocation3], 1
    %4251 = vsyncpa %s4250, 1

</llo_original>
